<compile_context>
chip_gen: v7x
topology: tpu7x:2x2x1
jax: 0.10.0
libtpu: 0.0.40
codegen_flags: <defaults>
</compile_context>

<pallas_src>
import functools

import jax
import jax.numpy as jnp
from jax.experimental import pallas as pl
from jax.experimental.pallas import tpu as pltpu

F32 = jnp.float32

# ----------------------------- model config ---------------------------------
FEATURE_DIM = 32          # args.feature_dim
HEADS = 8                 # MHSA heads
ACTION_CLS_NUM = 4        # args.action_cls_num  -> snippet_cls out = 5
NUM_CLS = ACTION_CLS_NUM + 1
MAX_SEGMENTS = 8          # args.max_segments_num
FG_TOPK_SEG = 8           # args.fg_topk_seg
BG_TOPK_SEG = 4           # args.bg_topk_seg
BN_EPS = 1e-5
PACK = 128                # lane-dense packed output width


# ----------------------------- in-kernel helpers -----------------------------
def _softmax_lastdim(x):
    m = jnp.max(x, axis=-1, keepdims=True)
    p = jnp.exp(x - m)
    return p / jnp.sum(p, axis=-1, keepdims=True)


def _masked_softmax(sim, mask0):
    """Softmax over the last dim; `mask0`==True entries excluded; fully-masked
    rows produce exact zeros (matches torch masked_fill(-inf) + nan_to_num)."""
    sim = jnp.where(mask0, -1e30, sim)
    m = jnp.max(sim, axis=-1, keepdims=True)
    p = jnp.where(mask0, 0.0, jnp.exp(sim - m))
    denom = jnp.sum(p, axis=-1, keepdims=True)
    return p * pl.reciprocal(jnp.maximum(denom, 1e-30), approx=True)


def _topk_mean_axis0(x, k):
    """Mean of the k largest values along axis 0, per column. x:(T,C)->(1,C).
    Removes exactly one occurrence of the current max per step (matches
    torch.sort top-k semantics, including ties)."""
    t = x.shape[0]
    row_ids = jax.lax.broadcasted_iota(jnp.int32, x.shape, 0).astype(F32)
    acc = jnp.zeros((1, x.shape[1]), F32)
    cur = x
    for _ in range(k):
        m = jnp.max(cur, axis=0, keepdims=True)
        acc = acc + m
        first = jnp.min(jnp.where(cur == m, row_ids, float(t)),
                        axis=0, keepdims=True)
        cur = jnp.where(row_ids == first, -1e30, cur)
    return acc * (1.0 / k)


def _mhsa_context(feat, mask, wqkv_h, bqkv_h, wo_h, *, heads, dim_head):
    """Multi-head self-attention context already projected by (BN-folded)
    conv_out (bias added by caller after any reverse projection).

    feat: (C, N), mask: (N, N), wqkv_h: (H, 3*dh, C), bqkv_h: (H, 3*dh, 1),
    wo_h: (H, C, dh).  Returns (C, N)."""
    n = feat.shape[1]
    c = heads * dim_head
    featb = jnp.broadcast_to(feat[None, :, :], (heads, c, n))               # (H,C,N)
    qkv = jnp.einsum('hdc,hcn->hdn', wqkv_h, featb,
                     preferred_element_type=F32) + bqkv_h                   # (H,3dh,N)
    q3 = qkv[:, 0:dim_head, :]                  # attention scale folded in Wq
    k3 = qkv[:, dim_head:2 * dim_head, :]
    v3 = qkv[:, 2 * dim_head:3 * dim_head, :]
    qT = jnp.swapaxes(q3, 1, 2)                                             # (H,N,dh)
    sim = jnp.einsum('hnd,hdm->hnm', qT, k3, preferred_element_type=F32)    # (H,N,N)
    attn = _masked_softmax(sim, (mask == 0.0)[None, :, :])
    ctx = jnp.einsum('hnm,hdm->hnd', attn, v3, preferred_element_type=F32)  # (H,N,dh)
    out = jnp.einsum('hcd,hnd->hcn', wo_h, ctx, preferred_element_type=F32) # (H,C,N)
    return jnp.sum(out, axis=0)                                             # (C,N)


# ----------------------------- fused kernel ----------------------------------
def _asmloc_kernel(xpad_ref, intra_ref, proj_ref, inter_ref,
                   wtap_ref, cbias_ref,
                   wqkv_i_ref, bqkv_i_ref, wo_i_ref,
                   wqkv_e_ref, bqkv_e_ref, wo_e_ref,
                   wh_ref, bh_ref,
                   out_ref,
                   *, heads, dim_head, temp_len, cls, fg_topk, bg_topk, pack):
    T = temp_len

    cb = cbias_ref[...]                                   # (C, 3)
    embed_b = cb[:, 0:1]
    bo_intra = cb[:, 1:2]
    bo_inter = cb[:, 2:3]

    # ---- feature embedding: Conv1d(k=3, pad=1) + ReLU (3 shifted matmuls) ----
    xpad = xpad_ref[0]                                    # (C, T+2)
    y = (jnp.dot(wtap_ref[0], xpad[:, 0:T], preferred_element_type=F32)
         + jnp.dot(wtap_ref[1], xpad[:, 1:T + 1], preferred_element_type=F32)
         + jnp.dot(wtap_ref[2], xpad[:, 2:T + 2], preferred_element_type=F32)
         + embed_b)
    feat = jnp.maximum(y, 0.0)                            # (C, T)

    # ---- MHSA_Intra + conv_out / BatchNorm(eval, folded) residual ----
    ctx = _mhsa_context(feat, intra_ref[0], wqkv_i_ref[...], bqkv_i_ref[...],
                        wo_i_ref[...], heads=heads, dim_head=dim_head)
    feat = feat + ctx + bo_intra

    # ---- MHSA_Inter + conv_out / BatchNorm(eval, folded) residual ----
    pm = proj_ref[0]                                      # (T, K)
    col = jnp.maximum(jnp.sum(pm, axis=0, keepdims=True), 1e-5)    # (1, K)
    seg = jnp.dot(feat, pm / col, preferred_element_type=F32)      # (C, K)
    ctx_seg = _mhsa_context(seg, inter_ref[0], wqkv_e_ref[...], bqkv_e_ref[...],
                            wo_e_ref[...], heads=heads, dim_head=dim_head)
    row = jnp.maximum(jnp.sum(pm, axis=1, keepdims=True), 1e-5)    # (T, 1)
    ctx_t = jnp.dot(ctx_seg, (pm / row).T, preferred_element_type=F32)  # (C, T)
    feat = feat + ctx_t + bo_inter

    # ---- heads: att(2) | uncertainty(1) | snippet_cls(cls) in one matmul ----
    ho = jnp.dot(wh_ref[...], feat, preferred_element_type=F32) + bh_ref[...]
    hoT = ho.T                                            # (T, 3+cls)
    temp_att = _softmax_lastdim(hoT[:, 0:2])              # (T, 2)
    unc = hoT[:, 2:3]                                     # (T, 1)
    cas = hoT[:, 3:3 + cls]                               # (T, cls)
    fg_cas = cas * temp_att[:, 0:1]
    bg_cas = cas * temp_att[:, 1:2]

    # video-level scores from raw fg/bg cas (top-k mean + softmax), in-kernel
    fg_cls = _softmax_lastdim(_topk_mean_axis0(fg_cas, fg_topk))   # (1, cls)
    bg_cls = _softmax_lastdim(_topk_mean_axis0(bg_cas, bg_topk))   # (1, cls)

    # ---- pack everything into one lane-dense (T, pack) slab ----
    used = 3 + 5 * cls
    packed = jnp.concatenate(
        [temp_att,
         _softmax_lastdim(cas),
         _softmax_lastdim(fg_cas),
         _softmax_lastdim(bg_cas),
         unc,
         jnp.broadcast_to(fg_cls, (T, cls)),
         jnp.broadcast_to(bg_cls, (T, cls)),
         jnp.zeros((T, pack - used), F32)],
        axis=1)
    out_ref[0] = packed


# ----------------------------- plain-JAX glue ---------------------------------
def build_masks(proposal_bbox, counts, T):
    """Vectorized equivalent of the python mask-construction loops."""
    K = proposal_bbox.shape[1]
    t_idx = jnp.arange(T)
    starts = proposal_bbox[..., 0]
    ends = proposal_bbox[..., 1]
    valid = jnp.arange(K)[None, :] < counts[:, None]                  # (B, K)
    in_prop = ((t_idx[None, :, None] >= starts[:, None, :]) &
               (t_idx[None, :, None] <= ends[:, None, :]) &
               valid[:, None, :])                                     # (B, T, K)
    proj_mask = in_prop.astype(F32)
    intra = jnp.any(in_prop[:, :, None, :] & in_prop[:, None, :, :],
                    axis=-1).astype(F32)                              # (B, T, T)
    inter = (valid[:, :, None] & valid[:, None, :]).astype(F32)       # (B, K, K)
    return intra, inter, proj_mask


def _prep_mhsa_weights(p, heads, dim_head):
    """Trace-time folding: attention scale into Wq, eval-mode BatchNorm into
    conv_out; weights laid out per-head for the batched in-kernel einsums."""
    C = heads * dim_head
    scale = dim_head ** -0.5
    wqkv = jnp.concatenate([p['wq'] * scale, p['wk'], p['wv']], axis=0)   # (3C, C)
    bqkv = jnp.concatenate([p['bq'] * scale, p['bk'], p['bv']], axis=0)   # (3C, 1)
    wqkv_h = (wqkv.reshape(3, heads, dim_head, C)
              .transpose(1, 0, 2, 3).reshape(heads, 3 * dim_head, C))
    bqkv_h = (bqkv.reshape(3, heads, dim_head, 1)
              .transpose(1, 0, 2, 3).reshape(heads, 3 * dim_head, 1))
    # eval-mode BatchNorm folded into conv_out (gamma=beta=0 at module init).
    sc = p['bn_gamma'] / jnp.sqrt(p['bn_var'] + BN_EPS)                   # (C,)
    wo_h = (p['wo'] * sc[:, None]).reshape(C, heads, dim_head).transpose(1, 0, 2)
    bo = (sc * (p['bo'] - p['bn_mean']) + p['bn_beta']).reshape(C, 1)
    return wqkv_h, bqkv_h, wo_h, bo


def asmloc_forward(params, input_feature, proposal_bbox, proposal_count):
    """input_feature: (B, T, C); proposal_bbox: (B, K, 2) int; counts: (B,)."""
    B, T, C = input_feature.shape
    CLS = params['cls_w'].shape[0]
    H = HEADS
    dh = C // H
    K = proposal_bbox.shape[1]
    fg_topk = max(T // FG_TOPK_SEG, 1)
    bg_topk = max(T // BG_TOPK_SEG, 1)
    assert 3 + 5 * CLS <= PACK

    x = jnp.transpose(input_feature, (0, 2, 1))              # (B, C, T)
    xpad = jnp.pad(x, ((0, 0), (0, 0), (1, 1)))              # (B, C, T+2)
    intra_mask, inter_mask, proj_mask = build_masks(proposal_bbox,
                                                    proposal_count, T)

    # trace-time weight preparation (tiny)
    w_taps = jnp.transpose(params['embed_w'], (2, 0, 1))     # (3, C_out, C_in)
    wqkv_i, bqkv_i, wo_i, bo_i = _prep_mhsa_weights(params['intra'], H, dh)
    wqkv_e, bqkv_e, wo_e, bo_e = _prep_mhsa_weights(params['inter'], H, dh)
    cbias = jnp.concatenate([params['embed_b'].reshape(C, 1), bo_i, bo_e],
                            axis=1)                          # (C, 3)
    w_head = jnp.concatenate([params['att_w'], params['unc_w'],
                              params['cls_w']], axis=0)      # (3+CLS, C)
    b_head = jnp.concatenate([params['att_b'], jnp.zeros((1, 1), F32),
                              params['cls_b'].reshape(CLS, 1)],
                             axis=0)                         # (3+CLS, 1)

    kernel = functools.partial(
        _asmloc_kernel, heads=H, dim_head=dh, temp_len=T, cls=CLS,
        fg_topk=fg_topk, bg_topk=bg_topk, pack=PACK)

    packed = pl.pallas_call(
        kernel,
        out_shape=jax.ShapeDtypeStruct((B, T, PACK), F32),
        grid=(B,),
        in_specs=[
            pl.BlockSpec((1, C, T + 2), lambda i: (i, 0, 0)),
            pl.BlockSpec((1, T, T), lambda i: (i, 0, 0)),
            pl.BlockSpec((1, T, K), lambda i: (i, 0, 0)),
            pl.BlockSpec((1, K, K), lambda i: (i, 0, 0)),
            pl.BlockSpec((3, C, C), lambda i: (0, 0, 0)),
            pl.BlockSpec((C, 3), lambda i: (0, 0)),
            pl.BlockSpec((H, 3 * dh, C), lambda i: (0, 0, 0)),
            pl.BlockSpec((H, 3 * dh, 1), lambda i: (0, 0, 0)),
            pl.BlockSpec((H, C, dh), lambda i: (0, 0, 0)),
            pl.BlockSpec((H, 3 * dh, C), lambda i: (0, 0, 0)),
            pl.BlockSpec((H, 3 * dh, 1), lambda i: (0, 0, 0)),
            pl.BlockSpec((H, C, dh), lambda i: (0, 0, 0)),
            pl.BlockSpec((3 + CLS, C), lambda i: (0, 0)),
            pl.BlockSpec((3 + CLS, 1), lambda i: (0, 0)),
        ],
        out_specs=pl.BlockSpec((1, T, PACK), lambda i: (i, 0, 0)),
        compiler_params=pltpu.CompilerParams(dimension_semantics=("parallel",)),
    )(xpad, intra_mask, proj_mask, inter_mask, w_taps, cbias,
      wqkv_i, bqkv_i, wo_i, wqkv_e, bqkv_e, wo_e, w_head, b_head)

    # slice the lane-dense packed slab apart (tiny, trace-time offsets)
    o_cas = 2
    o_fg = 2 + CLS
    o_bg = 2 + 2 * CLS
    o_unc = 2 + 3 * CLS
    o_fgc = 3 + 3 * CLS
    o_bgc = 3 + 4 * CLS
    temp_att = packed[:, :, 0:2]
    cas_sm = packed[:, :, o_cas:o_cas + CLS]
    fg_cas_sm = packed[:, :, o_fg:o_fg + CLS]
    bg_cas_sm = packed[:, :, o_bg:o_bg + CLS]
    uncertainty = packed[:, :, o_unc:o_unc + 1]
    fg_cls = packed[:, 0, o_fgc:o_fgc + CLS]
    bg_cls = packed[:, 0, o_bgc:o_bgc + CLS]
    return fg_cls, bg_cls, temp_att, cas_sm, fg_cas_sm, bg_cas_sm, uncertainty


# ----------------------------- parameter init ---------------------------------
def init_params(key, C, cls):
    ks = jax.random.split(key, 10)

    def nrm(k, shape, s=0.05):
        return jax.random.normal(k, shape, F32) * s

    def mhsa_params(k):
        kk = jax.random.split(k, 8)
        return {'wq': nrm(kk[0], (C, C)), 'bq': nrm(kk[1], (C, 1)),
                'wk': nrm(kk[2], (C, C)), 'bk': nrm(kk[3], (C, 1)),
                'wv': nrm(kk[4], (C, C)), 'bv': nrm(kk[5], (C, 1)),
                'wo': nrm(kk[6], (C, C)), 'bo': nrm(kk[7], (C,)),
                # BatchNorm1d parameters (module __init__ zeroes weight/bias).
                'bn_gamma': jnp.zeros((C,), F32), 'bn_beta': jnp.zeros((C,), F32),
                'bn_mean': jnp.zeros((C,), F32), 'bn_var': jnp.ones((C,), F32)}

    return {
        'embed_w': nrm(ks[0], (C, C, 3)),
        'embed_b': nrm(ks[1], (C,)),
        'intra': mhsa_params(ks[2]),
        'inter': mhsa_params(ks[3]),
        'att_w': nrm(ks[4], (2, C)),
        'att_b': nrm(ks[5], (2, 1)),
        'cls_w': nrm(ks[6], (cls, C)),
        'cls_b': nrm(ks[7], (1, cls)),
        'unc_w': nrm(ks[8], (1, C), 1e-4),   # uncertainty_branch init N(0, 1e-4)
    }


# ----------------------------- main --------------------------------------------
if __name__ == "__main__":
    B, T, C = 2, 16, FEATURE_DIM
    K = MAX_SEGMENTS

    key = jax.random.PRNGKey(0)
    k_param, k_feat = jax.random.split(key)

    params = init_params(k_param, C, NUM_CLS)
    input_feature = jax.random.normal(k_feat, (B, T, C), F32)

    proposal_bbox = jnp.array(
        [[[1, 4], [6, 9], [11, 14], [0, 0], [0, 0], [0, 0], [0, 0], [0, 0]],
         [[0, 7], [9, 15], [0, 0], [0, 0], [0, 0], [0, 0], [0, 0], [0, 0]]],
        dtype=jnp.int32)                                    # (B, K, 2)
    proposal_count = jnp.array([3, 2], dtype=jnp.int32)     # (B,)

    fwd = jax.jit(asmloc_forward)
    outs = fwd(params, input_feature, proposal_bbox, proposal_count)
    jax.block_until_ready(outs)

    fg_cls, bg_cls, temp_att, cas, fg_cas, bg_cas, uncertainty = outs
    assert fg_cls.shape == (B, NUM_CLS)
    assert bg_cls.shape == (B, NUM_CLS)
    assert temp_att.shape == (B, T, 2)
    assert cas.shape == (B, T, NUM_CLS)
    assert fg_cas.shape == (B, T, NUM_CLS)
    assert bg_cas.shape == (B, T, NUM_CLS)
    assert uncertainty.shape == (B, T, 1)
    # sanity: softmax outputs sum to 1
    assert jnp.allclose(jnp.sum(temp_att, axis=-1), 1.0, atol=1e-4)
    assert jnp.allclose(jnp.sum(cas, axis=-1), 1.0, atol=1e-4)
    assert jnp.allclose(jnp.sum(fg_cls, axis=-1), 1.0, atol=1e-4)
    assert jnp.allclose(jnp.sum(bg_cls, axis=-1), 1.0, atol=1e-4)

    print("KERNEL_OK")
</pallas_src>

<mosaic_0001>
module attributes {stable_mosaic.version = 11 : i64} {
  func.func @_asmloc_kernel(%arg0: i32, %arg1: memref<1x32x18xf32, #tpu.memory_space<vmem>>, %arg2: memref<1x16x16xf32, #tpu.memory_space<vmem>>, %arg3: memref<1x16x8xf32, #tpu.memory_space<vmem>>, %arg4: memref<1x8x8xf32, #tpu.memory_space<vmem>>, %arg5: memref<3x32x32xf32, #tpu.memory_space<vmem>>, %arg6: memref<32x3xf32, #tpu.memory_space<vmem>>, %arg7: memref<8x12x32xf32, #tpu.memory_space<vmem>>, %arg8: memref<8x12x1xf32, #tpu.memory_space<vmem>>, %arg9: memref<8x32x4xf32, #tpu.memory_space<vmem>>, %arg10: memref<8x12x32xf32, #tpu.memory_space<vmem>>, %arg11: memref<8x12x1xf32, #tpu.memory_space<vmem>>, %arg12: memref<8x32x4xf32, #tpu.memory_space<vmem>>, %arg13: memref<8x32xf32, #tpu.memory_space<vmem>>, %arg14: memref<8x1xf32, #tpu.memory_space<vmem>>, %arg15: memref<1x16x128xf32, #tpu.memory_space<vmem>>) attributes {dimension_semantics = [#tpu.dimension_semantics<parallel>], iteration_bounds = array<i64: 2>, scalar_prefetch = 0 : i64, scratch_operands = 0 : i64, tpu.core_type = #tpu.core_type<tc>, window_params = [{transform_indices = @transform_0, window_bounds = array<i64: 1, 32, 18>}, {transform_indices = @transform_1, window_bounds = array<i64: 1, 16, 16>}, {transform_indices = @transform_2, window_bounds = array<i64: 1, 16, 8>}, {transform_indices = @transform_3, window_bounds = array<i64: 1, 8, 8>}, {pipeline_mode = #tpu.pipeline_mode<synchronous>, transform_indices = @transform_4, window_bounds = array<i64: 3, 32, 32>}, {pipeline_mode = #tpu.pipeline_mode<synchronous>, transform_indices = @transform_5, window_bounds = array<i64: 32, 3>}, {pipeline_mode = #tpu.pipeline_mode<synchronous>, transform_indices = @transform_6, window_bounds = array<i64: 8, 12, 32>}, {pipeline_mode = #tpu.pipeline_mode<synchronous>, transform_indices = @transform_7, window_bounds = array<i64: 8, 12, 1>}, {pipeline_mode = #tpu.pipeline_mode<synchronous>, transform_indices = @transform_8, window_bounds = array<i64: 8, 32, 4>}, {pipeline_mode = #tpu.pipeline_mode<synchronous>, transform_indices = @transform_9, window_bounds = array<i64: 8, 12, 32>}, {pipeline_mode = #tpu.pipeline_mode<synchronous>, transform_indices = @transform_10, window_bounds = array<i64: 8, 12, 1>}, {pipeline_mode = #tpu.pipeline_mode<synchronous>, transform_indices = @transform_11, window_bounds = array<i64: 8, 32, 4>}, {pipeline_mode = #tpu.pipeline_mode<synchronous>, transform_indices = @transform_12, window_bounds = array<i64: 8, 32>}, {pipeline_mode = #tpu.pipeline_mode<synchronous>, transform_indices = @transform_13, window_bounds = array<i64: 8, 1>}, {transform_indices = @transform_14, window_bounds = array<i64: 1, 16, 128>}]} {
    %c0 = arith.constant 0 : index
    %c0_0 = arith.constant 0 : index
    %0 = vector.load %arg6[%c0, %c0_0] : memref<32x3xf32, #tpu.memory_space<vmem>>, vector<32x3xf32>
    %1 = vector.extract_strided_slice %0 {offsets = [0, 0], sizes = [32, 1], strides = [1, 1]} : vector<32x3xf32> to vector<32x1xf32>
    %2 = vector.extract_strided_slice %0 {offsets = [0, 1], sizes = [32, 1], strides = [1, 1]} : vector<32x3xf32> to vector<32x1xf32>
    %3 = vector.extract_strided_slice %0 {offsets = [0, 2], sizes = [32, 1], strides = [1, 1]} : vector<32x3xf32> to vector<32x1xf32>
    %c0_1 = arith.constant 0 : index
    %c0_2 = arith.constant 0 : index
    %c0_3 = arith.constant 0 : index
    %4 = vector.load %arg1[%c0_1, %c0_2, %c0_3] : memref<1x32x18xf32, #tpu.memory_space<vmem>>, vector<1x32x18xf32>
    %5 = vector.shape_cast %4 : vector<1x32x18xf32> to vector<32x18xf32>
    %c0_4 = arith.constant 0 : index
    %c0_5 = arith.constant 0 : index
    %c0_6 = arith.constant 0 : index
    %6 = vector.load %arg5[%c0_4, %c0_5, %c0_6] : memref<3x32x32xf32, #tpu.memory_space<vmem>>, vector<1x32x32xf32>
    %7 = vector.shape_cast %6 : vector<1x32x32xf32> to vector<32x32xf32>
    %8 = vector.extract_strided_slice %5 {offsets = [0, 0], sizes = [32, 16], strides = [1, 1]} : vector<32x18xf32> to vector<32x16xf32>
    %cst = arith.constant dense<0.000000e+00> : vector<32x16xf32>
    %9 = tpu.matmul %7, %8, %cst {dimension_numbers = #tpu.dot_dimension_numbers<[1], [0], [0], [1], [0, 0, 1, 1], [], []>} : vector<32x32xf32>, vector<32x16xf32>, vector<32x16xf32> -> vector<32x16xf32>
    %c1 = arith.constant 1 : index
    %c0_7 = arith.constant 0 : index
    %c0_8 = arith.constant 0 : index
    %10 = vector.load %arg5[%c1, %c0_7, %c0_8] : memref<3x32x32xf32, #tpu.memory_space<vmem>>, vector<1x32x32xf32>
    %11 = vector.shape_cast %10 : vector<1x32x32xf32> to vector<32x32xf32>
    %12 = vector.extract_strided_slice %5 {offsets = [0, 1], sizes = [32, 16], strides = [1, 1]} : vector<32x18xf32> to vector<32x16xf32>
    %cst_9 = arith.constant dense<0.000000e+00> : vector<32x16xf32>
    %13 = tpu.matmul %11, %12, %cst_9 {dimension_numbers = #tpu.dot_dimension_numbers<[1], [0], [0], [1], [0, 0, 1, 1], [], []>} : vector<32x32xf32>, vector<32x16xf32>, vector<32x16xf32> -> vector<32x16xf32>
    %14 = arith.addf %9, %13 : vector<32x16xf32>
    %c2 = arith.constant 2 : index
    %c0_10 = arith.constant 0 : index
    %c0_11 = arith.constant 0 : index
    %15 = vector.load %arg5[%c2, %c0_10, %c0_11] : memref<3x32x32xf32, #tpu.memory_space<vmem>>, vector<1x32x32xf32>
    %16 = vector.shape_cast %15 : vector<1x32x32xf32> to vector<32x32xf32>
    %17 = vector.extract_strided_slice %5 {offsets = [0, 2], sizes = [32, 16], strides = [1, 1]} : vector<32x18xf32> to vector<32x16xf32>
    %cst_12 = arith.constant dense<0.000000e+00> : vector<32x16xf32>
    %18 = tpu.matmul %16, %17, %cst_12 {dimension_numbers = #tpu.dot_dimension_numbers<[1], [0], [0], [1], [0, 0, 1, 1], [], []>} : vector<32x32xf32>, vector<32x16xf32>, vector<32x16xf32> -> vector<32x16xf32>
    %19 = arith.addf %14, %18 : vector<32x16xf32>
    %20 = vector.broadcast %1 : vector<32x1xf32> to vector<32x16xf32>
    %21 = arith.addf %19, %20 : vector<32x16xf32>
    %cst_13 = arith.constant 0.000000e+00 : f32
    %22 = vector.broadcast %cst_13 : f32 to vector<32x16xf32>
    %23 = arith.maximumf %21, %22 : vector<32x16xf32>
    %c0_14 = arith.constant 0 : index
    %c0_15 = arith.constant 0 : index
    %c0_16 = arith.constant 0 : index
    %24 = vector.load %arg2[%c0_14, %c0_15, %c0_16] : memref<1x16x16xf32, #tpu.memory_space<vmem>>, vector<1x16x16xf32>
    %25 = vector.shape_cast %24 : vector<1x16x16xf32> to vector<16x16xf32>
    %c0_17 = arith.constant 0 : index
    %c0_18 = arith.constant 0 : index
    %c0_19 = arith.constant 0 : index
    %26 = vector.load %arg7[%c0_17, %c0_18, %c0_19] : memref<8x12x32xf32, #tpu.memory_space<vmem>>, vector<8x12x32xf32>
    %c0_20 = arith.constant 0 : index
    %c0_21 = arith.constant 0 : index
    %c0_22 = arith.constant 0 : index
    %27 = vector.load %arg8[%c0_20, %c0_21, %c0_22] : memref<8x12x1xf32, #tpu.memory_space<vmem>>, vector<8x12x1xf32>
    %c0_23 = arith.constant 0 : index
    %c0_24 = arith.constant 0 : index
    %c0_25 = arith.constant 0 : index
    %28 = vector.load %arg9[%c0_23, %c0_24, %c0_25] : memref<8x32x4xf32, #tpu.memory_space<vmem>>, vector<8x32x4xf32>
    %29 = vector.shape_cast %23 : vector<32x16xf32> to vector<1x32x16xf32>
    %30 = vector.shape_cast %29 : vector<1x32x16xf32> to vector<1x32x16xf32>
    %31 = vector.broadcast %30 : vector<1x32x16xf32> to vector<8x32x16xf32>
    "tpu.trace_start"() <{level = 10 : i32, message = "hdc,hcn->hdn"}> : () -> ()
    %cst_26 = arith.constant dense<0.000000e+00> : vector<8x12x16xf32>
    %32 = tpu.matmul %26, %31, %cst_26 {dimension_numbers = #tpu.dot_dimension_numbers<[2], [1], [1], [2], [0, 0, 0, 1, 1, 2], [0], [0]>} : vector<8x12x32xf32>, vector<8x32x16xf32>, vector<8x12x16xf32> -> vector<8x12x16xf32>
    "tpu.trace_stop"() : () -> ()
    %33 = vector.broadcast %27 : vector<8x12x1xf32> to vector<8x12x16xf32>
    %34 = arith.addf %32, %33 : vector<8x12x16xf32>
    %35 = vector.extract_strided_slice %34 {offsets = [0, 0, 0], sizes = [8, 4, 16], strides = [1, 1, 1]} : vector<8x12x16xf32> to vector<8x4x16xf32>
    %36 = vector.extract_strided_slice %34 {offsets = [0, 4, 0], sizes = [8, 4, 16], strides = [1, 1, 1]} : vector<8x12x16xf32> to vector<8x4x16xf32>
    %37 = vector.extract_strided_slice %34 {offsets = [0, 8, 0], sizes = [8, 4, 16], strides = [1, 1, 1]} : vector<8x12x16xf32> to vector<8x4x16xf32>
    %38 = tpu.transpose %35, [0, 2, 1] : vector<8x4x16xf32> -> vector<8x16x4xf32>
    "tpu.trace_start"() <{level = 10 : i32, message = "hnd,hdm->hnm"}> : () -> ()
    %cst_27 = arith.constant dense<0.000000e+00> : vector<8x16x16xf32>
    %39 = tpu.matmul %38, %36, %cst_27 {dimension_numbers = #tpu.dot_dimension_numbers<[2], [1], [1], [2], [0, 0, 0, 1, 1, 2], [0], [0]>} : vector<8x16x4xf32>, vector<8x4x16xf32>, vector<8x16x16xf32> -> vector<8x16x16xf32>
    %cst_28 = arith.constant 0.000000e+00 : f32
    "tpu.trace_stop"() : () -> ()
    %40 = vector.broadcast %cst_28 : f32 to vector<16x16xf32>
    %41 = arith.cmpf oeq, %25, %40 : vector<16x16xf32>
    %42 = vector.shape_cast %41 : vector<16x16xi1> to vector<1x16x16xi1>
    %cst_29 = arith.constant -1.000000e+30 : f32
    %43 = vector.shape_cast %42 : vector<1x16x16xi1> to vector<1x16x16xi1>
    %44 = vector.broadcast %43 : vector<1x16x16xi1> to vector<8x16x16xi1>
    %45 = vector.broadcast %cst_29 : f32 to vector<8x16x16xf32>
    %46 = arith.select %44, %45, %39 : vector<8x16x16xi1>, vector<8x16x16xf32>
    %cst_30 = arith.constant dense<0xFF800000> : vector<8x16xf32>
    %47 = vector.multi_reduction <maximumf>, %46, %cst_30 [2] : vector<8x16x16xf32> to vector<8x16xf32>
    %48 = vector.shape_cast %47 : vector<8x16xf32> to vector<8x16x1xf32>
    %49 = vector.broadcast %48 : vector<8x16x1xf32> to vector<8x16x16xf32>
    %50 = arith.subf %46, %49 : vector<8x16x16xf32>
    %51 = math.exp %50 : vector<8x16x16xf32>
    %cst_31 = arith.constant 0.000000e+00 : f32
    %52 = vector.shape_cast %42 : vector<1x16x16xi1> to vector<1x16x16xi1>
    %53 = vector.broadcast %52 : vector<1x16x16xi1> to vector<8x16x16xi1>
    %54 = vector.broadcast %cst_31 : f32 to vector<8x16x16xf32>
    %55 = arith.select %53, %54, %51 : vector<8x16x16xi1>, vector<8x16x16xf32>
    %cst_32 = arith.constant dense<0.000000e+00> : vector<8x16xf32>
    %56 = vector.multi_reduction <add>, %55, %cst_32 [2] : vector<8x16x16xf32> to vector<8x16xf32>
    %57 = vector.shape_cast %56 : vector<8x16xf32> to vector<8x16x1xf32>
    %cst_33 = arith.constant 1.000000e-30 : f32
    %58 = vector.broadcast %cst_33 : f32 to vector<8x16x1xf32>
    %59 = arith.maximumf %57, %58 : vector<8x16x1xf32>
    %60 = tpu.reciprocal %59 {approx = true} : vector<8x16x1xf32> -> vector<8x16x1xf32>
    %61 = vector.broadcast %60 : vector<8x16x1xf32> to vector<8x16x16xf32>
    %62 = arith.mulf %55, %61 : vector<8x16x16xf32>
    "tpu.trace_start"() <{level = 10 : i32, message = "hnm,hdm->hnd"}> : () -> ()
    %cst_34 = arith.constant dense<0.000000e+00> : vector<8x16x4xf32>
    %63 = tpu.matmul %62, %37, %cst_34 {dimension_numbers = #tpu.dot_dimension_numbers<[2], [2], [1], [1], [0, 0, 0, 1, 1, 1], [0], [0]>} : vector<8x16x16xf32>, vector<8x4x16xf32>, vector<8x16x4xf32> -> vector<8x16x4xf32>
    "tpu.trace_stop"() : () -> ()
    "tpu.trace_start"() <{level = 10 : i32, message = "hcd,hnd->hcn"}> : () -> ()
    %cst_35 = arith.constant dense<0.000000e+00> : vector<8x32x16xf32>
    %64 = tpu.matmul %28, %63, %cst_35 {dimension_numbers = #tpu.dot_dimension_numbers<[2], [2], [1], [1], [0, 0, 0, 1, 1, 1], [0], [0]>} : vector<8x32x4xf32>, vector<8x16x4xf32>, vector<8x32x16xf32> -> vector<8x32x16xf32>
    "tpu.trace_stop"() : () -> ()
    %cst_36 = arith.constant dense<0.000000e+00> : vector<32x16xf32>
    %65 = vector.multi_reduction <add>, %64, %cst_36 [0] : vector<8x32x16xf32> to vector<32x16xf32>
    %66 = arith.addf %23, %65 : vector<32x16xf32>
    %67 = vector.broadcast %2 : vector<32x1xf32> to vector<32x16xf32>
    %68 = arith.addf %66, %67 : vector<32x16xf32>
    %c0_37 = arith.constant 0 : index
    %c0_38 = arith.constant 0 : index
    %c0_39 = arith.constant 0 : index
    %69 = vector.load %arg3[%c0_37, %c0_38, %c0_39] : memref<1x16x8xf32, #tpu.memory_space<vmem>>, vector<1x16x8xf32>
    %70 = vector.shape_cast %69 : vector<1x16x8xf32> to vector<16x8xf32>
    %cst_40 = arith.constant dense<0.000000e+00> : vector<8xf32>
    %71 = vector.multi_reduction <add>, %70, %cst_40 [0] : vector<16x8xf32> to vector<8xf32>
    %72 = vector.shape_cast %71 : vector<8xf32> to vector<1x8xf32>
    %cst_41 = arith.constant 9.99999974E-6 : f32
    %73 = vector.broadcast %cst_41 : f32 to vector<1x8xf32>
    %74 = arith.maximumf %72, %73 : vector<1x8xf32>
    %75 = vector.broadcast %74 : vector<1x8xf32> to vector<16x8xf32>
    %76 = arith.divf %70, %75 : vector<16x8xf32>
    %cst_42 = arith.constant dense<0.000000e+00> : vector<32x8xf32>
    %77 = tpu.matmul %68, %76, %cst_42 {dimension_numbers = #tpu.dot_dimension_numbers<[1], [0], [0], [1], [0, 0, 1, 1], [], []>} : vector<32x16xf32>, vector<16x8xf32>, vector<32x8xf32> -> vector<32x8xf32>
    %c0_43 = arith.constant 0 : index
    %c0_44 = arith.constant 0 : index
    %c0_45 = arith.constant 0 : index
    %78 = vector.load %arg4[%c0_43, %c0_44, %c0_45] : memref<1x8x8xf32, #tpu.memory_space<vmem>>, vector<1x8x8xf32>
    %79 = vector.shape_cast %78 : vector<1x8x8xf32> to vector<8x8xf32>
    %c0_46 = arith.constant 0 : index
    %c0_47 = arith.constant 0 : index
    %c0_48 = arith.constant 0 : index
    %80 = vector.load %arg10[%c0_46, %c0_47, %c0_48] : memref<8x12x32xf32, #tpu.memory_space<vmem>>, vector<8x12x32xf32>
    %c0_49 = arith.constant 0 : index
    %c0_50 = arith.constant 0 : index
    %c0_51 = arith.constant 0 : index
    %81 = vector.load %arg11[%c0_49, %c0_50, %c0_51] : memref<8x12x1xf32, #tpu.memory_space<vmem>>, vector<8x12x1xf32>
    %c0_52 = arith.constant 0 : index
    %c0_53 = arith.constant 0 : index
    %c0_54 = arith.constant 0 : index
    %82 = vector.load %arg12[%c0_52, %c0_53, %c0_54] : memref<8x32x4xf32, #tpu.memory_space<vmem>>, vector<8x32x4xf32>
    %83 = vector.shape_cast %77 : vector<32x8xf32> to vector<1x32x8xf32>
    %84 = vector.shape_cast %83 : vector<1x32x8xf32> to vector<1x32x8xf32>
    %85 = vector.broadcast %84 : vector<1x32x8xf32> to vector<8x32x8xf32>
    "tpu.trace_start"() <{level = 10 : i32, message = "hdc,hcn->hdn"}> : () -> ()
    %cst_55 = arith.constant dense<0.000000e+00> : vector<8x12x8xf32>
    %86 = tpu.matmul %80, %85, %cst_55 {dimension_numbers = #tpu.dot_dimension_numbers<[2], [1], [1], [2], [0, 0, 0, 1, 1, 2], [0], [0]>} : vector<8x12x32xf32>, vector<8x32x8xf32>, vector<8x12x8xf32> -> vector<8x12x8xf32>
    "tpu.trace_stop"() : () -> ()
    %87 = vector.broadcast %81 : vector<8x12x1xf32> to vector<8x12x8xf32>
    %88 = arith.addf %86, %87 : vector<8x12x8xf32>
    %89 = vector.extract_strided_slice %88 {offsets = [0, 0, 0], sizes = [8, 4, 8], strides = [1, 1, 1]} : vector<8x12x8xf32> to vector<8x4x8xf32>
    %90 = vector.extract_strided_slice %88 {offsets = [0, 4, 0], sizes = [8, 4, 8], strides = [1, 1, 1]} : vector<8x12x8xf32> to vector<8x4x8xf32>
    %91 = vector.extract_strided_slice %88 {offsets = [0, 8, 0], sizes = [8, 4, 8], strides = [1, 1, 1]} : vector<8x12x8xf32> to vector<8x4x8xf32>
    %92 = tpu.transpose %89, [0, 2, 1] : vector<8x4x8xf32> -> vector<8x8x4xf32>
    "tpu.trace_start"() <{level = 10 : i32, message = "hnd,hdm->hnm"}> : () -> ()
    %cst_56 = arith.constant dense<0.000000e+00> : vector<8x8x8xf32>
    %93 = tpu.matmul %92, %90, %cst_56 {dimension_numbers = #tpu.dot_dimension_numbers<[2], [1], [1], [2], [0, 0, 0, 1, 1, 2], [0], [0]>} : vector<8x8x4xf32>, vector<8x4x8xf32>, vector<8x8x8xf32> -> vector<8x8x8xf32>
    %cst_57 = arith.constant 0.000000e+00 : f32
    "tpu.trace_stop"() : () -> ()
    %94 = vector.broadcast %cst_57 : f32 to vector<8x8xf32>
    %95 = arith.cmpf oeq, %79, %94 : vector<8x8xf32>
    %96 = vector.shape_cast %95 : vector<8x8xi1> to vector<1x8x8xi1>
    %cst_58 = arith.constant -1.000000e+30 : f32
    %97 = vector.shape_cast %96 : vector<1x8x8xi1> to vector<1x8x8xi1>
    %98 = vector.broadcast %97 : vector<1x8x8xi1> to vector<8x8x8xi1>
    %99 = vector.broadcast %cst_58 : f32 to vector<8x8x8xf32>
    %100 = arith.select %98, %99, %93 : vector<8x8x8xi1>, vector<8x8x8xf32>
    %cst_59 = arith.constant dense<0xFF800000> : vector<8x8xf32>
    %101 = vector.multi_reduction <maximumf>, %100, %cst_59 [2] : vector<8x8x8xf32> to vector<8x8xf32>
    %102 = vector.shape_cast %101 : vector<8x8xf32> to vector<8x8x1xf32>
    %103 = vector.broadcast %102 : vector<8x8x1xf32> to vector<8x8x8xf32>
    %104 = arith.subf %100, %103 : vector<8x8x8xf32>
    %105 = math.exp %104 : vector<8x8x8xf32>
    %cst_60 = arith.constant 0.000000e+00 : f32
    %106 = vector.shape_cast %96 : vector<1x8x8xi1> to vector<1x8x8xi1>
    %107 = vector.broadcast %106 : vector<1x8x8xi1> to vector<8x8x8xi1>
    %108 = vector.broadcast %cst_60 : f32 to vector<8x8x8xf32>
    %109 = arith.select %107, %108, %105 : vector<8x8x8xi1>, vector<8x8x8xf32>
    %cst_61 = arith.constant dense<0.000000e+00> : vector<8x8xf32>
    %110 = vector.multi_reduction <add>, %109, %cst_61 [2] : vector<8x8x8xf32> to vector<8x8xf32>
    %111 = vector.shape_cast %110 : vector<8x8xf32> to vector<8x8x1xf32>
    %cst_62 = arith.constant 1.000000e-30 : f32
    %112 = vector.broadcast %cst_62 : f32 to vector<8x8x1xf32>
    %113 = arith.maximumf %111, %112 : vector<8x8x1xf32>
    %114 = tpu.reciprocal %113 {approx = true} : vector<8x8x1xf32> -> vector<8x8x1xf32>
    %115 = vector.broadcast %114 : vector<8x8x1xf32> to vector<8x8x8xf32>
    %116 = arith.mulf %109, %115 : vector<8x8x8xf32>
    "tpu.trace_start"() <{level = 10 : i32, message = "hnm,hdm->hnd"}> : () -> ()
    %cst_63 = arith.constant dense<0.000000e+00> : vector<8x8x4xf32>
    %117 = tpu.matmul %116, %91, %cst_63 {dimension_numbers = #tpu.dot_dimension_numbers<[2], [2], [1], [1], [0, 0, 0, 1, 1, 1], [0], [0]>} : vector<8x8x8xf32>, vector<8x4x8xf32>, vector<8x8x4xf32> -> vector<8x8x4xf32>
    "tpu.trace_stop"() : () -> ()
    "tpu.trace_start"() <{level = 10 : i32, message = "hcd,hnd->hcn"}> : () -> ()
    %cst_64 = arith.constant dense<0.000000e+00> : vector<8x32x8xf32>
    %118 = tpu.matmul %82, %117, %cst_64 {dimension_numbers = #tpu.dot_dimension_numbers<[2], [2], [1], [1], [0, 0, 0, 1, 1, 1], [0], [0]>} : vector<8x32x4xf32>, vector<8x8x4xf32>, vector<8x32x8xf32> -> vector<8x32x8xf32>
    "tpu.trace_stop"() : () -> ()
    %cst_65 = arith.constant dense<0.000000e+00> : vector<32x8xf32>
    %119 = vector.multi_reduction <add>, %118, %cst_65 [0] : vector<8x32x8xf32> to vector<32x8xf32>
    %cst_66 = arith.constant dense<0.000000e+00> : vector<16xf32>
    %120 = vector.multi_reduction <add>, %70, %cst_66 [1] : vector<16x8xf32> to vector<16xf32>
    %121 = vector.shape_cast %120 : vector<16xf32> to vector<16x1xf32>
    %cst_67 = arith.constant 9.99999974E-6 : f32
    %122 = vector.broadcast %cst_67 : f32 to vector<16x1xf32>
    %123 = arith.maximumf %121, %122 : vector<16x1xf32>
    %124 = vector.broadcast %123 : vector<16x1xf32> to vector<16x8xf32>
    %125 = arith.divf %70, %124 : vector<16x8xf32>
    %126 = tpu.transpose %125, [1, 0] : vector<16x8xf32> -> vector<8x16xf32>
    %cst_68 = arith.constant dense<0.000000e+00> : vector<32x16xf32>
    %127 = tpu.matmul %119, %126, %cst_68 {dimension_numbers = #tpu.dot_dimension_numbers<[1], [0], [0], [1], [0, 0, 1, 1], [], []>} : vector<32x8xf32>, vector<8x16xf32>, vector<32x16xf32> -> vector<32x16xf32>
    %128 = arith.addf %68, %127 : vector<32x16xf32>
    %129 = vector.broadcast %3 : vector<32x1xf32> to vector<32x16xf32>
    %130 = arith.addf %128, %129 : vector<32x16xf32>
    %c0_69 = arith.constant 0 : index
    %c0_70 = arith.constant 0 : index
    %131 = vector.load %arg13[%c0_69, %c0_70] : memref<8x32xf32, #tpu.memory_space<vmem>>, vector<8x32xf32>
    %cst_71 = arith.constant dense<0.000000e+00> : vector<8x16xf32>
    %132 = tpu.matmul %131, %130, %cst_71 {dimension_numbers = #tpu.dot_dimension_numbers<[1], [0], [0], [1], [0, 0, 1, 1], [], []>} : vector<8x32xf32>, vector<32x16xf32>, vector<8x16xf32> -> vector<8x16xf32>
    %c0_72 = arith.constant 0 : index
    %c0_73 = arith.constant 0 : index
    %133 = vector.load %arg14[%c0_72, %c0_73] : memref<8x1xf32, #tpu.memory_space<vmem>>, vector<8x1xf32>
    %134 = vector.broadcast %133 : vector<8x1xf32> to vector<8x16xf32>
    %135 = arith.addf %132, %134 : vector<8x16xf32>
    %136 = tpu.transpose %135, [1, 0] : vector<8x16xf32> -> vector<16x8xf32>
    %137 = vector.extract_strided_slice %136 {offsets = [0, 0], sizes = [16, 2], strides = [1, 1]} : vector<16x8xf32> to vector<16x2xf32>
    %cst_74 = arith.constant dense<0xFF800000> : vector<16xf32>
    %138 = vector.multi_reduction <maximumf>, %137, %cst_74 [1] : vector<16x2xf32> to vector<16xf32>
    %139 = vector.shape_cast %138 : vector<16xf32> to vector<16x1xf32>
    %140 = vector.broadcast %139 : vector<16x1xf32> to vector<16x2xf32>
    %141 = arith.subf %137, %140 : vector<16x2xf32>
    %142 = math.exp %141 : vector<16x2xf32>
    %cst_75 = arith.constant dense<0.000000e+00> : vector<16xf32>
    %143 = vector.multi_reduction <add>, %142, %cst_75 [1] : vector<16x2xf32> to vector<16xf32>
    %144 = vector.shape_cast %143 : vector<16xf32> to vector<16x1xf32>
    %145 = vector.broadcast %144 : vector<16x1xf32> to vector<16x2xf32>
    %146 = arith.divf %142, %145 : vector<16x2xf32>
    %147 = vector.extract_strided_slice %136 {offsets = [0, 2], sizes = [16, 1], strides = [1, 1]} : vector<16x8xf32> to vector<16x1xf32>
    %148 = vector.extract_strided_slice %136 {offsets = [0, 3], sizes = [16, 5], strides = [1, 1]} : vector<16x8xf32> to vector<16x5xf32>
    %149 = vector.extract_strided_slice %146 {offsets = [0, 0], sizes = [16, 1], strides = [1, 1]} : vector<16x2xf32> to vector<16x1xf32>
    %150 = vector.broadcast %149 : vector<16x1xf32> to vector<16x5xf32>
    %151 = arith.mulf %148, %150 : vector<16x5xf32>
    %152 = vector.extract_strided_slice %146 {offsets = [0, 1], sizes = [16, 1], strides = [1, 1]} : vector<16x2xf32> to vector<16x1xf32>
    %153 = vector.broadcast %152 : vector<16x1xf32> to vector<16x5xf32>
    %154 = arith.mulf %148, %153 : vector<16x5xf32>
    %155 = tpu.iota {dimensions = array<i32: 0>} : vector<16x5xi32>
    %156 = arith.sitofp %155 : vector<16x5xi32> to vector<16x5xf32>
    %cst_76 = arith.constant 0.000000e+00 : f32
    %157 = vector.broadcast %cst_76 : f32 to vector<1x5xf32>
    %cst_77 = arith.constant dense<0xFF800000> : vector<5xf32>
    %158 = vector.multi_reduction <maximumf>, %151, %cst_77 [0] : vector<16x5xf32> to vector<5xf32>
    %159 = vector.shape_cast %158 : vector<5xf32> to vector<1x5xf32>
    %160 = arith.addf %157, %159 : vector<1x5xf32>
    %161 = vector.broadcast %159 : vector<1x5xf32> to vector<16x5xf32>
    %162 = arith.cmpf oeq, %151, %161 : vector<16x5xf32>
    %cst_78 = arith.constant 1.600000e+01 : f32
    %163 = vector.broadcast %cst_78 : f32 to vector<16x5xf32>
    %164 = arith.select %162, %156, %163 : vector<16x5xi1>, vector<16x5xf32>
    %cst_79 = arith.constant dense<0x7F800000> : vector<5xf32>
    %165 = vector.multi_reduction <minimumf>, %164, %cst_79 [0] : vector<16x5xf32> to vector<5xf32>
    %166 = vector.shape_cast %165 : vector<5xf32> to vector<1x5xf32>
    %167 = vector.broadcast %166 : vector<1x5xf32> to vector<16x5xf32>
    %168 = arith.cmpf oeq, %156, %167 : vector<16x5xf32>
    %cst_80 = arith.constant -1.000000e+30 : f32
    %169 = vector.broadcast %cst_80 : f32 to vector<16x5xf32>
    %170 = arith.select %168, %169, %151 : vector<16x5xi1>, vector<16x5xf32>
    %cst_81 = arith.constant dense<0xFF800000> : vector<5xf32>
    %171 = vector.multi_reduction <maximumf>, %170, %cst_81 [0] : vector<16x5xf32> to vector<5xf32>
    %172 = vector.shape_cast %171 : vector<5xf32> to vector<1x5xf32>
    %173 = arith.addf %160, %172 : vector<1x5xf32>
    %cst_82 = arith.constant 5.000000e-01 : f32
    %174 = vector.broadcast %cst_82 : f32 to vector<1x5xf32>
    %175 = arith.mulf %173, %174 : vector<1x5xf32>
    %cst_83 = arith.constant dense<0xFF800000> : vector<1xf32>
    %176 = vector.multi_reduction <maximumf>, %175, %cst_83 [1] : vector<1x5xf32> to vector<1xf32>
    %177 = vector.shape_cast %176 : vector<1xf32> to vector<1x1xf32>
    %178 = vector.broadcast %177 : vector<1x1xf32> to vector<1x5xf32>
    %179 = arith.subf %175, %178 : vector<1x5xf32>
    %180 = math.exp %179 : vector<1x5xf32>
    %cst_84 = arith.constant dense<0.000000e+00> : vector<1xf32>
    %181 = vector.multi_reduction <add>, %180, %cst_84 [1] : vector<1x5xf32> to vector<1xf32>
    %182 = vector.shape_cast %181 : vector<1xf32> to vector<1x1xf32>
    %183 = vector.broadcast %182 : vector<1x1xf32> to vector<1x5xf32>
    %184 = arith.divf %180, %183 : vector<1x5xf32>
    %185 = tpu.iota {dimensions = array<i32: 0>} : vector<16x5xi32>
    %186 = arith.sitofp %185 : vector<16x5xi32> to vector<16x5xf32>
    %cst_85 = arith.constant 0.000000e+00 : f32
    %187 = vector.broadcast %cst_85 : f32 to vector<1x5xf32>
    %cst_86 = arith.constant dense<0xFF800000> : vector<5xf32>
    %188 = vector.multi_reduction <maximumf>, %154, %cst_86 [0] : vector<16x5xf32> to vector<5xf32>
    %189 = vector.shape_cast %188 : vector<5xf32> to vector<1x5xf32>
    %190 = arith.addf %187, %189 : vector<1x5xf32>
    %191 = vector.broadcast %189 : vector<1x5xf32> to vector<16x5xf32>
    %192 = arith.cmpf oeq, %154, %191 : vector<16x5xf32>
    %cst_87 = arith.constant 1.600000e+01 : f32
    %193 = vector.broadcast %cst_87 : f32 to vector<16x5xf32>
    %194 = arith.select %192, %186, %193 : vector<16x5xi1>, vector<16x5xf32>
    %cst_88 = arith.constant dense<0x7F800000> : vector<5xf32>
    %195 = vector.multi_reduction <minimumf>, %194, %cst_88 [0] : vector<16x5xf32> to vector<5xf32>
    %196 = vector.shape_cast %195 : vector<5xf32> to vector<1x5xf32>
    %197 = vector.broadcast %196 : vector<1x5xf32> to vector<16x5xf32>
    %198 = arith.cmpf oeq, %186, %197 : vector<16x5xf32>
    %cst_89 = arith.constant -1.000000e+30 : f32
    %199 = vector.broadcast %cst_89 : f32 to vector<16x5xf32>
    %200 = arith.select %198, %199, %154 : vector<16x5xi1>, vector<16x5xf32>
    %cst_90 = arith.constant dense<0xFF800000> : vector<5xf32>
    %201 = vector.multi_reduction <maximumf>, %200, %cst_90 [0] : vector<16x5xf32> to vector<5xf32>
    %202 = vector.shape_cast %201 : vector<5xf32> to vector<1x5xf32>
    %203 = arith.addf %190, %202 : vector<1x5xf32>
    %204 = vector.broadcast %202 : vector<1x5xf32> to vector<16x5xf32>
    %205 = arith.cmpf oeq, %200, %204 : vector<16x5xf32>
    %cst_91 = arith.constant 1.600000e+01 : f32
    %206 = vector.broadcast %cst_91 : f32 to vector<16x5xf32>
    %207 = arith.select %205, %186, %206 : vector<16x5xi1>, vector<16x5xf32>
    %cst_92 = arith.constant dense<0x7F800000> : vector<5xf32>
    %208 = vector.multi_reduction <minimumf>, %207, %cst_92 [0] : vector<16x5xf32> to vector<5xf32>
    %209 = vector.shape_cast %208 : vector<5xf32> to vector<1x5xf32>
    %210 = vector.broadcast %209 : vector<1x5xf32> to vector<16x5xf32>
    %211 = arith.cmpf oeq, %186, %210 : vector<16x5xf32>
    %cst_93 = arith.constant -1.000000e+30 : f32
    %212 = vector.broadcast %cst_93 : f32 to vector<16x5xf32>
    %213 = arith.select %211, %212, %200 : vector<16x5xi1>, vector<16x5xf32>
    %cst_94 = arith.constant dense<0xFF800000> : vector<5xf32>
    %214 = vector.multi_reduction <maximumf>, %213, %cst_94 [0] : vector<16x5xf32> to vector<5xf32>
    %215 = vector.shape_cast %214 : vector<5xf32> to vector<1x5xf32>
    %216 = arith.addf %203, %215 : vector<1x5xf32>
    %217 = vector.broadcast %215 : vector<1x5xf32> to vector<16x5xf32>
    %218 = arith.cmpf oeq, %213, %217 : vector<16x5xf32>
    %cst_95 = arith.constant 1.600000e+01 : f32
    %219 = vector.broadcast %cst_95 : f32 to vector<16x5xf32>
    %220 = arith.select %218, %186, %219 : vector<16x5xi1>, vector<16x5xf32>
    %cst_96 = arith.constant dense<0x7F800000> : vector<5xf32>
    %221 = vector.multi_reduction <minimumf>, %220, %cst_96 [0] : vector<16x5xf32> to vector<5xf32>
    %222 = vector.shape_cast %221 : vector<5xf32> to vector<1x5xf32>
    %223 = vector.broadcast %222 : vector<1x5xf32> to vector<16x5xf32>
    %224 = arith.cmpf oeq, %186, %223 : vector<16x5xf32>
    %cst_97 = arith.constant -1.000000e+30 : f32
    %225 = vector.broadcast %cst_97 : f32 to vector<16x5xf32>
    %226 = arith.select %224, %225, %213 : vector<16x5xi1>, vector<16x5xf32>
    %cst_98 = arith.constant dense<0xFF800000> : vector<5xf32>
    %227 = vector.multi_reduction <maximumf>, %226, %cst_98 [0] : vector<16x5xf32> to vector<5xf32>
    %228 = vector.shape_cast %227 : vector<5xf32> to vector<1x5xf32>
    %229 = arith.addf %216, %228 : vector<1x5xf32>
    %cst_99 = arith.constant 2.500000e-01 : f32
    %230 = vector.broadcast %cst_99 : f32 to vector<1x5xf32>
    %231 = arith.mulf %229, %230 : vector<1x5xf32>
    %cst_100 = arith.constant dense<0xFF800000> : vector<1xf32>
    %232 = vector.multi_reduction <maximumf>, %231, %cst_100 [1] : vector<1x5xf32> to vector<1xf32>
    %233 = vector.shape_cast %232 : vector<1xf32> to vector<1x1xf32>
    %234 = vector.broadcast %233 : vector<1x1xf32> to vector<1x5xf32>
    %235 = arith.subf %231, %234 : vector<1x5xf32>
    %236 = math.exp %235 : vector<1x5xf32>
    %cst_101 = arith.constant dense<0.000000e+00> : vector<1xf32>
    %237 = vector.multi_reduction <add>, %236, %cst_101 [1] : vector<1x5xf32> to vector<1xf32>
    %238 = vector.shape_cast %237 : vector<1xf32> to vector<1x1xf32>
    %239 = vector.broadcast %238 : vector<1x1xf32> to vector<1x5xf32>
    %240 = arith.divf %236, %239 : vector<1x5xf32>
    %cst_102 = arith.constant dense<0xFF800000> : vector<16xf32>
    %241 = vector.multi_reduction <maximumf>, %148, %cst_102 [1] : vector<16x5xf32> to vector<16xf32>
    %242 = vector.shape_cast %241 : vector<16xf32> to vector<16x1xf32>
    %243 = vector.broadcast %242 : vector<16x1xf32> to vector<16x5xf32>
    %244 = arith.subf %148, %243 : vector<16x5xf32>
    %245 = math.exp %244 : vector<16x5xf32>
    %cst_103 = arith.constant dense<0.000000e+00> : vector<16xf32>
    %246 = vector.multi_reduction <add>, %245, %cst_103 [1] : vector<16x5xf32> to vector<16xf32>
    %247 = vector.shape_cast %246 : vector<16xf32> to vector<16x1xf32>
    %248 = vector.broadcast %247 : vector<16x1xf32> to vector<16x5xf32>
    %249 = arith.divf %245, %248 : vector<16x5xf32>
    %cst_104 = arith.constant dense<0xFF800000> : vector<16xf32>
    %250 = vector.multi_reduction <maximumf>, %151, %cst_104 [1] : vector<16x5xf32> to vector<16xf32>
    %251 = vector.shape_cast %250 : vector<16xf32> to vector<16x1xf32>
    %252 = vector.broadcast %251 : vector<16x1xf32> to vector<16x5xf32>
    %253 = arith.subf %151, %252 : vector<16x5xf32>
    %254 = math.exp %253 : vector<16x5xf32>
    %cst_105 = arith.constant dense<0.000000e+00> : vector<16xf32>
    %255 = vector.multi_reduction <add>, %254, %cst_105 [1] : vector<16x5xf32> to vector<16xf32>
    %256 = vector.shape_cast %255 : vector<16xf32> to vector<16x1xf32>
    %257 = vector.broadcast %256 : vector<16x1xf32> to vector<16x5xf32>
    %258 = arith.divf %254, %257 : vector<16x5xf32>
    %cst_106 = arith.constant dense<0xFF800000> : vector<16xf32>
    %259 = vector.multi_reduction <maximumf>, %154, %cst_106 [1] : vector<16x5xf32> to vector<16xf32>
    %260 = vector.shape_cast %259 : vector<16xf32> to vector<16x1xf32>
    %261 = vector.broadcast %260 : vector<16x1xf32> to vector<16x5xf32>
    %262 = arith.subf %154, %261 : vector<16x5xf32>
    %263 = math.exp %262 : vector<16x5xf32>
    %cst_107 = arith.constant dense<0.000000e+00> : vector<16xf32>
    %264 = vector.multi_reduction <add>, %263, %cst_107 [1] : vector<16x5xf32> to vector<16xf32>
    %265 = vector.shape_cast %264 : vector<16xf32> to vector<16x1xf32>
    %266 = vector.broadcast %265 : vector<16x1xf32> to vector<16x5xf32>
    %267 = arith.divf %263, %266 : vector<16x5xf32>
    %268 = vector.shape_cast %184 : vector<1x5xf32> to vector<1x5xf32>
    %269 = vector.broadcast %268 : vector<1x5xf32> to vector<16x5xf32>
    %270 = vector.shape_cast %240 : vector<1x5xf32> to vector<1x5xf32>
    %271 = vector.broadcast %270 : vector<1x5xf32> to vector<16x5xf32>
    %cst_108 = arith.constant 0.000000e+00 : f32
    %272 = vector.broadcast %cst_108 : f32 to vector<16x100xf32>
    %273 = tpu.concatenate %146, %249, %258, %267, %147, %269, %271, %272 in 1 : vector<16x2xf32>, vector<16x5xf32>, vector<16x5xf32>, vector<16x5xf32>, vector<16x1xf32>, vector<16x5xf32>, vector<16x5xf32>, vector<16x100xf32> -> vector<16x128xf32>
    %c0_109 = arith.constant 0 : index
    %c0_110 = arith.constant 0 : index
    %c0_111 = arith.constant 0 : index
    %274 = vector.load %arg15[%c0_109, %c0_110, %c0_111] : memref<1x16x128xf32, #tpu.memory_space<vmem>>, vector<1x16x128xf32>
    %275 = vector.shape_cast %274 : vector<1x16x128xf32> to vector<16x128xf32>
    %276 = vector.shape_cast %273 : vector<16x128xf32> to vector<1x16x128xf32>
    tpu.vector_store %arg15[%c0_109, %c0_110, %c0_111], %276 {strides = array<i32>} : memref<1x16x128xf32, #tpu.memory_space<vmem>>, vector<1x16x128xf32>,
    return
  }
  func.func @transform_0(%arg0: i32) -> (i32, i32, i32) {
    %c0_i32 = arith.constant 0 : i32
    %c0_i32_0 = arith.constant 0 : i32
    %c0_i32_1 = arith.constant 0 : i32
    return %arg0, %c0_i32, %c0_i32_0 : i32, i32, i32
  }
  func.func @transform_1(%arg0: i32) -> (i32, i32, i32) {
    %c0_i32 = arith.constant 0 : i32
    %c0_i32_0 = arith.constant 0 : i32
    %c0_i32_1 = arith.constant 0 : i32
    return %arg0, %c0_i32, %c0_i32_0 : i32, i32, i32
  }
  func.func @transform_2(%arg0: i32) -> (i32, i32, i32) {
    %c0_i32 = arith.constant 0 : i32
    %c0_i32_0 = arith.constant 0 : i32
    %c0_i32_1 = arith.constant 0 : i32
    return %arg0, %c0_i32, %c0_i32_0 : i32, i32, i32
  }
  func.func @transform_3(%arg0: i32) -> (i32, i32, i32) {
    %c0_i32 = arith.constant 0 : i32
    %c0_i32_0 = arith.constant 0 : i32
    %c0_i32_1 = arith.constant 0 : i32
    return %arg0, %c0_i32, %c0_i32_0 : i32, i32, i32
  }
  func.func @transform_4(%arg0: i32) -> (i32, i32, i32) {
    %c0_i32 = arith.constant 0 : i32
    %c0_i32_0 = arith.constant 0 : i32
    %c0_i32_1 = arith.constant 0 : i32
    %c0_i32_2 = arith.constant 0 : i32
    return %c0_i32, %c0_i32_0, %c0_i32_1 : i32, i32, i32
  }
  func.func @transform_5(%arg0: i32) -> (i32, i32) {
    %c0_i32 = arith.constant 0 : i32
    %c0_i32_0 = arith.constant 0 : i32
    %c0_i32_1 = arith.constant 0 : i32
    return %c0_i32, %c0_i32_0 : i32, i32
  }
  func.func @transform_6(%arg0: i32) -> (i32, i32, i32) {
    %c0_i32 = arith.constant 0 : i32
    %c0_i32_0 = arith.constant 0 : i32
    %c0_i32_1 = arith.constant 0 : i32
    %c0_i32_2 = arith.constant 0 : i32
    return %c0_i32, %c0_i32_0, %c0_i32_1 : i32, i32, i32
  }
  func.func @transform_7(%arg0: i32) -> (i32, i32, i32) {
    %c0_i32 = arith.constant 0 : i32
    %c0_i32_0 = arith.constant 0 : i32
    %c0_i32_1 = arith.constant 0 : i32
    %c0_i32_2 = arith.constant 0 : i32
    return %c0_i32, %c0_i32_0, %c0_i32_1 : i32, i32, i32
  }
  func.func @transform_8(%arg0: i32) -> (i32, i32, i32) {
    %c0_i32 = arith.constant 0 : i32
    %c0_i32_0 = arith.constant 0 : i32
    %c0_i32_1 = arith.constant 0 : i32
    %c0_i32_2 = arith.constant 0 : i32
    return %c0_i32, %c0_i32_0, %c0_i32_1 : i32, i32, i32
  }
  func.func @transform_9(%arg0: i32) -> (i32, i32, i32) {
    %c0_i32 = arith.constant 0 : i32
    %c0_i32_0 = arith.constant 0 : i32
    %c0_i32_1 = arith.constant 0 : i32
    %c0_i32_2 = arith.constant 0 : i32
    return %c0_i32, %c0_i32_0, %c0_i32_1 : i32, i32, i32
  }
  func.func @transform_10(%arg0: i32) -> (i32, i32, i32) {
    %c0_i32 = arith.constant 0 : i32
    %c0_i32_0 = arith.constant 0 : i32
    %c0_i32_1 = arith.constant 0 : i32
    %c0_i32_2 = arith.constant 0 : i32
    return %c0_i32, %c0_i32_0, %c0_i32_1 : i32, i32, i32
  }
  func.func @transform_11(%arg0: i32) -> (i32, i32, i32) {
    %c0_i32 = arith.constant 0 : i32
    %c0_i32_0 = arith.constant 0 : i32
    %c0_i32_1 = arith.constant 0 : i32
    %c0_i32_2 = arith.constant 0 : i32
    return %c0_i32, %c0_i32_0, %c0_i32_1 : i32, i32, i32
  }
  func.func @transform_12(%arg0: i32) -> (i32, i32) {
    %c0_i32 = arith.constant 0 : i32
    %c0_i32_0 = arith.constant 0 : i32
    %c0_i32_1 = arith.constant 0 : i32
    return %c0_i32, %c0_i32_0 : i32, i32
  }
  func.func @transform_13(%arg0: i32) -> (i32, i32) {
    %c0_i32 = arith.constant 0 : i32
    %c0_i32_0 = arith.constant 0 : i32
    %c0_i32_1 = arith.constant 0 : i32
    return %c0_i32, %c0_i32_0 : i32, i32
  }
  func.func @transform_14(%arg0: i32) -> (i32, i32, i32) {
    %c0_i32 = arith.constant 0 : i32
    %c0_i32_0 = arith.constant 0 : i32
    %c0_i32_1 = arith.constant 0 : i32
    return %arg0, %c0_i32, %c0_i32_0 : i32, i32, i32
  }
}

</mosaic_0001>

<llo_original>
// kernel: asmloc_forward.1
$region0: #{asmloc_forward.1}
  #allocation0 [shape = 'u32[]', space=smem, size = 0x4, offset = 0x4, fixed_abs, tag = 'smem constant byte address 0x4 - core index']
  #allocation1 [shape = 'u32[144,128]{1,0:T(1,128)}', space=vmem, size = 0x12000, scoped, tag = 'internal scratch']
  %s0 = inlined_call_operand.vmem [shape: f32[2,32,18], index: 0, kind: input, shape index: {}]
  %s1 = inlined_call_operand.vmem [shape: f32[2,16,16], index: 1, kind: input, shape index: {}]
  %s2 = inlined_call_operand.vmem [shape: f32[2,16,8], index: 2, kind: input, shape index: {}]
  %s3 = inlined_call_operand.vmem [shape: f32[2,8,8], index: 3, kind: input, shape index: {}]
  %s4 = inlined_call_operand.vmem [shape: f32[3,32,32], index: 4, kind: input, shape index: {}]
  %s5 = inlined_call_operand.vmem [shape: f32[32,3], index: 5, kind: input, shape index: {}]
  %s6 = inlined_call_operand.vmem [shape: f32[8,12,32], index: 6, kind: input, shape index: {}]
  %s7 = inlined_call_operand.vmem [shape: f32[8,12,1], index: 7, kind: input, shape index: {}]
  %s8 = inlined_call_operand.vmem [shape: f32[8,32,4], index: 8, kind: input, shape index: {}]
  %s9 = inlined_call_operand.vmem [shape: f32[8,12,32], index: 9, kind: input, shape index: {}]
  %s10 = inlined_call_operand.vmem [shape: f32[8,12,1], index: 10, kind: input, shape index: {}]
  %s11 = inlined_call_operand.vmem [shape: f32[8,32,4], index: 11, kind: input, shape index: {}]
  %s12 = inlined_call_operand.vmem [shape: f32[8,32], index: 12, kind: input, shape index: {}]
  %s13 = inlined_call_operand.vmem [shape: f32[8,1], index: 13, kind: input, shape index: {}]
  %s14 = inlined_call_operand.vmem [shape: f32[2,16,128], index: 14, kind: output, shape index: {}]
  %s15 = sld [smem:[#allocation0]]
  $region89: #{asmloc_forward.1} parent=0
    _
  %s17 = ssub.s32 1, %s15
  %s18 = scalar_select 0, %s17, %s15
  loop: start=0, step=1, limit=4
  $region2: #{asmloc_forward.1} parent=0 // loop_pre_header
    _
  $region3: #{asmloc_forward.1} parent=0 // loop_header
    %s20 = sphi 0, %s24
    %p21 = scmp.ge.s32.totalorder %s20, 4
    %s30 = sphi 0, %s32
    %s33 = sphi 0, %s30
    %s34 = sphi 0, %s33
    %s50 = sphi 0, %s34
    %s56 = sphi 0, %s58
    %s59 = sphi 0, %s56
    %s60 = sphi 0, %s59
    %s76 = sphi 0, %s60
    %s82 = sphi 0, %s84
    %s85 = sphi 0, %s82
    %s86 = sphi 0, %s85
    %s102 = sphi 0, %s86
    %s108 = sphi 0, %s110
    %s111 = sphi 0, %s108
    %s112 = sphi 0, %s111
    %s128 = sphi 0, %s112
    %s132 = sphi 0, %s132
    %s134 = sphi 0, %s132
    %s135 = sphi 0, %s134
    %s149 = sphi 0, %s135
    %s153 = sphi 0, %s153
    %s155 = sphi 0, %s153
    %s156 = sphi 0, %s155
    %s170 = sphi 0, %s156
    %s174 = sphi 0, %s174
    %s176 = sphi 0, %s174
    %s177 = sphi 0, %s176
    %s191 = sphi 0, %s177
    %s195 = sphi 0, %s195
    %s197 = sphi 0, %s195
    %s198 = sphi 0, %s197
    %s212 = sphi 0, %s198
    %s216 = sphi 0, %s216
    %s218 = sphi 0, %s216
    %s219 = sphi 0, %s218
    %s233 = sphi 0, %s219
    %s237 = sphi 0, %s237
    %s239 = sphi 0, %s237
    %s240 = sphi 0, %s239
    %s254 = sphi 0, %s240
    %s258 = sphi 0, %s258
    %s260 = sphi 0, %s258
    %s261 = sphi 0, %s260
    %s275 = sphi 0, %s261
    %s279 = sphi 0, %s279
    %s281 = sphi 0, %s279
    %s282 = sphi 0, %s281
    %s296 = sphi 0, %s282
    %s300 = sphi 0, %s300
    %s302 = sphi 0, %s300
    %s303 = sphi 0, %s302
    %s317 = sphi 0, %s303
    %s321 = sphi 0, %s321
    %s323 = sphi 0, %s321
    %s324 = sphi 0, %s323
    %s338 = sphi 0, %s324
    %s344 = sphi 0, %s346
    %s347 = sphi 0, %s344
    %s348 = sphi 0, %s347
    %s364 = sphi 0, %s348
  $region4: #{asmloc_forward.1} parent=0 // loop_header_branch
    %23 = sbr.rel (%p21) target = $region8
  $region5: #{asmloc_forward.1} parent=0 // loop_body
    %s25 = ssub.s32 %s20, 1
    %s26 = ssub.s32 %s20, 2
    %s27 = sadd.s32 %s20, 1
    %s28 = ssub.s32 %s20, %s27
    %p29 = scmp.eq.s32.totalorder %s28, 0
    %s31 = sadd.s32 %s30, 1
    %s32 = scalar_select %p29, %s30, %s31
    %p35 = pneg %p29
    %p36 = scmp.eq.s32.totalorder %s20, 1
    %p37 = por %p35, %p36
    %p38 = scmp.ne.s32.totalorder %s30, %s33
    %p39 = scmp.eq.s32.totalorder %s20, 0
    %p40 = por %p38, %p39
    %p41 = scmp.ne.s32.totalorder %s30, %s33
    %p42 = scmp.eq.s32.totalorder %s25, 1
    %p43 = por %p41, %p42
    %p44 = scmp.ne.s32.totalorder %s33, %s34
    %p45 = scmp.eq.s32.totalorder %s25, 0
    %p46 = por %p44, %p45
    %p47 = scmp.ne.s32.totalorder %s33, %s34
    %p48 = scmp.eq.s32.totalorder %s26, 1
    %p49 = por %p47, %p48
    %p51 = scmp.ne.s32.totalorder %s34, %s50
    %p52 = scmp.eq.s32.totalorder %s26, 0
    %p53 = por %p51, %p52
    %s54 = ssub.s32 %s20, %s27
    %p55 = scmp.eq.s32.totalorder %s54, 0
    %s57 = sadd.s32 %s56, 1
    %s58 = scalar_select %p55, %s56, %s57
    %p61 = pneg %p55
    %p62 = scmp.eq.s32.totalorder %s20, 1
    %p63 = por %p61, %p62
    %p64 = scmp.ne.s32.totalorder %s56, %s59
    %p65 = scmp.eq.s32.totalorder %s20, 0
    %p66 = por %p64, %p65
    %p67 = scmp.ne.s32.totalorder %s56, %s59
    %p68 = scmp.eq.s32.totalorder %s25, 1
    %p69 = por %p67, %p68
    %p70 = scmp.ne.s32.totalorder %s59, %s60
    %p71 = scmp.eq.s32.totalorder %s25, 0
    %p72 = por %p70, %p71
    %p73 = scmp.ne.s32.totalorder %s59, %s60
    %p74 = scmp.eq.s32.totalorder %s26, 1
    %p75 = por %p73, %p74
    %p77 = scmp.ne.s32.totalorder %s60, %s76
    %p78 = scmp.eq.s32.totalorder %s26, 0
    %p79 = por %p77, %p78
    %s80 = ssub.s32 %s20, %s27
    %p81 = scmp.eq.s32.totalorder %s80, 0
    %s83 = sadd.s32 %s82, 1
    %s84 = scalar_select %p81, %s82, %s83
    %p87 = pneg %p81
    %p88 = scmp.eq.s32.totalorder %s20, 1
    %p89 = por %p87, %p88
    %p90 = scmp.ne.s32.totalorder %s82, %s85
    %p91 = scmp.eq.s32.totalorder %s20, 0
    %p92 = por %p90, %p91
    %p93 = scmp.ne.s32.totalorder %s82, %s85
    %p94 = scmp.eq.s32.totalorder %s25, 1
    %p95 = por %p93, %p94
    %p96 = scmp.ne.s32.totalorder %s85, %s86
    %p97 = scmp.eq.s32.totalorder %s25, 0
    %p98 = por %p96, %p97
    %p99 = scmp.ne.s32.totalorder %s85, %s86
    %p100 = scmp.eq.s32.totalorder %s26, 1
    %p101 = por %p99, %p100
    %p103 = scmp.ne.s32.totalorder %s86, %s102
    %p104 = scmp.eq.s32.totalorder %s26, 0
    %p105 = por %p103, %p104
    %s106 = ssub.s32 %s20, %s27
    %p107 = scmp.eq.s32.totalorder %s106, 0
    %s109 = sadd.s32 %s108, 1
    %s110 = scalar_select %p107, %s108, %s109
    %p113 = pneg %p107
    %p114 = scmp.eq.s32.totalorder %s20, 1
    %p115 = por %p113, %p114
    %p116 = scmp.ne.s32.totalorder %s108, %s111
    %p117 = scmp.eq.s32.totalorder %s20, 0
    %p118 = por %p116, %p117
    %p119 = scmp.ne.s32.totalorder %s108, %s111
    %p120 = scmp.eq.s32.totalorder %s25, 1
    %p121 = por %p119, %p120
    %p122 = scmp.ne.s32.totalorder %s111, %s112
    %p123 = scmp.eq.s32.totalorder %s25, 0
    %p124 = por %p122, %p123
    %p125 = scmp.ne.s32.totalorder %s111, %s112
    %p126 = scmp.eq.s32.totalorder %s26, 1
    %p127 = por %p125, %p126
    %p129 = scmp.ne.s32.totalorder %s112, %s128
    %p130 = scmp.eq.s32.totalorder %s26, 0
    %p131 = por %p129, %p130
    %s133 = sadd.s32 %s132, 1
    %p136 = scmp.eq.s32.totalorder %s20, 1
    %p137 = scmp.ne.s32.totalorder %s132, %s134
    %p138 = scmp.eq.s32.totalorder %s20, 0
    %p139 = por %p137, %p138
    %p140 = scmp.ne.s32.totalorder %s132, %s134
    %p141 = scmp.eq.s32.totalorder %s25, 1
    %p142 = por %p140, %p141
    %p143 = scmp.ne.s32.totalorder %s134, %s135
    %p144 = scmp.eq.s32.totalorder %s25, 0
    %p145 = por %p143, %p144
    %p146 = scmp.ne.s32.totalorder %s134, %s135
    %p147 = scmp.eq.s32.totalorder %s26, 1
    %p148 = por %p146, %p147
    %p150 = scmp.ne.s32.totalorder %s135, %s149
    %p151 = scmp.eq.s32.totalorder %s26, 0
    %p152 = por %p150, %p151
    %s154 = sadd.s32 %s153, 1
    %p157 = scmp.eq.s32.totalorder %s20, 1
    %p158 = scmp.ne.s32.totalorder %s153, %s155
    %p159 = scmp.eq.s32.totalorder %s20, 0
    %p160 = por %p158, %p159
    %p161 = scmp.ne.s32.totalorder %s153, %s155
    %p162 = scmp.eq.s32.totalorder %s25, 1
    %p163 = por %p161, %p162
    %p164 = scmp.ne.s32.totalorder %s155, %s156
    %p165 = scmp.eq.s32.totalorder %s25, 0
    %p166 = por %p164, %p165
    %p167 = scmp.ne.s32.totalorder %s155, %s156
    %p168 = scmp.eq.s32.totalorder %s26, 1
    %p169 = por %p167, %p168
    %p171 = scmp.ne.s32.totalorder %s156, %s170
    %p172 = scmp.eq.s32.totalorder %s26, 0
    %p173 = por %p171, %p172
    %s175 = sadd.s32 %s174, 1
    %p178 = scmp.eq.s32.totalorder %s20, 1
    %p179 = scmp.ne.s32.totalorder %s174, %s176
    %p180 = scmp.eq.s32.totalorder %s20, 0
    %p181 = por %p179, %p180
    %p182 = scmp.ne.s32.totalorder %s174, %s176
    %p183 = scmp.eq.s32.totalorder %s25, 1
    %p184 = por %p182, %p183
    %p185 = scmp.ne.s32.totalorder %s176, %s177
    %p186 = scmp.eq.s32.totalorder %s25, 0
    %p187 = por %p185, %p186
    %p188 = scmp.ne.s32.totalorder %s176, %s177
    %p189 = scmp.eq.s32.totalorder %s26, 1
    %p190 = por %p188, %p189
    %p192 = scmp.ne.s32.totalorder %s177, %s191
    %p193 = scmp.eq.s32.totalorder %s26, 0
    %p194 = por %p192, %p193
    %s196 = sadd.s32 %s195, 1
    %p199 = scmp.eq.s32.totalorder %s20, 1
    %p200 = scmp.ne.s32.totalorder %s195, %s197
    %p201 = scmp.eq.s32.totalorder %s20, 0
    %p202 = por %p200, %p201
    %p203 = scmp.ne.s32.totalorder %s195, %s197
    %p204 = scmp.eq.s32.totalorder %s25, 1
    %p205 = por %p203, %p204
    %p206 = scmp.ne.s32.totalorder %s197, %s198
    %p207 = scmp.eq.s32.totalorder %s25, 0
    %p208 = por %p206, %p207
    %p209 = scmp.ne.s32.totalorder %s197, %s198
    %p210 = scmp.eq.s32.totalorder %s26, 1
    %p211 = por %p209, %p210
    %p213 = scmp.ne.s32.totalorder %s198, %s212
    %p214 = scmp.eq.s32.totalorder %s26, 0
    %p215 = por %p213, %p214
    %s217 = sadd.s32 %s216, 1
    %p220 = scmp.eq.s32.totalorder %s20, 1
    %p221 = scmp.ne.s32.totalorder %s216, %s218
    %p222 = scmp.eq.s32.totalorder %s20, 0
    %p223 = por %p221, %p222
    %p224 = scmp.ne.s32.totalorder %s216, %s218
    %p225 = scmp.eq.s32.totalorder %s25, 1
    %p226 = por %p224, %p225
    %p227 = scmp.ne.s32.totalorder %s218, %s219
    %p228 = scmp.eq.s32.totalorder %s25, 0
    %p229 = por %p227, %p228
    %p230 = scmp.ne.s32.totalorder %s218, %s219
    %p231 = scmp.eq.s32.totalorder %s26, 1
    %p232 = por %p230, %p231
    %p234 = scmp.ne.s32.totalorder %s219, %s233
    %p235 = scmp.eq.s32.totalorder %s26, 0
    %p236 = por %p234, %p235
    %s238 = sadd.s32 %s237, 1
    %p241 = scmp.eq.s32.totalorder %s20, 1
    %p242 = scmp.ne.s32.totalorder %s237, %s239
    %p243 = scmp.eq.s32.totalorder %s20, 0
    %p244 = por %p242, %p243
    %p245 = scmp.ne.s32.totalorder %s237, %s239
    %p246 = scmp.eq.s32.totalorder %s25, 1
    %p247 = por %p245, %p246
    %p248 = scmp.ne.s32.totalorder %s239, %s240
    %p249 = scmp.eq.s32.totalorder %s25, 0
    %p250 = por %p248, %p249
    %p251 = scmp.ne.s32.totalorder %s239, %s240
    %p252 = scmp.eq.s32.totalorder %s26, 1
    %p253 = por %p251, %p252
    %p255 = scmp.ne.s32.totalorder %s240, %s254
    %p256 = scmp.eq.s32.totalorder %s26, 0
    %p257 = por %p255, %p256
    %s259 = sadd.s32 %s258, 1
    %p262 = scmp.eq.s32.totalorder %s20, 1
    %p263 = scmp.ne.s32.totalorder %s258, %s260
    %p264 = scmp.eq.s32.totalorder %s20, 0
    %p265 = por %p263, %p264
    %p266 = scmp.ne.s32.totalorder %s258, %s260
    %p267 = scmp.eq.s32.totalorder %s25, 1
    %p268 = por %p266, %p267
    %p269 = scmp.ne.s32.totalorder %s260, %s261
    %p270 = scmp.eq.s32.totalorder %s25, 0
    %p271 = por %p269, %p270
    %p272 = scmp.ne.s32.totalorder %s260, %s261
    %p273 = scmp.eq.s32.totalorder %s26, 1
    %p274 = por %p272, %p273
    %p276 = scmp.ne.s32.totalorder %s261, %s275
    %p277 = scmp.eq.s32.totalorder %s26, 0
    %p278 = por %p276, %p277
    %s280 = sadd.s32 %s279, 1
    %p283 = scmp.eq.s32.totalorder %s20, 1
    %p284 = scmp.ne.s32.totalorder %s279, %s281
    %p285 = scmp.eq.s32.totalorder %s20, 0
    %p286 = por %p284, %p285
    %p287 = scmp.ne.s32.totalorder %s279, %s281
    %p288 = scmp.eq.s32.totalorder %s25, 1
    %p289 = por %p287, %p288
    %p290 = scmp.ne.s32.totalorder %s281, %s282
    %p291 = scmp.eq.s32.totalorder %s25, 0
    %p292 = por %p290, %p291
    %p293 = scmp.ne.s32.totalorder %s281, %s282
    %p294 = scmp.eq.s32.totalorder %s26, 1
    %p295 = por %p293, %p294
    %p297 = scmp.ne.s32.totalorder %s282, %s296
    %p298 = scmp.eq.s32.totalorder %s26, 0
    %p299 = por %p297, %p298
    %s301 = sadd.s32 %s300, 1
    %p304 = scmp.eq.s32.totalorder %s20, 1
    %p305 = scmp.ne.s32.totalorder %s300, %s302
    %p306 = scmp.eq.s32.totalorder %s20, 0
    %p307 = por %p305, %p306
    %p308 = scmp.ne.s32.totalorder %s300, %s302
    %p309 = scmp.eq.s32.totalorder %s25, 1
    %p310 = por %p308, %p309
    %p311 = scmp.ne.s32.totalorder %s302, %s303
    %p312 = scmp.eq.s32.totalorder %s25, 0
    %p313 = por %p311, %p312
    %p314 = scmp.ne.s32.totalorder %s302, %s303
    %p315 = scmp.eq.s32.totalorder %s26, 1
    %p316 = por %p314, %p315
    %p318 = scmp.ne.s32.totalorder %s303, %s317
    %p319 = scmp.eq.s32.totalorder %s26, 0
    %p320 = por %p318, %p319
    %s322 = sadd.s32 %s321, 1
    %p325 = scmp.eq.s32.totalorder %s20, 1
    %p326 = scmp.ne.s32.totalorder %s321, %s323
    %p327 = scmp.eq.s32.totalorder %s20, 0
    %p328 = por %p326, %p327
    %p329 = scmp.ne.s32.totalorder %s321, %s323
    %p330 = scmp.eq.s32.totalorder %s25, 1
    %p331 = por %p329, %p330
    %p332 = scmp.ne.s32.totalorder %s323, %s324
    %p333 = scmp.eq.s32.totalorder %s25, 0
    %p334 = por %p332, %p333
    %p335 = scmp.ne.s32.totalorder %s323, %s324
    %p336 = scmp.eq.s32.totalorder %s26, 1
    %p337 = por %p335, %p336
    %p339 = scmp.ne.s32.totalorder %s324, %s338
    %p340 = scmp.eq.s32.totalorder %s26, 0
    %p341 = por %p339, %p340
    %s342 = ssub.s32 %s20, %s27
    %p343 = scmp.eq.s32.totalorder %s342, 0
    %s345 = sadd.s32 %s344, 1
    %s346 = scalar_select %p343, %s344, %s345
    %p349 = pneg %p343
    %p350 = scmp.eq.s32.totalorder %s20, 1
    %p351 = por %p349, %p350
    %p352 = scmp.ne.s32.totalorder %s344, %s347
    %p353 = scmp.eq.s32.totalorder %s20, 0
    %p354 = por %p352, %p353
    %p355 = scmp.ne.s32.totalorder %s344, %s347
    %p356 = scmp.eq.s32.totalorder %s25, 1
    %p357 = por %p355, %p356
    %p358 = scmp.ne.s32.totalorder %s347, %s348
    %p359 = scmp.eq.s32.totalorder %s25, 0
    %p360 = por %p358, %p359
    %p361 = scmp.ne.s32.totalorder %s347, %s348
    %p362 = scmp.eq.s32.totalorder %s26, 1
    %p363 = por %p361, %p362
    %p365 = scmp.ne.s32.totalorder %s348, %s364
    %p366 = scmp.eq.s32.totalorder %s26, 0
    %p367 = por %p365, %p366
    %p368 = scmp.le.s32.totalorder 1, %s20
    %p369 = scmp.lt.s32.totalorder %s20, 3
    %p370 = pnand %p368, %p369
    %p371 = pneg %p370
    // Predicated region
    $region9: #{asmloc_forward.1} parent=5 // pred_check
      _
    $region10: #{asmloc_forward.1} parent=5 // pred_check_branch
      %373 = sbr.rel (%p370) target = $region12
    $region11: #{asmloc_forward.1} parent=5 // pred_region
      %s374 = ssub.s32 %s20, 1
      // Predicated region
      $region13: #{asmloc_forward.1} parent=11 // pred_check
        %p375 = pneg %p145
      $region14: #{asmloc_forward.1} parent=11 // pred_check_branch
        %377 = sbr.rel (%p375) target = $region16
      $region15: #{asmloc_forward.1} parent=11 // pred_region
        _
      $region16: #{asmloc_forward.1} parent=11 // pred_fallthru
        _
      // Predicated region
      $region17: #{asmloc_forward.1} parent=11 // pred_check
        %p378 = pneg %p166
      $region18: #{asmloc_forward.1} parent=11 // pred_check_branch
        %380 = sbr.rel (%p378) target = $region20
      $region19: #{asmloc_forward.1} parent=11 // pred_region
        _
      $region20: #{asmloc_forward.1} parent=11 // pred_fallthru
        _
      // Predicated region
      $region21: #{asmloc_forward.1} parent=11 // pred_check
        %p381 = pneg %p187
      $region22: #{asmloc_forward.1} parent=11 // pred_check_branch
        %383 = sbr.rel (%p381) target = $region24
      $region23: #{asmloc_forward.1} parent=11 // pred_region
        _
      $region24: #{asmloc_forward.1} parent=11 // pred_fallthru
        _
      // Predicated region
      $region25: #{asmloc_forward.1} parent=11 // pred_check
        %p384 = pneg %p208
      $region26: #{asmloc_forward.1} parent=11 // pred_check_branch
        %386 = sbr.rel (%p384) target = $region28
      $region27: #{asmloc_forward.1} parent=11 // pred_region
        _
      $region28: #{asmloc_forward.1} parent=11 // pred_fallthru
        _
      // Predicated region
      $region29: #{asmloc_forward.1} parent=11 // pred_check
        %p387 = pneg %p229
      $region30: #{asmloc_forward.1} parent=11 // pred_check_branch
        %389 = sbr.rel (%p387) target = $region32
      $region31: #{asmloc_forward.1} parent=11 // pred_region
        _
      $region32: #{asmloc_forward.1} parent=11 // pred_fallthru
        _
      // Predicated region
      $region33: #{asmloc_forward.1} parent=11 // pred_check
        %p390 = pneg %p250
      $region34: #{asmloc_forward.1} parent=11 // pred_check_branch
        %392 = sbr.rel (%p390) target = $region36
      $region35: #{asmloc_forward.1} parent=11 // pred_region
        _
      $region36: #{asmloc_forward.1} parent=11 // pred_fallthru
        _
      // Predicated region
      $region37: #{asmloc_forward.1} parent=11 // pred_check
        %p393 = pneg %p271
      $region38: #{asmloc_forward.1} parent=11 // pred_check_branch
        %395 = sbr.rel (%p393) target = $region40
      $region39: #{asmloc_forward.1} parent=11 // pred_region
        _
      $region40: #{asmloc_forward.1} parent=11 // pred_fallthru
        _
      // Predicated region
      $region41: #{asmloc_forward.1} parent=11 // pred_check
        %p396 = pneg %p292
      $region42: #{asmloc_forward.1} parent=11 // pred_check_branch
        %398 = sbr.rel (%p396) target = $region44
      $region43: #{asmloc_forward.1} parent=11 // pred_region
        _
      $region44: #{asmloc_forward.1} parent=11 // pred_fallthru
        _
      // Predicated region
      $region45: #{asmloc_forward.1} parent=11 // pred_check
        %p399 = pneg %p313
      $region46: #{asmloc_forward.1} parent=11 // pred_check_branch
        %401 = sbr.rel (%p399) target = $region48
      $region47: #{asmloc_forward.1} parent=11 // pred_region
        _
      $region48: #{asmloc_forward.1} parent=11 // pred_fallthru
        _
      // Predicated region
      $region49: #{asmloc_forward.1} parent=11 // pred_check
        %p402 = pneg %p334
      $region50: #{asmloc_forward.1} parent=11 // pred_check_branch
        %404 = sbr.rel (%p402) target = $region52
      $region51: #{asmloc_forward.1} parent=11 // pred_region
        _
      $region52: #{asmloc_forward.1} parent=11 // pred_fallthru
        _
    $region12: #{asmloc_forward.1} parent=5 // pred_fallthru
      _
    %p405 = scmp.lt.s32.totalorder %s20, 2
    // Predicated region
    $region53: #{asmloc_forward.1} parent=5 // pred_check
      %p406 = pneg %p405
    $region54: #{asmloc_forward.1} parent=5 // pred_check_branch
      %408 = sbr.rel (%p406) target = $region56
    $region55: #{asmloc_forward.1} parent=5 // pred_region
      // Predicated region
      $region57: #{asmloc_forward.1} parent=55 // pred_check
        %p409 = pneg %p40
      $region58: #{asmloc_forward.1} parent=55 // pred_check_branch
        %411 = sbr.rel (%p409) target = $region60
      $region59: #{asmloc_forward.1} parent=55 // pred_region
        %p412 = scmp.lt.s32.totalorder %s20, 1
        %s413 = scalar_select %p412, %s20, 1
        %s414 = smul.addr %s413, 4
        %s415 = smul.addr %s414, 8
        %s416 = scalar_lea.vmem %s0, %s415
      $region60: #{asmloc_forward.1} parent=55 // pred_fallthru
        _
      // Predicated region
      $region61: #{asmloc_forward.1} parent=55 // pred_check
        %p417 = pneg %p66
      $region62: #{asmloc_forward.1} parent=55 // pred_check_branch
        %419 = sbr.rel (%p417) target = $region64
      $region63: #{asmloc_forward.1} parent=55 // pred_region
        %p420 = scmp.lt.s32.totalorder %s20, 1
        %s421 = scalar_select %p420, %s20, 1
        %s422 = smul.addr %s421, 2
        %s423 = smul.addr %s422, 8
        %s424 = scalar_lea.vmem %s1, %s423
      $region64: #{asmloc_forward.1} parent=55 // pred_fallthru
        _
      // Predicated region
      $region65: #{asmloc_forward.1} parent=55 // pred_check
        %p425 = pneg %p92
      $region66: #{asmloc_forward.1} parent=55 // pred_check_branch
        %427 = sbr.rel (%p425) target = $region68
      $region67: #{asmloc_forward.1} parent=55 // pred_region
        %p428 = scmp.lt.s32.totalorder %s20, 1
        %s429 = scalar_select %p428, %s20, 1
        %s430 = smul.addr %s429, 2
        %s431 = smul.addr %s430, 8
        %s432 = scalar_lea.vmem %s2, %s431
      $region68: #{asmloc_forward.1} parent=55 // pred_fallthru
        _
      // Predicated region
      $region69: #{asmloc_forward.1} parent=55 // pred_check
        %p433 = pneg %p118
      $region70: #{asmloc_forward.1} parent=55 // pred_check_branch
        %435 = sbr.rel (%p433) target = $region72
      $region71: #{asmloc_forward.1} parent=55 // pred_region
        %p436 = scmp.lt.s32.totalorder %s20, 1
        %s437 = scalar_select %p436, %s20, 1
        %s438 = smul.addr %s437, 8
        %s439 = scalar_lea.vmem %s3, %s438
      $region72: #{asmloc_forward.1} parent=55 // pred_fallthru
        _
    $region56: #{asmloc_forward.1} parent=5 // pred_fallthru
      _
    %p440 = scmp.le.s32.totalorder 1, %s20
    %p441 = scmp.lt.s32.totalorder %s20, 3
    %p442 = pnand %p440, %p441
    %p443 = pneg %p442
    // Predicated region
    $region73: #{asmloc_forward.1} parent=5 // pred_check
      _
    $region74: #{asmloc_forward.1} parent=5 // pred_check_branch
      %445 = sbr.rel (%p442) target = $region76
    $region75: #{asmloc_forward.1} parent=5 // pred_region
      %s446 = ssub.s32 %s20, 1
      %p447 = scmp.lt.s32.totalorder %s25, 1
      %s448 = scalar_select %p447, %s25, 1
      %s449 = smul.addr %s448, 4
      %s450 = smul.addr %s449, 8
      %s451 = scalar_lea.vmem %s0, %s450
      %p452 = pneg %p46
      %p453 = pneg %p43
      %p454 = scmp.lt.s32.totalorder %s25, 1
      %s455 = scalar_select %p454, %s25, 1
      %s456 = smul.addr %s455, 2
      %s457 = smul.addr %s456, 8
      %s458 = scalar_lea.vmem %s1, %s457
      %p459 = pneg %p72
      %p460 = pneg %p69
      %p461 = scmp.lt.s32.totalorder %s25, 1
      %s462 = scalar_select %p461, %s25, 1
      %s463 = smul.addr %s462, 2
      %s464 = smul.addr %s463, 8
      %s465 = scalar_lea.vmem %s2, %s464
      %p466 = pneg %p98
      %p467 = pneg %p95
      %p468 = scmp.lt.s32.totalorder %s25, 1
      %s469 = scalar_select %p468, %s25, 1
      %s470 = smul.addr %s469, 8
      %s471 = scalar_lea.vmem %s3, %s470
      %p472 = pneg %p124
      %p473 = pneg %p121
      %p474 = pneg %p145
      %p475 = pneg %p142
      %p476 = pneg %p166
      %p477 = pneg %p163
      %p478 = pneg %p187
      %p479 = pneg %p184
      %p480 = pneg %p208
      %p481 = pneg %p205
      %p482 = pneg %p229
      %p483 = pneg %p226
      %p484 = pneg %p250
      %p485 = pneg %p247
      %p486 = pneg %p271
      %p487 = pneg %p268
      %p488 = pneg %p292
      %p489 = pneg %p289
      %p490 = pneg %p313
      %p491 = pneg %p310
      %p492 = pneg %p334
      %p493 = pneg %p331
      %p494 = pneg %p360
      %p495 = pneg %p357
      %p496 = scmp.lt.s32.totalorder %s25, 1
      %s497 = scalar_select %p496, %s25, 1
      %s498 = smul.addr %s497, 2
      %s499 = smul.addr %s498, 8
      %s500 = scalar_lea.vmem %s14, %s499
      %p501 = scmp.lt.s32.totalorder %s25, 1
      %s502 = scalar_select %p501, %s25, 1
      %s503 = smul.addr %s502, 4
      %s504 = smul.addr %s503, 8
      %s505 = scalar_lea.vmem %s0, %s504
      %p506 = scmp.lt.s32.totalorder %s25, 1
      %s507 = scalar_select %p506, %s25, 1
      %s508 = smul.addr %s507, 2
      %s509 = smul.addr %s508, 8
      %s510 = scalar_lea.vmem %s1, %s509
      %p511 = scmp.lt.s32.totalorder %s25, 1
      %s512 = scalar_select %p511, %s25, 1
      %s513 = smul.addr %s512, 2
      %s514 = smul.addr %s513, 8
      %s515 = scalar_lea.vmem %s2, %s514
      %p516 = scmp.lt.s32.totalorder %s25, 1
      %s517 = scalar_select %p516, %s25, 1
      %s518 = smul.addr %s517, 8
      %s519 = scalar_lea.vmem %s3, %s518
      %p520 = scmp.lt.s32.totalorder %s25, 1
      %s521 = scalar_select %p520, %s25, 1
      %s522 = smul.addr %s521, 2
      %s523 = smul.addr %s522, 8
      %s524 = scalar_lea.vmem %s14, %s523
      %v525 = vld [vmem:[%s5] sm:$0xff]
      %v526 = vld [vmem:[%s5 + $0x8] sm:$0xff]
      %v527 = vld [vmem:[%s5 + $0x10] sm:$0xff]
      %v528 = vld [vmem:[%s5 + $0x18] sm:$0xff]
      %v529 = vld [vmem:[%s505] sm:$0xff]
      %v530 = vld [vmem:[%s505 + $0x8] sm:$0xff]
      %v531 = vld [vmem:[%s505 + $0x10] sm:$0xff]
      %v532 = vld [vmem:[%s505 + $0x18] sm:$0xff]
      %v533 = vld [vmem:[%s4] sm:$0xff]
      %v534 = vld [vmem:[%s4 + $0x8] sm:$0xff]
      %v535 = vld [vmem:[%s4 + $0x10] sm:$0xff]
      %v536 = vld [vmem:[%s4 + $0x18] sm:$0xff]
      %s537 = scalar_lea.vmem %s4, 32
      %v538 = vld [vmem:[%s537] sm:$0xff]
      %v539 = vld [vmem:[%s537 + $0x8] sm:$0xff]
      %v540 = vld [vmem:[%s537 + $0x10] sm:$0xff]
      %v541 = vld [vmem:[%s537 + $0x18] sm:$0xff]
      %546 = vrot.lane.b32.xlu0 %v529, 127
      %v547 = vpop.permute.xlu0 %546
      %548 = vrot.lane.b32.xlu0 %v530, 127
      %v549 = vpop.permute.xlu0 %548
      %550 = vrot.lane.b32.xlu0 %v531, 127
      %v551 = vpop.permute.xlu0 %550
      %552 = vrot.lane.b32.xlu0 %v532, 127
      %v553 = vpop.permute.xlu0 %552
      %vm558 = vcmask 261120
      %v560 = vsel %vm558, %v538, 0
      %v563 = vsel %vm558, %v539, 0
      %v566 = vsel %vm558, %v540, 0
      %v569 = vsel %vm558, %v541, 0
      %571 = vmatprep.subr.mxu0 0.0
      %572 = vmatpush1.msra.mxu0 %v547
      %573 = vmatprep.subr.mxu0 0.0
      %574 = vmatpush1.msra.mxu0 %v549
      %575 = vmatprep.subr.mxu0 0.0
      %576 = vmatpush1.msra.mxu0 %v551
      %577 = vmatprep.subr.mxu0 0.0
      %578 = vmatpush1.msra.mxu0 %v553
      %579 = vmatprep.subr.mxu0 0.0
      %580 = vmatpush1.msra.mxu0 0.0
      %581 = vmatprep.subr.mxu0 0.0
      %582 = vmatpush1.msra.mxu0 0.0
      %583 = vmatprep.subr.mxu0 0.0
      %584 = vmatpush1.msra.mxu0 0.0
      %585 = vmatprep.subr.mxu0 0.0
      %586 = vmatpush1.msra.mxu0 0.0
      %587 = vmatprep.subr.mxu0 0.0
      %588 = vmatpush1.msra.mxu0 0.0
      %589 = vmatprep.subr.mxu0 0.0
      %590 = vmatpush1.msra.mxu0 0.0
      %591 = vmatprep.subr.mxu0 0.0
      %592 = vmatpush1.msra.mxu0 0.0
      %593 = vmatprep.subr.mxu0 0.0
      %594 = vmatpush1.msra.mxu0 0.0
      %595 = vmatprep.subr.mxu0 0.0
      %596 = vmatpush1.msra.mxu0 0.0
      %597 = vmatprep.subr.mxu0 0.0
      %598 = vmatpush1.msra.mxu0 0.0
      %599 = vmatprep.subr.mxu0 0.0
      %600 = vmatpush1.msra.mxu0 0.0
      %601 = vmatprep.subr.mxu0 0.0
      %602 = vmatpush1.msra.mxu0 0.0
      %603 = vmatprep.subr.mxu0 0.0
      %604 = vmatpush1.msra.mxu0 0.0
      %605 = vmatprep.subr.mxu0 0.0
      %606 = vmatpush1.msra.mxu0 0.0
      %607 = vmatprep.subr.mxu0 0.0
      %608 = vmatpush1.msra.mxu0 0.0
      %609 = vmatprep.subr.mxu0 0.0
      %610 = vmatpush1.msra.mxu0 0.0
      %611 = vmatprep.subr.mxu0 0.0
      %612 = vmatpush1.msra.mxu0 0.0
      %613 = vmatprep.subr.mxu0 0.0
      %614 = vmatpush1.msra.mxu0 0.0
      %615 = vmatprep.subr.mxu0 0.0
      %616 = vmatpush1.msra.mxu0 0.0
      %617 = vmatprep.subr.mxu0 0.0
      %618 = vmatpush1.msra.mxu0 0.0
      %619 = vmatprep.subr.mxu0 0.0
      %620 = vmatpush1.msra.mxu0 0.0
      %621 = vmatprep.subr.mxu0 0.0
      %622 = vmatpush1.msra.mxu0 0.0
      %623 = vmatprep.subr.mxu0 0.0
      %624 = vmatpush1.msra.mxu0 0.0
      %625 = vmatprep.subr.mxu0 0.0
      %626 = vmatpush1.msra.mxu0 0.0
      %627 = vmatprep.subr.mxu0 0.0
      %628 = vmatpush1.msra.mxu0 0.0
      %629 = vmatprep.subr.mxu0 0.0
      %630 = vmatpush1.msra.mxu0 0.0
      %631 = vmatprep.subr.mxu0 0.0
      %632 = vmatpush1.msra.mxu0 0.0
      %633 = vmatprep.subr.mxu0 0.0
      %634 = vmatpush1.msra.mxu0 0.0
      %635 = vmatprep.mubr.f32.mxu0 0.0
      %636 = vmatmul.mubr.f32.gmra.mrb[0].mxu0 %v560
      %v637 = vpop.f32.mrb[0].mxu0
      %v638 = vadd.f32 0.0, %v637
      %v639 = vpop.f32.mrb[0].mxu0
      %640 = vmatprep.mubr.f32.mxu0 0.0
      %641 = vmatmul.mubr.f32.gmra.mrb[0].mxu0 %v563
      %v642 = vpop.f32.mrb[0].mxu0
      %v643 = vadd.f32 0.0, %v642
      %v644 = vpop.f32.mrb[0].mxu0
      %645 = vmatprep.mubr.f32.mxu0 0.0
      %646 = vmatmul.mubr.f32.gmra.mrb[0].mxu0 %v566
      %v647 = vpop.f32.mrb[0].mxu0
      %v648 = vadd.f32 0.0, %v647
      %v649 = vpop.f32.mrb[0].mxu0
      %650 = vmatprep.mubr.f32.mxu0 0.0
      %651 = vmatmul.mubr.f32.gmra.mrb[0].mxu0 %v569
      %v652 = vpop.f32.mrb[0].mxu0
      %v653 = vadd.f32 0.0, %v652
      %v654 = vpop.f32.mrb[0].mxu0
      %655 = vdwg.mxu0
      %v657 = vsel %vm558, %v533, 0
      %v660 = vsel %vm558, %v534, 0
      %v663 = vsel %vm558, %v535, 0
      %v666 = vsel %vm558, %v536, 0
      %668 = vmatprep.subr.mxu0 0.0
      %669 = vmatpush1.msra.mxu0 %v529
      %670 = vmatprep.subr.mxu0 0.0
      %671 = vmatpush1.msra.mxu0 %v530
      %672 = vmatprep.subr.mxu0 0.0
      %673 = vmatpush1.msra.mxu0 %v531
      %674 = vmatprep.subr.mxu0 0.0
      %675 = vmatpush1.msra.mxu0 %v532
      %676 = vmatprep.subr.mxu0 0.0
      %677 = vmatpush1.msra.mxu0 0.0
      %678 = vmatprep.subr.mxu0 0.0
      %679 = vmatpush1.msra.mxu0 0.0
      %680 = vmatprep.subr.mxu0 0.0
      %681 = vmatpush1.msra.mxu0 0.0
      %682 = vmatprep.subr.mxu0 0.0
      %683 = vmatpush1.msra.mxu0 0.0
      %684 = vmatprep.subr.mxu0 0.0
      %685 = vmatpush1.msra.mxu0 0.0
      %686 = vmatprep.subr.mxu0 0.0
      %687 = vmatpush1.msra.mxu0 0.0
      %688 = vmatprep.subr.mxu0 0.0
      %689 = vmatpush1.msra.mxu0 0.0
      %690 = vmatprep.subr.mxu0 0.0
      %691 = vmatpush1.msra.mxu0 0.0
      %692 = vmatprep.subr.mxu0 0.0
      %693 = vmatpush1.msra.mxu0 0.0
      %694 = vmatprep.subr.mxu0 0.0
      %695 = vmatpush1.msra.mxu0 0.0
      %696 = vmatprep.subr.mxu0 0.0
      %697 = vmatpush1.msra.mxu0 0.0
      %698 = vmatprep.subr.mxu0 0.0
      %699 = vmatpush1.msra.mxu0 0.0
      %700 = vmatprep.subr.mxu0 0.0
      %701 = vmatpush1.msra.mxu0 0.0
      %702 = vmatprep.subr.mxu0 0.0
      %703 = vmatpush1.msra.mxu0 0.0
      %704 = vmatprep.subr.mxu0 0.0
      %705 = vmatpush1.msra.mxu0 0.0
      %706 = vmatprep.subr.mxu0 0.0
      %707 = vmatpush1.msra.mxu0 0.0
      %708 = vmatprep.subr.mxu0 0.0
      %709 = vmatpush1.msra.mxu0 0.0
      %710 = vmatprep.subr.mxu0 0.0
      %711 = vmatpush1.msra.mxu0 0.0
      %712 = vmatprep.subr.mxu0 0.0
      %713 = vmatpush1.msra.mxu0 0.0
      %714 = vmatprep.subr.mxu0 0.0
      %715 = vmatpush1.msra.mxu0 0.0
      %716 = vmatprep.subr.mxu0 0.0
      %717 = vmatpush1.msra.mxu0 0.0
      %718 = vmatprep.subr.mxu0 0.0
      %719 = vmatpush1.msra.mxu0 0.0
      %720 = vmatprep.subr.mxu0 0.0
      %721 = vmatpush1.msra.mxu0 0.0
      %722 = vmatprep.subr.mxu0 0.0
      %723 = vmatpush1.msra.mxu0 0.0
      %724 = vmatprep.subr.mxu0 0.0
      %725 = vmatpush1.msra.mxu0 0.0
      %726 = vmatprep.subr.mxu0 0.0
      %727 = vmatpush1.msra.mxu0 0.0
      %728 = vmatprep.subr.mxu0 0.0
      %729 = vmatpush1.msra.mxu0 0.0
      %730 = vmatprep.subr.mxu0 0.0
      %731 = vmatpush1.msra.mxu0 0.0
      %732 = vmatprep.mubr.f32.mxu0 0.0
      %733 = vmatmul.mubr.f32.gmra.mrb[0].mxu0 %v657
      %v734 = vpop.f32.mrb[0].mxu0
      %v735 = vadd.f32 %v638, %v734
      %v736 = vpop.f32.mrb[0].mxu0
      %737 = vmatprep.mubr.f32.mxu0 0.0
      %738 = vmatmul.mubr.f32.gmra.mrb[0].mxu0 %v660
      %v739 = vpop.f32.mrb[0].mxu0
      %v740 = vadd.f32 %v643, %v739
      %v741 = vpop.f32.mrb[0].mxu0
      %742 = vmatprep.mubr.f32.mxu0 0.0
      %743 = vmatmul.mubr.f32.gmra.mrb[0].mxu0 %v663
      %v744 = vpop.f32.mrb[0].mxu0
      %v745 = vadd.f32 %v648, %v744
      %v746 = vpop.f32.mrb[0].mxu0
      %747 = vmatprep.mubr.f32.mxu0 0.0
      %748 = vmatmul.mubr.f32.gmra.mrb[0].mxu0 %v666
      %v749 = vpop.f32.mrb[0].mxu0
      %v750 = vadd.f32 %v653, %v749
      %v751 = vpop.f32.mrb[0].mxu0
      %752 = vdwg.mxu0
      %s753 = scalar_lea.vmem %s4, 64
      %v754 = vld [vmem:[%s753] sm:$0xff]
      %v755 = vld [vmem:[%s753 + $0x8] sm:$0xff]
      %v756 = vld [vmem:[%s753 + $0x10] sm:$0xff]
      %v757 = vld [vmem:[%s753 + $0x18] sm:$0xff]
      %758 = vrot.lane.b32.xlu0 %v529, 126
      %v759 = vpop.permute.xlu0 %758
      %760 = vrot.lane.b32.xlu0 %v530, 126
      %v761 = vpop.permute.xlu0 %760
      %762 = vrot.lane.b32.xlu0 %v531, 126
      %v763 = vpop.permute.xlu0 %762
      %764 = vrot.lane.b32.xlu0 %v532, 126
      %v765 = vpop.permute.xlu0 %764
      %v771 = vsel %vm558, %v754, 0
      %v774 = vsel %vm558, %v755, 0
      %v777 = vsel %vm558, %v756, 0
      %v780 = vsel %vm558, %v757, 0
      %782 = vmatprep.subr.mxu0 0.0
      %783 = vmatpush1.msra.mxu0 %v759
      %784 = vmatprep.subr.mxu0 0.0
      %785 = vmatpush1.msra.mxu0 %v761
      %786 = vmatprep.subr.mxu0 0.0
      %787 = vmatpush1.msra.mxu0 %v763
      %788 = vmatprep.subr.mxu0 0.0
      %789 = vmatpush1.msra.mxu0 %v765
      %790 = vmatprep.subr.mxu0 0.0
      %791 = vmatpush1.msra.mxu0 0.0
      %792 = vmatprep.subr.mxu0 0.0
      %793 = vmatpush1.msra.mxu0 0.0
      %794 = vmatprep.subr.mxu0 0.0
      %795 = vmatpush1.msra.mxu0 0.0
      %796 = vmatprep.subr.mxu0 0.0
      %797 = vmatpush1.msra.mxu0 0.0
      %798 = vmatprep.subr.mxu0 0.0
      %799 = vmatpush1.msra.mxu0 0.0
      %800 = vmatprep.subr.mxu0 0.0
      %801 = vmatpush1.msra.mxu0 0.0
      %802 = vmatprep.subr.mxu0 0.0
      %803 = vmatpush1.msra.mxu0 0.0
      %804 = vmatprep.subr.mxu0 0.0
      %805 = vmatpush1.msra.mxu0 0.0
      %806 = vmatprep.subr.mxu0 0.0
      %807 = vmatpush1.msra.mxu0 0.0
      %808 = vmatprep.subr.mxu0 0.0
      %809 = vmatpush1.msra.mxu0 0.0
      %810 = vmatprep.subr.mxu0 0.0
      %811 = vmatpush1.msra.mxu0 0.0
      %812 = vmatprep.subr.mxu0 0.0
      %813 = vmatpush1.msra.mxu0 0.0
      %814 = vmatprep.subr.mxu0 0.0
      %815 = vmatpush1.msra.mxu0 0.0
      %816 = vmatprep.subr.mxu0 0.0
      %817 = vmatpush1.msra.mxu0 0.0
      %818 = vmatprep.subr.mxu0 0.0
      %819 = vmatpush1.msra.mxu0 0.0
      %820 = vmatprep.subr.mxu0 0.0
      %821 = vmatpush1.msra.mxu0 0.0
      %822 = vmatprep.subr.mxu0 0.0
      %823 = vmatpush1.msra.mxu0 0.0
      %824 = vmatprep.subr.mxu0 0.0
      %825 = vmatpush1.msra.mxu0 0.0
      %826 = vmatprep.subr.mxu0 0.0
      %827 = vmatpush1.msra.mxu0 0.0
      %828 = vmatprep.subr.mxu0 0.0
      %829 = vmatpush1.msra.mxu0 0.0
      %830 = vmatprep.subr.mxu0 0.0
      %831 = vmatpush1.msra.mxu0 0.0
      %832 = vmatprep.subr.mxu0 0.0
      %833 = vmatpush1.msra.mxu0 0.0
      %834 = vmatprep.subr.mxu0 0.0
      %835 = vmatpush1.msra.mxu0 0.0
      %836 = vmatprep.subr.mxu0 0.0
      %837 = vmatpush1.msra.mxu0 0.0
      %838 = vmatprep.subr.mxu0 0.0
      %839 = vmatpush1.msra.mxu0 0.0
      %840 = vmatprep.subr.mxu0 0.0
      %841 = vmatpush1.msra.mxu0 0.0
      %842 = vmatprep.subr.mxu0 0.0
      %843 = vmatpush1.msra.mxu0 0.0
      %844 = vmatprep.subr.mxu0 0.0
      %845 = vmatpush1.msra.mxu0 0.0
      %846 = vmatprep.mubr.f32.mxu0 0.0
      %847 = vmatmul.mubr.f32.gmra.mrb[0].mxu0 %v771
      %v848 = vpop.f32.mrb[0].mxu0
      %v849 = vadd.f32 0.0, %v848
      %v850 = vpop.f32.mrb[0].mxu0
      %851 = vmatprep.mubr.f32.mxu0 0.0
      %852 = vmatmul.mubr.f32.gmra.mrb[0].mxu0 %v774
      %v853 = vpop.f32.mrb[0].mxu0
      %v854 = vadd.f32 0.0, %v853
      %v855 = vpop.f32.mrb[0].mxu0
      %856 = vmatprep.mubr.f32.mxu0 0.0
      %857 = vmatmul.mubr.f32.gmra.mrb[0].mxu0 %v777
      %v858 = vpop.f32.mrb[0].mxu0
      %v859 = vadd.f32 0.0, %v858
      %v860 = vpop.f32.mrb[0].mxu0
      %861 = vmatprep.mubr.f32.mxu0 0.0
      %862 = vmatmul.mubr.f32.gmra.mrb[0].mxu0 %v780
      %v863 = vpop.f32.mrb[0].mxu0
      %v864 = vadd.f32 0.0, %v863
      %v865 = vpop.f32.mrb[0].mxu0
      %866 = vdwg.mxu0
      %v867 = vadd.f32 %v735, %v849
      %v868 = vadd.f32 %v740, %v854
      %v869 = vadd.f32 %v745, %v859
      %v870 = vadd.f32 %v750, %v864
      %872 = vset.pattern.permute.xlu0 0
      %873 = vperm.xlu0 %872, %v525
      %v874 = vpop.permute.xlu0 %873
      %877 = vset.pattern.permute.xlu0 0
      %878 = vperm.xlu0 %877, %v526
      %v879 = vpop.permute.xlu0 %878
      %882 = vset.pattern.permute.xlu0 0
      %883 = vperm.xlu0 %882, %v527
      %v884 = vpop.permute.xlu0 %883
      %887 = vset.pattern.permute.xlu0 0
      %888 = vperm.xlu0 %887, %v528
      %v889 = vpop.permute.xlu0 %888
      %v891 = vadd.f32 %v867, %v874
      %v892 = vadd.f32 %v868, %v879
      %v893 = vadd.f32 %v869, %v884
      %v894 = vadd.f32 %v870, %v889
      %v895 = vmax.f32 %v891, 0.0
      %v896 = vmax.f32 %v892, 0.0
      %v897 = vmax.f32 %v893, 0.0
      %v898 = vmax.f32 %v894, 0.0
      %v899 = vld [vmem:[%s510] sm:$0xff]
      %v900 = vld [vmem:[%s510 + $0x8] sm:$0xff]
      %v901 = vld [vmem:[%s6] sm:$0xff]
      %v902 = vld [vmem:[%s6 + $0x8] sm:$0xf]
      %v903 = vld [vmem:[%s6 + $0x10] sm:$0xff]
      %v904 = vld [vmem:[%s6 + $0x18] sm:$0xf]
      %v905 = vld [vmem:[%s6 + $0x20] sm:$0xff]
      %v906 = vld [vmem:[%s6 + $0x28] sm:$0xf]
      %v907 = vld [vmem:[%s6 + $0x30] sm:$0xff]
      %v908 = vld [vmem:[%s6 + $0x38] sm:$0xf]
      %v909 = vld [vmem:[%s6 + $0x40] sm:$0xff]
      %v910 = vld [vmem:[%s6 + $0x48] sm:$0xf]
      %v911 = vld [vmem:[%s6 + $0x50] sm:$0xff]
      %v912 = vld [vmem:[%s6 + $0x58] sm:$0xf]
      %v913 = vld [vmem:[%s6 + $0x60] sm:$0xff]
      %v914 = vld [vmem:[%s6 + $0x68] sm:$0xf]
      %v915 = vld [vmem:[%s6 + $0x70] sm:$0xff]
      %v916 = vld [vmem:[%s6 + $0x78] sm:$0xf]
      %v917 = vld [vmem:[%s7] sm:$0xff]
      %v918 = vld [vmem:[%s7 + $0x8] sm:$0xf]
      %v919 = vld [vmem:[%s7 + $0x10] sm:$0xff]
      %v920 = vld [vmem:[%s7 + $0x18] sm:$0xf]
      %v921 = vld [vmem:[%s7 + $0x20] sm:$0xff]
      %v922 = vld [vmem:[%s7 + $0x28] sm:$0xf]
      %v923 = vld [vmem:[%s7 + $0x30] sm:$0xff]
      %v924 = vld [vmem:[%s7 + $0x38] sm:$0xf]
      %v925 = vld [vmem:[%s7 + $0x40] sm:$0xff]
      %v926 = vld [vmem:[%s7 + $0x48] sm:$0xf]
      %v927 = vld [vmem:[%s7 + $0x50] sm:$0xff]
      %v928 = vld [vmem:[%s7 + $0x58] sm:$0xf]
      %v929 = vld [vmem:[%s7 + $0x60] sm:$0xff]
      %v930 = vld [vmem:[%s7 + $0x68] sm:$0xf]
      %v931 = vld [vmem:[%s7 + $0x70] sm:$0xff]
      %v932 = vld [vmem:[%s7 + $0x78] sm:$0xf]
      %v933 = vld [vmem:[%s8] sm:$0xff]
      %v934 = vld [vmem:[%s8 + $0x8] sm:$0xff]
      %v935 = vld [vmem:[%s8 + $0x10] sm:$0xff]
      %v936 = vld [vmem:[%s8 + $0x18] sm:$0xff]
      %v937 = vld [vmem:[%s8 + $0x20] sm:$0xff]
      %v938 = vld [vmem:[%s8 + $0x28] sm:$0xff]
      %v939 = vld [vmem:[%s8 + $0x30] sm:$0xff]
      %v940 = vld [vmem:[%s8 + $0x38] sm:$0xff]
      %v941 = vld [vmem:[%s8 + $0x40] sm:$0xff]
      %v942 = vld [vmem:[%s8 + $0x48] sm:$0xff]
      %v943 = vld [vmem:[%s8 + $0x50] sm:$0xff]
      %v944 = vld [vmem:[%s8 + $0x58] sm:$0xff]
      %v945 = vld [vmem:[%s8 + $0x60] sm:$0xff]
      %v946 = vld [vmem:[%s8 + $0x68] sm:$0xff]
      %v947 = vld [vmem:[%s8 + $0x70] sm:$0xff]
      %v948 = vld [vmem:[%s8 + $0x78] sm:$0xff]
      %v949 = vld [vmem:[%s8 + $0x80] sm:$0xff]
      %v950 = vld [vmem:[%s8 + $0x88] sm:$0xff]
      %v951 = vld [vmem:[%s8 + $0x90] sm:$0xff]
      %v952 = vld [vmem:[%s8 + $0x98] sm:$0xff]
      %v953 = vld [vmem:[%s8 + $0xa0] sm:$0xff]
      %v954 = vld [vmem:[%s8 + $0xa8] sm:$0xff]
      %v955 = vld [vmem:[%s8 + $0xb0] sm:$0xff]
      %v956 = vld [vmem:[%s8 + $0xb8] sm:$0xff]
      %v957 = vld [vmem:[%s8 + $0xc0] sm:$0xff]
      %v958 = vld [vmem:[%s8 + $0xc8] sm:$0xff]
      %v959 = vld [vmem:[%s8 + $0xd0] sm:$0xff]
      %v960 = vld [vmem:[%s8 + $0xd8] sm:$0xff]
      %v961 = vld [vmem:[%s8 + $0xe0] sm:$0xff]
      %v962 = vld [vmem:[%s8 + $0xe8] sm:$0xff]
      %v963 = vld [vmem:[%s8 + $0xf0] sm:$0xff]
      %v964 = vld [vmem:[%s8 + $0xf8] sm:$0xff]
      %966 = vset.pattern.permute.xlu0 0
      %967 = vperm.xlu0 %966, %v917
      %v968 = vpop.permute.xlu0 %967
      %971 = vset.pattern.permute.xlu0 0
      %972 = vperm.xlu0 %971, %v918
      %v973 = vpop.permute.xlu0 %972
      %976 = vset.pattern.permute.xlu0 0
      %977 = vperm.xlu0 %976, %v919
      %v978 = vpop.permute.xlu0 %977
      %981 = vset.pattern.permute.xlu0 0
      %982 = vperm.xlu0 %981, %v920
      %v983 = vpop.permute.xlu0 %982
      %986 = vset.pattern.permute.xlu0 0
      %987 = vperm.xlu0 %986, %v921
      %v988 = vpop.permute.xlu0 %987
      %991 = vset.pattern.permute.xlu0 0
      %992 = vperm.xlu0 %991, %v922
      %v993 = vpop.permute.xlu0 %992
      %996 = vset.pattern.permute.xlu0 0
      %997 = vperm.xlu0 %996, %v923
      %v998 = vpop.permute.xlu0 %997
      %1001 = vset.pattern.permute.xlu0 0
      %1002 = vperm.xlu0 %1001, %v924
      %v1003 = vpop.permute.xlu0 %1002
      %1006 = vset.pattern.permute.xlu0 0
      %1007 = vperm.xlu0 %1006, %v925
      %v1008 = vpop.permute.xlu0 %1007
      %1011 = vset.pattern.permute.xlu0 0
      %1012 = vperm.xlu0 %1011, %v926
      %v1013 = vpop.permute.xlu0 %1012
      %1016 = vset.pattern.permute.xlu0 0
      %1017 = vperm.xlu0 %1016, %v927
      %v1018 = vpop.permute.xlu0 %1017
      %1021 = vset.pattern.permute.xlu0 0
      %1022 = vperm.xlu0 %1021, %v928
      %v1023 = vpop.permute.xlu0 %1022
      %1026 = vset.pattern.permute.xlu0 0
      %1027 = vperm.xlu0 %1026, %v929
      %v1028 = vpop.permute.xlu0 %1027
      %1031 = vset.pattern.permute.xlu0 0
      %1032 = vperm.xlu0 %1031, %v930
      %v1033 = vpop.permute.xlu0 %1032
      %1036 = vset.pattern.permute.xlu0 0
      %1037 = vperm.xlu0 %1036, %v931
      %v1038 = vpop.permute.xlu0 %1037
      %1041 = vset.pattern.permute.xlu0 0
      %1042 = vperm.xlu0 %1041, %v932
      %v1043 = vpop.permute.xlu0 %1042
      %v1046 = vsel %vm558, %v901, 0
      %v1049 = vsel %vm558, %v902, 0
      %1051 = vmatprep.subr.mxu0 0.0
      %1052 = vmatpush1.msra.mxu0 %v895
      %1053 = vmatprep.subr.mxu0 0.0
      %1054 = vmatpush1.msra.mxu0 %v896
      %1055 = vmatprep.subr.mxu0 0.0
      %1056 = vmatpush1.msra.mxu0 %v897
      %1057 = vmatprep.subr.mxu0 0.0
      %1058 = vmatpush1.msra.mxu0 %v898
      %1059 = vmatprep.subr.mxu0 0.0
      %1060 = vmatpush1.msra.mxu0 0.0
      %1061 = vmatprep.subr.mxu0 0.0
      %1062 = vmatpush1.msra.mxu0 0.0
      %1063 = vmatprep.subr.mxu0 0.0
      %1064 = vmatpush1.msra.mxu0 0.0
      %1065 = vmatprep.subr.mxu0 0.0
      %1066 = vmatpush1.msra.mxu0 0.0
      %1067 = vmatprep.subr.mxu0 0.0
      %1068 = vmatpush1.msra.mxu0 0.0
      %1069 = vmatprep.subr.mxu0 0.0
      %1070 = vmatpush1.msra.mxu0 0.0
      %1071 = vmatprep.subr.mxu0 0.0
      %1072 = vmatpush1.msra.mxu0 0.0
      %1073 = vmatprep.subr.mxu0 0.0
      %1074 = vmatpush1.msra.mxu0 0.0
      %1075 = vmatprep.subr.mxu0 0.0
      %1076 = vmatpush1.msra.mxu0 0.0
      %1077 = vmatprep.subr.mxu0 0.0
      %1078 = vmatpush1.msra.mxu0 0.0
      %1079 = vmatprep.subr.mxu0 0.0
      %1080 = vmatpush1.msra.mxu0 0.0
      %1081 = vmatprep.subr.mxu0 0.0
      %1082 = vmatpush1.msra.mxu0 0.0
      %1083 = vmatprep.subr.mxu0 0.0
      %1084 = vmatpush1.msra.mxu0 0.0
      %1085 = vmatprep.subr.mxu0 0.0
      %1086 = vmatpush1.msra.mxu0 0.0
      %1087 = vmatprep.subr.mxu0 0.0
      %1088 = vmatpush1.msra.mxu0 0.0
      %1089 = vmatprep.subr.mxu0 0.0
      %1090 = vmatpush1.msra.mxu0 0.0
      %1091 = vmatprep.subr.mxu0 0.0
      %1092 = vmatpush1.msra.mxu0 0.0
      %1093 = vmatprep.subr.mxu0 0.0
      %1094 = vmatpush1.msra.mxu0 0.0
      %1095 = vmatprep.subr.mxu0 0.0
      %1096 = vmatpush1.msra.mxu0 0.0
      %1097 = vmatprep.subr.mxu0 0.0
      %1098 = vmatpush1.msra.mxu0 0.0
      %1099 = vmatprep.subr.mxu0 0.0
      %1100 = vmatpush1.msra.mxu0 0.0
      %1101 = vmatprep.subr.mxu0 0.0
      %1102 = vmatpush1.msra.mxu0 0.0
      %1103 = vmatprep.subr.mxu0 0.0
      %1104 = vmatpush1.msra.mxu0 0.0
      %1105 = vmatprep.subr.mxu0 0.0
      %1106 = vmatpush1.msra.mxu0 0.0
      %1107 = vmatprep.subr.mxu0 0.0
      %1108 = vmatpush1.msra.mxu0 0.0
      %1109 = vmatprep.subr.mxu0 0.0
      %1110 = vmatpush1.msra.mxu0 0.0
      %1111 = vmatprep.subr.mxu0 0.0
      %1112 = vmatpush1.msra.mxu0 0.0
      %1113 = vmatprep.subr.mxu0 0.0
      %1114 = vmatpush1.msra.mxu0 0.0
      %1115 = vmatprep.mubr.f32.mxu0 0.0
      %1116 = vmatmul.mubr.f32.gmra.mrb[0].mxu0 %v1046
      %v1117 = vpop.f32.mrb[0].mxu0
      %v1118 = vadd.f32 %v968, %v1117
      %v1119 = vpop.f32.mrb[0].mxu0
      %1120 = vmatprep.mubr.f32.mxu0 0.0
      %1121 = vmatmul.mubr.f32.gmra.mrb[0].mxu0 %v1049
      %v1122 = vpop.f32.mrb[0].mxu0
      %v1123 = vadd.f32 %v973, %v1122
      %v1124 = vpop.f32.mrb[0].mxu0
      %1125 = vdwg.mxu0
      %v1127 = vsel %vm558, %v903, 0
      %v1130 = vsel %vm558, %v904, 0
      %1132 = vmatprep.subr.mxu0 0.0
      %1133 = vmatpush1.msra.mxu0 %v895
      %1134 = vmatprep.subr.mxu0 0.0
      %1135 = vmatpush1.msra.mxu0 %v896
      %1136 = vmatprep.subr.mxu0 0.0
      %1137 = vmatpush1.msra.mxu0 %v897
      %1138 = vmatprep.subr.mxu0 0.0
      %1139 = vmatpush1.msra.mxu0 %v898
      %1140 = vmatprep.subr.mxu0 0.0
      %1141 = vmatpush1.msra.mxu0 0.0
      %1142 = vmatprep.subr.mxu0 0.0
      %1143 = vmatpush1.msra.mxu0 0.0
      %1144 = vmatprep.subr.mxu0 0.0
      %1145 = vmatpush1.msra.mxu0 0.0
      %1146 = vmatprep.subr.mxu0 0.0
      %1147 = vmatpush1.msra.mxu0 0.0
      %1148 = vmatprep.subr.mxu0 0.0
      %1149 = vmatpush1.msra.mxu0 0.0
      %1150 = vmatprep.subr.mxu0 0.0
      %1151 = vmatpush1.msra.mxu0 0.0
      %1152 = vmatprep.subr.mxu0 0.0
      %1153 = vmatpush1.msra.mxu0 0.0
      %1154 = vmatprep.subr.mxu0 0.0
      %1155 = vmatpush1.msra.mxu0 0.0
      %1156 = vmatprep.subr.mxu0 0.0
      %1157 = vmatpush1.msra.mxu0 0.0
      %1158 = vmatprep.subr.mxu0 0.0
      %1159 = vmatpush1.msra.mxu0 0.0
      %1160 = vmatprep.subr.mxu0 0.0
      %1161 = vmatpush1.msra.mxu0 0.0
      %1162 = vmatprep.subr.mxu0 0.0
      %1163 = vmatpush1.msra.mxu0 0.0
      %1164 = vmatprep.subr.mxu0 0.0
      %1165 = vmatpush1.msra.mxu0 0.0
      %1166 = vmatprep.subr.mxu0 0.0
      %1167 = vmatpush1.msra.mxu0 0.0
      %1168 = vmatprep.subr.mxu0 0.0
      %1169 = vmatpush1.msra.mxu0 0.0
      %1170 = vmatprep.subr.mxu0 0.0
      %1171 = vmatpush1.msra.mxu0 0.0
      %1172 = vmatprep.subr.mxu0 0.0
      %1173 = vmatpush1.msra.mxu0 0.0
      %1174 = vmatprep.subr.mxu0 0.0
      %1175 = vmatpush1.msra.mxu0 0.0
      %1176 = vmatprep.subr.mxu0 0.0
      %1177 = vmatpush1.msra.mxu0 0.0
      %1178 = vmatprep.subr.mxu0 0.0
      %1179 = vmatpush1.msra.mxu0 0.0
      %1180 = vmatprep.subr.mxu0 0.0
      %1181 = vmatpush1.msra.mxu0 0.0
      %1182 = vmatprep.subr.mxu0 0.0
      %1183 = vmatpush1.msra.mxu0 0.0
      %1184 = vmatprep.subr.mxu0 0.0
      %1185 = vmatpush1.msra.mxu0 0.0
      %1186 = vmatprep.subr.mxu0 0.0
      %1187 = vmatpush1.msra.mxu0 0.0
      %1188 = vmatprep.subr.mxu0 0.0
      %1189 = vmatpush1.msra.mxu0 0.0
      %1190 = vmatprep.subr.mxu0 0.0
      %1191 = vmatpush1.msra.mxu0 0.0
      %1192 = vmatprep.subr.mxu0 0.0
      %1193 = vmatpush1.msra.mxu0 0.0
      %1194 = vmatprep.subr.mxu0 0.0
      %1195 = vmatpush1.msra.mxu0 0.0
      %1196 = vmatprep.mubr.f32.mxu0 0.0
      %1197 = vmatmul.mubr.f32.gmra.mrb[0].mxu0 %v1127
      %v1198 = vpop.f32.mrb[0].mxu0
      %v1199 = vadd.f32 %v978, %v1198
      %v1200 = vpop.f32.mrb[0].mxu0
      %1201 = vmatprep.mubr.f32.mxu0 0.0
      %1202 = vmatmul.mubr.f32.gmra.mrb[0].mxu0 %v1130
      %v1203 = vpop.f32.mrb[0].mxu0
      %v1204 = vadd.f32 %v983, %v1203
      %v1205 = vpop.f32.mrb[0].mxu0
      %1206 = vdwg.mxu0
      %v1208 = vsel %vm558, %v905, 0
      %v1211 = vsel %vm558, %v906, 0
      %1213 = vmatprep.subr.mxu0 0.0
      %1214 = vmatpush1.msra.mxu0 %v895
      %1215 = vmatprep.subr.mxu0 0.0
      %1216 = vmatpush1.msra.mxu0 %v896
      %1217 = vmatprep.subr.mxu0 0.0
      %1218 = vmatpush1.msra.mxu0 %v897
      %1219 = vmatprep.subr.mxu0 0.0
      %1220 = vmatpush1.msra.mxu0 %v898
      %1221 = vmatprep.subr.mxu0 0.0
      %1222 = vmatpush1.msra.mxu0 0.0
      %1223 = vmatprep.subr.mxu0 0.0
      %1224 = vmatpush1.msra.mxu0 0.0
      %1225 = vmatprep.subr.mxu0 0.0
      %1226 = vmatpush1.msra.mxu0 0.0
      %1227 = vmatprep.subr.mxu0 0.0
      %1228 = vmatpush1.msra.mxu0 0.0
      %1229 = vmatprep.subr.mxu0 0.0
      %1230 = vmatpush1.msra.mxu0 0.0
      %1231 = vmatprep.subr.mxu0 0.0
      %1232 = vmatpush1.msra.mxu0 0.0
      %1233 = vmatprep.subr.mxu0 0.0
      %1234 = vmatpush1.msra.mxu0 0.0
      %1235 = vmatprep.subr.mxu0 0.0
      %1236 = vmatpush1.msra.mxu0 0.0
      %1237 = vmatprep.subr.mxu0 0.0
      %1238 = vmatpush1.msra.mxu0 0.0
      %1239 = vmatprep.subr.mxu0 0.0
      %1240 = vmatpush1.msra.mxu0 0.0
      %1241 = vmatprep.subr.mxu0 0.0
      %1242 = vmatpush1.msra.mxu0 0.0
      %1243 = vmatprep.subr.mxu0 0.0
      %1244 = vmatpush1.msra.mxu0 0.0
      %1245 = vmatprep.subr.mxu0 0.0
      %1246 = vmatpush1.msra.mxu0 0.0
      %1247 = vmatprep.subr.mxu0 0.0
      %1248 = vmatpush1.msra.mxu0 0.0
      %1249 = vmatprep.subr.mxu0 0.0
      %1250 = vmatpush1.msra.mxu0 0.0
      %1251 = vmatprep.subr.mxu0 0.0
      %1252 = vmatpush1.msra.mxu0 0.0
      %1253 = vmatprep.subr.mxu0 0.0
      %1254 = vmatpush1.msra.mxu0 0.0
      %1255 = vmatprep.subr.mxu0 0.0
      %1256 = vmatpush1.msra.mxu0 0.0
      %1257 = vmatprep.subr.mxu0 0.0
      %1258 = vmatpush1.msra.mxu0 0.0
      %1259 = vmatprep.subr.mxu0 0.0
      %1260 = vmatpush1.msra.mxu0 0.0
      %1261 = vmatprep.subr.mxu0 0.0
      %1262 = vmatpush1.msra.mxu0 0.0
      %1263 = vmatprep.subr.mxu0 0.0
      %1264 = vmatpush1.msra.mxu0 0.0
      %1265 = vmatprep.subr.mxu0 0.0
      %1266 = vmatpush1.msra.mxu0 0.0
      %1267 = vmatprep.subr.mxu0 0.0
      %1268 = vmatpush1.msra.mxu0 0.0
      %1269 = vmatprep.subr.mxu0 0.0
      %1270 = vmatpush1.msra.mxu0 0.0
      %1271 = vmatprep.subr.mxu0 0.0
      %1272 = vmatpush1.msra.mxu0 0.0
      %1273 = vmatprep.subr.mxu0 0.0
      %1274 = vmatpush1.msra.mxu0 0.0
      %1275 = vmatprep.subr.mxu0 0.0
      %1276 = vmatpush1.msra.mxu0 0.0
      %1277 = vmatprep.mubr.f32.mxu0 0.0
      %1278 = vmatmul.mubr.f32.gmra.mrb[0].mxu0 %v1208
      %v1279 = vpop.f32.mrb[0].mxu0
      %v1280 = vadd.f32 %v988, %v1279
      %v1281 = vpop.f32.mrb[0].mxu0
      %1282 = vmatprep.mubr.f32.mxu0 0.0
      %1283 = vmatmul.mubr.f32.gmra.mrb[0].mxu0 %v1211
      %v1284 = vpop.f32.mrb[0].mxu0
      %v1285 = vadd.f32 %v993, %v1284
      %v1286 = vpop.f32.mrb[0].mxu0
      %1287 = vdwg.mxu0
      %v1289 = vsel %vm558, %v907, 0
      %v1292 = vsel %vm558, %v908, 0
      %1294 = vmatprep.subr.mxu0 0.0
      %1295 = vmatpush1.msra.mxu0 %v895
      %1296 = vmatprep.subr.mxu0 0.0
      %1297 = vmatpush1.msra.mxu0 %v896
      %1298 = vmatprep.subr.mxu0 0.0
      %1299 = vmatpush1.msra.mxu0 %v897
      %1300 = vmatprep.subr.mxu0 0.0
      %1301 = vmatpush1.msra.mxu0 %v898
      %1302 = vmatprep.subr.mxu0 0.0
      %1303 = vmatpush1.msra.mxu0 0.0
      %1304 = vmatprep.subr.mxu0 0.0
      %1305 = vmatpush1.msra.mxu0 0.0
      %1306 = vmatprep.subr.mxu0 0.0
      %1307 = vmatpush1.msra.mxu0 0.0
      %1308 = vmatprep.subr.mxu0 0.0
      %1309 = vmatpush1.msra.mxu0 0.0
      %1310 = vmatprep.subr.mxu0 0.0
      %1311 = vmatpush1.msra.mxu0 0.0
      %1312 = vmatprep.subr.mxu0 0.0
      %1313 = vmatpush1.msra.mxu0 0.0
      %1314 = vmatprep.subr.mxu0 0.0
      %1315 = vmatpush1.msra.mxu0 0.0
      %1316 = vmatprep.subr.mxu0 0.0
      %1317 = vmatpush1.msra.mxu0 0.0
      %1318 = vmatprep.subr.mxu0 0.0
      %1319 = vmatpush1.msra.mxu0 0.0
      %1320 = vmatprep.subr.mxu0 0.0
      %1321 = vmatpush1.msra.mxu0 0.0
      %1322 = vmatprep.subr.mxu0 0.0
      %1323 = vmatpush1.msra.mxu0 0.0
      %1324 = vmatprep.subr.mxu0 0.0
      %1325 = vmatpush1.msra.mxu0 0.0
      %1326 = vmatprep.subr.mxu0 0.0
      %1327 = vmatpush1.msra.mxu0 0.0
      %1328 = vmatprep.subr.mxu0 0.0
      %1329 = vmatpush1.msra.mxu0 0.0
      %1330 = vmatprep.subr.mxu0 0.0
      %1331 = vmatpush1.msra.mxu0 0.0
      %1332 = vmatprep.subr.mxu0 0.0
      %1333 = vmatpush1.msra.mxu0 0.0
      %1334 = vmatprep.subr.mxu0 0.0
      %1335 = vmatpush1.msra.mxu0 0.0
      %1336 = vmatprep.subr.mxu0 0.0
      %1337 = vmatpush1.msra.mxu0 0.0
      %1338 = vmatprep.subr.mxu0 0.0
      %1339 = vmatpush1.msra.mxu0 0.0
      %1340 = vmatprep.subr.mxu0 0.0
      %1341 = vmatpush1.msra.mxu0 0.0
      %1342 = vmatprep.subr.mxu0 0.0
      %1343 = vmatpush1.msra.mxu0 0.0
      %1344 = vmatprep.subr.mxu0 0.0
      %1345 = vmatpush1.msra.mxu0 0.0
      %1346 = vmatprep.subr.mxu0 0.0
      %1347 = vmatpush1.msra.mxu0 0.0
      %1348 = vmatprep.subr.mxu0 0.0
      %1349 = vmatpush1.msra.mxu0 0.0
      %1350 = vmatprep.subr.mxu0 0.0
      %1351 = vmatpush1.msra.mxu0 0.0
      %1352 = vmatprep.subr.mxu0 0.0
      %1353 = vmatpush1.msra.mxu0 0.0
      %1354 = vmatprep.subr.mxu0 0.0
      %1355 = vmatpush1.msra.mxu0 0.0
      %1356 = vmatprep.subr.mxu0 0.0
      %1357 = vmatpush1.msra.mxu0 0.0
      %1358 = vmatprep.mubr.f32.mxu0 0.0
      %1359 = vmatmul.mubr.f32.gmra.mrb[0].mxu0 %v1289
      %v1360 = vpop.f32.mrb[0].mxu0
      %v1361 = vadd.f32 %v998, %v1360
      %v1362 = vpop.f32.mrb[0].mxu0
      %1363 = vmatprep.mubr.f32.mxu0 0.0
      %1364 = vmatmul.mubr.f32.gmra.mrb[0].mxu0 %v1292
      %v1365 = vpop.f32.mrb[0].mxu0
      %v1366 = vadd.f32 %v1003, %v1365
      %v1367 = vpop.f32.mrb[0].mxu0
      %1368 = vdwg.mxu0
      %v1370 = vsel %vm558, %v909, 0
      %v1373 = vsel %vm558, %v910, 0
      %1375 = vmatprep.subr.mxu0 0.0
      %1376 = vmatpush1.msra.mxu0 %v895
      %1377 = vmatprep.subr.mxu0 0.0
      %1378 = vmatpush1.msra.mxu0 %v896
      %1379 = vmatprep.subr.mxu0 0.0
      %1380 = vmatpush1.msra.mxu0 %v897
      %1381 = vmatprep.subr.mxu0 0.0
      %1382 = vmatpush1.msra.mxu0 %v898
      %1383 = vmatprep.subr.mxu0 0.0
      %1384 = vmatpush1.msra.mxu0 0.0
      %1385 = vmatprep.subr.mxu0 0.0
      %1386 = vmatpush1.msra.mxu0 0.0
      %1387 = vmatprep.subr.mxu0 0.0
      %1388 = vmatpush1.msra.mxu0 0.0
      %1389 = vmatprep.subr.mxu0 0.0
      %1390 = vmatpush1.msra.mxu0 0.0
      %1391 = vmatprep.subr.mxu0 0.0
      %1392 = vmatpush1.msra.mxu0 0.0
      %1393 = vmatprep.subr.mxu0 0.0
      %1394 = vmatpush1.msra.mxu0 0.0
      %1395 = vmatprep.subr.mxu0 0.0
      %1396 = vmatpush1.msra.mxu0 0.0
      %1397 = vmatprep.subr.mxu0 0.0
      %1398 = vmatpush1.msra.mxu0 0.0
      %1399 = vmatprep.subr.mxu0 0.0
      %1400 = vmatpush1.msra.mxu0 0.0
      %1401 = vmatprep.subr.mxu0 0.0
      %1402 = vmatpush1.msra.mxu0 0.0
      %1403 = vmatprep.subr.mxu0 0.0
      %1404 = vmatpush1.msra.mxu0 0.0
      %1405 = vmatprep.subr.mxu0 0.0
      %1406 = vmatpush1.msra.mxu0 0.0
      %1407 = vmatprep.subr.mxu0 0.0
      %1408 = vmatpush1.msra.mxu0 0.0
      %1409 = vmatprep.subr.mxu0 0.0
      %1410 = vmatpush1.msra.mxu0 0.0
      %1411 = vmatprep.subr.mxu0 0.0
      %1412 = vmatpush1.msra.mxu0 0.0
      %1413 = vmatprep.subr.mxu0 0.0
      %1414 = vmatpush1.msra.mxu0 0.0
      %1415 = vmatprep.subr.mxu0 0.0
      %1416 = vmatpush1.msra.mxu0 0.0
      %1417 = vmatprep.subr.mxu0 0.0
      %1418 = vmatpush1.msra.mxu0 0.0
      %1419 = vmatprep.subr.mxu0 0.0
      %1420 = vmatpush1.msra.mxu0 0.0
      %1421 = vmatprep.subr.mxu0 0.0
      %1422 = vmatpush1.msra.mxu0 0.0
      %1423 = vmatprep.subr.mxu0 0.0
      %1424 = vmatpush1.msra.mxu0 0.0
      %1425 = vmatprep.subr.mxu0 0.0
      %1426 = vmatpush1.msra.mxu0 0.0
      %1427 = vmatprep.subr.mxu0 0.0
      %1428 = vmatpush1.msra.mxu0 0.0
      %1429 = vmatprep.subr.mxu0 0.0
      %1430 = vmatpush1.msra.mxu0 0.0
      %1431 = vmatprep.subr.mxu0 0.0
      %1432 = vmatpush1.msra.mxu0 0.0
      %1433 = vmatprep.subr.mxu0 0.0
      %1434 = vmatpush1.msra.mxu0 0.0
      %1435 = vmatprep.subr.mxu0 0.0
      %1436 = vmatpush1.msra.mxu0 0.0
      %1437 = vmatprep.subr.mxu0 0.0
      %1438 = vmatpush1.msra.mxu0 0.0
      %1439 = vmatprep.mubr.f32.mxu0 0.0
      %1440 = vmatmul.mubr.f32.gmra.mrb[0].mxu0 %v1370
      %v1441 = vpop.f32.mrb[0].mxu0
      %v1442 = vadd.f32 %v1008, %v1441
      %v1443 = vpop.f32.mrb[0].mxu0
      %1444 = vmatprep.mubr.f32.mxu0 0.0
      %1445 = vmatmul.mubr.f32.gmra.mrb[0].mxu0 %v1373
      %v1446 = vpop.f32.mrb[0].mxu0
      %v1447 = vadd.f32 %v1013, %v1446
      %v1448 = vpop.f32.mrb[0].mxu0
      %1449 = vdwg.mxu0
      %v1451 = vsel %vm558, %v911, 0
      %v1454 = vsel %vm558, %v912, 0
      %1456 = vmatprep.subr.mxu0 0.0
      %1457 = vmatpush1.msra.mxu0 %v895
      %1458 = vmatprep.subr.mxu0 0.0
      %1459 = vmatpush1.msra.mxu0 %v896
      %1460 = vmatprep.subr.mxu0 0.0
      %1461 = vmatpush1.msra.mxu0 %v897
      %1462 = vmatprep.subr.mxu0 0.0
      %1463 = vmatpush1.msra.mxu0 %v898
      %1464 = vmatprep.subr.mxu0 0.0
      %1465 = vmatpush1.msra.mxu0 0.0
      %1466 = vmatprep.subr.mxu0 0.0
      %1467 = vmatpush1.msra.mxu0 0.0
      %1468 = vmatprep.subr.mxu0 0.0
      %1469 = vmatpush1.msra.mxu0 0.0
      %1470 = vmatprep.subr.mxu0 0.0
      %1471 = vmatpush1.msra.mxu0 0.0
      %1472 = vmatprep.subr.mxu0 0.0
      %1473 = vmatpush1.msra.mxu0 0.0
      %1474 = vmatprep.subr.mxu0 0.0
      %1475 = vmatpush1.msra.mxu0 0.0
      %1476 = vmatprep.subr.mxu0 0.0
      %1477 = vmatpush1.msra.mxu0 0.0
      %1478 = vmatprep.subr.mxu0 0.0
      %1479 = vmatpush1.msra.mxu0 0.0
      %1480 = vmatprep.subr.mxu0 0.0
      %1481 = vmatpush1.msra.mxu0 0.0
      %1482 = vmatprep.subr.mxu0 0.0
      %1483 = vmatpush1.msra.mxu0 0.0
      %1484 = vmatprep.subr.mxu0 0.0
      %1485 = vmatpush1.msra.mxu0 0.0
      %1486 = vmatprep.subr.mxu0 0.0
      %1487 = vmatpush1.msra.mxu0 0.0
      %1488 = vmatprep.subr.mxu0 0.0
      %1489 = vmatpush1.msra.mxu0 0.0
      %1490 = vmatprep.subr.mxu0 0.0
      %1491 = vmatpush1.msra.mxu0 0.0
      %1492 = vmatprep.subr.mxu0 0.0
      %1493 = vmatpush1.msra.mxu0 0.0
      %1494 = vmatprep.subr.mxu0 0.0
      %1495 = vmatpush1.msra.mxu0 0.0
      %1496 = vmatprep.subr.mxu0 0.0
      %1497 = vmatpush1.msra.mxu0 0.0
      %1498 = vmatprep.subr.mxu0 0.0
      %1499 = vmatpush1.msra.mxu0 0.0
      %1500 = vmatprep.subr.mxu0 0.0
      %1501 = vmatpush1.msra.mxu0 0.0
      %1502 = vmatprep.subr.mxu0 0.0
      %1503 = vmatpush1.msra.mxu0 0.0
      %1504 = vmatprep.subr.mxu0 0.0
      %1505 = vmatpush1.msra.mxu0 0.0
      %1506 = vmatprep.subr.mxu0 0.0
      %1507 = vmatpush1.msra.mxu0 0.0
      %1508 = vmatprep.subr.mxu0 0.0
      %1509 = vmatpush1.msra.mxu0 0.0
      %1510 = vmatprep.subr.mxu0 0.0
      %1511 = vmatpush1.msra.mxu0 0.0
      %1512 = vmatprep.subr.mxu0 0.0
      %1513 = vmatpush1.msra.mxu0 0.0
      %1514 = vmatprep.subr.mxu0 0.0
      %1515 = vmatpush1.msra.mxu0 0.0
      %1516 = vmatprep.subr.mxu0 0.0
      %1517 = vmatpush1.msra.mxu0 0.0
      %1518 = vmatprep.subr.mxu0 0.0
      %1519 = vmatpush1.msra.mxu0 0.0
      %1520 = vmatprep.mubr.f32.mxu0 0.0
      %1521 = vmatmul.mubr.f32.gmra.mrb[0].mxu0 %v1451
      %v1522 = vpop.f32.mrb[0].mxu0
      %v1523 = vadd.f32 %v1018, %v1522
      %v1524 = vpop.f32.mrb[0].mxu0
      %1525 = vmatprep.mubr.f32.mxu0 0.0
      %1526 = vmatmul.mubr.f32.gmra.mrb[0].mxu0 %v1454
      %v1527 = vpop.f32.mrb[0].mxu0
      %v1528 = vadd.f32 %v1023, %v1527
      %v1529 = vpop.f32.mrb[0].mxu0
      %1530 = vdwg.mxu0
      %v1532 = vsel %vm558, %v913, 0
      %v1535 = vsel %vm558, %v914, 0
      %1537 = vmatprep.subr.mxu0 0.0
      %1538 = vmatpush1.msra.mxu0 %v895
      %1539 = vmatprep.subr.mxu0 0.0
      %1540 = vmatpush1.msra.mxu0 %v896
      %1541 = vmatprep.subr.mxu0 0.0
      %1542 = vmatpush1.msra.mxu0 %v897
      %1543 = vmatprep.subr.mxu0 0.0
      %1544 = vmatpush1.msra.mxu0 %v898
      %1545 = vmatprep.subr.mxu0 0.0
      %1546 = vmatpush1.msra.mxu0 0.0
      %1547 = vmatprep.subr.mxu0 0.0
      %1548 = vmatpush1.msra.mxu0 0.0
      %1549 = vmatprep.subr.mxu0 0.0
      %1550 = vmatpush1.msra.mxu0 0.0
      %1551 = vmatprep.subr.mxu0 0.0
      %1552 = vmatpush1.msra.mxu0 0.0
      %1553 = vmatprep.subr.mxu0 0.0
      %1554 = vmatpush1.msra.mxu0 0.0
      %1555 = vmatprep.subr.mxu0 0.0
      %1556 = vmatpush1.msra.mxu0 0.0
      %1557 = vmatprep.subr.mxu0 0.0
      %1558 = vmatpush1.msra.mxu0 0.0
      %1559 = vmatprep.subr.mxu0 0.0
      %1560 = vmatpush1.msra.mxu0 0.0
      %1561 = vmatprep.subr.mxu0 0.0
      %1562 = vmatpush1.msra.mxu0 0.0
      %1563 = vmatprep.subr.mxu0 0.0
      %1564 = vmatpush1.msra.mxu0 0.0
      %1565 = vmatprep.subr.mxu0 0.0
      %1566 = vmatpush1.msra.mxu0 0.0
      %1567 = vmatprep.subr.mxu0 0.0
      %1568 = vmatpush1.msra.mxu0 0.0
      %1569 = vmatprep.subr.mxu0 0.0
      %1570 = vmatpush1.msra.mxu0 0.0
      %1571 = vmatprep.subr.mxu0 0.0
      %1572 = vmatpush1.msra.mxu0 0.0
      %1573 = vmatprep.subr.mxu0 0.0
      %1574 = vmatpush1.msra.mxu0 0.0
      %1575 = vmatprep.subr.mxu0 0.0
      %1576 = vmatpush1.msra.mxu0 0.0
      %1577 = vmatprep.subr.mxu0 0.0
      %1578 = vmatpush1.msra.mxu0 0.0
      %1579 = vmatprep.subr.mxu0 0.0
      %1580 = vmatpush1.msra.mxu0 0.0
      %1581 = vmatprep.subr.mxu0 0.0
      %1582 = vmatpush1.msra.mxu0 0.0
      %1583 = vmatprep.subr.mxu0 0.0
      %1584 = vmatpush1.msra.mxu0 0.0
      %1585 = vmatprep.subr.mxu0 0.0
      %1586 = vmatpush1.msra.mxu0 0.0
      %1587 = vmatprep.subr.mxu0 0.0
      %1588 = vmatpush1.msra.mxu0 0.0
      %1589 = vmatprep.subr.mxu0 0.0
      %1590 = vmatpush1.msra.mxu0 0.0
      %1591 = vmatprep.subr.mxu0 0.0
      %1592 = vmatpush1.msra.mxu0 0.0
      %1593 = vmatprep.subr.mxu0 0.0
      %1594 = vmatpush1.msra.mxu0 0.0
      %1595 = vmatprep.subr.mxu0 0.0
      %1596 = vmatpush1.msra.mxu0 0.0
      %1597 = vmatprep.subr.mxu0 0.0
      %1598 = vmatpush1.msra.mxu0 0.0
      %1599 = vmatprep.subr.mxu0 0.0
      %1600 = vmatpush1.msra.mxu0 0.0
      %1601 = vmatprep.mubr.f32.mxu0 0.0
      %1602 = vmatmul.mubr.f32.gmra.mrb[0].mxu0 %v1532
      %v1603 = vpop.f32.mrb[0].mxu0
      %v1604 = vadd.f32 %v1028, %v1603
      %v1605 = vpop.f32.mrb[0].mxu0
      %1606 = vmatprep.mubr.f32.mxu0 0.0
      %1607 = vmatmul.mubr.f32.gmra.mrb[0].mxu0 %v1535
      %v1608 = vpop.f32.mrb[0].mxu0
      %v1609 = vadd.f32 %v1033, %v1608
      %v1610 = vpop.f32.mrb[0].mxu0
      %1611 = vdwg.mxu0
      %v1613 = vsel %vm558, %v915, 0
      %v1616 = vsel %vm558, %v916, 0
      %1618 = vmatprep.subr.mxu0 0.0
      %1619 = vmatpush1.msra.mxu0 %v895
      %1620 = vmatprep.subr.mxu0 0.0
      %1621 = vmatpush1.msra.mxu0 %v896
      %1622 = vmatprep.subr.mxu0 0.0
      %1623 = vmatpush1.msra.mxu0 %v897
      %1624 = vmatprep.subr.mxu0 0.0
      %1625 = vmatpush1.msra.mxu0 %v898
      %1626 = vmatprep.subr.mxu0 0.0
      %1627 = vmatpush1.msra.mxu0 0.0
      %1628 = vmatprep.subr.mxu0 0.0
      %1629 = vmatpush1.msra.mxu0 0.0
      %1630 = vmatprep.subr.mxu0 0.0
      %1631 = vmatpush1.msra.mxu0 0.0
      %1632 = vmatprep.subr.mxu0 0.0
      %1633 = vmatpush1.msra.mxu0 0.0
      %1634 = vmatprep.subr.mxu0 0.0
      %1635 = vmatpush1.msra.mxu0 0.0
      %1636 = vmatprep.subr.mxu0 0.0
      %1637 = vmatpush1.msra.mxu0 0.0
      %1638 = vmatprep.subr.mxu0 0.0
      %1639 = vmatpush1.msra.mxu0 0.0
      %1640 = vmatprep.subr.mxu0 0.0
      %1641 = vmatpush1.msra.mxu0 0.0
      %1642 = vmatprep.subr.mxu0 0.0
      %1643 = vmatpush1.msra.mxu0 0.0
      %1644 = vmatprep.subr.mxu0 0.0
      %1645 = vmatpush1.msra.mxu0 0.0
      %1646 = vmatprep.subr.mxu0 0.0
      %1647 = vmatpush1.msra.mxu0 0.0
      %1648 = vmatprep.subr.mxu0 0.0
      %1649 = vmatpush1.msra.mxu0 0.0
      %1650 = vmatprep.subr.mxu0 0.0
      %1651 = vmatpush1.msra.mxu0 0.0
      %1652 = vmatprep.subr.mxu0 0.0
      %1653 = vmatpush1.msra.mxu0 0.0
      %1654 = vmatprep.subr.mxu0 0.0
      %1655 = vmatpush1.msra.mxu0 0.0
      %1656 = vmatprep.subr.mxu0 0.0
      %1657 = vmatpush1.msra.mxu0 0.0
      %1658 = vmatprep.subr.mxu0 0.0
      %1659 = vmatpush1.msra.mxu0 0.0
      %1660 = vmatprep.subr.mxu0 0.0
      %1661 = vmatpush1.msra.mxu0 0.0
      %1662 = vmatprep.subr.mxu0 0.0
      %1663 = vmatpush1.msra.mxu0 0.0
      %1664 = vmatprep.subr.mxu0 0.0
      %1665 = vmatpush1.msra.mxu0 0.0
      %1666 = vmatprep.subr.mxu0 0.0
      %1667 = vmatpush1.msra.mxu0 0.0
      %1668 = vmatprep.subr.mxu0 0.0
      %1669 = vmatpush1.msra.mxu0 0.0
      %1670 = vmatprep.subr.mxu0 0.0
      %1671 = vmatpush1.msra.mxu0 0.0
      %1672 = vmatprep.subr.mxu0 0.0
      %1673 = vmatpush1.msra.mxu0 0.0
      %1674 = vmatprep.subr.mxu0 0.0
      %1675 = vmatpush1.msra.mxu0 0.0
      %1676 = vmatprep.subr.mxu0 0.0
      %1677 = vmatpush1.msra.mxu0 0.0
      %1678 = vmatprep.subr.mxu0 0.0
      %1679 = vmatpush1.msra.mxu0 0.0
      %1680 = vmatprep.subr.mxu0 0.0
      %1681 = vmatpush1.msra.mxu0 0.0
      %1682 = vmatprep.mubr.f32.mxu0 0.0
      %1683 = vmatmul.mubr.f32.gmra.mrb[0].mxu0 %v1613
      %v1684 = vpop.f32.mrb[0].mxu0
      %v1685 = vadd.f32 %v1038, %v1684
      %v1686 = vpop.f32.mrb[0].mxu0
      %1687 = vmatprep.mubr.f32.mxu0 0.0
      %1688 = vmatmul.mubr.f32.gmra.mrb[0].mxu0 %v1616
      %v1689 = vpop.f32.mrb[0].mxu0
      %v1690 = vadd.f32 %v1043, %v1689
      %v1691 = vpop.f32.mrb[0].mxu0
      %1692 = vdwg.mxu0
      %1693 = vxpose.xlu0.b32.start [1/16] %v1118, 128
      %1694 = vxpose.xlu0.b32.cont [2/16] 0.0, 128
      %1695 = vxpose.xlu0.b32.cont [3/16] 0.0, 128
      %1696 = vxpose.xlu0.b32.cont [4/16] 0.0, 128
      %1697 = vxpose.xlu0.b32.cont [5/16] 0.0, 128
      %1698 = vxpose.xlu0.b32.cont [6/16] 0.0, 128
      %1699 = vxpose.xlu0.b32.cont [7/16] 0.0, 128
      %1700 = vxpose.xlu0.b32.cont [8/16] 0.0, 128
      %1701 = vxpose.xlu0.b32.cont [9/16] 0.0, 128
      %1702 = vxpose.xlu0.b32.cont [10/16] 0.0, 128
      %1703 = vxpose.xlu0.b32.cont [11/16] 0.0, 128
      %1704 = vxpose.xlu0.b32.cont [12/16] 0.0, 128
      %1705 = vxpose.xlu0.b32.cont [13/16] 0.0, 128
      %1706 = vxpose.xlu0.b32.cont [14/16] 0.0, 128
      %1707 = vxpose.xlu0.b32.cont [15/16] 0.0, 128
      %1708 = vxpose.xlu0.b32.end [16/16] 0.0, 128
      %v1709 = vpop.trf.xlu0
      %v1710 = vpop.trf.xlu0
      %v1711 = vpop.trf.xlu0
      %v1712 = vpop.trf.xlu0
      %v1713 = vpop.trf.xlu0
      %v1714 = vpop.trf.xlu0
      %v1715 = vpop.trf.xlu0
      %v1716 = vpop.trf.xlu0
      %v1717 = vpop.trf.xlu0
      %v1718 = vpop.trf.xlu0
      %v1719 = vpop.trf.xlu0
      %v1720 = vpop.trf.xlu0
      %v1721 = vpop.trf.xlu0
      %v1722 = vpop.trf.xlu0
      %v1723 = vpop.trf.xlu0
      %v1724 = vpop.trf.xlu0
      %1725 = vxpose.xlu0.b32.start [1/16] %v1199, 128
      %1726 = vxpose.xlu0.b32.cont [2/16] 0.0, 128
      %1727 = vxpose.xlu0.b32.cont [3/16] 0.0, 128
      %1728 = vxpose.xlu0.b32.cont [4/16] 0.0, 128
      %1729 = vxpose.xlu0.b32.cont [5/16] 0.0, 128
      %1730 = vxpose.xlu0.b32.cont [6/16] 0.0, 128
      %1731 = vxpose.xlu0.b32.cont [7/16] 0.0, 128
      %1732 = vxpose.xlu0.b32.cont [8/16] 0.0, 128
      %1733 = vxpose.xlu0.b32.cont [9/16] 0.0, 128
      %1734 = vxpose.xlu0.b32.cont [10/16] 0.0, 128
      %1735 = vxpose.xlu0.b32.cont [11/16] 0.0, 128
      %1736 = vxpose.xlu0.b32.cont [12/16] 0.0, 128
      %1737 = vxpose.xlu0.b32.cont [13/16] 0.0, 128
      %1738 = vxpose.xlu0.b32.cont [14/16] 0.0, 128
      %1739 = vxpose.xlu0.b32.cont [15/16] 0.0, 128
      %1740 = vxpose.xlu0.b32.end [16/16] 0.0, 128
      %v1741 = vpop.trf.xlu0
      %v1742 = vpop.trf.xlu0
      %v1743 = vpop.trf.xlu0
      %v1744 = vpop.trf.xlu0
      %v1745 = vpop.trf.xlu0
      %v1746 = vpop.trf.xlu0
      %v1747 = vpop.trf.xlu0
      %v1748 = vpop.trf.xlu0
      %v1749 = vpop.trf.xlu0
      %v1750 = vpop.trf.xlu0
      %v1751 = vpop.trf.xlu0
      %v1752 = vpop.trf.xlu0
      %v1753 = vpop.trf.xlu0
      %v1754 = vpop.trf.xlu0
      %v1755 = vpop.trf.xlu0
      %v1756 = vpop.trf.xlu0
      %1757 = vxpose.xlu0.b32.start [1/16] %v1280, 128
      %1758 = vxpose.xlu0.b32.cont [2/16] 0.0, 128
      %1759 = vxpose.xlu0.b32.cont [3/16] 0.0, 128
      %1760 = vxpose.xlu0.b32.cont [4/16] 0.0, 128
      %1761 = vxpose.xlu0.b32.cont [5/16] 0.0, 128
      %1762 = vxpose.xlu0.b32.cont [6/16] 0.0, 128
      %1763 = vxpose.xlu0.b32.cont [7/16] 0.0, 128
      %1764 = vxpose.xlu0.b32.cont [8/16] 0.0, 128
      %1765 = vxpose.xlu0.b32.cont [9/16] 0.0, 128
      %1766 = vxpose.xlu0.b32.cont [10/16] 0.0, 128
      %1767 = vxpose.xlu0.b32.cont [11/16] 0.0, 128
      %1768 = vxpose.xlu0.b32.cont [12/16] 0.0, 128
      %1769 = vxpose.xlu0.b32.cont [13/16] 0.0, 128
      %1770 = vxpose.xlu0.b32.cont [14/16] 0.0, 128
      %1771 = vxpose.xlu0.b32.cont [15/16] 0.0, 128
      %1772 = vxpose.xlu0.b32.end [16/16] 0.0, 128
      %v1773 = vpop.trf.xlu0
      %v1774 = vpop.trf.xlu0
      %v1775 = vpop.trf.xlu0
      %v1776 = vpop.trf.xlu0
      %v1777 = vpop.trf.xlu0
      %v1778 = vpop.trf.xlu0
      %v1779 = vpop.trf.xlu0
      %v1780 = vpop.trf.xlu0
      %v1781 = vpop.trf.xlu0
      %v1782 = vpop.trf.xlu0
      %v1783 = vpop.trf.xlu0
      %v1784 = vpop.trf.xlu0
      %v1785 = vpop.trf.xlu0
      %v1786 = vpop.trf.xlu0
      %v1787 = vpop.trf.xlu0
      %v1788 = vpop.trf.xlu0
      %1789 = vxpose.xlu0.b32.start [1/16] %v1361, 128
      %1790 = vxpose.xlu0.b32.cont [2/16] 0.0, 128
      %1791 = vxpose.xlu0.b32.cont [3/16] 0.0, 128
      %1792 = vxpose.xlu0.b32.cont [4/16] 0.0, 128
      %1793 = vxpose.xlu0.b32.cont [5/16] 0.0, 128
      %1794 = vxpose.xlu0.b32.cont [6/16] 0.0, 128
      %1795 = vxpose.xlu0.b32.cont [7/16] 0.0, 128
      %1796 = vxpose.xlu0.b32.cont [8/16] 0.0, 128
      %1797 = vxpose.xlu0.b32.cont [9/16] 0.0, 128
      %1798 = vxpose.xlu0.b32.cont [10/16] 0.0, 128
      %1799 = vxpose.xlu0.b32.cont [11/16] 0.0, 128
      %1800 = vxpose.xlu0.b32.cont [12/16] 0.0, 128
      %1801 = vxpose.xlu0.b32.cont [13/16] 0.0, 128
      %1802 = vxpose.xlu0.b32.cont [14/16] 0.0, 128
      %1803 = vxpose.xlu0.b32.cont [15/16] 0.0, 128
      %1804 = vxpose.xlu0.b32.end [16/16] 0.0, 128
      %v1805 = vpop.trf.xlu0
      %v1806 = vpop.trf.xlu0
      %v1807 = vpop.trf.xlu0
      %v1808 = vpop.trf.xlu0
      %v1809 = vpop.trf.xlu0
      %v1810 = vpop.trf.xlu0
      %v1811 = vpop.trf.xlu0
      %v1812 = vpop.trf.xlu0
      %v1813 = vpop.trf.xlu0
      %v1814 = vpop.trf.xlu0
      %v1815 = vpop.trf.xlu0
      %v1816 = vpop.trf.xlu0
      %v1817 = vpop.trf.xlu0
      %v1818 = vpop.trf.xlu0
      %v1819 = vpop.trf.xlu0
      %v1820 = vpop.trf.xlu0
      %1821 = vxpose.xlu0.b32.start [1/16] %v1442, 128
      %1822 = vxpose.xlu0.b32.cont [2/16] 0.0, 128
      %1823 = vxpose.xlu0.b32.cont [3/16] 0.0, 128
      %1824 = vxpose.xlu0.b32.cont [4/16] 0.0, 128
      %1825 = vxpose.xlu0.b32.cont [5/16] 0.0, 128
      %1826 = vxpose.xlu0.b32.cont [6/16] 0.0, 128
      %1827 = vxpose.xlu0.b32.cont [7/16] 0.0, 128
      %1828 = vxpose.xlu0.b32.cont [8/16] 0.0, 128
      %1829 = vxpose.xlu0.b32.cont [9/16] 0.0, 128
      %1830 = vxpose.xlu0.b32.cont [10/16] 0.0, 128
      %1831 = vxpose.xlu0.b32.cont [11/16] 0.0, 128
      %1832 = vxpose.xlu0.b32.cont [12/16] 0.0, 128
      %1833 = vxpose.xlu0.b32.cont [13/16] 0.0, 128
      %1834 = vxpose.xlu0.b32.cont [14/16] 0.0, 128
      %1835 = vxpose.xlu0.b32.cont [15/16] 0.0, 128
      %1836 = vxpose.xlu0.b32.end [16/16] 0.0, 128
      %v1837 = vpop.trf.xlu0
      %v1838 = vpop.trf.xlu0
      %v1839 = vpop.trf.xlu0
      %v1840 = vpop.trf.xlu0
      %v1841 = vpop.trf.xlu0
      %v1842 = vpop.trf.xlu0
      %v1843 = vpop.trf.xlu0
      %v1844 = vpop.trf.xlu0
      %v1845 = vpop.trf.xlu0
      %v1846 = vpop.trf.xlu0
      %v1847 = vpop.trf.xlu0
      %v1848 = vpop.trf.xlu0
      %v1849 = vpop.trf.xlu0
      %v1850 = vpop.trf.xlu0
      %v1851 = vpop.trf.xlu0
      %v1852 = vpop.trf.xlu0
      %1853 = vxpose.xlu0.b32.start [1/16] %v1523, 128
      %1854 = vxpose.xlu0.b32.cont [2/16] 0.0, 128
      %1855 = vxpose.xlu0.b32.cont [3/16] 0.0, 128
      %1856 = vxpose.xlu0.b32.cont [4/16] 0.0, 128
      %1857 = vxpose.xlu0.b32.cont [5/16] 0.0, 128
      %1858 = vxpose.xlu0.b32.cont [6/16] 0.0, 128
      %1859 = vxpose.xlu0.b32.cont [7/16] 0.0, 128
      %1860 = vxpose.xlu0.b32.cont [8/16] 0.0, 128
      %1861 = vxpose.xlu0.b32.cont [9/16] 0.0, 128
      %1862 = vxpose.xlu0.b32.cont [10/16] 0.0, 128
      %1863 = vxpose.xlu0.b32.cont [11/16] 0.0, 128
      %1864 = vxpose.xlu0.b32.cont [12/16] 0.0, 128
      %1865 = vxpose.xlu0.b32.cont [13/16] 0.0, 128
      %1866 = vxpose.xlu0.b32.cont [14/16] 0.0, 128
      %1867 = vxpose.xlu0.b32.cont [15/16] 0.0, 128
      %1868 = vxpose.xlu0.b32.end [16/16] 0.0, 128
      %v1869 = vpop.trf.xlu0
      %v1870 = vpop.trf.xlu0
      %v1871 = vpop.trf.xlu0
      %v1872 = vpop.trf.xlu0
      %v1873 = vpop.trf.xlu0
      %v1874 = vpop.trf.xlu0
      %v1875 = vpop.trf.xlu0
      %v1876 = vpop.trf.xlu0
      %v1877 = vpop.trf.xlu0
      %v1878 = vpop.trf.xlu0
      %v1879 = vpop.trf.xlu0
      %v1880 = vpop.trf.xlu0
      %v1881 = vpop.trf.xlu0
      %v1882 = vpop.trf.xlu0
      %v1883 = vpop.trf.xlu0
      %v1884 = vpop.trf.xlu0
      %1885 = vxpose.xlu0.b32.start [1/16] %v1604, 128
      %1886 = vxpose.xlu0.b32.cont [2/16] 0.0, 128
      %1887 = vxpose.xlu0.b32.cont [3/16] 0.0, 128
      %1888 = vxpose.xlu0.b32.cont [4/16] 0.0, 128
      %1889 = vxpose.xlu0.b32.cont [5/16] 0.0, 128
      %1890 = vxpose.xlu0.b32.cont [6/16] 0.0, 128
      %1891 = vxpose.xlu0.b32.cont [7/16] 0.0, 128
      %1892 = vxpose.xlu0.b32.cont [8/16] 0.0, 128
      %1893 = vxpose.xlu0.b32.cont [9/16] 0.0, 128
      %1894 = vxpose.xlu0.b32.cont [10/16] 0.0, 128
      %1895 = vxpose.xlu0.b32.cont [11/16] 0.0, 128
      %1896 = vxpose.xlu0.b32.cont [12/16] 0.0, 128
      %1897 = vxpose.xlu0.b32.cont [13/16] 0.0, 128
      %1898 = vxpose.xlu0.b32.cont [14/16] 0.0, 128
      %1899 = vxpose.xlu0.b32.cont [15/16] 0.0, 128
      %1900 = vxpose.xlu0.b32.end [16/16] 0.0, 128
      %v1901 = vpop.trf.xlu0
      %v1902 = vpop.trf.xlu0
      %v1903 = vpop.trf.xlu0
      %v1904 = vpop.trf.xlu0
      %v1905 = vpop.trf.xlu0
      %v1906 = vpop.trf.xlu0
      %v1907 = vpop.trf.xlu0
      %v1908 = vpop.trf.xlu0
      %v1909 = vpop.trf.xlu0
      %v1910 = vpop.trf.xlu0
      %v1911 = vpop.trf.xlu0
      %v1912 = vpop.trf.xlu0
      %v1913 = vpop.trf.xlu0
      %v1914 = vpop.trf.xlu0
      %v1915 = vpop.trf.xlu0
      %v1916 = vpop.trf.xlu0
      %1917 = vxpose.xlu0.b32.start [1/16] %v1685, 128
      %1918 = vxpose.xlu0.b32.cont [2/16] 0.0, 128
      %1919 = vxpose.xlu0.b32.cont [3/16] 0.0, 128
      %1920 = vxpose.xlu0.b32.cont [4/16] 0.0, 128
      %1921 = vxpose.xlu0.b32.cont [5/16] 0.0, 128
      %1922 = vxpose.xlu0.b32.cont [6/16] 0.0, 128
      %1923 = vxpose.xlu0.b32.cont [7/16] 0.0, 128
      %1924 = vxpose.xlu0.b32.cont [8/16] 0.0, 128
      %1925 = vxpose.xlu0.b32.cont [9/16] 0.0, 128
      %1926 = vxpose.xlu0.b32.cont [10/16] 0.0, 128
      %1927 = vxpose.xlu0.b32.cont [11/16] 0.0, 128
      %1928 = vxpose.xlu0.b32.cont [12/16] 0.0, 128
      %1929 = vxpose.xlu0.b32.cont [13/16] 0.0, 128
      %1930 = vxpose.xlu0.b32.cont [14/16] 0.0, 128
      %1931 = vxpose.xlu0.b32.cont [15/16] 0.0, 128
      %1932 = vxpose.xlu0.b32.end [16/16] 0.0, 128
      %v1933 = vpop.trf.xlu0
      %v1934 = vpop.trf.xlu0
      %v1935 = vpop.trf.xlu0
      %v1936 = vpop.trf.xlu0
      %v1937 = vpop.trf.xlu0
      %v1938 = vpop.trf.xlu0
      %v1939 = vpop.trf.xlu0
      %v1940 = vpop.trf.xlu0
      %v1941 = vpop.trf.xlu0
      %v1942 = vpop.trf.xlu0
      %v1943 = vpop.trf.xlu0
      %v1944 = vpop.trf.xlu0
      %v1945 = vpop.trf.xlu0
      %v1946 = vpop.trf.xlu0
      %v1947 = vpop.trf.xlu0
      %v1948 = vpop.trf.xlu0
      %v1950 = vrot.slane %v1118, 4
      %vm1951 = vcmask 31744
      %v1953 = vsel %vm1951, %v1709, 0
      %v1956 = vsel %vm1951, %v1710, 0
      %vm1958 = vcmask 1043456
      %v1959 = vsel %vm1958, %v1950, 0
      %1961 = vmatprep.subr.mxu0 0.0
      %1962 = vmatpush1.msra.mxu0 %v1959
      %1963 = vmatprep.subr.mxu0 0.0
      %1964 = vmatpush1.msra.mxu0 0.0
      %1965 = vmatprep.subr.mxu0 0.0
      %1966 = vmatpush1.msra.mxu0 0.0
      %1967 = vmatprep.subr.mxu0 0.0
      %1968 = vmatpush1.msra.mxu0 0.0
      %1969 = vmatprep.subr.mxu0 0.0
      %1970 = vmatpush1.msra.mxu0 0.0
      %1971 = vmatprep.subr.mxu0 0.0
      %1972 = vmatpush1.msra.mxu0 0.0
      %1973 = vmatprep.subr.mxu0 0.0
      %1974 = vmatpush1.msra.mxu0 0.0
      %1975 = vmatprep.subr.mxu0 0.0
      %1976 = vmatpush1.msra.mxu0 0.0
      %1977 = vmatprep.subr.mxu0 0.0
      %1978 = vmatpush1.msra.mxu0 0.0
      %1979 = vmatprep.subr.mxu0 0.0
      %1980 = vmatpush1.msra.mxu0 0.0
      %1981 = vmatprep.subr.mxu0 0.0
      %1982 = vmatpush1.msra.mxu0 0.0
      %1983 = vmatprep.subr.mxu0 0.0
      %1984 = vmatpush1.msra.mxu0 0.0
      %1985 = vmatprep.subr.mxu0 0.0
      %1986 = vmatpush1.msra.mxu0 0.0
      %1987 = vmatprep.subr.mxu0 0.0
      %1988 = vmatpush1.msra.mxu0 0.0
      %1989 = vmatprep.subr.mxu0 0.0
      %1990 = vmatpush1.msra.mxu0 0.0
      %1991 = vmatprep.subr.mxu0 0.0
      %1992 = vmatpush1.msra.mxu0 0.0
      %1993 = vmatprep.subr.mxu0 0.0
      %1994 = vmatpush1.msra.mxu0 0.0
      %1995 = vmatprep.subr.mxu0 0.0
      %1996 = vmatpush1.msra.mxu0 0.0
      %1997 = vmatprep.subr.mxu0 0.0
      %1998 = vmatpush1.msra.mxu0 0.0
      %1999 = vmatprep.subr.mxu0 0.0
      %2000 = vmatpush1.msra.mxu0 0.0
      %2001 = vmatprep.subr.mxu0 0.0
      %2002 = vmatpush1.msra.mxu0 0.0
      %2003 = vmatprep.subr.mxu0 0.0
      %2004 = vmatpush1.msra.mxu0 0.0
      %2005 = vmatprep.subr.mxu0 0.0
      %2006 = vmatpush1.msra.mxu0 0.0
      %2007 = vmatprep.subr.mxu0 0.0
      %2008 = vmatpush1.msra.mxu0 0.0
      %2009 = vmatprep.subr.mxu0 0.0
      %2010 = vmatpush1.msra.mxu0 0.0
      %2011 = vmatprep.subr.mxu0 0.0
      %2012 = vmatpush1.msra.mxu0 0.0
      %2013 = vmatprep.subr.mxu0 0.0
      %2014 = vmatpush1.msra.mxu0 0.0
      %2015 = vmatprep.subr.mxu0 0.0
      %2016 = vmatpush1.msra.mxu0 0.0
      %2017 = vmatprep.subr.mxu0 0.0
      %2018 = vmatpush1.msra.mxu0 0.0
      %2019 = vmatprep.subr.mxu0 0.0
      %2020 = vmatpush1.msra.mxu0 0.0
      %2021 = vmatprep.subr.mxu0 0.0
      %2022 = vmatpush1.msra.mxu0 0.0
      %2023 = vmatprep.subr.mxu0 0.0
      %2024 = vmatpush1.msra.mxu0 0.0
      %2025 = vmatprep.mubr.f32.mxu0 0.0
      %2026 = vmatmul.mubr.f32.gmra.mrb[0].mxu0 %v1953
      %v2027 = vpop.f32.mrb[0].mxu0
      %v2028 = vadd.f32 0.0, %v2027
      %v2029 = vpop.f32.mrb[0].mxu0
      %2030 = vmatprep.mubr.f32.mxu0 0.0
      %2031 = vmatmul.mubr.f32.gmra.mrb[0].mxu0 %v1956
      %v2032 = vpop.f32.mrb[0].mxu0
      %v2033 = vadd.f32 0.0, %v2032
      %v2034 = vpop.f32.mrb[0].mxu0
      %2035 = vdwg.mxu0
      %v2037 = vrot.slane %v1199, 4
      %v2039 = vsel %vm1951, %v1741, 0
      %v2042 = vsel %vm1951, %v1742, 0
      %v2044 = vsel %vm1958, %v2037, 0
      %2046 = vmatprep.subr.mxu0 0.0
      %2047 = vmatpush1.msra.mxu0 %v2044
      %2048 = vmatprep.subr.mxu0 0.0
      %2049 = vmatpush1.msra.mxu0 0.0
      %2050 = vmatprep.subr.mxu0 0.0
      %2051 = vmatpush1.msra.mxu0 0.0
      %2052 = vmatprep.subr.mxu0 0.0
      %2053 = vmatpush1.msra.mxu0 0.0
      %2054 = vmatprep.subr.mxu0 0.0
      %2055 = vmatpush1.msra.mxu0 0.0
      %2056 = vmatprep.subr.mxu0 0.0
      %2057 = vmatpush1.msra.mxu0 0.0
      %2058 = vmatprep.subr.mxu0 0.0
      %2059 = vmatpush1.msra.mxu0 0.0
      %2060 = vmatprep.subr.mxu0 0.0
      %2061 = vmatpush1.msra.mxu0 0.0
      %2062 = vmatprep.subr.mxu0 0.0
      %2063 = vmatpush1.msra.mxu0 0.0
      %2064 = vmatprep.subr.mxu0 0.0
      %2065 = vmatpush1.msra.mxu0 0.0
      %2066 = vmatprep.subr.mxu0 0.0
      %2067 = vmatpush1.msra.mxu0 0.0
      %2068 = vmatprep.subr.mxu0 0.0
      %2069 = vmatpush1.msra.mxu0 0.0
      %2070 = vmatprep.subr.mxu0 0.0
      %2071 = vmatpush1.msra.mxu0 0.0
      %2072 = vmatprep.subr.mxu0 0.0
      %2073 = vmatpush1.msra.mxu0 0.0
      %2074 = vmatprep.subr.mxu0 0.0
      %2075 = vmatpush1.msra.mxu0 0.0
      %2076 = vmatprep.subr.mxu0 0.0
      %2077 = vmatpush1.msra.mxu0 0.0
      %2078 = vmatprep.subr.mxu0 0.0
      %2079 = vmatpush1.msra.mxu0 0.0
      %2080 = vmatprep.subr.mxu0 0.0
      %2081 = vmatpush1.msra.mxu0 0.0
      %2082 = vmatprep.subr.mxu0 0.0
      %2083 = vmatpush1.msra.mxu0 0.0
      %2084 = vmatprep.subr.mxu0 0.0
      %2085 = vmatpush1.msra.mxu0 0.0
      %2086 = vmatprep.subr.mxu0 0.0
      %2087 = vmatpush1.msra.mxu0 0.0
      %2088 = vmatprep.subr.mxu0 0.0
      %2089 = vmatpush1.msra.mxu0 0.0
      %2090 = vmatprep.subr.mxu0 0.0
      %2091 = vmatpush1.msra.mxu0 0.0
      %2092 = vmatprep.subr.mxu0 0.0
      %2093 = vmatpush1.msra.mxu0 0.0
      %2094 = vmatprep.subr.mxu0 0.0
      %2095 = vmatpush1.msra.mxu0 0.0
      %2096 = vmatprep.subr.mxu0 0.0
      %2097 = vmatpush1.msra.mxu0 0.0
      %2098 = vmatprep.subr.mxu0 0.0
      %2099 = vmatpush1.msra.mxu0 0.0
      %2100 = vmatprep.subr.mxu0 0.0
      %2101 = vmatpush1.msra.mxu0 0.0
      %2102 = vmatprep.subr.mxu0 0.0
      %2103 = vmatpush1.msra.mxu0 0.0
      %2104 = vmatprep.subr.mxu0 0.0
      %2105 = vmatpush1.msra.mxu0 0.0
      %2106 = vmatprep.subr.mxu0 0.0
      %2107 = vmatpush1.msra.mxu0 0.0
      %2108 = vmatprep.subr.mxu0 0.0
      %2109 = vmatpush1.msra.mxu0 0.0
      %2110 = vmatprep.mubr.f32.mxu0 0.0
      %2111 = vmatmul.mubr.f32.gmra.mrb[0].mxu0 %v2039
      %v2112 = vpop.f32.mrb[0].mxu0
      %v2113 = vadd.f32 0.0, %v2112
      %v2114 = vpop.f32.mrb[0].mxu0
      %2115 = vmatprep.mubr.f32.mxu0 0.0
      %2116 = vmatmul.mubr.f32.gmra.mrb[0].mxu0 %v2042
      %v2117 = vpop.f32.mrb[0].mxu0
      %v2118 = vadd.f32 0.0, %v2117
      %v2119 = vpop.f32.mrb[0].mxu0
      %2120 = vdwg.mxu0
      %v2122 = vrot.slane %v1280, 4
      %v2124 = vsel %vm1951, %v1773, 0
      %v2127 = vsel %vm1951, %v1774, 0
      %v2129 = vsel %vm1958, %v2122, 0
      %2131 = vmatprep.subr.mxu0 0.0
      %2132 = vmatpush1.msra.mxu0 %v2129
      %2133 = vmatprep.subr.mxu0 0.0
      %2134 = vmatpush1.msra.mxu0 0.0
      %2135 = vmatprep.subr.mxu0 0.0
      %2136 = vmatpush1.msra.mxu0 0.0
      %2137 = vmatprep.subr.mxu0 0.0
      %2138 = vmatpush1.msra.mxu0 0.0
      %2139 = vmatprep.subr.mxu0 0.0
      %2140 = vmatpush1.msra.mxu0 0.0
      %2141 = vmatprep.subr.mxu0 0.0
      %2142 = vmatpush1.msra.mxu0 0.0
      %2143 = vmatprep.subr.mxu0 0.0
      %2144 = vmatpush1.msra.mxu0 0.0
      %2145 = vmatprep.subr.mxu0 0.0
      %2146 = vmatpush1.msra.mxu0 0.0
      %2147 = vmatprep.subr.mxu0 0.0
      %2148 = vmatpush1.msra.mxu0 0.0
      %2149 = vmatprep.subr.mxu0 0.0
      %2150 = vmatpush1.msra.mxu0 0.0
      %2151 = vmatprep.subr.mxu0 0.0
      %2152 = vmatpush1.msra.mxu0 0.0
      %2153 = vmatprep.subr.mxu0 0.0
      %2154 = vmatpush1.msra.mxu0 0.0
      %2155 = vmatprep.subr.mxu0 0.0
      %2156 = vmatpush1.msra.mxu0 0.0
      %2157 = vmatprep.subr.mxu0 0.0
      %2158 = vmatpush1.msra.mxu0 0.0
      %2159 = vmatprep.subr.mxu0 0.0
      %2160 = vmatpush1.msra.mxu0 0.0
      %2161 = vmatprep.subr.mxu0 0.0
      %2162 = vmatpush1.msra.mxu0 0.0
      %2163 = vmatprep.subr.mxu0 0.0
      %2164 = vmatpush1.msra.mxu0 0.0
      %2165 = vmatprep.subr.mxu0 0.0
      %2166 = vmatpush1.msra.mxu0 0.0
      %2167 = vmatprep.subr.mxu0 0.0
      %2168 = vmatpush1.msra.mxu0 0.0
      %2169 = vmatprep.subr.mxu0 0.0
      %2170 = vmatpush1.msra.mxu0 0.0
      %2171 = vmatprep.subr.mxu0 0.0
      %2172 = vmatpush1.msra.mxu0 0.0
      %2173 = vmatprep.subr.mxu0 0.0
      %2174 = vmatpush1.msra.mxu0 0.0
      %2175 = vmatprep.subr.mxu0 0.0
      %2176 = vmatpush1.msra.mxu0 0.0
      %2177 = vmatprep.subr.mxu0 0.0
      %2178 = vmatpush1.msra.mxu0 0.0
      %2179 = vmatprep.subr.mxu0 0.0
      %2180 = vmatpush1.msra.mxu0 0.0
      %2181 = vmatprep.subr.mxu0 0.0
      %2182 = vmatpush1.msra.mxu0 0.0
      %2183 = vmatprep.subr.mxu0 0.0
      %2184 = vmatpush1.msra.mxu0 0.0
      %2185 = vmatprep.subr.mxu0 0.0
      %2186 = vmatpush1.msra.mxu0 0.0
      %2187 = vmatprep.subr.mxu0 0.0
      %2188 = vmatpush1.msra.mxu0 0.0
      %2189 = vmatprep.subr.mxu0 0.0
      %2190 = vmatpush1.msra.mxu0 0.0
      %2191 = vmatprep.subr.mxu0 0.0
      %2192 = vmatpush1.msra.mxu0 0.0
      %2193 = vmatprep.subr.mxu0 0.0
      %2194 = vmatpush1.msra.mxu0 0.0
      %2195 = vmatprep.mubr.f32.mxu0 0.0
      %2196 = vmatmul.mubr.f32.gmra.mrb[0].mxu0 %v2124
      %v2197 = vpop.f32.mrb[0].mxu0
      %v2198 = vadd.f32 0.0, %v2197
      %v2199 = vpop.f32.mrb[0].mxu0
      %2200 = vmatprep.mubr.f32.mxu0 0.0
      %2201 = vmatmul.mubr.f32.gmra.mrb[0].mxu0 %v2127
      %v2202 = vpop.f32.mrb[0].mxu0
      %v2203 = vadd.f32 0.0, %v2202
      %v2204 = vpop.f32.mrb[0].mxu0
      %2205 = vdwg.mxu0
      %v2207 = vrot.slane %v1361, 4
      %v2209 = vsel %vm1951, %v1805, 0
      %v2212 = vsel %vm1951, %v1806, 0
      %v2214 = vsel %vm1958, %v2207, 0
      %2216 = vmatprep.subr.mxu0 0.0
      %2217 = vmatpush1.msra.mxu0 %v2214
      %2218 = vmatprep.subr.mxu0 0.0
      %2219 = vmatpush1.msra.mxu0 0.0
      %2220 = vmatprep.subr.mxu0 0.0
      %2221 = vmatpush1.msra.mxu0 0.0
      %2222 = vmatprep.subr.mxu0 0.0
      %2223 = vmatpush1.msra.mxu0 0.0
      %2224 = vmatprep.subr.mxu0 0.0
      %2225 = vmatpush1.msra.mxu0 0.0
      %2226 = vmatprep.subr.mxu0 0.0
      %2227 = vmatpush1.msra.mxu0 0.0
      %2228 = vmatprep.subr.mxu0 0.0
      %2229 = vmatpush1.msra.mxu0 0.0
      %2230 = vmatprep.subr.mxu0 0.0
      %2231 = vmatpush1.msra.mxu0 0.0
      %2232 = vmatprep.subr.mxu0 0.0
      %2233 = vmatpush1.msra.mxu0 0.0
      %2234 = vmatprep.subr.mxu0 0.0
      %2235 = vmatpush1.msra.mxu0 0.0
      %2236 = vmatprep.subr.mxu0 0.0
      %2237 = vmatpush1.msra.mxu0 0.0
      %2238 = vmatprep.subr.mxu0 0.0
      %2239 = vmatpush1.msra.mxu0 0.0
      %2240 = vmatprep.subr.mxu0 0.0
      %2241 = vmatpush1.msra.mxu0 0.0
      %2242 = vmatprep.subr.mxu0 0.0
      %2243 = vmatpush1.msra.mxu0 0.0
      %2244 = vmatprep.subr.mxu0 0.0
      %2245 = vmatpush1.msra.mxu0 0.0
      %2246 = vmatprep.subr.mxu0 0.0
      %2247 = vmatpush1.msra.mxu0 0.0
      %2248 = vmatprep.subr.mxu0 0.0
      %2249 = vmatpush1.msra.mxu0 0.0
      %2250 = vmatprep.subr.mxu0 0.0
      %2251 = vmatpush1.msra.mxu0 0.0
      %2252 = vmatprep.subr.mxu0 0.0
      %2253 = vmatpush1.msra.mxu0 0.0
      %2254 = vmatprep.subr.mxu0 0.0
      %2255 = vmatpush1.msra.mxu0 0.0
      %2256 = vmatprep.subr.mxu0 0.0
      %2257 = vmatpush1.msra.mxu0 0.0
      %2258 = vmatprep.subr.mxu0 0.0
      %2259 = vmatpush1.msra.mxu0 0.0
      %2260 = vmatprep.subr.mxu0 0.0
      %2261 = vmatpush1.msra.mxu0 0.0
      %2262 = vmatprep.subr.mxu0 0.0
      %2263 = vmatpush1.msra.mxu0 0.0
      %2264 = vmatprep.subr.mxu0 0.0
      %2265 = vmatpush1.msra.mxu0 0.0
      %2266 = vmatprep.subr.mxu0 0.0
      %2267 = vmatpush1.msra.mxu0 0.0
      %2268 = vmatprep.subr.mxu0 0.0
      %2269 = vmatpush1.msra.mxu0 0.0
      %2270 = vmatprep.subr.mxu0 0.0
      %2271 = vmatpush1.msra.mxu0 0.0
      %2272 = vmatprep.subr.mxu0 0.0
      %2273 = vmatpush1.msra.mxu0 0.0
      %2274 = vmatprep.subr.mxu0 0.0
      %2275 = vmatpush1.msra.mxu0 0.0
      %2276 = vmatprep.subr.mxu0 0.0
      %2277 = vmatpush1.msra.mxu0 0.0
      %2278 = vmatprep.subr.mxu0 0.0
      %2279 = vmatpush1.msra.mxu0 0.0
      %2280 = vmatprep.mubr.f32.mxu0 0.0
      %2281 = vmatmul.mubr.f32.gmra.mrb[0].mxu0 %v2209
      %v2282 = vpop.f32.mrb[0].mxu0
      %v2283 = vadd.f32 0.0, %v2282
      %v2284 = vpop.f32.mrb[0].mxu0
      %2285 = vmatprep.mubr.f32.mxu0 0.0
      %2286 = vmatmul.mubr.f32.gmra.mrb[0].mxu0 %v2212
      %v2287 = vpop.f32.mrb[0].mxu0
      %v2288 = vadd.f32 0.0, %v2287
      %v2289 = vpop.f32.mrb[0].mxu0
      %2290 = vdwg.mxu0
      %v2292 = vrot.slane %v1442, 4
      %v2294 = vsel %vm1951, %v1837, 0
      %v2297 = vsel %vm1951, %v1838, 0
      %v2299 = vsel %vm1958, %v2292, 0
      %2301 = vmatprep.subr.mxu0 0.0
      %2302 = vmatpush1.msra.mxu0 %v2299
      %2303 = vmatprep.subr.mxu0 0.0
      %2304 = vmatpush1.msra.mxu0 0.0
      %2305 = vmatprep.subr.mxu0 0.0
      %2306 = vmatpush1.msra.mxu0 0.0
      %2307 = vmatprep.subr.mxu0 0.0
      %2308 = vmatpush1.msra.mxu0 0.0
      %2309 = vmatprep.subr.mxu0 0.0
      %2310 = vmatpush1.msra.mxu0 0.0
      %2311 = vmatprep.subr.mxu0 0.0
      %2312 = vmatpush1.msra.mxu0 0.0
      %2313 = vmatprep.subr.mxu0 0.0
      %2314 = vmatpush1.msra.mxu0 0.0
      %2315 = vmatprep.subr.mxu0 0.0
      %2316 = vmatpush1.msra.mxu0 0.0
      %2317 = vmatprep.subr.mxu0 0.0
      %2318 = vmatpush1.msra.mxu0 0.0
      %2319 = vmatprep.subr.mxu0 0.0
      %2320 = vmatpush1.msra.mxu0 0.0
      %2321 = vmatprep.subr.mxu0 0.0
      %2322 = vmatpush1.msra.mxu0 0.0
      %2323 = vmatprep.subr.mxu0 0.0
      %2324 = vmatpush1.msra.mxu0 0.0
      %2325 = vmatprep.subr.mxu0 0.0
      %2326 = vmatpush1.msra.mxu0 0.0
      %2327 = vmatprep.subr.mxu0 0.0
      %2328 = vmatpush1.msra.mxu0 0.0
      %2329 = vmatprep.subr.mxu0 0.0
      %2330 = vmatpush1.msra.mxu0 0.0
      %2331 = vmatprep.subr.mxu0 0.0
      %2332 = vmatpush1.msra.mxu0 0.0
      %2333 = vmatprep.subr.mxu0 0.0
      %2334 = vmatpush1.msra.mxu0 0.0
      %2335 = vmatprep.subr.mxu0 0.0
      %2336 = vmatpush1.msra.mxu0 0.0
      %2337 = vmatprep.subr.mxu0 0.0
      %2338 = vmatpush1.msra.mxu0 0.0
      %2339 = vmatprep.subr.mxu0 0.0
      %2340 = vmatpush1.msra.mxu0 0.0
      %2341 = vmatprep.subr.mxu0 0.0
      %2342 = vmatpush1.msra.mxu0 0.0
      %2343 = vmatprep.subr.mxu0 0.0
      %2344 = vmatpush1.msra.mxu0 0.0
      %2345 = vmatprep.subr.mxu0 0.0
      %2346 = vmatpush1.msra.mxu0 0.0
      %2347 = vmatprep.subr.mxu0 0.0
      %2348 = vmatpush1.msra.mxu0 0.0
      %2349 = vmatprep.subr.mxu0 0.0
      %2350 = vmatpush1.msra.mxu0 0.0
      %2351 = vmatprep.subr.mxu0 0.0
      %2352 = vmatpush1.msra.mxu0 0.0
      %2353 = vmatprep.subr.mxu0 0.0
      %2354 = vmatpush1.msra.mxu0 0.0
      %2355 = vmatprep.subr.mxu0 0.0
      %2356 = vmatpush1.msra.mxu0 0.0
      %2357 = vmatprep.subr.mxu0 0.0
      %2358 = vmatpush1.msra.mxu0 0.0
      %2359 = vmatprep.subr.mxu0 0.0
      %2360 = vmatpush1.msra.mxu0 0.0
      %2361 = vmatprep.subr.mxu0 0.0
      %2362 = vmatpush1.msra.mxu0 0.0
      %2363 = vmatprep.subr.mxu0 0.0
      %2364 = vmatpush1.msra.mxu0 0.0
      %2365 = vmatprep.mubr.f32.mxu0 0.0
      %2366 = vmatmul.mubr.f32.gmra.mrb[0].mxu0 %v2294
      %v2367 = vpop.f32.mrb[0].mxu0
      %v2368 = vadd.f32 0.0, %v2367
      %v2369 = vpop.f32.mrb[0].mxu0
      %2370 = vmatprep.mubr.f32.mxu0 0.0
      %2371 = vmatmul.mubr.f32.gmra.mrb[0].mxu0 %v2297
      %v2372 = vpop.f32.mrb[0].mxu0
      %v2373 = vadd.f32 0.0, %v2372
      %v2374 = vpop.f32.mrb[0].mxu0
      %2375 = vdwg.mxu0
      %v2377 = vrot.slane %v1523, 4
      %v2379 = vsel %vm1951, %v1869, 0
      %v2382 = vsel %vm1951, %v1870, 0
      %v2384 = vsel %vm1958, %v2377, 0
      %2386 = vmatprep.subr.mxu0 0.0
      %2387 = vmatpush1.msra.mxu0 %v2384
      %2388 = vmatprep.subr.mxu0 0.0
      %2389 = vmatpush1.msra.mxu0 0.0
      %2390 = vmatprep.subr.mxu0 0.0
      %2391 = vmatpush1.msra.mxu0 0.0
      %2392 = vmatprep.subr.mxu0 0.0
      %2393 = vmatpush1.msra.mxu0 0.0
      %2394 = vmatprep.subr.mxu0 0.0
      %2395 = vmatpush1.msra.mxu0 0.0
      %2396 = vmatprep.subr.mxu0 0.0
      %2397 = vmatpush1.msra.mxu0 0.0
      %2398 = vmatprep.subr.mxu0 0.0
      %2399 = vmatpush1.msra.mxu0 0.0
      %2400 = vmatprep.subr.mxu0 0.0
      %2401 = vmatpush1.msra.mxu0 0.0
      %2402 = vmatprep.subr.mxu0 0.0
      %2403 = vmatpush1.msra.mxu0 0.0
      %2404 = vmatprep.subr.mxu0 0.0
      %2405 = vmatpush1.msra.mxu0 0.0
      %2406 = vmatprep.subr.mxu0 0.0
      %2407 = vmatpush1.msra.mxu0 0.0
      %2408 = vmatprep.subr.mxu0 0.0
      %2409 = vmatpush1.msra.mxu0 0.0
      %2410 = vmatprep.subr.mxu0 0.0
      %2411 = vmatpush1.msra.mxu0 0.0
      %2412 = vmatprep.subr.mxu0 0.0
      %2413 = vmatpush1.msra.mxu0 0.0
      %2414 = vmatprep.subr.mxu0 0.0
      %2415 = vmatpush1.msra.mxu0 0.0
      %2416 = vmatprep.subr.mxu0 0.0
      %2417 = vmatpush1.msra.mxu0 0.0
      %2418 = vmatprep.subr.mxu0 0.0
      %2419 = vmatpush1.msra.mxu0 0.0
      %2420 = vmatprep.subr.mxu0 0.0
      %2421 = vmatpush1.msra.mxu0 0.0
      %2422 = vmatprep.subr.mxu0 0.0
      %2423 = vmatpush1.msra.mxu0 0.0
      %2424 = vmatprep.subr.mxu0 0.0
      %2425 = vmatpush1.msra.mxu0 0.0
      %2426 = vmatprep.subr.mxu0 0.0
      %2427 = vmatpush1.msra.mxu0 0.0
      %2428 = vmatprep.subr.mxu0 0.0
      %2429 = vmatpush1.msra.mxu0 0.0
      %2430 = vmatprep.subr.mxu0 0.0
      %2431 = vmatpush1.msra.mxu0 0.0
      %2432 = vmatprep.subr.mxu0 0.0
      %2433 = vmatpush1.msra.mxu0 0.0
      %2434 = vmatprep.subr.mxu0 0.0
      %2435 = vmatpush1.msra.mxu0 0.0
      %2436 = vmatprep.subr.mxu0 0.0
      %2437 = vmatpush1.msra.mxu0 0.0
      %2438 = vmatprep.subr.mxu0 0.0
      %2439 = vmatpush1.msra.mxu0 0.0
      %2440 = vmatprep.subr.mxu0 0.0
      %2441 = vmatpush1.msra.mxu0 0.0
      %2442 = vmatprep.subr.mxu0 0.0
      %2443 = vmatpush1.msra.mxu0 0.0
      %2444 = vmatprep.subr.mxu0 0.0
      %2445 = vmatpush1.msra.mxu0 0.0
      %2446 = vmatprep.subr.mxu0 0.0
      %2447 = vmatpush1.msra.mxu0 0.0
      %2448 = vmatprep.subr.mxu0 0.0
      %2449 = vmatpush1.msra.mxu0 0.0
      %2450 = vmatprep.mubr.f32.mxu0 0.0
      %2451 = vmatmul.mubr.f32.gmra.mrb[0].mxu0 %v2379
      %v2452 = vpop.f32.mrb[0].mxu0
      %v2453 = vadd.f32 0.0, %v2452
      %v2454 = vpop.f32.mrb[0].mxu0
      %2455 = vmatprep.mubr.f32.mxu0 0.0
      %2456 = vmatmul.mubr.f32.gmra.mrb[0].mxu0 %v2382
      %v2457 = vpop.f32.mrb[0].mxu0
      %v2458 = vadd.f32 0.0, %v2457
      %v2459 = vpop.f32.mrb[0].mxu0
      %2460 = vdwg.mxu0
      %v2462 = vrot.slane %v1604, 4
      %v2464 = vsel %vm1951, %v1901, 0
      %v2467 = vsel %vm1951, %v1902, 0
      %v2469 = vsel %vm1958, %v2462, 0
      %2471 = vmatprep.subr.mxu0 0.0
      %2472 = vmatpush1.msra.mxu0 %v2469
      %2473 = vmatprep.subr.mxu0 0.0
      %2474 = vmatpush1.msra.mxu0 0.0
      %2475 = vmatprep.subr.mxu0 0.0
      %2476 = vmatpush1.msra.mxu0 0.0
      %2477 = vmatprep.subr.mxu0 0.0
      %2478 = vmatpush1.msra.mxu0 0.0
      %2479 = vmatprep.subr.mxu0 0.0
      %2480 = vmatpush1.msra.mxu0 0.0
      %2481 = vmatprep.subr.mxu0 0.0
      %2482 = vmatpush1.msra.mxu0 0.0
      %2483 = vmatprep.subr.mxu0 0.0
      %2484 = vmatpush1.msra.mxu0 0.0
      %2485 = vmatprep.subr.mxu0 0.0
      %2486 = vmatpush1.msra.mxu0 0.0
      %2487 = vmatprep.subr.mxu0 0.0
      %2488 = vmatpush1.msra.mxu0 0.0
      %2489 = vmatprep.subr.mxu0 0.0
      %2490 = vmatpush1.msra.mxu0 0.0
      %2491 = vmatprep.subr.mxu0 0.0
      %2492 = vmatpush1.msra.mxu0 0.0
      %2493 = vmatprep.subr.mxu0 0.0
      %2494 = vmatpush1.msra.mxu0 0.0
      %2495 = vmatprep.subr.mxu0 0.0
      %2496 = vmatpush1.msra.mxu0 0.0
      %2497 = vmatprep.subr.mxu0 0.0
      %2498 = vmatpush1.msra.mxu0 0.0
      %2499 = vmatprep.subr.mxu0 0.0
      %2500 = vmatpush1.msra.mxu0 0.0
      %2501 = vmatprep.subr.mxu0 0.0
      %2502 = vmatpush1.msra.mxu0 0.0
      %2503 = vmatprep.subr.mxu0 0.0
      %2504 = vmatpush1.msra.mxu0 0.0
      %2505 = vmatprep.subr.mxu0 0.0
      %2506 = vmatpush1.msra.mxu0 0.0
      %2507 = vmatprep.subr.mxu0 0.0
      %2508 = vmatpush1.msra.mxu0 0.0
      %2509 = vmatprep.subr.mxu0 0.0
      %2510 = vmatpush1.msra.mxu0 0.0
      %2511 = vmatprep.subr.mxu0 0.0
      %2512 = vmatpush1.msra.mxu0 0.0
      %2513 = vmatprep.subr.mxu0 0.0
      %2514 = vmatpush1.msra.mxu0 0.0
      %2515 = vmatprep.subr.mxu0 0.0
      %2516 = vmatpush1.msra.mxu0 0.0
      %2517 = vmatprep.subr.mxu0 0.0
      %2518 = vmatpush1.msra.mxu0 0.0
      %2519 = vmatprep.subr.mxu0 0.0
      %2520 = vmatpush1.msra.mxu0 0.0
      %2521 = vmatprep.subr.mxu0 0.0
      %2522 = vmatpush1.msra.mxu0 0.0
      %2523 = vmatprep.subr.mxu0 0.0
      %2524 = vmatpush1.msra.mxu0 0.0
      %2525 = vmatprep.subr.mxu0 0.0
      %2526 = vmatpush1.msra.mxu0 0.0
      %2527 = vmatprep.subr.mxu0 0.0
      %2528 = vmatpush1.msra.mxu0 0.0
      %2529 = vmatprep.subr.mxu0 0.0
      %2530 = vmatpush1.msra.mxu0 0.0
      %2531 = vmatprep.subr.mxu0 0.0
      %2532 = vmatpush1.msra.mxu0 0.0
      %2533 = vmatprep.subr.mxu0 0.0
      %2534 = vmatpush1.msra.mxu0 0.0
      %2535 = vmatprep.mubr.f32.mxu0 0.0
      %2536 = vmatmul.mubr.f32.gmra.mrb[0].mxu0 %v2464
      %v2537 = vpop.f32.mrb[0].mxu0
      %v2538 = vadd.f32 0.0, %v2537
      %v2539 = vpop.f32.mrb[0].mxu0
      %2540 = vmatprep.mubr.f32.mxu0 0.0
      %2541 = vmatmul.mubr.f32.gmra.mrb[0].mxu0 %v2467
      %v2542 = vpop.f32.mrb[0].mxu0
      %v2543 = vadd.f32 0.0, %v2542
      %v2544 = vpop.f32.mrb[0].mxu0
      %2545 = vdwg.mxu0
      %v2547 = vrot.slane %v1685, 4
      %v2549 = vsel %vm1951, %v1933, 0
      %v2552 = vsel %vm1951, %v1934, 0
      %v2554 = vsel %vm1958, %v2547, 0
      %2556 = vmatprep.subr.mxu0 0.0
      %2557 = vmatpush1.msra.mxu0 %v2554
      %2558 = vmatprep.subr.mxu0 0.0
      %2559 = vmatpush1.msra.mxu0 0.0
      %2560 = vmatprep.subr.mxu0 0.0
      %2561 = vmatpush1.msra.mxu0 0.0
      %2562 = vmatprep.subr.mxu0 0.0
      %2563 = vmatpush1.msra.mxu0 0.0
      %2564 = vmatprep.subr.mxu0 0.0
      %2565 = vmatpush1.msra.mxu0 0.0
      %2566 = vmatprep.subr.mxu0 0.0
      %2567 = vmatpush1.msra.mxu0 0.0
      %2568 = vmatprep.subr.mxu0 0.0
      %2569 = vmatpush1.msra.mxu0 0.0
      %2570 = vmatprep.subr.mxu0 0.0
      %2571 = vmatpush1.msra.mxu0 0.0
      %2572 = vmatprep.subr.mxu0 0.0
      %2573 = vmatpush1.msra.mxu0 0.0
      %2574 = vmatprep.subr.mxu0 0.0
      %2575 = vmatpush1.msra.mxu0 0.0
      %2576 = vmatprep.subr.mxu0 0.0
      %2577 = vmatpush1.msra.mxu0 0.0
      %2578 = vmatprep.subr.mxu0 0.0
      %2579 = vmatpush1.msra.mxu0 0.0
      %2580 = vmatprep.subr.mxu0 0.0
      %2581 = vmatpush1.msra.mxu0 0.0
      %2582 = vmatprep.subr.mxu0 0.0
      %2583 = vmatpush1.msra.mxu0 0.0
      %2584 = vmatprep.subr.mxu0 0.0
      %2585 = vmatpush1.msra.mxu0 0.0
      %2586 = vmatprep.subr.mxu0 0.0
      %2587 = vmatpush1.msra.mxu0 0.0
      %2588 = vmatprep.subr.mxu0 0.0
      %2589 = vmatpush1.msra.mxu0 0.0
      %2590 = vmatprep.subr.mxu0 0.0
      %2591 = vmatpush1.msra.mxu0 0.0
      %2592 = vmatprep.subr.mxu0 0.0
      %2593 = vmatpush1.msra.mxu0 0.0
      %2594 = vmatprep.subr.mxu0 0.0
      %2595 = vmatpush1.msra.mxu0 0.0
      %2596 = vmatprep.subr.mxu0 0.0
      %2597 = vmatpush1.msra.mxu0 0.0
      %2598 = vmatprep.subr.mxu0 0.0
      %2599 = vmatpush1.msra.mxu0 0.0
      %2600 = vmatprep.subr.mxu0 0.0
      %2601 = vmatpush1.msra.mxu0 0.0
      %2602 = vmatprep.subr.mxu0 0.0
      %2603 = vmatpush1.msra.mxu0 0.0
      %2604 = vmatprep.subr.mxu0 0.0
      %2605 = vmatpush1.msra.mxu0 0.0
      %2606 = vmatprep.subr.mxu0 0.0
      %2607 = vmatpush1.msra.mxu0 0.0
      %2608 = vmatprep.subr.mxu0 0.0
      %2609 = vmatpush1.msra.mxu0 0.0
      %2610 = vmatprep.subr.mxu0 0.0
      %2611 = vmatpush1.msra.mxu0 0.0
      %2612 = vmatprep.subr.mxu0 0.0
      %2613 = vmatpush1.msra.mxu0 0.0
      %2614 = vmatprep.subr.mxu0 0.0
      %2615 = vmatpush1.msra.mxu0 0.0
      %2616 = vmatprep.subr.mxu0 0.0
      %2617 = vmatpush1.msra.mxu0 0.0
      %2618 = vmatprep.subr.mxu0 0.0
      %2619 = vmatpush1.msra.mxu0 0.0
      %2620 = vmatprep.mubr.f32.mxu0 0.0
      %2621 = vmatmul.mubr.f32.gmra.mrb[0].mxu0 %v2549
      %v2622 = vpop.f32.mrb[0].mxu0
      %v2623 = vadd.f32 0.0, %v2622
      %v2624 = vpop.f32.mrb[0].mxu0
      %2625 = vmatprep.mubr.f32.mxu0 0.0
      %2626 = vmatmul.mubr.f32.gmra.mrb[0].mxu0 %v2552
      %v2627 = vpop.f32.mrb[0].mxu0
      %v2628 = vadd.f32 0.0, %v2627
      %v2629 = vpop.f32.mrb[0].mxu0
      %2630 = vdwg.mxu0
      %vm2631 = vcmp.eq.f32.partialorder %v899, 0.0
      %vm2632 = vcmp.eq.f32.partialorder %v900, 0.0
      %v2633 = vsel %vm2631, 1, 0
      %v2634 = vsel %vm2632, 1, 0
      %vm2635 = vcmp.eq.s32.totalorder %v2633, 1
      %vm2636 = vcmp.eq.s32.totalorder %v2634, 1
      %v2637 = vsel %vm2635, -1e+30, %v2028
      %v2638 = vsel %vm2636, -1e+30, %v2033
      %v2639 = vsel %vm2635, -1e+30, %v2113
      %v2640 = vsel %vm2636, -1e+30, %v2118
      %v2641 = vsel %vm2635, -1e+30, %v2198
      %v2642 = vsel %vm2636, -1e+30, %v2203
      %v2643 = vsel %vm2635, -1e+30, %v2283
      %v2644 = vsel %vm2636, -1e+30, %v2288
      %v2645 = vsel %vm2635, -1e+30, %v2368
      %v2646 = vsel %vm2636, -1e+30, %v2373
      %v2647 = vsel %vm2635, -1e+30, %v2453
      %v2648 = vsel %vm2636, -1e+30, %v2458
      %v2649 = vsel %vm2635, -1e+30, %v2538
      %v2650 = vsel %vm2636, -1e+30, %v2543
      %v2651 = vsel %vm2635, -1e+30, %v2623
      %v2652 = vsel %vm2636, -1e+30, %v2628
      %vm2653 = vcmask 130048
      %v2654 = vsel %vm2653, %v2637, -inf
      %2655 = vmax.xlane.f32.xlu0 %v2654
      %v2656 = vpop.xlane.xlu0 %2655
      %v2657 = vsel %vm2653, %v2638, -inf
      %2658 = vmax.xlane.f32.xlu0 %v2657
      %v2659 = vpop.xlane.xlu0 %2658
      %v2660 = vsel %vm2653, %v2639, -inf
      %2661 = vmax.xlane.f32.xlu0 %v2660
      %v2662 = vpop.xlane.xlu0 %2661
      %v2663 = vsel %vm2653, %v2640, -inf
      %2664 = vmax.xlane.f32.xlu0 %v2663
      %v2665 = vpop.xlane.xlu0 %2664
      %v2666 = vsel %vm2653, %v2641, -inf
      %2667 = vmax.xlane.f32.xlu0 %v2666
      %v2668 = vpop.xlane.xlu0 %2667
      %v2669 = vsel %vm2653, %v2642, -inf
      %2670 = vmax.xlane.f32.xlu0 %v2669
      %v2671 = vpop.xlane.xlu0 %2670
      %v2672 = vsel %vm2653, %v2643, -inf
      %2673 = vmax.xlane.f32.xlu0 %v2672
      %v2674 = vpop.xlane.xlu0 %2673
      %v2675 = vsel %vm2653, %v2644, -inf
      %2676 = vmax.xlane.f32.xlu0 %v2675
      %v2677 = vpop.xlane.xlu0 %2676
      %v2678 = vsel %vm2653, %v2645, -inf
      %2679 = vmax.xlane.f32.xlu0 %v2678
      %v2680 = vpop.xlane.xlu0 %2679
      %v2681 = vsel %vm2653, %v2646, -inf
      %2682 = vmax.xlane.f32.xlu0 %v2681
      %v2683 = vpop.xlane.xlu0 %2682
      %v2684 = vsel %vm2653, %v2647, -inf
      %2685 = vmax.xlane.f32.xlu0 %v2684
      %v2686 = vpop.xlane.xlu0 %2685
      %v2687 = vsel %vm2653, %v2648, -inf
      %2688 = vmax.xlane.f32.xlu0 %v2687
      %v2689 = vpop.xlane.xlu0 %2688
      %v2690 = vsel %vm2653, %v2649, -inf
      %2691 = vmax.xlane.f32.xlu0 %v2690
      %v2692 = vpop.xlane.xlu0 %2691
      %v2693 = vsel %vm2653, %v2650, -inf
      %2694 = vmax.xlane.f32.xlu0 %v2693
      %v2695 = vpop.xlane.xlu0 %2694
      %v2696 = vsel %vm2653, %v2651, -inf
      %2697 = vmax.xlane.f32.xlu0 %v2696
      %v2698 = vpop.xlane.xlu0 %2697
      %v2699 = vsel %vm2653, %v2652, -inf
      %2700 = vmax.xlane.f32.xlu0 %v2699
      %v2701 = vpop.xlane.xlu0 %2700
      %v2702 = vsub.f32 %v2637, %v2656
      %v2703 = vsub.f32 %v2638, %v2659
      %v2704 = vsub.f32 %v2639, %v2662
      %v2705 = vsub.f32 %v2640, %v2665
      %v2706 = vsub.f32 %v2641, %v2668
      %v2707 = vsub.f32 %v2642, %v2671
      %v2708 = vsub.f32 %v2643, %v2674
      %v2709 = vsub.f32 %v2644, %v2677
      %v2710 = vsub.f32 %v2645, %v2680
      %v2711 = vsub.f32 %v2646, %v2683
      %v2712 = vsub.f32 %v2647, %v2686
      %v2713 = vsub.f32 %v2648, %v2689
      %v2714 = vsub.f32 %v2649, %v2692
      %v2715 = vsub.f32 %v2650, %v2695
      %v2716 = vsub.f32 %v2651, %v2698
      %v2717 = vsub.f32 %v2652, %v2701
      %v2718 = vmul.f32 %v2702, 1.442695
      %v2719 = vpow.pop %v2718
      %v2720 = vmul.f32 %v2703, 1.442695
      %v2721 = vpow.pop %v2720
      %v2722 = vmul.f32 %v2704, 1.442695
      %v2723 = vpow.pop %v2722
      %v2724 = vmul.f32 %v2705, 1.442695
      %v2725 = vpow.pop %v2724
      %v2726 = vmul.f32 %v2706, 1.442695
      %v2727 = vpow.pop %v2726
      %v2728 = vmul.f32 %v2707, 1.442695
      %v2729 = vpow.pop %v2728
      %v2730 = vmul.f32 %v2708, 1.442695
      %v2731 = vpow.pop %v2730
      %v2732 = vmul.f32 %v2709, 1.442695
      %v2733 = vpow.pop %v2732
      %v2734 = vmul.f32 %v2710, 1.442695
      %v2735 = vpow.pop %v2734
      %v2736 = vmul.f32 %v2711, 1.442695
      %v2737 = vpow.pop %v2736
      %v2738 = vmul.f32 %v2712, 1.442695
      %v2739 = vpow.pop %v2738
      %v2740 = vmul.f32 %v2713, 1.442695
      %v2741 = vpow.pop %v2740
      %v2742 = vmul.f32 %v2714, 1.442695
      %v2743 = vpow.pop %v2742
      %v2744 = vmul.f32 %v2715, 1.442695
      %v2745 = vpow.pop %v2744
      %v2746 = vmul.f32 %v2716, 1.442695
      %v2747 = vpow.pop %v2746
      %v2748 = vmul.f32 %v2717, 1.442695
      %v2749 = vpow.pop %v2748
      %v2750 = vsel %vm2635, 0.0, %v2719
      %v2751 = vsel %vm2636, 0.0, %v2721
      %v2752 = vsel %vm2635, 0.0, %v2723
      %v2753 = vsel %vm2636, 0.0, %v2725
      %v2754 = vsel %vm2635, 0.0, %v2727
      %v2755 = vsel %vm2636, 0.0, %v2729
      %v2756 = vsel %vm2635, 0.0, %v2731
      %v2757 = vsel %vm2636, 0.0, %v2733
      %v2758 = vsel %vm2635, 0.0, %v2735
      %v2759 = vsel %vm2636, 0.0, %v2737
      %v2760 = vsel %vm2635, 0.0, %v2739
      %v2761 = vsel %vm2636, 0.0, %v2741
      %v2762 = vsel %vm2635, 0.0, %v2743
      %v2763 = vsel %vm2636, 0.0, %v2745
      %v2764 = vsel %vm2635, 0.0, %v2747
      %v2765 = vsel %vm2636, 0.0, %v2749
      %v2766 = vsel %vm2653, %v2750, 0.0
      %2767 = vadd.xlane.f32.xlu0 %v2766
      %v2768 = vpop.xlane.xlu0 %2767
      %v2769 = vsel %vm2653, %v2751, 0.0
      %2770 = vadd.xlane.f32.xlu0 %v2769
      %v2771 = vpop.xlane.xlu0 %2770
      %v2772 = vsel %vm2653, %v2752, 0.0
      %2773 = vadd.xlane.f32.xlu0 %v2772
      %v2774 = vpop.xlane.xlu0 %2773
      %v2775 = vsel %vm2653, %v2753, 0.0
      %2776 = vadd.xlane.f32.xlu0 %v2775
      %v2777 = vpop.xlane.xlu0 %2776
      %v2778 = vsel %vm2653, %v2754, 0.0
      %2779 = vadd.xlane.f32.xlu0 %v2778
      %v2780 = vpop.xlane.xlu0 %2779
      %v2781 = vsel %vm2653, %v2755, 0.0
      %2782 = vadd.xlane.f32.xlu0 %v2781
      %v2783 = vpop.xlane.xlu0 %2782
      %v2784 = vsel %vm2653, %v2756, 0.0
      %2785 = vadd.xlane.f32.xlu0 %v2784
      %v2786 = vpop.xlane.xlu0 %2785
      %v2787 = vsel %vm2653, %v2757, 0.0
      %2788 = vadd.xlane.f32.xlu0 %v2787
      %v2789 = vpop.xlane.xlu0 %2788
      %v2790 = vsel %vm2653, %v2758, 0.0
      %2791 = vadd.xlane.f32.xlu0 %v2790
      %v2792 = vpop.xlane.xlu0 %2791
      %v2793 = vsel %vm2653, %v2759, 0.0
      %2794 = vadd.xlane.f32.xlu0 %v2793
      %v2795 = vpop.xlane.xlu0 %2794
      %v2796 = vsel %vm2653, %v2760, 0.0
      %2797 = vadd.xlane.f32.xlu0 %v2796
      %v2798 = vpop.xlane.xlu0 %2797
      %v2799 = vsel %vm2653, %v2761, 0.0
      %2800 = vadd.xlane.f32.xlu0 %v2799
      %v2801 = vpop.xlane.xlu0 %2800
      %v2802 = vsel %vm2653, %v2762, 0.0
      %2803 = vadd.xlane.f32.xlu0 %v2802
      %v2804 = vpop.xlane.xlu0 %2803
      %v2805 = vsel %vm2653, %v2763, 0.0
      %2806 = vadd.xlane.f32.xlu0 %v2805
      %v2807 = vpop.xlane.xlu0 %2806
      %v2808 = vsel %vm2653, %v2764, 0.0
      %2809 = vadd.xlane.f32.xlu0 %v2808
      %v2810 = vpop.xlane.xlu0 %2809
      %v2811 = vsel %vm2653, %v2765, 0.0
      %2812 = vadd.xlane.f32.xlu0 %v2811
      %v2813 = vpop.xlane.xlu0 %2812
      %v2814 = vmax.f32 %v2768, 1e-30
      %v2815 = vmax.f32 %v2771, 1e-30
      %v2816 = vmax.f32 %v2774, 1e-30
      %v2817 = vmax.f32 %v2777, 1e-30
      %v2818 = vmax.f32 %v2780, 1e-30
      %v2819 = vmax.f32 %v2783, 1e-30
      %v2820 = vmax.f32 %v2786, 1e-30
      %v2821 = vmax.f32 %v2789, 1e-30
      %v2822 = vmax.f32 %v2792, 1e-30
      %v2823 = vmax.f32 %v2795, 1e-30
      %v2824 = vmax.f32 %v2798, 1e-30
      %v2825 = vmax.f32 %v2801, 1e-30
      %v2826 = vmax.f32 %v2804, 1e-30
      %v2827 = vmax.f32 %v2807, 1e-30
      %v2828 = vmax.f32 %v2810, 1e-30
      %v2829 = vmax.f32 %v2813, 1e-30
      %v2830 = vrcp.pop %v2814
      %v2831 = vrcp.pop %v2815
      %v2832 = vrcp.pop %v2816
      %v2833 = vrcp.pop %v2817
      %v2834 = vrcp.pop %v2818
      %v2835 = vrcp.pop %v2819
      %v2836 = vrcp.pop %v2820
      %v2837 = vrcp.pop %v2821
      %v2838 = vrcp.pop %v2822
      %v2839 = vrcp.pop %v2823
      %v2840 = vrcp.pop %v2824
      %v2841 = vrcp.pop %v2825
      %v2842 = vrcp.pop %v2826
      %v2843 = vrcp.pop %v2827
      %v2844 = vrcp.pop %v2828
      %v2845 = vrcp.pop %v2829
      %v2846 = vmul.f32 %v2750, %v2830
      %v2847 = vmul.f32 %v2751, %v2831
      %v2848 = vmul.f32 %v2752, %v2832
      %v2849 = vmul.f32 %v2753, %v2833
      %v2850 = vmul.f32 %v2754, %v2834
      %v2851 = vmul.f32 %v2755, %v2835
      %v2852 = vmul.f32 %v2756, %v2836
      %v2853 = vmul.f32 %v2757, %v2837
      %v2854 = vmul.f32 %v2758, %v2838
      %v2855 = vmul.f32 %v2759, %v2839
      %v2856 = vmul.f32 %v2760, %v2840
      %v2857 = vmul.f32 %v2761, %v2841
      %v2858 = vmul.f32 %v2762, %v2842
      %v2859 = vmul.f32 %v2763, %v2843
      %v2860 = vmul.f32 %v2764, %v2844
      %v2861 = vmul.f32 %v2765, %v2845
      %v2863 = vsel %vm2653, %v2846, 0
      %v2866 = vsel %vm2653, %v2847, 0
      %v2869 = vsel %vm2653, %v1123, 0
      %2871 = vmatprep.subr.mxu0 0.0
      %2872 = vmatpush1.xpose.msra.mxu0 %v2869
      %2873 = vmatprep.subr.mxu0 0.0
      %2874 = vmatpush1.xpose.msra.mxu0 0.0
      %2875 = vmatprep.subr.mxu0 0.0
      %2876 = vmatpush1.xpose.msra.mxu0 0.0
      %2877 = vmatprep.subr.mxu0 0.0
      %2878 = vmatpush1.xpose.msra.mxu0 0.0
      %2879 = vmatprep.subr.mxu0 0.0
      %2880 = vmatpush1.xpose.msra.mxu0 0.0
      %2881 = vmatprep.subr.mxu0 0.0
      %2882 = vmatpush1.xpose.msra.mxu0 0.0
      %2883 = vmatprep.subr.mxu0 0.0
      %2884 = vmatpush1.xpose.msra.mxu0 0.0
      %2885 = vmatprep.subr.mxu0 0.0
      %2886 = vmatpush1.xpose.msra.mxu0 0.0
      %2887 = vmatprep.subr.mxu0 0.0
      %2888 = vmatpush1.xpose.msra.mxu0 0.0
      %2889 = vmatprep.subr.mxu0 0.0
      %2890 = vmatpush1.xpose.msra.mxu0 0.0
      %2891 = vmatprep.subr.mxu0 0.0
      %2892 = vmatpush1.xpose.msra.mxu0 0.0
      %2893 = vmatprep.subr.mxu0 0.0
      %2894 = vmatpush1.xpose.msra.mxu0 0.0
      %2895 = vmatprep.subr.mxu0 0.0
      %2896 = vmatpush1.xpose.msra.mxu0 0.0
      %2897 = vmatprep.subr.mxu0 0.0
      %2898 = vmatpush1.xpose.msra.mxu0 0.0
      %2899 = vmatprep.subr.mxu0 0.0
      %2900 = vmatpush1.xpose.msra.mxu0 0.0
      %2901 = vmatprep.subr.mxu0 0.0
      %2902 = vmatpush1.xpose.msra.mxu0 0.0
      %2903 = vmatprep.subr.mxu0 0.0
      %2904 = vmatpush1.xpose.msra.mxu0 0.0
      %2905 = vmatprep.subr.mxu0 0.0
      %2906 = vmatpush1.xpose.msra.mxu0 0.0
      %2907 = vmatprep.subr.mxu0 0.0
      %2908 = vmatpush1.xpose.msra.mxu0 0.0
      %2909 = vmatprep.subr.mxu0 0.0
      %2910 = vmatpush1.xpose.msra.mxu0 0.0
      %2911 = vmatprep.subr.mxu0 0.0
      %2912 = vmatpush1.xpose.msra.mxu0 0.0
      %2913 = vmatprep.subr.mxu0 0.0
      %2914 = vmatpush1.xpose.msra.mxu0 0.0
      %2915 = vmatprep.subr.mxu0 0.0
      %2916 = vmatpush1.xpose.msra.mxu0 0.0
      %2917 = vmatprep.subr.mxu0 0.0
      %2918 = vmatpush1.xpose.msra.mxu0 0.0
      %2919 = vmatprep.subr.mxu0 0.0
      %2920 = vmatpush1.xpose.msra.mxu0 0.0
      %2921 = vmatprep.subr.mxu0 0.0
      %2922 = vmatpush1.xpose.msra.mxu0 0.0
      %2923 = vmatprep.subr.mxu0 0.0
      %2924 = vmatpush1.xpose.msra.mxu0 0.0
      %2925 = vmatprep.subr.mxu0 0.0
      %2926 = vmatpush1.xpose.msra.mxu0 0.0
      %2927 = vmatprep.subr.mxu0 0.0
      %2928 = vmatpush1.xpose.msra.mxu0 0.0
      %2929 = vmatprep.subr.mxu0 0.0
      %2930 = vmatpush1.xpose.msra.mxu0 0.0
      %2931 = vmatprep.subr.mxu0 0.0
      %2932 = vmatpush1.xpose.msra.mxu0 0.0
      %2933 = vmatprep.subr.mxu0 0.0
      %2934 = vmatpush1.xpose.msra.mxu0 0.0
      %2935 = vmatprep.mubr.f32.mxu0 0.0
      %2936 = vmatmul.mubr.f32.gmra.mrb[0].mxu0 %v2863
      %v2937 = vpop.f32.mrb[0].mxu0
      %v2938 = vadd.f32 0.0, %v2937
      %v2939 = vpop.f32.mrb[0].mxu0
      %2940 = vmatprep.mubr.f32.mxu0 0.0
      %2941 = vmatmul.mubr.f32.gmra.mrb[0].mxu0 %v2866
      %v2942 = vpop.f32.mrb[0].mxu0
      %v2943 = vadd.f32 0.0, %v2942
      %v2944 = vpop.f32.mrb[0].mxu0
      %2945 = vdwg.mxu0
      %v2947 = vsel %vm2653, %v2848, 0
      %v2950 = vsel %vm2653, %v2849, 0
      %v2953 = vsel %vm2653, %v1204, 0
      %2955 = vmatprep.subr.mxu0 0.0
      %2956 = vmatpush1.xpose.msra.mxu0 %v2953
      %2957 = vmatprep.subr.mxu0 0.0
      %2958 = vmatpush1.xpose.msra.mxu0 0.0
      %2959 = vmatprep.subr.mxu0 0.0
      %2960 = vmatpush1.xpose.msra.mxu0 0.0
      %2961 = vmatprep.subr.mxu0 0.0
      %2962 = vmatpush1.xpose.msra.mxu0 0.0
      %2963 = vmatprep.subr.mxu0 0.0
      %2964 = vmatpush1.xpose.msra.mxu0 0.0
      %2965 = vmatprep.subr.mxu0 0.0
      %2966 = vmatpush1.xpose.msra.mxu0 0.0
      %2967 = vmatprep.subr.mxu0 0.0
      %2968 = vmatpush1.xpose.msra.mxu0 0.0
      %2969 = vmatprep.subr.mxu0 0.0
      %2970 = vmatpush1.xpose.msra.mxu0 0.0
      %2971 = vmatprep.subr.mxu0 0.0
      %2972 = vmatpush1.xpose.msra.mxu0 0.0
      %2973 = vmatprep.subr.mxu0 0.0
      %2974 = vmatpush1.xpose.msra.mxu0 0.0
      %2975 = vmatprep.subr.mxu0 0.0
      %2976 = vmatpush1.xpose.msra.mxu0 0.0
      %2977 = vmatprep.subr.mxu0 0.0
      %2978 = vmatpush1.xpose.msra.mxu0 0.0
      %2979 = vmatprep.subr.mxu0 0.0
      %2980 = vmatpush1.xpose.msra.mxu0 0.0
      %2981 = vmatprep.subr.mxu0 0.0
      %2982 = vmatpush1.xpose.msra.mxu0 0.0
      %2983 = vmatprep.subr.mxu0 0.0
      %2984 = vmatpush1.xpose.msra.mxu0 0.0
      %2985 = vmatprep.subr.mxu0 0.0
      %2986 = vmatpush1.xpose.msra.mxu0 0.0
      %2987 = vmatprep.subr.mxu0 0.0
      %2988 = vmatpush1.xpose.msra.mxu0 0.0
      %2989 = vmatprep.subr.mxu0 0.0
      %2990 = vmatpush1.xpose.msra.mxu0 0.0
      %2991 = vmatprep.subr.mxu0 0.0
      %2992 = vmatpush1.xpose.msra.mxu0 0.0
      %2993 = vmatprep.subr.mxu0 0.0
      %2994 = vmatpush1.xpose.msra.mxu0 0.0
      %2995 = vmatprep.subr.mxu0 0.0
      %2996 = vmatpush1.xpose.msra.mxu0 0.0
      %2997 = vmatprep.subr.mxu0 0.0
      %2998 = vmatpush1.xpose.msra.mxu0 0.0
      %2999 = vmatprep.subr.mxu0 0.0
      %3000 = vmatpush1.xpose.msra.mxu0 0.0
      %3001 = vmatprep.subr.mxu0 0.0
      %3002 = vmatpush1.xpose.msra.mxu0 0.0
      %3003 = vmatprep.subr.mxu0 0.0
      %3004 = vmatpush1.xpose.msra.mxu0 0.0
      %3005 = vmatprep.subr.mxu0 0.0
      %3006 = vmatpush1.xpose.msra.mxu0 0.0
      %3007 = vmatprep.subr.mxu0 0.0
      %3008 = vmatpush1.xpose.msra.mxu0 0.0
      %3009 = vmatprep.subr.mxu0 0.0
      %3010 = vmatpush1.xpose.msra.mxu0 0.0
      %3011 = vmatprep.subr.mxu0 0.0
      %3012 = vmatpush1.xpose.msra.mxu0 0.0
      %3013 = vmatprep.subr.mxu0 0.0
      %3014 = vmatpush1.xpose.msra.mxu0 0.0
      %3015 = vmatprep.subr.mxu0 0.0
      %3016 = vmatpush1.xpose.msra.mxu0 0.0
      %3017 = vmatprep.subr.mxu0 0.0
      %3018 = vmatpush1.xpose.msra.mxu0 0.0
      %3019 = vmatprep.mubr.f32.mxu0 0.0
      %3020 = vmatmul.mubr.f32.gmra.mrb[0].mxu0 %v2947
      %v3021 = vpop.f32.mrb[0].mxu0
      %v3022 = vadd.f32 0.0, %v3021
      %v3023 = vpop.f32.mrb[0].mxu0
      %3024 = vmatprep.mubr.f32.mxu0 0.0
      %3025 = vmatmul.mubr.f32.gmra.mrb[0].mxu0 %v2950
      %v3026 = vpop.f32.mrb[0].mxu0
      %v3027 = vadd.f32 0.0, %v3026
      %v3028 = vpop.f32.mrb[0].mxu0
      %3029 = vdwg.mxu0
      %v3031 = vsel %vm2653, %v2850, 0
      %v3034 = vsel %vm2653, %v2851, 0
      %v3037 = vsel %vm2653, %v1285, 0
      %3039 = vmatprep.subr.mxu0 0.0
      %3040 = vmatpush1.xpose.msra.mxu0 %v3037
      %3041 = vmatprep.subr.mxu0 0.0
      %3042 = vmatpush1.xpose.msra.mxu0 0.0
      %3043 = vmatprep.subr.mxu0 0.0
      %3044 = vmatpush1.xpose.msra.mxu0 0.0
      %3045 = vmatprep.subr.mxu0 0.0
      %3046 = vmatpush1.xpose.msra.mxu0 0.0
      %3047 = vmatprep.subr.mxu0 0.0
      %3048 = vmatpush1.xpose.msra.mxu0 0.0
      %3049 = vmatprep.subr.mxu0 0.0
      %3050 = vmatpush1.xpose.msra.mxu0 0.0
      %3051 = vmatprep.subr.mxu0 0.0
      %3052 = vmatpush1.xpose.msra.mxu0 0.0
      %3053 = vmatprep.subr.mxu0 0.0
      %3054 = vmatpush1.xpose.msra.mxu0 0.0
      %3055 = vmatprep.subr.mxu0 0.0
      %3056 = vmatpush1.xpose.msra.mxu0 0.0
      %3057 = vmatprep.subr.mxu0 0.0
      %3058 = vmatpush1.xpose.msra.mxu0 0.0
      %3059 = vmatprep.subr.mxu0 0.0
      %3060 = vmatpush1.xpose.msra.mxu0 0.0
      %3061 = vmatprep.subr.mxu0 0.0
      %3062 = vmatpush1.xpose.msra.mxu0 0.0
      %3063 = vmatprep.subr.mxu0 0.0
      %3064 = vmatpush1.xpose.msra.mxu0 0.0
      %3065 = vmatprep.subr.mxu0 0.0
      %3066 = vmatpush1.xpose.msra.mxu0 0.0
      %3067 = vmatprep.subr.mxu0 0.0
      %3068 = vmatpush1.xpose.msra.mxu0 0.0
      %3069 = vmatprep.subr.mxu0 0.0
      %3070 = vmatpush1.xpose.msra.mxu0 0.0
      %3071 = vmatprep.subr.mxu0 0.0
      %3072 = vmatpush1.xpose.msra.mxu0 0.0
      %3073 = vmatprep.subr.mxu0 0.0
      %3074 = vmatpush1.xpose.msra.mxu0 0.0
      %3075 = vmatprep.subr.mxu0 0.0
      %3076 = vmatpush1.xpose.msra.mxu0 0.0
      %3077 = vmatprep.subr.mxu0 0.0
      %3078 = vmatpush1.xpose.msra.mxu0 0.0
      %3079 = vmatprep.subr.mxu0 0.0
      %3080 = vmatpush1.xpose.msra.mxu0 0.0
      %3081 = vmatprep.subr.mxu0 0.0
      %3082 = vmatpush1.xpose.msra.mxu0 0.0
      %3083 = vmatprep.subr.mxu0 0.0
      %3084 = vmatpush1.xpose.msra.mxu0 0.0
      %3085 = vmatprep.subr.mxu0 0.0
      %3086 = vmatpush1.xpose.msra.mxu0 0.0
      %3087 = vmatprep.subr.mxu0 0.0
      %3088 = vmatpush1.xpose.msra.mxu0 0.0
      %3089 = vmatprep.subr.mxu0 0.0
      %3090 = vmatpush1.xpose.msra.mxu0 0.0
      %3091 = vmatprep.subr.mxu0 0.0
      %3092 = vmatpush1.xpose.msra.mxu0 0.0
      %3093 = vmatprep.subr.mxu0 0.0
      %3094 = vmatpush1.xpose.msra.mxu0 0.0
      %3095 = vmatprep.subr.mxu0 0.0
      %3096 = vmatpush1.xpose.msra.mxu0 0.0
      %3097 = vmatprep.subr.mxu0 0.0
      %3098 = vmatpush1.xpose.msra.mxu0 0.0
      %3099 = vmatprep.subr.mxu0 0.0
      %3100 = vmatpush1.xpose.msra.mxu0 0.0
      %3101 = vmatprep.subr.mxu0 0.0
      %3102 = vmatpush1.xpose.msra.mxu0 0.0
      %3103 = vmatprep.mubr.f32.mxu0 0.0
      %3104 = vmatmul.mubr.f32.gmra.mrb[0].mxu0 %v3031
      %v3105 = vpop.f32.mrb[0].mxu0
      %v3106 = vadd.f32 0.0, %v3105
      %v3107 = vpop.f32.mrb[0].mxu0
      %3108 = vmatprep.mubr.f32.mxu0 0.0
      %3109 = vmatmul.mubr.f32.gmra.mrb[0].mxu0 %v3034
      %v3110 = vpop.f32.mrb[0].mxu0
      %v3111 = vadd.f32 0.0, %v3110
      %v3112 = vpop.f32.mrb[0].mxu0
      %3113 = vdwg.mxu0
      %v3115 = vsel %vm2653, %v2852, 0
      %v3118 = vsel %vm2653, %v2853, 0
      %v3121 = vsel %vm2653, %v1366, 0
      %3123 = vmatprep.subr.mxu0 0.0
      %3124 = vmatpush1.xpose.msra.mxu0 %v3121
      %3125 = vmatprep.subr.mxu0 0.0
      %3126 = vmatpush1.xpose.msra.mxu0 0.0
      %3127 = vmatprep.subr.mxu0 0.0
      %3128 = vmatpush1.xpose.msra.mxu0 0.0
      %3129 = vmatprep.subr.mxu0 0.0
      %3130 = vmatpush1.xpose.msra.mxu0 0.0
      %3131 = vmatprep.subr.mxu0 0.0
      %3132 = vmatpush1.xpose.msra.mxu0 0.0
      %3133 = vmatprep.subr.mxu0 0.0
      %3134 = vmatpush1.xpose.msra.mxu0 0.0
      %3135 = vmatprep.subr.mxu0 0.0
      %3136 = vmatpush1.xpose.msra.mxu0 0.0
      %3137 = vmatprep.subr.mxu0 0.0
      %3138 = vmatpush1.xpose.msra.mxu0 0.0
      %3139 = vmatprep.subr.mxu0 0.0
      %3140 = vmatpush1.xpose.msra.mxu0 0.0
      %3141 = vmatprep.subr.mxu0 0.0
      %3142 = vmatpush1.xpose.msra.mxu0 0.0
      %3143 = vmatprep.subr.mxu0 0.0
      %3144 = vmatpush1.xpose.msra.mxu0 0.0
      %3145 = vmatprep.subr.mxu0 0.0
      %3146 = vmatpush1.xpose.msra.mxu0 0.0
      %3147 = vmatprep.subr.mxu0 0.0
      %3148 = vmatpush1.xpose.msra.mxu0 0.0
      %3149 = vmatprep.subr.mxu0 0.0
      %3150 = vmatpush1.xpose.msra.mxu0 0.0
      %3151 = vmatprep.subr.mxu0 0.0
      %3152 = vmatpush1.xpose.msra.mxu0 0.0
      %3153 = vmatprep.subr.mxu0 0.0
      %3154 = vmatpush1.xpose.msra.mxu0 0.0
      %3155 = vmatprep.subr.mxu0 0.0
      %3156 = vmatpush1.xpose.msra.mxu0 0.0
      %3157 = vmatprep.subr.mxu0 0.0
      %3158 = vmatpush1.xpose.msra.mxu0 0.0
      %3159 = vmatprep.subr.mxu0 0.0
      %3160 = vmatpush1.xpose.msra.mxu0 0.0
      %3161 = vmatprep.subr.mxu0 0.0
      %3162 = vmatpush1.xpose.msra.mxu0 0.0
      %3163 = vmatprep.subr.mxu0 0.0
      %3164 = vmatpush1.xpose.msra.mxu0 0.0
      %3165 = vmatprep.subr.mxu0 0.0
      %3166 = vmatpush1.xpose.msra.mxu0 0.0
      %3167 = vmatprep.subr.mxu0 0.0
      %3168 = vmatpush1.xpose.msra.mxu0 0.0
      %3169 = vmatprep.subr.mxu0 0.0
      %3170 = vmatpush1.xpose.msra.mxu0 0.0
      %3171 = vmatprep.subr.mxu0 0.0
      %3172 = vmatpush1.xpose.msra.mxu0 0.0
      %3173 = vmatprep.subr.mxu0 0.0
      %3174 = vmatpush1.xpose.msra.mxu0 0.0
      %3175 = vmatprep.subr.mxu0 0.0
      %3176 = vmatpush1.xpose.msra.mxu0 0.0
      %3177 = vmatprep.subr.mxu0 0.0
      %3178 = vmatpush1.xpose.msra.mxu0 0.0
      %3179 = vmatprep.subr.mxu0 0.0
      %3180 = vmatpush1.xpose.msra.mxu0 0.0
      %3181 = vmatprep.subr.mxu0 0.0
      %3182 = vmatpush1.xpose.msra.mxu0 0.0
      %3183 = vmatprep.subr.mxu0 0.0
      %3184 = vmatpush1.xpose.msra.mxu0 0.0
      %3185 = vmatprep.subr.mxu0 0.0
      %3186 = vmatpush1.xpose.msra.mxu0 0.0
      %3187 = vmatprep.mubr.f32.mxu0 0.0
      %3188 = vmatmul.mubr.f32.gmra.mrb[0].mxu0 %v3115
      %v3189 = vpop.f32.mrb[0].mxu0
      %v3190 = vadd.f32 0.0, %v3189
      %v3191 = vpop.f32.mrb[0].mxu0
      %3192 = vmatprep.mubr.f32.mxu0 0.0
      %3193 = vmatmul.mubr.f32.gmra.mrb[0].mxu0 %v3118
      %v3194 = vpop.f32.mrb[0].mxu0
      %v3195 = vadd.f32 0.0, %v3194
      %v3196 = vpop.f32.mrb[0].mxu0
      %3197 = vdwg.mxu0
      %v3199 = vsel %vm2653, %v2854, 0
      %v3202 = vsel %vm2653, %v2855, 0
      %v3205 = vsel %vm2653, %v1447, 0
      %3207 = vmatprep.subr.mxu0 0.0
      %3208 = vmatpush1.xpose.msra.mxu0 %v3205
      %3209 = vmatprep.subr.mxu0 0.0
      %3210 = vmatpush1.xpose.msra.mxu0 0.0
      %3211 = vmatprep.subr.mxu0 0.0
      %3212 = vmatpush1.xpose.msra.mxu0 0.0
      %3213 = vmatprep.subr.mxu0 0.0
      %3214 = vmatpush1.xpose.msra.mxu0 0.0
      %3215 = vmatprep.subr.mxu0 0.0
      %3216 = vmatpush1.xpose.msra.mxu0 0.0
      %3217 = vmatprep.subr.mxu0 0.0
      %3218 = vmatpush1.xpose.msra.mxu0 0.0
      %3219 = vmatprep.subr.mxu0 0.0
      %3220 = vmatpush1.xpose.msra.mxu0 0.0
      %3221 = vmatprep.subr.mxu0 0.0
      %3222 = vmatpush1.xpose.msra.mxu0 0.0
      %3223 = vmatprep.subr.mxu0 0.0
      %3224 = vmatpush1.xpose.msra.mxu0 0.0
      %3225 = vmatprep.subr.mxu0 0.0
      %3226 = vmatpush1.xpose.msra.mxu0 0.0
      %3227 = vmatprep.subr.mxu0 0.0
      %3228 = vmatpush1.xpose.msra.mxu0 0.0
      %3229 = vmatprep.subr.mxu0 0.0
      %3230 = vmatpush1.xpose.msra.mxu0 0.0
      %3231 = vmatprep.subr.mxu0 0.0
      %3232 = vmatpush1.xpose.msra.mxu0 0.0
      %3233 = vmatprep.subr.mxu0 0.0
      %3234 = vmatpush1.xpose.msra.mxu0 0.0
      %3235 = vmatprep.subr.mxu0 0.0
      %3236 = vmatpush1.xpose.msra.mxu0 0.0
      %3237 = vmatprep.subr.mxu0 0.0
      %3238 = vmatpush1.xpose.msra.mxu0 0.0
      %3239 = vmatprep.subr.mxu0 0.0
      %3240 = vmatpush1.xpose.msra.mxu0 0.0
      %3241 = vmatprep.subr.mxu0 0.0
      %3242 = vmatpush1.xpose.msra.mxu0 0.0
      %3243 = vmatprep.subr.mxu0 0.0
      %3244 = vmatpush1.xpose.msra.mxu0 0.0
      %3245 = vmatprep.subr.mxu0 0.0
      %3246 = vmatpush1.xpose.msra.mxu0 0.0
      %3247 = vmatprep.subr.mxu0 0.0
      %3248 = vmatpush1.xpose.msra.mxu0 0.0
      %3249 = vmatprep.subr.mxu0 0.0
      %3250 = vmatpush1.xpose.msra.mxu0 0.0
      %3251 = vmatprep.subr.mxu0 0.0
      %3252 = vmatpush1.xpose.msra.mxu0 0.0
      %3253 = vmatprep.subr.mxu0 0.0
      %3254 = vmatpush1.xpose.msra.mxu0 0.0
      %3255 = vmatprep.subr.mxu0 0.0
      %3256 = vmatpush1.xpose.msra.mxu0 0.0
      %3257 = vmatprep.subr.mxu0 0.0
      %3258 = vmatpush1.xpose.msra.mxu0 0.0
      %3259 = vmatprep.subr.mxu0 0.0
      %3260 = vmatpush1.xpose.msra.mxu0 0.0
      %3261 = vmatprep.subr.mxu0 0.0
      %3262 = vmatpush1.xpose.msra.mxu0 0.0
      %3263 = vmatprep.subr.mxu0 0.0
      %3264 = vmatpush1.xpose.msra.mxu0 0.0
      %3265 = vmatprep.subr.mxu0 0.0
      %3266 = vmatpush1.xpose.msra.mxu0 0.0
      %3267 = vmatprep.subr.mxu0 0.0
      %3268 = vmatpush1.xpose.msra.mxu0 0.0
      %3269 = vmatprep.subr.mxu0 0.0
      %3270 = vmatpush1.xpose.msra.mxu0 0.0
      %3271 = vmatprep.mubr.f32.mxu0 0.0
      %3272 = vmatmul.mubr.f32.gmra.mrb[0].mxu0 %v3199
      %v3273 = vpop.f32.mrb[0].mxu0
      %v3274 = vadd.f32 0.0, %v3273
      %v3275 = vpop.f32.mrb[0].mxu0
      %3276 = vmatprep.mubr.f32.mxu0 0.0
      %3277 = vmatmul.mubr.f32.gmra.mrb[0].mxu0 %v3202
      %v3278 = vpop.f32.mrb[0].mxu0
      %v3279 = vadd.f32 0.0, %v3278
      %v3280 = vpop.f32.mrb[0].mxu0
      %3281 = vdwg.mxu0
      %v3283 = vsel %vm2653, %v2856, 0
      %v3286 = vsel %vm2653, %v2857, 0
      %v3289 = vsel %vm2653, %v1528, 0
      %3291 = vmatprep.subr.mxu0 0.0
      %3292 = vmatpush1.xpose.msra.mxu0 %v3289
      %3293 = vmatprep.subr.mxu0 0.0
      %3294 = vmatpush1.xpose.msra.mxu0 0.0
      %3295 = vmatprep.subr.mxu0 0.0
      %3296 = vmatpush1.xpose.msra.mxu0 0.0
      %3297 = vmatprep.subr.mxu0 0.0
      %3298 = vmatpush1.xpose.msra.mxu0 0.0
      %3299 = vmatprep.subr.mxu0 0.0
      %3300 = vmatpush1.xpose.msra.mxu0 0.0
      %3301 = vmatprep.subr.mxu0 0.0
      %3302 = vmatpush1.xpose.msra.mxu0 0.0
      %3303 = vmatprep.subr.mxu0 0.0
      %3304 = vmatpush1.xpose.msra.mxu0 0.0
      %3305 = vmatprep.subr.mxu0 0.0
      %3306 = vmatpush1.xpose.msra.mxu0 0.0
      %3307 = vmatprep.subr.mxu0 0.0
      %3308 = vmatpush1.xpose.msra.mxu0 0.0
      %3309 = vmatprep.subr.mxu0 0.0
      %3310 = vmatpush1.xpose.msra.mxu0 0.0
      %3311 = vmatprep.subr.mxu0 0.0
      %3312 = vmatpush1.xpose.msra.mxu0 0.0
      %3313 = vmatprep.subr.mxu0 0.0
      %3314 = vmatpush1.xpose.msra.mxu0 0.0
      %3315 = vmatprep.subr.mxu0 0.0
      %3316 = vmatpush1.xpose.msra.mxu0 0.0
      %3317 = vmatprep.subr.mxu0 0.0
      %3318 = vmatpush1.xpose.msra.mxu0 0.0
      %3319 = vmatprep.subr.mxu0 0.0
      %3320 = vmatpush1.xpose.msra.mxu0 0.0
      %3321 = vmatprep.subr.mxu0 0.0
      %3322 = vmatpush1.xpose.msra.mxu0 0.0
      %3323 = vmatprep.subr.mxu0 0.0
      %3324 = vmatpush1.xpose.msra.mxu0 0.0
      %3325 = vmatprep.subr.mxu0 0.0
      %3326 = vmatpush1.xpose.msra.mxu0 0.0
      %3327 = vmatprep.subr.mxu0 0.0
      %3328 = vmatpush1.xpose.msra.mxu0 0.0
      %3329 = vmatprep.subr.mxu0 0.0
      %3330 = vmatpush1.xpose.msra.mxu0 0.0
      %3331 = vmatprep.subr.mxu0 0.0
      %3332 = vmatpush1.xpose.msra.mxu0 0.0
      %3333 = vmatprep.subr.mxu0 0.0
      %3334 = vmatpush1.xpose.msra.mxu0 0.0
      %3335 = vmatprep.subr.mxu0 0.0
      %3336 = vmatpush1.xpose.msra.mxu0 0.0
      %3337 = vmatprep.subr.mxu0 0.0
      %3338 = vmatpush1.xpose.msra.mxu0 0.0
      %3339 = vmatprep.subr.mxu0 0.0
      %3340 = vmatpush1.xpose.msra.mxu0 0.0
      %3341 = vmatprep.subr.mxu0 0.0
      %3342 = vmatpush1.xpose.msra.mxu0 0.0
      %3343 = vmatprep.subr.mxu0 0.0
      %3344 = vmatpush1.xpose.msra.mxu0 0.0
      %3345 = vmatprep.subr.mxu0 0.0
      %3346 = vmatpush1.xpose.msra.mxu0 0.0
      %3347 = vmatprep.subr.mxu0 0.0
      %3348 = vmatpush1.xpose.msra.mxu0 0.0
      %3349 = vmatprep.subr.mxu0 0.0
      %3350 = vmatpush1.xpose.msra.mxu0 0.0
      %3351 = vmatprep.subr.mxu0 0.0
      %3352 = vmatpush1.xpose.msra.mxu0 0.0
      %3353 = vmatprep.subr.mxu0 0.0
      %3354 = vmatpush1.xpose.msra.mxu0 0.0
      %3355 = vmatprep.mubr.f32.mxu0 0.0
      %3356 = vmatmul.mubr.f32.gmra.mrb[0].mxu0 %v3283
      %v3357 = vpop.f32.mrb[0].mxu0
      %v3358 = vadd.f32 0.0, %v3357
      %v3359 = vpop.f32.mrb[0].mxu0
      %3360 = vmatprep.mubr.f32.mxu0 0.0
      %3361 = vmatmul.mubr.f32.gmra.mrb[0].mxu0 %v3286
      %v3362 = vpop.f32.mrb[0].mxu0
      %v3363 = vadd.f32 0.0, %v3362
      %v3364 = vpop.f32.mrb[0].mxu0
      %3365 = vdwg.mxu0
      %v3367 = vsel %vm2653, %v2858, 0
      %v3370 = vsel %vm2653, %v2859, 0
      %v3373 = vsel %vm2653, %v1609, 0
      %3375 = vmatprep.subr.mxu0 0.0
      %3376 = vmatpush1.xpose.msra.mxu0 %v3373
      %3377 = vmatprep.subr.mxu0 0.0
      %3378 = vmatpush1.xpose.msra.mxu0 0.0
      %3379 = vmatprep.subr.mxu0 0.0
      %3380 = vmatpush1.xpose.msra.mxu0 0.0
      %3381 = vmatprep.subr.mxu0 0.0
      %3382 = vmatpush1.xpose.msra.mxu0 0.0
      %3383 = vmatprep.subr.mxu0 0.0
      %3384 = vmatpush1.xpose.msra.mxu0 0.0
      %3385 = vmatprep.subr.mxu0 0.0
      %3386 = vmatpush1.xpose.msra.mxu0 0.0
      %3387 = vmatprep.subr.mxu0 0.0
      %3388 = vmatpush1.xpose.msra.mxu0 0.0
      %3389 = vmatprep.subr.mxu0 0.0
      %3390 = vmatpush1.xpose.msra.mxu0 0.0
      %3391 = vmatprep.subr.mxu0 0.0
      %3392 = vmatpush1.xpose.msra.mxu0 0.0
      %3393 = vmatprep.subr.mxu0 0.0
      %3394 = vmatpush1.xpose.msra.mxu0 0.0
      %3395 = vmatprep.subr.mxu0 0.0
      %3396 = vmatpush1.xpose.msra.mxu0 0.0
      %3397 = vmatprep.subr.mxu0 0.0
      %3398 = vmatpush1.xpose.msra.mxu0 0.0
      %3399 = vmatprep.subr.mxu0 0.0
      %3400 = vmatpush1.xpose.msra.mxu0 0.0
      %3401 = vmatprep.subr.mxu0 0.0
      %3402 = vmatpush1.xpose.msra.mxu0 0.0
      %3403 = vmatprep.subr.mxu0 0.0
      %3404 = vmatpush1.xpose.msra.mxu0 0.0
      %3405 = vmatprep.subr.mxu0 0.0
      %3406 = vmatpush1.xpose.msra.mxu0 0.0
      %3407 = vmatprep.subr.mxu0 0.0
      %3408 = vmatpush1.xpose.msra.mxu0 0.0
      %3409 = vmatprep.subr.mxu0 0.0
      %3410 = vmatpush1.xpose.msra.mxu0 0.0
      %3411 = vmatprep.subr.mxu0 0.0
      %3412 = vmatpush1.xpose.msra.mxu0 0.0
      %3413 = vmatprep.subr.mxu0 0.0
      %3414 = vmatpush1.xpose.msra.mxu0 0.0
      %3415 = vmatprep.subr.mxu0 0.0
      %3416 = vmatpush1.xpose.msra.mxu0 0.0
      %3417 = vmatprep.subr.mxu0 0.0
      %3418 = vmatpush1.xpose.msra.mxu0 0.0
      %3419 = vmatprep.subr.mxu0 0.0
      %3420 = vmatpush1.xpose.msra.mxu0 0.0
      %3421 = vmatprep.subr.mxu0 0.0
      %3422 = vmatpush1.xpose.msra.mxu0 0.0
      %3423 = vmatprep.subr.mxu0 0.0
      %3424 = vmatpush1.xpose.msra.mxu0 0.0
      %3425 = vmatprep.subr.mxu0 0.0
      %3426 = vmatpush1.xpose.msra.mxu0 0.0
      %3427 = vmatprep.subr.mxu0 0.0
      %3428 = vmatpush1.xpose.msra.mxu0 0.0
      %3429 = vmatprep.subr.mxu0 0.0
      %3430 = vmatpush1.xpose.msra.mxu0 0.0
      %3431 = vmatprep.subr.mxu0 0.0
      %3432 = vmatpush1.xpose.msra.mxu0 0.0
      %3433 = vmatprep.subr.mxu0 0.0
      %3434 = vmatpush1.xpose.msra.mxu0 0.0
      %3435 = vmatprep.subr.mxu0 0.0
      %3436 = vmatpush1.xpose.msra.mxu0 0.0
      %3437 = vmatprep.subr.mxu0 0.0
      %3438 = vmatpush1.xpose.msra.mxu0 0.0
      %3439 = vmatprep.mubr.f32.mxu0 0.0
      %3440 = vmatmul.mubr.f32.gmra.mrb[0].mxu0 %v3367
      %v3441 = vpop.f32.mrb[0].mxu0
      %v3442 = vadd.f32 0.0, %v3441
      %v3443 = vpop.f32.mrb[0].mxu0
      %3444 = vmatprep.mubr.f32.mxu0 0.0
      %3445 = vmatmul.mubr.f32.gmra.mrb[0].mxu0 %v3370
      %v3446 = vpop.f32.mrb[0].mxu0
      %v3447 = vadd.f32 0.0, %v3446
      %v3448 = vpop.f32.mrb[0].mxu0
      %3449 = vdwg.mxu0
      %v3451 = vsel %vm2653, %v2860, 0
      %v3454 = vsel %vm2653, %v2861, 0
      %v3457 = vsel %vm2653, %v1690, 0
      %3459 = vmatprep.subr.mxu0 0.0
      %3460 = vmatpush1.xpose.msra.mxu0 %v3457
      %3461 = vmatprep.subr.mxu0 0.0
      %3462 = vmatpush1.xpose.msra.mxu0 0.0
      %3463 = vmatprep.subr.mxu0 0.0
      %3464 = vmatpush1.xpose.msra.mxu0 0.0
      %3465 = vmatprep.subr.mxu0 0.0
      %3466 = vmatpush1.xpose.msra.mxu0 0.0
      %3467 = vmatprep.subr.mxu0 0.0
      %3468 = vmatpush1.xpose.msra.mxu0 0.0
      %3469 = vmatprep.subr.mxu0 0.0
      %3470 = vmatpush1.xpose.msra.mxu0 0.0
      %3471 = vmatprep.subr.mxu0 0.0
      %3472 = vmatpush1.xpose.msra.mxu0 0.0
      %3473 = vmatprep.subr.mxu0 0.0
      %3474 = vmatpush1.xpose.msra.mxu0 0.0
      %3475 = vmatprep.subr.mxu0 0.0
      %3476 = vmatpush1.xpose.msra.mxu0 0.0
      %3477 = vmatprep.subr.mxu0 0.0
      %3478 = vmatpush1.xpose.msra.mxu0 0.0
      %3479 = vmatprep.subr.mxu0 0.0
      %3480 = vmatpush1.xpose.msra.mxu0 0.0
      %3481 = vmatprep.subr.mxu0 0.0
      %3482 = vmatpush1.xpose.msra.mxu0 0.0
      %3483 = vmatprep.subr.mxu0 0.0
      %3484 = vmatpush1.xpose.msra.mxu0 0.0
      %3485 = vmatprep.subr.mxu0 0.0
      %3486 = vmatpush1.xpose.msra.mxu0 0.0
      %3487 = vmatprep.subr.mxu0 0.0
      %3488 = vmatpush1.xpose.msra.mxu0 0.0
      %3489 = vmatprep.subr.mxu0 0.0
      %3490 = vmatpush1.xpose.msra.mxu0 0.0
      %3491 = vmatprep.subr.mxu0 0.0
      %3492 = vmatpush1.xpose.msra.mxu0 0.0
      %3493 = vmatprep.subr.mxu0 0.0
      %3494 = vmatpush1.xpose.msra.mxu0 0.0
      %3495 = vmatprep.subr.mxu0 0.0
      %3496 = vmatpush1.xpose.msra.mxu0 0.0
      %3497 = vmatprep.subr.mxu0 0.0
      %3498 = vmatpush1.xpose.msra.mxu0 0.0
      %3499 = vmatprep.subr.mxu0 0.0
      %3500 = vmatpush1.xpose.msra.mxu0 0.0
      %3501 = vmatprep.subr.mxu0 0.0
      %3502 = vmatpush1.xpose.msra.mxu0 0.0
      %3503 = vmatprep.subr.mxu0 0.0
      %3504 = vmatpush1.xpose.msra.mxu0 0.0
      %3505 = vmatprep.subr.mxu0 0.0
      %3506 = vmatpush1.xpose.msra.mxu0 0.0
      %3507 = vmatprep.subr.mxu0 0.0
      %3508 = vmatpush1.xpose.msra.mxu0 0.0
      %3509 = vmatprep.subr.mxu0 0.0
      %3510 = vmatpush1.xpose.msra.mxu0 0.0
      %3511 = vmatprep.subr.mxu0 0.0
      %3512 = vmatpush1.xpose.msra.mxu0 0.0
      %3513 = vmatprep.subr.mxu0 0.0
      %3514 = vmatpush1.xpose.msra.mxu0 0.0
      %3515 = vmatprep.subr.mxu0 0.0
      %3516 = vmatpush1.xpose.msra.mxu0 0.0
      %3517 = vmatprep.subr.mxu0 0.0
      %3518 = vmatpush1.xpose.msra.mxu0 0.0
      %3519 = vmatprep.subr.mxu0 0.0
      %3520 = vmatpush1.xpose.msra.mxu0 0.0
      %3521 = vmatprep.subr.mxu0 0.0
      %3522 = vmatpush1.xpose.msra.mxu0 0.0
      %3523 = vmatprep.mubr.f32.mxu0 0.0
      %3524 = vmatmul.mubr.f32.gmra.mrb[0].mxu0 %v3451
      %v3525 = vpop.f32.mrb[0].mxu0
      %v3526 = vadd.f32 0.0, %v3525
      %v3527 = vpop.f32.mrb[0].mxu0
      %3528 = vmatprep.mubr.f32.mxu0 0.0
      %3529 = vmatmul.mubr.f32.gmra.mrb[0].mxu0 %v3454
      %v3530 = vpop.f32.mrb[0].mxu0
      %v3531 = vadd.f32 0.0, %v3530
      %v3532 = vpop.f32.mrb[0].mxu0
      %3533 = vdwg.mxu0
      %v3535 = vsel %vm1951, %v933, 0
      %v3538 = vsel %vm1951, %v934, 0
      %v3541 = vsel %vm1951, %v935, 0
      %v3544 = vsel %vm1951, %v936, 0
      %v3547 = vsel %vm1951, %v2938, 0
      %v3550 = vsel %vm1951, %v2943, 0
      %3552 = vmatprep.subr.mxu0 0.0
      %3553 = vmatpush1.xpose.msra.mxu0 %v3547
      %3554 = vmatprep.subr.mxu0 0.0
      %3555 = vmatpush1.xpose.msra.mxu0 %v3550
      %3556 = vmatprep.subr.mxu0 0.0
      %3557 = vmatpush1.xpose.msra.mxu0 0.0
      %3558 = vmatprep.subr.mxu0 0.0
      %3559 = vmatpush1.xpose.msra.mxu0 0.0
      %3560 = vmatprep.subr.mxu0 0.0
      %3561 = vmatpush1.xpose.msra.mxu0 0.0
      %3562 = vmatprep.subr.mxu0 0.0
      %3563 = vmatpush1.xpose.msra.mxu0 0.0
      %3564 = vmatprep.subr.mxu0 0.0
      %3565 = vmatpush1.xpose.msra.mxu0 0.0
      %3566 = vmatprep.subr.mxu0 0.0
      %3567 = vmatpush1.xpose.msra.mxu0 0.0
      %3568 = vmatprep.subr.mxu0 0.0
      %3569 = vmatpush1.xpose.msra.mxu0 0.0
      %3570 = vmatprep.subr.mxu0 0.0
      %3571 = vmatpush1.xpose.msra.mxu0 0.0
      %3572 = vmatprep.subr.mxu0 0.0
      %3573 = vmatpush1.xpose.msra.mxu0 0.0
      %3574 = vmatprep.subr.mxu0 0.0
      %3575 = vmatpush1.xpose.msra.mxu0 0.0
      %3576 = vmatprep.subr.mxu0 0.0
      %3577 = vmatpush1.xpose.msra.mxu0 0.0
      %3578 = vmatprep.subr.mxu0 0.0
      %3579 = vmatpush1.xpose.msra.mxu0 0.0
      %3580 = vmatprep.subr.mxu0 0.0
      %3581 = vmatpush1.xpose.msra.mxu0 0.0
      %3582 = vmatprep.subr.mxu0 0.0
      %3583 = vmatpush1.xpose.msra.mxu0 0.0
      %3584 = vmatprep.subr.mxu0 0.0
      %3585 = vmatpush1.xpose.msra.mxu0 0.0
      %3586 = vmatprep.subr.mxu0 0.0
      %3587 = vmatpush1.xpose.msra.mxu0 0.0
      %3588 = vmatprep.subr.mxu0 0.0
      %3589 = vmatpush1.xpose.msra.mxu0 0.0
      %3590 = vmatprep.subr.mxu0 0.0
      %3591 = vmatpush1.xpose.msra.mxu0 0.0
      %3592 = vmatprep.subr.mxu0 0.0
      %3593 = vmatpush1.xpose.msra.mxu0 0.0
      %3594 = vmatprep.subr.mxu0 0.0
      %3595 = vmatpush1.xpose.msra.mxu0 0.0
      %3596 = vmatprep.subr.mxu0 0.0
      %3597 = vmatpush1.xpose.msra.mxu0 0.0
      %3598 = vmatprep.subr.mxu0 0.0
      %3599 = vmatpush1.xpose.msra.mxu0 0.0
      %3600 = vmatprep.subr.mxu0 0.0
      %3601 = vmatpush1.xpose.msra.mxu0 0.0
      %3602 = vmatprep.subr.mxu0 0.0
      %3603 = vmatpush1.xpose.msra.mxu0 0.0
      %3604 = vmatprep.subr.mxu0 0.0
      %3605 = vmatpush1.xpose.msra.mxu0 0.0
      %3606 = vmatprep.subr.mxu0 0.0
      %3607 = vmatpush1.xpose.msra.mxu0 0.0
      %3608 = vmatprep.subr.mxu0 0.0
      %3609 = vmatpush1.xpose.msra.mxu0 0.0
      %3610 = vmatprep.subr.mxu0 0.0
      %3611 = vmatpush1.xpose.msra.mxu0 0.0
      %3612 = vmatprep.subr.mxu0 0.0
      %3613 = vmatpush1.xpose.msra.mxu0 0.0
      %3614 = vmatprep.subr.mxu0 0.0
      %3615 = vmatpush1.xpose.msra.mxu0 0.0
      %3616 = vmatprep.mubr.f32.mxu0 0.0
      %3617 = vmatmul.mubr.f32.gmra.mrb[0].mxu0 %v3535
      %v3618 = vpop.f32.mrb[0].mxu0
      %v3619 = vadd.f32 0.0, %v3618
      %v3620 = vpop.f32.mrb[0].mxu0
      %3621 = vmatprep.mubr.f32.mxu0 0.0
      %3622 = vmatmul.mubr.f32.gmra.mrb[0].mxu0 %v3538
      %v3623 = vpop.f32.mrb[0].mxu0
      %v3624 = vadd.f32 0.0, %v3623
      %v3625 = vpop.f32.mrb[0].mxu0
      %3626 = vmatprep.mubr.f32.mxu0 0.0
      %3627 = vmatmul.mubr.f32.gmra.mrb[0].mxu0 %v3541
      %v3628 = vpop.f32.mrb[0].mxu0
      %v3629 = vadd.f32 0.0, %v3628
      %v3630 = vpop.f32.mrb[0].mxu0
      %3631 = vmatprep.mubr.f32.mxu0 0.0
      %3632 = vmatmul.mubr.f32.gmra.mrb[0].mxu0 %v3544
      %v3633 = vpop.f32.mrb[0].mxu0
      %v3634 = vadd.f32 0.0, %v3633
      %v3635 = vpop.f32.mrb[0].mxu0
      %3636 = vdwg.mxu0
      %v3638 = vsel %vm1951, %v937, 0
      %v3641 = vsel %vm1951, %v938, 0
      %v3644 = vsel %vm1951, %v939, 0
      %v3647 = vsel %vm1951, %v940, 0
      %v3650 = vsel %vm1951, %v3022, 0
      %v3653 = vsel %vm1951, %v3027, 0
      %3655 = vmatprep.subr.mxu0 0.0
      %3656 = vmatpush1.xpose.msra.mxu0 %v3650
      %3657 = vmatprep.subr.mxu0 0.0
      %3658 = vmatpush1.xpose.msra.mxu0 %v3653
      %3659 = vmatprep.subr.mxu0 0.0
      %3660 = vmatpush1.xpose.msra.mxu0 0.0
      %3661 = vmatprep.subr.mxu0 0.0
      %3662 = vmatpush1.xpose.msra.mxu0 0.0
      %3663 = vmatprep.subr.mxu0 0.0
      %3664 = vmatpush1.xpose.msra.mxu0 0.0
      %3665 = vmatprep.subr.mxu0 0.0
      %3666 = vmatpush1.xpose.msra.mxu0 0.0
      %3667 = vmatprep.subr.mxu0 0.0
      %3668 = vmatpush1.xpose.msra.mxu0 0.0
      %3669 = vmatprep.subr.mxu0 0.0
      %3670 = vmatpush1.xpose.msra.mxu0 0.0
      %3671 = vmatprep.subr.mxu0 0.0
      %3672 = vmatpush1.xpose.msra.mxu0 0.0
      %3673 = vmatprep.subr.mxu0 0.0
      %3674 = vmatpush1.xpose.msra.mxu0 0.0
      %3675 = vmatprep.subr.mxu0 0.0
      %3676 = vmatpush1.xpose.msra.mxu0 0.0
      %3677 = vmatprep.subr.mxu0 0.0
      %3678 = vmatpush1.xpose.msra.mxu0 0.0
      %3679 = vmatprep.subr.mxu0 0.0
      %3680 = vmatpush1.xpose.msra.mxu0 0.0
      %3681 = vmatprep.subr.mxu0 0.0
      %3682 = vmatpush1.xpose.msra.mxu0 0.0
      %3683 = vmatprep.subr.mxu0 0.0
      %3684 = vmatpush1.xpose.msra.mxu0 0.0
      %3685 = vmatprep.subr.mxu0 0.0
      %3686 = vmatpush1.xpose.msra.mxu0 0.0
      %3687 = vmatprep.subr.mxu0 0.0
      %3688 = vmatpush1.xpose.msra.mxu0 0.0
      %3689 = vmatprep.subr.mxu0 0.0
      %3690 = vmatpush1.xpose.msra.mxu0 0.0
      %3691 = vmatprep.subr.mxu0 0.0
      %3692 = vmatpush1.xpose.msra.mxu0 0.0
      %3693 = vmatprep.subr.mxu0 0.0
      %3694 = vmatpush1.xpose.msra.mxu0 0.0
      %3695 = vmatprep.subr.mxu0 0.0
      %3696 = vmatpush1.xpose.msra.mxu0 0.0
      %3697 = vmatprep.subr.mxu0 0.0
      %3698 = vmatpush1.xpose.msra.mxu0 0.0
      %3699 = vmatprep.subr.mxu0 0.0
      %3700 = vmatpush1.xpose.msra.mxu0 0.0
      %3701 = vmatprep.subr.mxu0 0.0
      %3702 = vmatpush1.xpose.msra.mxu0 0.0
      %3703 = vmatprep.subr.mxu0 0.0
      %3704 = vmatpush1.xpose.msra.mxu0 0.0
      %3705 = vmatprep.subr.mxu0 0.0
      %3706 = vmatpush1.xpose.msra.mxu0 0.0
      %3707 = vmatprep.subr.mxu0 0.0
      %3708 = vmatpush1.xpose.msra.mxu0 0.0
      %3709 = vmatprep.subr.mxu0 0.0
      %3710 = vmatpush1.xpose.msra.mxu0 0.0
      %3711 = vmatprep.subr.mxu0 0.0
      %3712 = vmatpush1.xpose.msra.mxu0 0.0
      %3713 = vmatprep.subr.mxu0 0.0
      %3714 = vmatpush1.xpose.msra.mxu0 0.0
      %3715 = vmatprep.subr.mxu0 0.0
      %3716 = vmatpush1.xpose.msra.mxu0 0.0
      %3717 = vmatprep.subr.mxu0 0.0
      %3718 = vmatpush1.xpose.msra.mxu0 0.0
      %3719 = vmatprep.mubr.f32.mxu0 0.0
      %3720 = vmatmul.mubr.f32.gmra.mrb[0].mxu0 %v3638
      %v3721 = vpop.f32.mrb[0].mxu0
      %v3722 = vadd.f32 0.0, %v3721
      %v3723 = vpop.f32.mrb[0].mxu0
      %3724 = vmatprep.mubr.f32.mxu0 0.0
      %3725 = vmatmul.mubr.f32.gmra.mrb[0].mxu0 %v3641
      %v3726 = vpop.f32.mrb[0].mxu0
      %v3727 = vadd.f32 0.0, %v3726
      %v3728 = vpop.f32.mrb[0].mxu0
      %3729 = vmatprep.mubr.f32.mxu0 0.0
      %3730 = vmatmul.mubr.f32.gmra.mrb[0].mxu0 %v3644
      %v3731 = vpop.f32.mrb[0].mxu0
      %v3732 = vadd.f32 0.0, %v3731
      %v3733 = vpop.f32.mrb[0].mxu0
      %3734 = vmatprep.mubr.f32.mxu0 0.0
      %3735 = vmatmul.mubr.f32.gmra.mrb[0].mxu0 %v3647
      %v3736 = vpop.f32.mrb[0].mxu0
      %v3737 = vadd.f32 0.0, %v3736
      %v3738 = vpop.f32.mrb[0].mxu0
      %3739 = vdwg.mxu0
      %v3741 = vsel %vm1951, %v941, 0
      %v3744 = vsel %vm1951, %v942, 0
      %v3747 = vsel %vm1951, %v943, 0
      %v3750 = vsel %vm1951, %v944, 0
      %v3753 = vsel %vm1951, %v3106, 0
      %v3756 = vsel %vm1951, %v3111, 0
      %3758 = vmatprep.subr.mxu0 0.0
      %3759 = vmatpush1.xpose.msra.mxu0 %v3753
      %3760 = vmatprep.subr.mxu0 0.0
      %3761 = vmatpush1.xpose.msra.mxu0 %v3756
      %3762 = vmatprep.subr.mxu0 0.0
      %3763 = vmatpush1.xpose.msra.mxu0 0.0
      %3764 = vmatprep.subr.mxu0 0.0
      %3765 = vmatpush1.xpose.msra.mxu0 0.0
      %3766 = vmatprep.subr.mxu0 0.0
      %3767 = vmatpush1.xpose.msra.mxu0 0.0
      %3768 = vmatprep.subr.mxu0 0.0
      %3769 = vmatpush1.xpose.msra.mxu0 0.0
      %3770 = vmatprep.subr.mxu0 0.0
      %3771 = vmatpush1.xpose.msra.mxu0 0.0
      %3772 = vmatprep.subr.mxu0 0.0
      %3773 = vmatpush1.xpose.msra.mxu0 0.0
      %3774 = vmatprep.subr.mxu0 0.0
      %3775 = vmatpush1.xpose.msra.mxu0 0.0
      %3776 = vmatprep.subr.mxu0 0.0
      %3777 = vmatpush1.xpose.msra.mxu0 0.0
      %3778 = vmatprep.subr.mxu0 0.0
      %3779 = vmatpush1.xpose.msra.mxu0 0.0
      %3780 = vmatprep.subr.mxu0 0.0
      %3781 = vmatpush1.xpose.msra.mxu0 0.0
      %3782 = vmatprep.subr.mxu0 0.0
      %3783 = vmatpush1.xpose.msra.mxu0 0.0
      %3784 = vmatprep.subr.mxu0 0.0
      %3785 = vmatpush1.xpose.msra.mxu0 0.0
      %3786 = vmatprep.subr.mxu0 0.0
      %3787 = vmatpush1.xpose.msra.mxu0 0.0
      %3788 = vmatprep.subr.mxu0 0.0
      %3789 = vmatpush1.xpose.msra.mxu0 0.0
      %3790 = vmatprep.subr.mxu0 0.0
      %3791 = vmatpush1.xpose.msra.mxu0 0.0
      %3792 = vmatprep.subr.mxu0 0.0
      %3793 = vmatpush1.xpose.msra.mxu0 0.0
      %3794 = vmatprep.subr.mxu0 0.0
      %3795 = vmatpush1.xpose.msra.mxu0 0.0
      %3796 = vmatprep.subr.mxu0 0.0
      %3797 = vmatpush1.xpose.msra.mxu0 0.0
      %3798 = vmatprep.subr.mxu0 0.0
      %3799 = vmatpush1.xpose.msra.mxu0 0.0
      %3800 = vmatprep.subr.mxu0 0.0
      %3801 = vmatpush1.xpose.msra.mxu0 0.0
      %3802 = vmatprep.subr.mxu0 0.0
      %3803 = vmatpush1.xpose.msra.mxu0 0.0
      %3804 = vmatprep.subr.mxu0 0.0
      %3805 = vmatpush1.xpose.msra.mxu0 0.0
      %3806 = vmatprep.subr.mxu0 0.0
      %3807 = vmatpush1.xpose.msra.mxu0 0.0
      %3808 = vmatprep.subr.mxu0 0.0
      %3809 = vmatpush1.xpose.msra.mxu0 0.0
      %3810 = vmatprep.subr.mxu0 0.0
      %3811 = vmatpush1.xpose.msra.mxu0 0.0
      %3812 = vmatprep.subr.mxu0 0.0
      %3813 = vmatpush1.xpose.msra.mxu0 0.0
      %3814 = vmatprep.subr.mxu0 0.0
      %3815 = vmatpush1.xpose.msra.mxu0 0.0
      %3816 = vmatprep.subr.mxu0 0.0
      %3817 = vmatpush1.xpose.msra.mxu0 0.0
      %3818 = vmatprep.subr.mxu0 0.0
      %3819 = vmatpush1.xpose.msra.mxu0 0.0
      %3820 = vmatprep.subr.mxu0 0.0
      %3821 = vmatpush1.xpose.msra.mxu0 0.0
      %3822 = vmatprep.mubr.f32.mxu0 0.0
      %3823 = vmatmul.mubr.f32.gmra.mrb[0].mxu0 %v3741
      %v3824 = vpop.f32.mrb[0].mxu0
      %v3825 = vadd.f32 0.0, %v3824
      %v3826 = vpop.f32.mrb[0].mxu0
      %3827 = vmatprep.mubr.f32.mxu0 0.0
      %3828 = vmatmul.mubr.f32.gmra.mrb[0].mxu0 %v3744
      %v3829 = vpop.f32.mrb[0].mxu0
      %v3830 = vadd.f32 0.0, %v3829
      %v3831 = vpop.f32.mrb[0].mxu0
      %3832 = vmatprep.mubr.f32.mxu0 0.0
      %3833 = vmatmul.mubr.f32.gmra.mrb[0].mxu0 %v3747
      %v3834 = vpop.f32.mrb[0].mxu0
      %v3835 = vadd.f32 0.0, %v3834
      %v3836 = vpop.f32.mrb[0].mxu0
      %3837 = vmatprep.mubr.f32.mxu0 0.0
      %3838 = vmatmul.mubr.f32.gmra.mrb[0].mxu0 %v3750
      %v3839 = vpop.f32.mrb[0].mxu0
      %v3840 = vadd.f32 0.0, %v3839
      %v3841 = vpop.f32.mrb[0].mxu0
      %3842 = vdwg.mxu0
      %v3844 = vsel %vm1951, %v945, 0
      %v3847 = vsel %vm1951, %v946, 0
      %v3850 = vsel %vm1951, %v947, 0
      %v3853 = vsel %vm1951, %v948, 0
      %v3856 = vsel %vm1951, %v3190, 0
      %v3859 = vsel %vm1951, %v3195, 0
      %3861 = vmatprep.subr.mxu0 0.0
      %3862 = vmatpush1.xpose.msra.mxu0 %v3856
      %3863 = vmatprep.subr.mxu0 0.0
      %3864 = vmatpush1.xpose.msra.mxu0 %v3859
      %3865 = vmatprep.subr.mxu0 0.0
      %3866 = vmatpush1.xpose.msra.mxu0 0.0
      %3867 = vmatprep.subr.mxu0 0.0
      %3868 = vmatpush1.xpose.msra.mxu0 0.0
      %3869 = vmatprep.subr.mxu0 0.0
      %3870 = vmatpush1.xpose.msra.mxu0 0.0
      %3871 = vmatprep.subr.mxu0 0.0
      %3872 = vmatpush1.xpose.msra.mxu0 0.0
      %3873 = vmatprep.subr.mxu0 0.0
      %3874 = vmatpush1.xpose.msra.mxu0 0.0
      %3875 = vmatprep.subr.mxu0 0.0
      %3876 = vmatpush1.xpose.msra.mxu0 0.0
      %3877 = vmatprep.subr.mxu0 0.0
      %3878 = vmatpush1.xpose.msra.mxu0 0.0
      %3879 = vmatprep.subr.mxu0 0.0
      %3880 = vmatpush1.xpose.msra.mxu0 0.0
      %3881 = vmatprep.subr.mxu0 0.0
      %3882 = vmatpush1.xpose.msra.mxu0 0.0
      %3883 = vmatprep.subr.mxu0 0.0
      %3884 = vmatpush1.xpose.msra.mxu0 0.0
      %3885 = vmatprep.subr.mxu0 0.0
      %3886 = vmatpush1.xpose.msra.mxu0 0.0
      %3887 = vmatprep.subr.mxu0 0.0
      %3888 = vmatpush1.xpose.msra.mxu0 0.0
      %3889 = vmatprep.subr.mxu0 0.0
      %3890 = vmatpush1.xpose.msra.mxu0 0.0
      %3891 = vmatprep.subr.mxu0 0.0
      %3892 = vmatpush1.xpose.msra.mxu0 0.0
      %3893 = vmatprep.subr.mxu0 0.0
      %3894 = vmatpush1.xpose.msra.mxu0 0.0
      %3895 = vmatprep.subr.mxu0 0.0
      %3896 = vmatpush1.xpose.msra.mxu0 0.0
      %3897 = vmatprep.subr.mxu0 0.0
      %3898 = vmatpush1.xpose.msra.mxu0 0.0
      %3899 = vmatprep.subr.mxu0 0.0
      %3900 = vmatpush1.xpose.msra.mxu0 0.0
      %3901 = vmatprep.subr.mxu0 0.0
      %3902 = vmatpush1.xpose.msra.mxu0 0.0
      %3903 = vmatprep.subr.mxu0 0.0
      %3904 = vmatpush1.xpose.msra.mxu0 0.0
      %3905 = vmatprep.subr.mxu0 0.0
      %3906 = vmatpush1.xpose.msra.mxu0 0.0
      %3907 = vmatprep.subr.mxu0 0.0
      %3908 = vmatpush1.xpose.msra.mxu0 0.0
      %3909 = vmatprep.subr.mxu0 0.0
      %3910 = vmatpush1.xpose.msra.mxu0 0.0
      %3911 = vmatprep.subr.mxu0 0.0
      %3912 = vmatpush1.xpose.msra.mxu0 0.0
      %3913 = vmatprep.subr.mxu0 0.0
      %3914 = vmatpush1.xpose.msra.mxu0 0.0
      %3915 = vmatprep.subr.mxu0 0.0
      %3916 = vmatpush1.xpose.msra.mxu0 0.0
      %3917 = vmatprep.subr.mxu0 0.0
      %3918 = vmatpush1.xpose.msra.mxu0 0.0
      %3919 = vmatprep.subr.mxu0 0.0
      %3920 = vmatpush1.xpose.msra.mxu0 0.0
      %3921 = vmatprep.subr.mxu0 0.0
      %3922 = vmatpush1.xpose.msra.mxu0 0.0
      %3923 = vmatprep.subr.mxu0 0.0
      %3924 = vmatpush1.xpose.msra.mxu0 0.0
      %3925 = vmatprep.mubr.f32.mxu0 0.0
      %3926 = vmatmul.mubr.f32.gmra.mrb[0].mxu0 %v3844
      %v3927 = vpop.f32.mrb[0].mxu0
      %v3928 = vadd.f32 0.0, %v3927
      %v3929 = vpop.f32.mrb[0].mxu0
      %3930 = vmatprep.mubr.f32.mxu0 0.0
      %3931 = vmatmul.mubr.f32.gmra.mrb[0].mxu0 %v3847
      %v3932 = vpop.f32.mrb[0].mxu0
      %v3933 = vadd.f32 0.0, %v3932
      %v3934 = vpop.f32.mrb[0].mxu0
      %3935 = vmatprep.mubr.f32.mxu0 0.0
      %3936 = vmatmul.mubr.f32.gmra.mrb[0].mxu0 %v3850
      %v3937 = vpop.f32.mrb[0].mxu0
      %v3938 = vadd.f32 0.0, %v3937
      %v3939 = vpop.f32.mrb[0].mxu0
      %3940 = vmatprep.mubr.f32.mxu0 0.0
      %3941 = vmatmul.mubr.f32.gmra.mrb[0].mxu0 %v3853
      %v3942 = vpop.f32.mrb[0].mxu0
      %v3943 = vadd.f32 0.0, %v3942
      %v3944 = vpop.f32.mrb[0].mxu0
      %3945 = vdwg.mxu0
      %v3947 = vsel %vm1951, %v949, 0
      %v3950 = vsel %vm1951, %v950, 0
      %v3953 = vsel %vm1951, %v951, 0
      %v3956 = vsel %vm1951, %v952, 0
      %v3959 = vsel %vm1951, %v3274, 0
      %v3962 = vsel %vm1951, %v3279, 0
      %3964 = vmatprep.subr.mxu0 0.0
      %3965 = vmatpush1.xpose.msra.mxu0 %v3959
      %3966 = vmatprep.subr.mxu0 0.0
      %3967 = vmatpush1.xpose.msra.mxu0 %v3962
      %3968 = vmatprep.subr.mxu0 0.0
      %3969 = vmatpush1.xpose.msra.mxu0 0.0
      %3970 = vmatprep.subr.mxu0 0.0
      %3971 = vmatpush1.xpose.msra.mxu0 0.0
      %3972 = vmatprep.subr.mxu0 0.0
      %3973 = vmatpush1.xpose.msra.mxu0 0.0
      %3974 = vmatprep.subr.mxu0 0.0
      %3975 = vmatpush1.xpose.msra.mxu0 0.0
      %3976 = vmatprep.subr.mxu0 0.0
      %3977 = vmatpush1.xpose.msra.mxu0 0.0
      %3978 = vmatprep.subr.mxu0 0.0
      %3979 = vmatpush1.xpose.msra.mxu0 0.0
      %3980 = vmatprep.subr.mxu0 0.0
      %3981 = vmatpush1.xpose.msra.mxu0 0.0
      %3982 = vmatprep.subr.mxu0 0.0
      %3983 = vmatpush1.xpose.msra.mxu0 0.0
      %3984 = vmatprep.subr.mxu0 0.0
      %3985 = vmatpush1.xpose.msra.mxu0 0.0
      %3986 = vmatprep.subr.mxu0 0.0
      %3987 = vmatpush1.xpose.msra.mxu0 0.0
      %3988 = vmatprep.subr.mxu0 0.0
      %3989 = vmatpush1.xpose.msra.mxu0 0.0
      %3990 = vmatprep.subr.mxu0 0.0
      %3991 = vmatpush1.xpose.msra.mxu0 0.0
      %3992 = vmatprep.subr.mxu0 0.0
      %3993 = vmatpush1.xpose.msra.mxu0 0.0
      %3994 = vmatprep.subr.mxu0 0.0
      %3995 = vmatpush1.xpose.msra.mxu0 0.0
      %3996 = vmatprep.subr.mxu0 0.0
      %3997 = vmatpush1.xpose.msra.mxu0 0.0
      %3998 = vmatprep.subr.mxu0 0.0
      %3999 = vmatpush1.xpose.msra.mxu0 0.0
      %4000 = vmatprep.subr.mxu0 0.0
      %4001 = vmatpush1.xpose.msra.mxu0 0.0
      %4002 = vmatprep.subr.mxu0 0.0
      %4003 = vmatpush1.xpose.msra.mxu0 0.0
      %4004 = vmatprep.subr.mxu0 0.0
      %4005 = vmatpush1.xpose.msra.mxu0 0.0
      %4006 = vmatprep.subr.mxu0 0.0
      %4007 = vmatpush1.xpose.msra.mxu0 0.0
      %4008 = vmatprep.subr.mxu0 0.0
      %4009 = vmatpush1.xpose.msra.mxu0 0.0
      %4010 = vmatprep.subr.mxu0 0.0
      %4011 = vmatpush1.xpose.msra.mxu0 0.0
      %4012 = vmatprep.subr.mxu0 0.0
      %4013 = vmatpush1.xpose.msra.mxu0 0.0
      %4014 = vmatprep.subr.mxu0 0.0
      %4015 = vmatpush1.xpose.msra.mxu0 0.0
      %4016 = vmatprep.subr.mxu0 0.0
      %4017 = vmatpush1.xpose.msra.mxu0 0.0
      %4018 = vmatprep.subr.mxu0 0.0
      %4019 = vmatpush1.xpose.msra.mxu0 0.0
      %4020 = vmatprep.subr.mxu0 0.0
      %4021 = vmatpush1.xpose.msra.mxu0 0.0
      %4022 = vmatprep.subr.mxu0 0.0
      %4023 = vmatpush1.xpose.msra.mxu0 0.0
      %4024 = vmatprep.subr.mxu0 0.0
      %4025 = vmatpush1.xpose.msra.mxu0 0.0
      %4026 = vmatprep.subr.mxu0 0.0
      %4027 = vmatpush1.xpose.msra.mxu0 0.0
      %4028 = vmatprep.mubr.f32.mxu0 0.0
      %4029 = vmatmul.mubr.f32.gmra.mrb[0].mxu0 %v3947
      %v4030 = vpop.f32.mrb[0].mxu0
      %v4031 = vadd.f32 0.0, %v4030
      %v4032 = vpop.f32.mrb[0].mxu0
      %4033 = vmatprep.mubr.f32.mxu0 0.0
      %4034 = vmatmul.mubr.f32.gmra.mrb[0].mxu0 %v3950
      %v4035 = vpop.f32.mrb[0].mxu0
      %v4036 = vadd.f32 0.0, %v4035
      %v4037 = vpop.f32.mrb[0].mxu0
      %4038 = vmatprep.mubr.f32.mxu0 0.0
      %4039 = vmatmul.mubr.f32.gmra.mrb[0].mxu0 %v3953
      %v4040 = vpop.f32.mrb[0].mxu0
      %v4041 = vadd.f32 0.0, %v4040
      %v4042 = vpop.f32.mrb[0].mxu0
      %4043 = vmatprep.mubr.f32.mxu0 0.0
      %4044 = vmatmul.mubr.f32.gmra.mrb[0].mxu0 %v3956
      %v4045 = vpop.f32.mrb[0].mxu0
      %v4046 = vadd.f32 0.0, %v4045
      %v4047 = vpop.f32.mrb[0].mxu0
      %4048 = vdwg.mxu0
      %v4050 = vsel %vm1951, %v953, 0
      %v4053 = vsel %vm1951, %v954, 0
      %v4056 = vsel %vm1951, %v955, 0
      %v4059 = vsel %vm1951, %v956, 0
      %v4062 = vsel %vm1951, %v3358, 0
      %v4065 = vsel %vm1951, %v3363, 0
      %4067 = vmatprep.subr.mxu0 0.0
      %4068 = vmatpush1.xpose.msra.mxu0 %v4062
      %4069 = vmatprep.subr.mxu0 0.0
      %4070 = vmatpush1.xpose.msra.mxu0 %v4065
      %4071 = vmatprep.subr.mxu0 0.0
      %4072 = vmatpush1.xpose.msra.mxu0 0.0
      %4073 = vmatprep.subr.mxu0 0.0
      %4074 = vmatpush1.xpose.msra.mxu0 0.0
      %4075 = vmatprep.subr.mxu0 0.0
      %4076 = vmatpush1.xpose.msra.mxu0 0.0
      %4077 = vmatprep.subr.mxu0 0.0
      %4078 = vmatpush1.xpose.msra.mxu0 0.0
      %4079 = vmatprep.subr.mxu0 0.0
      %4080 = vmatpush1.xpose.msra.mxu0 0.0
      %4081 = vmatprep.subr.mxu0 0.0
      %4082 = vmatpush1.xpose.msra.mxu0 0.0
      %4083 = vmatprep.subr.mxu0 0.0
      %4084 = vmatpush1.xpose.msra.mxu0 0.0
      %4085 = vmatprep.subr.mxu0 0.0
      %4086 = vmatpush1.xpose.msra.mxu0 0.0
      %4087 = vmatprep.subr.mxu0 0.0
      %4088 = vmatpush1.xpose.msra.mxu0 0.0
      %4089 = vmatprep.subr.mxu0 0.0
      %4090 = vmatpush1.xpose.msra.mxu0 0.0
      %4091 = vmatprep.subr.mxu0 0.0
      %4092 = vmatpush1.xpose.msra.mxu0 0.0
      %4093 = vmatprep.subr.mxu0 0.0
      %4094 = vmatpush1.xpose.msra.mxu0 0.0
      %4095 = vmatprep.subr.mxu0 0.0
      %4096 = vmatpush1.xpose.msra.mxu0 0.0
      %4097 = vmatprep.subr.mxu0 0.0
      %4098 = vmatpush1.xpose.msra.mxu0 0.0
      %4099 = vmatprep.subr.mxu0 0.0
      %4100 = vmatpush1.xpose.msra.mxu0 0.0
      %4101 = vmatprep.subr.mxu0 0.0
      %4102 = vmatpush1.xpose.msra.mxu0 0.0
      %4103 = vmatprep.subr.mxu0 0.0
      %4104 = vmatpush1.xpose.msra.mxu0 0.0
      %4105 = vmatprep.subr.mxu0 0.0
      %4106 = vmatpush1.xpose.msra.mxu0 0.0
      %4107 = vmatprep.subr.mxu0 0.0
      %4108 = vmatpush1.xpose.msra.mxu0 0.0
      %4109 = vmatprep.subr.mxu0 0.0
      %4110 = vmatpush1.xpose.msra.mxu0 0.0
      %4111 = vmatprep.subr.mxu0 0.0
      %4112 = vmatpush1.xpose.msra.mxu0 0.0
      %4113 = vmatprep.subr.mxu0 0.0
      %4114 = vmatpush1.xpose.msra.mxu0 0.0
      %4115 = vmatprep.subr.mxu0 0.0
      %4116 = vmatpush1.xpose.msra.mxu0 0.0
      %4117 = vmatprep.subr.mxu0 0.0
      %4118 = vmatpush1.xpose.msra.mxu0 0.0
      %4119 = vmatprep.subr.mxu0 0.0
      %4120 = vmatpush1.xpose.msra.mxu0 0.0
      %4121 = vmatprep.subr.mxu0 0.0
      %4122 = vmatpush1.xpose.msra.mxu0 0.0
      %4123 = vmatprep.subr.mxu0 0.0
      %4124 = vmatpush1.xpose.msra.mxu0 0.0
      %4125 = vmatprep.subr.mxu0 0.0
      %4126 = vmatpush1.xpose.msra.mxu0 0.0
      %4127 = vmatprep.subr.mxu0 0.0
      %4128 = vmatpush1.xpose.msra.mxu0 0.0
      %4129 = vmatprep.subr.mxu0 0.0
      %4130 = vmatpush1.xpose.msra.mxu0 0.0
      %4131 = vmatprep.mubr.f32.mxu0 0.0
      %4132 = vmatmul.mubr.f32.gmra.mrb[0].mxu0 %v4050
      %v4133 = vpop.f32.mrb[0].mxu0
      %v4134 = vadd.f32 0.0, %v4133
      %v4135 = vpop.f32.mrb[0].mxu0
      %4136 = vmatprep.mubr.f32.mxu0 0.0
      %4137 = vmatmul.mubr.f32.gmra.mrb[0].mxu0 %v4053
      %v4138 = vpop.f32.mrb[0].mxu0
      %v4139 = vadd.f32 0.0, %v4138
      %v4140 = vpop.f32.mrb[0].mxu0
      %4141 = vmatprep.mubr.f32.mxu0 0.0
      %4142 = vmatmul.mubr.f32.gmra.mrb[0].mxu0 %v4056
      %v4143 = vpop.f32.mrb[0].mxu0
      %v4144 = vadd.f32 0.0, %v4143
      %v4145 = vpop.f32.mrb[0].mxu0
      %4146 = vmatprep.mubr.f32.mxu0 0.0
      %4147 = vmatmul.mubr.f32.gmra.mrb[0].mxu0 %v4059
      %v4148 = vpop.f32.mrb[0].mxu0
      %v4149 = vadd.f32 0.0, %v4148
      %v4150 = vpop.f32.mrb[0].mxu0
      %4151 = vdwg.mxu0
      %v4153 = vsel %vm1951, %v957, 0
      %v4156 = vsel %vm1951, %v958, 0
      %v4159 = vsel %vm1951, %v959, 0
      %v4162 = vsel %vm1951, %v960, 0
      %v4165 = vsel %vm1951, %v3442, 0
      %v4168 = vsel %vm1951, %v3447, 0
      %4170 = vmatprep.subr.mxu0 0.0
      %4171 = vmatpush1.xpose.msra.mxu0 %v4165
      %4172 = vmatprep.subr.mxu0 0.0
      %4173 = vmatpush1.xpose.msra.mxu0 %v4168
      %4174 = vmatprep.subr.mxu0 0.0
      %4175 = vmatpush1.xpose.msra.mxu0 0.0
      %4176 = vmatprep.subr.mxu0 0.0
      %4177 = vmatpush1.xpose.msra.mxu0 0.0
      %4178 = vmatprep.subr.mxu0 0.0
      %4179 = vmatpush1.xpose.msra.mxu0 0.0
      %4180 = vmatprep.subr.mxu0 0.0
      %4181 = vmatpush1.xpose.msra.mxu0 0.0
      %4182 = vmatprep.subr.mxu0 0.0
      %4183 = vmatpush1.xpose.msra.mxu0 0.0
      %4184 = vmatprep.subr.mxu0 0.0
      %4185 = vmatpush1.xpose.msra.mxu0 0.0
      %4186 = vmatprep.subr.mxu0 0.0
      %4187 = vmatpush1.xpose.msra.mxu0 0.0
      %4188 = vmatprep.subr.mxu0 0.0
      %4189 = vmatpush1.xpose.msra.mxu0 0.0
      %4190 = vmatprep.subr.mxu0 0.0
      %4191 = vmatpush1.xpose.msra.mxu0 0.0
      %4192 = vmatprep.subr.mxu0 0.0
      %4193 = vmatpush1.xpose.msra.mxu0 0.0
      %4194 = vmatprep.subr.mxu0 0.0
      %4195 = vmatpush1.xpose.msra.mxu0 0.0
      %4196 = vmatprep.subr.mxu0 0.0
      %4197 = vmatpush1.xpose.msra.mxu0 0.0
      %4198 = vmatprep.subr.mxu0 0.0
      %4199 = vmatpush1.xpose.msra.mxu0 0.0
      %4200 = vmatprep.subr.mxu0 0.0
      %4201 = vmatpush1.xpose.msra.mxu0 0.0
      %4202 = vmatprep.subr.mxu0 0.0
      %4203 = vmatpush1.xpose.msra.mxu0 0.0
      %4204 = vmatprep.subr.mxu0 0.0
      %4205 = vmatpush1.xpose.msra.mxu0 0.0
      %4206 = vmatprep.subr.mxu0 0.0
      %4207 = vmatpush1.xpose.msra.mxu0 0.0
      %4208 = vmatprep.subr.mxu0 0.0
      %4209 = vmatpush1.xpose.msra.mxu0 0.0
      %4210 = vmatprep.subr.mxu0 0.0
      %4211 = vmatpush1.xpose.msra.mxu0 0.0
      %4212 = vmatprep.subr.mxu0 0.0
      %4213 = vmatpush1.xpose.msra.mxu0 0.0
      %4214 = vmatprep.subr.mxu0 0.0
      %4215 = vmatpush1.xpose.msra.mxu0 0.0
      %4216 = vmatprep.subr.mxu0 0.0
      %4217 = vmatpush1.xpose.msra.mxu0 0.0
      %4218 = vmatprep.subr.mxu0 0.0
      %4219 = vmatpush1.xpose.msra.mxu0 0.0
      %4220 = vmatprep.subr.mxu0 0.0
      %4221 = vmatpush1.xpose.msra.mxu0 0.0
      %4222 = vmatprep.subr.mxu0 0.0
      %4223 = vmatpush1.xpose.msra.mxu0 0.0
      %4224 = vmatprep.subr.mxu0 0.0
      %4225 = vmatpush1.xpose.msra.mxu0 0.0
      %4226 = vmatprep.subr.mxu0 0.0
      %4227 = vmatpush1.xpose.msra.mxu0 0.0
      %4228 = vmatprep.subr.mxu0 0.0
      %4229 = vmatpush1.xpose.msra.mxu0 0.0
      %4230 = vmatprep.subr.mxu0 0.0
      %4231 = vmatpush1.xpose.msra.mxu0 0.0
      %4232 = vmatprep.subr.mxu0 0.0
      %4233 = vmatpush1.xpose.msra.mxu0 0.0
      %4234 = vmatprep.mubr.f32.mxu0 0.0
      %4235 = vmatmul.mubr.f32.gmra.mrb[0].mxu0 %v4153
      %v4236 = vpop.f32.mrb[0].mxu0
      %v4237 = vadd.f32 0.0, %v4236
      %v4238 = vpop.f32.mrb[0].mxu0
      %4239 = vmatprep.mubr.f32.mxu0 0.0
      %4240 = vmatmul.mubr.f32.gmra.mrb[0].mxu0 %v4156
      %v4241 = vpop.f32.mrb[0].mxu0
      %v4242 = vadd.f32 0.0, %v4241
      %v4243 = vpop.f32.mrb[0].mxu0
      %4244 = vmatprep.mubr.f32.mxu0 0.0
      %4245 = vmatmul.mubr.f32.gmra.mrb[0].mxu0 %v4159
      %v4246 = vpop.f32.mrb[0].mxu0
      %v4247 = vadd.f32 0.0, %v4246
      %v4248 = vpop.f32.mrb[0].mxu0
      %4249 = vmatprep.mubr.f32.mxu0 0.0
      %4250 = vmatmul.mubr.f32.gmra.mrb[0].mxu0 %v4162
      %v4251 = vpop.f32.mrb[0].mxu0
      %v4252 = vadd.f32 0.0, %v4251
      %v4253 = vpop.f32.mrb[0].mxu0
      %4254 = vdwg.mxu0
      %v4256 = vsel %vm1951, %v961, 0
      %v4259 = vsel %vm1951, %v962, 0
      %v4262 = vsel %vm1951, %v963, 0
      %v4265 = vsel %vm1951, %v964, 0
      %v4268 = vsel %vm1951, %v3526, 0
      %v4271 = vsel %vm1951, %v3531, 0
      %4273 = vmatprep.subr.mxu0 0.0
      %4274 = vmatpush1.xpose.msra.mxu0 %v4268
      %4275 = vmatprep.subr.mxu0 0.0
      %4276 = vmatpush1.xpose.msra.mxu0 %v4271
      %4277 = vmatprep.subr.mxu0 0.0
      %4278 = vmatpush1.xpose.msra.mxu0 0.0
      %4279 = vmatprep.subr.mxu0 0.0
      %4280 = vmatpush1.xpose.msra.mxu0 0.0
      %4281 = vmatprep.subr.mxu0 0.0
      %4282 = vmatpush1.xpose.msra.mxu0 0.0
      %4283 = vmatprep.subr.mxu0 0.0
      %4284 = vmatpush1.xpose.msra.mxu0 0.0
      %4285 = vmatprep.subr.mxu0 0.0
      %4286 = vmatpush1.xpose.msra.mxu0 0.0
      %4287 = vmatprep.subr.mxu0 0.0
      %4288 = vmatpush1.xpose.msra.mxu0 0.0
      %4289 = vmatprep.subr.mxu0 0.0
      %4290 = vmatpush1.xpose.msra.mxu0 0.0
      %4291 = vmatprep.subr.mxu0 0.0
      %4292 = vmatpush1.xpose.msra.mxu0 0.0
      %4293 = vmatprep.subr.mxu0 0.0
      %4294 = vmatpush1.xpose.msra.mxu0 0.0
      %4295 = vmatprep.subr.mxu0 0.0
      %4296 = vmatpush1.xpose.msra.mxu0 0.0
      %4297 = vmatprep.subr.mxu0 0.0
      %4298 = vmatpush1.xpose.msra.mxu0 0.0
      %4299 = vmatprep.subr.mxu0 0.0
      %4300 = vmatpush1.xpose.msra.mxu0 0.0
      %4301 = vmatprep.subr.mxu0 0.0
      %4302 = vmatpush1.xpose.msra.mxu0 0.0
      %4303 = vmatprep.subr.mxu0 0.0
      %4304 = vmatpush1.xpose.msra.mxu0 0.0
      %4305 = vmatprep.subr.mxu0 0.0
      %4306 = vmatpush1.xpose.msra.mxu0 0.0
      %4307 = vmatprep.subr.mxu0 0.0
      %4308 = vmatpush1.xpose.msra.mxu0 0.0
      %4309 = vmatprep.subr.mxu0 0.0
      %4310 = vmatpush1.xpose.msra.mxu0 0.0
      %4311 = vmatprep.subr.mxu0 0.0
      %4312 = vmatpush1.xpose.msra.mxu0 0.0
      %4313 = vmatprep.subr.mxu0 0.0
      %4314 = vmatpush1.xpose.msra.mxu0 0.0
      %4315 = vmatprep.subr.mxu0 0.0
      %4316 = vmatpush1.xpose.msra.mxu0 0.0
      %4317 = vmatprep.subr.mxu0 0.0
      %4318 = vmatpush1.xpose.msra.mxu0 0.0
      %4319 = vmatprep.subr.mxu0 0.0
      %4320 = vmatpush1.xpose.msra.mxu0 0.0
      %4321 = vmatprep.subr.mxu0 0.0
      %4322 = vmatpush1.xpose.msra.mxu0 0.0
      %4323 = vmatprep.subr.mxu0 0.0
      %4324 = vmatpush1.xpose.msra.mxu0 0.0
      %4325 = vmatprep.subr.mxu0 0.0
      %4326 = vmatpush1.xpose.msra.mxu0 0.0
      %4327 = vmatprep.subr.mxu0 0.0
      %4328 = vmatpush1.xpose.msra.mxu0 0.0
      %4329 = vmatprep.subr.mxu0 0.0
      %4330 = vmatpush1.xpose.msra.mxu0 0.0
      %4331 = vmatprep.subr.mxu0 0.0
      %4332 = vmatpush1.xpose.msra.mxu0 0.0
      %4333 = vmatprep.subr.mxu0 0.0
      %4334 = vmatpush1.xpose.msra.mxu0 0.0
      %4335 = vmatprep.subr.mxu0 0.0
      %4336 = vmatpush1.xpose.msra.mxu0 0.0
      %4337 = vmatprep.mubr.f32.mxu0 0.0
      %4338 = vmatmul.mubr.f32.gmra.mrb[0].mxu0 %v4256
      %v4339 = vpop.f32.mrb[0].mxu0
      %v4340 = vadd.f32 0.0, %v4339
      %v4341 = vpop.f32.mrb[0].mxu0
      %4342 = vmatprep.mubr.f32.mxu0 0.0
      %4343 = vmatmul.mubr.f32.gmra.mrb[0].mxu0 %v4259
      %v4344 = vpop.f32.mrb[0].mxu0
      %v4345 = vadd.f32 0.0, %v4344
      %v4346 = vpop.f32.mrb[0].mxu0
      %4347 = vmatprep.mubr.f32.mxu0 0.0
      %4348 = vmatmul.mubr.f32.gmra.mrb[0].mxu0 %v4262
      %v4349 = vpop.f32.mrb[0].mxu0
      %v4350 = vadd.f32 0.0, %v4349
      %v4351 = vpop.f32.mrb[0].mxu0
      %4352 = vmatprep.mubr.f32.mxu0 0.0
      %4353 = vmatmul.mubr.f32.gmra.mrb[0].mxu0 %v4265
      %v4354 = vpop.f32.mrb[0].mxu0
      %v4355 = vadd.f32 0.0, %v4354
      %v4356 = vpop.f32.mrb[0].mxu0
      %4357 = vdwg.mxu0
      %v4358 = vsel %vm2653, %v3619, 0.0
      %v4359 = vsel %vm2653, %v3722, 0.0
      %v4360 = vadd.f32 %v4358, %v4359
      %v4361 = vsel %vm2653, %v3825, 0.0
      %v4362 = vadd.f32 %v4360, %v4361
      %v4363 = vsel %vm2653, %v3928, 0.0
      %v4364 = vadd.f32 %v4362, %v4363
      %v4365 = vsel %vm2653, %v4031, 0.0
      %v4366 = vadd.f32 %v4364, %v4365
      %v4367 = vsel %vm2653, %v4134, 0.0
      %v4368 = vadd.f32 %v4366, %v4367
      %v4369 = vsel %vm2653, %v4237, 0.0
      %v4370 = vadd.f32 %v4368, %v4369
      %v4371 = vsel %vm2653, %v4340, 0.0
      %v4372 = vadd.f32 %v4370, %v4371
      %v4373 = vsel %vm2653, %v3624, 0.0
      %v4374 = vsel %vm2653, %v3727, 0.0
      %v4375 = vadd.f32 %v4373, %v4374
      %v4376 = vsel %vm2653, %v3830, 0.0
      %v4377 = vadd.f32 %v4375, %v4376
      %v4378 = vsel %vm2653, %v3933, 0.0
      %v4379 = vadd.f32 %v4377, %v4378
      %v4380 = vsel %vm2653, %v4036, 0.0
      %v4381 = vadd.f32 %v4379, %v4380
      %v4382 = vsel %vm2653, %v4139, 0.0
      %v4383 = vadd.f32 %v4381, %v4382
      %v4384 = vsel %vm2653, %v4242, 0.0
      %v4385 = vadd.f32 %v4383, %v4384
      %v4386 = vsel %vm2653, %v4345, 0.0
      %v4387 = vadd.f32 %v4385, %v4386
      %v4388 = vsel %vm2653, %v3629, 0.0
      %v4389 = vsel %vm2653, %v3732, 0.0
      %v4390 = vadd.f32 %v4388, %v4389
      %v4391 = vsel %vm2653, %v3835, 0.0
      %v4392 = vadd.f32 %v4390, %v4391
      %v4393 = vsel %vm2653, %v3938, 0.0
      %v4394 = vadd.f32 %v4392, %v4393
      %v4395 = vsel %vm2653, %v4041, 0.0
      %v4396 = vadd.f32 %v4394, %v4395
      %v4397 = vsel %vm2653, %v4144, 0.0
      %v4398 = vadd.f32 %v4396, %v4397
      %v4399 = vsel %vm2653, %v4247, 0.0
      %v4400 = vadd.f32 %v4398, %v4399
      %v4401 = vsel %vm2653, %v4350, 0.0
      %v4402 = vadd.f32 %v4400, %v4401
      %v4403 = vsel %vm2653, %v3634, 0.0
      %v4404 = vsel %vm2653, %v3737, 0.0
      %v4405 = vadd.f32 %v4403, %v4404
      %v4406 = vsel %vm2653, %v3840, 0.0
      %v4407 = vadd.f32 %v4405, %v4406
      %v4408 = vsel %vm2653, %v3943, 0.0
      %v4409 = vadd.f32 %v4407, %v4408
      %v4410 = vsel %vm2653, %v4046, 0.0
      %v4411 = vadd.f32 %v4409, %v4410
      %v4412 = vsel %vm2653, %v4149, 0.0
      %v4413 = vadd.f32 %v4411, %v4412
      %v4414 = vsel %vm2653, %v4252, 0.0
      %v4415 = vadd.f32 %v4413, %v4414
      %v4416 = vsel %vm2653, %v4355, 0.0
      %v4417 = vadd.f32 %v4415, %v4416
      %v4418 = vadd.f32 %v895, %v4372
      %v4419 = vadd.f32 %v896, %v4387
      %v4420 = vadd.f32 %v897, %v4402
      %v4421 = vadd.f32 %v898, %v4417
      %4422 = vset.pattern.permute.xlu0 1
      %4423 = vperm.xlu0 %4422, %v525
      %v4424 = vpop.permute.xlu0 %4423
      %4426 = vset.pattern.permute.xlu0 1
      %4427 = vperm.xlu0 %4426, %v526
      %v4428 = vpop.permute.xlu0 %4427
      %4430 = vset.pattern.permute.xlu0 1
      %4431 = vperm.xlu0 %4430, %v527
      %v4432 = vpop.permute.xlu0 %4431
      %4434 = vset.pattern.permute.xlu0 1
      %4435 = vperm.xlu0 %4434, %v528
      %v4436 = vpop.permute.xlu0 %4435
      %v4438 = vadd.f32 %v4418, %v4424
      %v4439 = vadd.f32 %v4419, %v4428
      %v4440 = vadd.f32 %v4420, %v4432
      %v4441 = vadd.f32 %v4421, %v4436
      %v4442 = vld [vmem:[%s515] sm:$0xff]
      %v4443 = vld [vmem:[%s515 + $0x8] sm:$0xff]
      %vm4444 = vcmask 64512
      %v4445 = vsel %vm4444, %v4442, 0.0
      %v4446 = vsel %vm4444, %v4443, 0.0
      %v4447 = vadd.f32 %v4445, %v4446
      %v4448 = vrot.slane %v4447, 4
      %v4449 = vadd.f32 %v4447, %v4448
      %v4450 = vrot.slane %v4449, 2
      %v4451 = vadd.f32 %v4449, %v4450
      %v4452 = vrot.slane %v4451, 1
      %v4453 = vadd.f32 %v4451, %v4452
      %v4454 = vmax.f32 %v4453, 1e-05
      %v4455 = vrcp.pop %v4454
      %v4456 = vmul.f32 %v4442, %v4455
      %v4457 = vmul.f32 %v4443, %v4455
      %v4459 = vsel %vm2653, %v4438, 0
      %v4462 = vsel %vm2653, %v4439, 0
      %v4465 = vsel %vm2653, %v4440, 0
      %v4468 = vsel %vm2653, %v4441, 0
      %4470 = vmatprep.subr.mxu0 0.0
      %4471 = vmatpush1.msra.mxu0 %v4456
      %4472 = vmatprep.subr.mxu0 0.0
      %4473 = vmatpush1.msra.mxu0 %v4457
      %4474 = vmatprep.subr.mxu0 0.0
      %4475 = vmatpush1.msra.mxu0 0.0
      %4476 = vmatprep.subr.mxu0 0.0
      %4477 = vmatpush1.msra.mxu0 0.0
      %4478 = vmatprep.subr.mxu0 0.0
      %4479 = vmatpush1.msra.mxu0 0.0
      %4480 = vmatprep.subr.mxu0 0.0
      %4481 = vmatpush1.msra.mxu0 0.0
      %4482 = vmatprep.subr.mxu0 0.0
      %4483 = vmatpush1.msra.mxu0 0.0
      %4484 = vmatprep.subr.mxu0 0.0
      %4485 = vmatpush1.msra.mxu0 0.0
      %4486 = vmatprep.subr.mxu0 0.0
      %4487 = vmatpush1.msra.mxu0 0.0
      %4488 = vmatprep.subr.mxu0 0.0
      %4489 = vmatpush1.msra.mxu0 0.0
      %4490 = vmatprep.subr.mxu0 0.0
      %4491 = vmatpush1.msra.mxu0 0.0
      %4492 = vmatprep.subr.mxu0 0.0
      %4493 = vmatpush1.msra.mxu0 0.0
      %4494 = vmatprep.subr.mxu0 0.0
      %4495 = vmatpush1.msra.mxu0 0.0
      %4496 = vmatprep.subr.mxu0 0.0
      %4497 = vmatpush1.msra.mxu0 0.0
      %4498 = vmatprep.subr.mxu0 0.0
      %4499 = vmatpush1.msra.mxu0 0.0
      %4500 = vmatprep.subr.mxu0 0.0
      %4501 = vmatpush1.msra.mxu0 0.0
      %4502 = vmatprep.subr.mxu0 0.0
      %4503 = vmatpush1.msra.mxu0 0.0
      %4504 = vmatprep.subr.mxu0 0.0
      %4505 = vmatpush1.msra.mxu0 0.0
      %4506 = vmatprep.subr.mxu0 0.0
      %4507 = vmatpush1.msra.mxu0 0.0
      %4508 = vmatprep.subr.mxu0 0.0
      %4509 = vmatpush1.msra.mxu0 0.0
      %4510 = vmatprep.subr.mxu0 0.0
      %4511 = vmatpush1.msra.mxu0 0.0
      %4512 = vmatprep.subr.mxu0 0.0
      %4513 = vmatpush1.msra.mxu0 0.0
      %4514 = vmatprep.subr.mxu0 0.0
      %4515 = vmatpush1.msra.mxu0 0.0
      %4516 = vmatprep.subr.mxu0 0.0
      %4517 = vmatpush1.msra.mxu0 0.0
      %4518 = vmatprep.subr.mxu0 0.0
      %4519 = vmatpush1.msra.mxu0 0.0
      %4520 = vmatprep.subr.mxu0 0.0
      %4521 = vmatpush1.msra.mxu0 0.0
      %4522 = vmatprep.subr.mxu0 0.0
      %4523 = vmatpush1.msra.mxu0 0.0
      %4524 = vmatprep.subr.mxu0 0.0
      %4525 = vmatpush1.msra.mxu0 0.0
      %4526 = vmatprep.subr.mxu0 0.0
      %4527 = vmatpush1.msra.mxu0 0.0
      %4528 = vmatprep.subr.mxu0 0.0
      %4529 = vmatpush1.msra.mxu0 0.0
      %4530 = vmatprep.subr.mxu0 0.0
      %4531 = vmatpush1.msra.mxu0 0.0
      %4532 = vmatprep.subr.mxu0 0.0
      %4533 = vmatpush1.msra.mxu0 0.0
      %4534 = vmatprep.mubr.f32.mxu0 0.0
      %4535 = vmatmul.mubr.f32.gmra.mrb[0].mxu0 %v4459
      %v4536 = vpop.f32.mrb[0].mxu0
      %v4537 = vadd.f32 0.0, %v4536
      %v4538 = vpop.f32.mrb[0].mxu0
      %4539 = vmatprep.mubr.f32.mxu0 0.0
      %4540 = vmatmul.mubr.f32.gmra.mrb[0].mxu0 %v4462
      %v4541 = vpop.f32.mrb[0].mxu0
      %v4542 = vadd.f32 0.0, %v4541
      %v4543 = vpop.f32.mrb[0].mxu0
      %4544 = vmatprep.mubr.f32.mxu0 0.0
      %4545 = vmatmul.mubr.f32.gmra.mrb[0].mxu0 %v4465
      %v4546 = vpop.f32.mrb[0].mxu0
      %v4547 = vadd.f32 0.0, %v4546
      %v4548 = vpop.f32.mrb[0].mxu0
      %4549 = vmatprep.mubr.f32.mxu0 0.0
      %4550 = vmatmul.mubr.f32.gmra.mrb[0].mxu0 %v4468
      %v4551 = vpop.f32.mrb[0].mxu0
      %v4552 = vadd.f32 0.0, %v4551
      %v4553 = vpop.f32.mrb[0].mxu0
      %4554 = vdwg.mxu0
      %v4555 = vld [vmem:[%s519] sm:$0xff]
      %v4556 = vld [vmem:[%s9] sm:$0xff]
      %v4557 = vld [vmem:[%s9 + $0x8] sm:$0xf]
      %v4558 = vld [vmem:[%s9 + $0x10] sm:$0xff]
      %v4559 = vld [vmem:[%s9 + $0x18] sm:$0xf]
      %v4560 = vld [vmem:[%s9 + $0x20] sm:$0xff]
      %v4561 = vld [vmem:[%s9 + $0x28] sm:$0xf]
      %v4562 = vld [vmem:[%s9 + $0x30] sm:$0xff]
      %v4563 = vld [vmem:[%s9 + $0x38] sm:$0xf]
      %v4564 = vld [vmem:[%s9 + $0x40] sm:$0xff]
      %v4565 = vld [vmem:[%s9 + $0x48] sm:$0xf]
      %v4566 = vld [vmem:[%s9 + $0x50] sm:$0xff]
      %v4567 = vld [vmem:[%s9 + $0x58] sm:$0xf]
      %v4568 = vld [vmem:[%s9 + $0x60] sm:$0xff]
      %v4569 = vld [vmem:[%s9 + $0x68] sm:$0xf]
      %v4570 = vld [vmem:[%s9 + $0x70] sm:$0xff]
      %v4571 = vld [vmem:[%s9 + $0x78] sm:$0xf]
      %v4572 = vld [vmem:[%s10] sm:$0xff]
      %v4573 = vld [vmem:[%s10 + $0x8] sm:$0xf]
      %v4574 = vld [vmem:[%s10 + $0x10] sm:$0xff]
      %v4575 = vld [vmem:[%s10 + $0x18] sm:$0xf]
      %v4576 = vld [vmem:[%s10 + $0x20] sm:$0xff]
      %v4577 = vld [vmem:[%s10 + $0x28] sm:$0xf]
      %v4578 = vld [vmem:[%s10 + $0x30] sm:$0xff]
      %v4579 = vld [vmem:[%s10 + $0x38] sm:$0xf]
      %v4580 = vld [vmem:[%s10 + $0x40] sm:$0xff]
      %v4581 = vld [vmem:[%s10 + $0x48] sm:$0xf]
      %v4582 = vld [vmem:[%s10 + $0x50] sm:$0xff]
      %v4583 = vld [vmem:[%s10 + $0x58] sm:$0xf]
      %v4584 = vld [vmem:[%s10 + $0x60] sm:$0xff]
      %v4585 = vld [vmem:[%s10 + $0x68] sm:$0xf]
      %v4586 = vld [vmem:[%s10 + $0x70] sm:$0xff]
      %v4587 = vld [vmem:[%s10 + $0x78] sm:$0xf]
      %v4588 = vld [vmem:[%s11] sm:$0xff]
      %v4589 = vld [vmem:[%s11 + $0x8] sm:$0xff]
      %v4590 = vld [vmem:[%s11 + $0x10] sm:$0xff]
      %v4591 = vld [vmem:[%s11 + $0x18] sm:$0xff]
      %v4592 = vld [vmem:[%s11 + $0x20] sm:$0xff]
      %v4593 = vld [vmem:[%s11 + $0x28] sm:$0xff]
      %v4594 = vld [vmem:[%s11 + $0x30] sm:$0xff]
      %v4595 = vld [vmem:[%s11 + $0x38] sm:$0xff]
      %v4596 = vld [vmem:[%s11 + $0x40] sm:$0xff]
      %v4597 = vld [vmem:[%s11 + $0x48] sm:$0xff]
      %v4598 = vld [vmem:[%s11 + $0x50] sm:$0xff]
      %v4599 = vld [vmem:[%s11 + $0x58] sm:$0xff]
      %v4600 = vld [vmem:[%s11 + $0x60] sm:$0xff]
      %v4601 = vld [vmem:[%s11 + $0x68] sm:$0xff]
      %v4602 = vld [vmem:[%s11 + $0x70] sm:$0xff]
      %v4603 = vld [vmem:[%s11 + $0x78] sm:$0xff]
      %v4604 = vld [vmem:[%s11 + $0x80] sm:$0xff]
      %v4605 = vld [vmem:[%s11 + $0x88] sm:$0xff]
      %v4606 = vld [vmem:[%s11 + $0x90] sm:$0xff]
      %v4607 = vld [vmem:[%s11 + $0x98] sm:$0xff]
      %v4608 = vld [vmem:[%s11 + $0xa0] sm:$0xff]
      %v4609 = vld [vmem:[%s11 + $0xa8] sm:$0xff]
      %v4610 = vld [vmem:[%s11 + $0xb0] sm:$0xff]
      %v4611 = vld [vmem:[%s11 + $0xb8] sm:$0xff]
      %v4612 = vld [vmem:[%s11 + $0xc0] sm:$0xff]
      %v4613 = vld [vmem:[%s11 + $0xc8] sm:$0xff]
      %v4614 = vld [vmem:[%s11 + $0xd0] sm:$0xff]
      %v4615 = vld [vmem:[%s11 + $0xd8] sm:$0xff]
      %v4616 = vld [vmem:[%s11 + $0xe0] sm:$0xff]
      %v4617 = vld [vmem:[%s11 + $0xe8] sm:$0xff]
      %v4618 = vld [vmem:[%s11 + $0xf0] sm:$0xff]
      %v4619 = vld [vmem:[%s11 + $0xf8] sm:$0xff]
      %4621 = vset.pattern.permute.xlu0 0
      %4622 = vperm.xlu0 %4621, %v4572
      %v4623 = vpop.permute.xlu0 %4622
      %4626 = vset.pattern.permute.xlu0 0
      %4627 = vperm.xlu0 %4626, %v4573
      %v4628 = vpop.permute.xlu0 %4627
      %4631 = vset.pattern.permute.xlu0 0
      %4632 = vperm.xlu0 %4631, %v4574
      %v4633 = vpop.permute.xlu0 %4632
      %4636 = vset.pattern.permute.xlu0 0
      %4637 = vperm.xlu0 %4636, %v4575
      %v4638 = vpop.permute.xlu0 %4637
      %4641 = vset.pattern.permute.xlu0 0
      %4642 = vperm.xlu0 %4641, %v4576
      %v4643 = vpop.permute.xlu0 %4642
      %4646 = vset.pattern.permute.xlu0 0
      %4647 = vperm.xlu0 %4646, %v4577
      %v4648 = vpop.permute.xlu0 %4647
      %4651 = vset.pattern.permute.xlu0 0
      %4652 = vperm.xlu0 %4651, %v4578
      %v4653 = vpop.permute.xlu0 %4652
      %4656 = vset.pattern.permute.xlu0 0
      %4657 = vperm.xlu0 %4656, %v4579
      %v4658 = vpop.permute.xlu0 %4657
      %4661 = vset.pattern.permute.xlu0 0
      %4662 = vperm.xlu0 %4661, %v4580
      %v4663 = vpop.permute.xlu0 %4662
      %4666 = vset.pattern.permute.xlu0 0
      %4667 = vperm.xlu0 %4666, %v4581
      %v4668 = vpop.permute.xlu0 %4667
      %4671 = vset.pattern.permute.xlu0 0
      %4672 = vperm.xlu0 %4671, %v4582
      %v4673 = vpop.permute.xlu0 %4672
      %4676 = vset.pattern.permute.xlu0 0
      %4677 = vperm.xlu0 %4676, %v4583
      %v4678 = vpop.permute.xlu0 %4677
      %4681 = vset.pattern.permute.xlu0 0
      %4682 = vperm.xlu0 %4681, %v4584
      %v4683 = vpop.permute.xlu0 %4682
      %4686 = vset.pattern.permute.xlu0 0
      %4687 = vperm.xlu0 %4686, %v4585
      %v4688 = vpop.permute.xlu0 %4687
      %4691 = vset.pattern.permute.xlu0 0
      %4692 = vperm.xlu0 %4691, %v4586
      %v4693 = vpop.permute.xlu0 %4692
      %4696 = vset.pattern.permute.xlu0 0
      %4697 = vperm.xlu0 %4696, %v4587
      %v4698 = vpop.permute.xlu0 %4697
      %v4701 = vsel %vm558, %v4556, 0
      %v4704 = vsel %vm558, %v4557, 0
      %4706 = vmatprep.subr.mxu0 0.0
      %4707 = vmatpush1.msra.mxu0 %v4537
      %4708 = vmatprep.subr.mxu0 0.0
      %4709 = vmatpush1.msra.mxu0 %v4542
      %4710 = vmatprep.subr.mxu0 0.0
      %4711 = vmatpush1.msra.mxu0 %v4547
      %4712 = vmatprep.subr.mxu0 0.0
      %4713 = vmatpush1.msra.mxu0 %v4552
      %4714 = vmatprep.subr.mxu0 0.0
      %4715 = vmatpush1.msra.mxu0 0.0
      %4716 = vmatprep.subr.mxu0 0.0
      %4717 = vmatpush1.msra.mxu0 0.0
      %4718 = vmatprep.subr.mxu0 0.0
      %4719 = vmatpush1.msra.mxu0 0.0
      %4720 = vmatprep.subr.mxu0 0.0
      %4721 = vmatpush1.msra.mxu0 0.0
      %4722 = vmatprep.subr.mxu0 0.0
      %4723 = vmatpush1.msra.mxu0 0.0
      %4724 = vmatprep.subr.mxu0 0.0
      %4725 = vmatpush1.msra.mxu0 0.0
      %4726 = vmatprep.subr.mxu0 0.0
      %4727 = vmatpush1.msra.mxu0 0.0
      %4728 = vmatprep.subr.mxu0 0.0
      %4729 = vmatpush1.msra.mxu0 0.0
      %4730 = vmatprep.subr.mxu0 0.0
      %4731 = vmatpush1.msra.mxu0 0.0
      %4732 = vmatprep.subr.mxu0 0.0
      %4733 = vmatpush1.msra.mxu0 0.0
      %4734 = vmatprep.subr.mxu0 0.0
      %4735 = vmatpush1.msra.mxu0 0.0
      %4736 = vmatprep.subr.mxu0 0.0
      %4737 = vmatpush1.msra.mxu0 0.0
      %4738 = vmatprep.subr.mxu0 0.0
      %4739 = vmatpush1.msra.mxu0 0.0
      %4740 = vmatprep.subr.mxu0 0.0
      %4741 = vmatpush1.msra.mxu0 0.0
      %4742 = vmatprep.subr.mxu0 0.0
      %4743 = vmatpush1.msra.mxu0 0.0
      %4744 = vmatprep.subr.mxu0 0.0
      %4745 = vmatpush1.msra.mxu0 0.0
      %4746 = vmatprep.subr.mxu0 0.0
      %4747 = vmatpush1.msra.mxu0 0.0
      %4748 = vmatprep.subr.mxu0 0.0
      %4749 = vmatpush1.msra.mxu0 0.0
      %4750 = vmatprep.subr.mxu0 0.0
      %4751 = vmatpush1.msra.mxu0 0.0
      %4752 = vmatprep.subr.mxu0 0.0
      %4753 = vmatpush1.msra.mxu0 0.0
      %4754 = vmatprep.subr.mxu0 0.0
      %4755 = vmatpush1.msra.mxu0 0.0
      %4756 = vmatprep.subr.mxu0 0.0
      %4757 = vmatpush1.msra.mxu0 0.0
      %4758 = vmatprep.subr.mxu0 0.0
      %4759 = vmatpush1.msra.mxu0 0.0
      %4760 = vmatprep.subr.mxu0 0.0
      %4761 = vmatpush1.msra.mxu0 0.0
      %4762 = vmatprep.subr.mxu0 0.0
      %4763 = vmatpush1.msra.mxu0 0.0
      %4764 = vmatprep.subr.mxu0 0.0
      %4765 = vmatpush1.msra.mxu0 0.0
      %4766 = vmatprep.subr.mxu0 0.0
      %4767 = vmatpush1.msra.mxu0 0.0
      %4768 = vmatprep.subr.mxu0 0.0
      %4769 = vmatpush1.msra.mxu0 0.0
      %4770 = vmatprep.mubr.f32.mxu0 0.0
      %4771 = vmatmul.mubr.f32.gmra.mrb[0].mxu0 %v4701
      %v4772 = vpop.f32.mrb[0].mxu0
      %v4773 = vadd.f32 %v4623, %v4772
      %v4774 = vpop.f32.mrb[0].mxu0
      %4775 = vmatprep.mubr.f32.mxu0 0.0
      %4776 = vmatmul.mubr.f32.gmra.mrb[0].mxu0 %v4704
      %v4777 = vpop.f32.mrb[0].mxu0
      %v4778 = vadd.f32 %v4628, %v4777
      %v4779 = vpop.f32.mrb[0].mxu0
      %4780 = vdwg.mxu0
      %v4782 = vsel %vm558, %v4558, 0
      %v4785 = vsel %vm558, %v4559, 0
      %4787 = vmatprep.subr.mxu0 0.0
      %4788 = vmatpush1.msra.mxu0 %v4537
      %4789 = vmatprep.subr.mxu0 0.0
      %4790 = vmatpush1.msra.mxu0 %v4542
      %4791 = vmatprep.subr.mxu0 0.0
      %4792 = vmatpush1.msra.mxu0 %v4547
      %4793 = vmatprep.subr.mxu0 0.0
      %4794 = vmatpush1.msra.mxu0 %v4552
      %4795 = vmatprep.subr.mxu0 0.0
      %4796 = vmatpush1.msra.mxu0 0.0
      %4797 = vmatprep.subr.mxu0 0.0
      %4798 = vmatpush1.msra.mxu0 0.0
      %4799 = vmatprep.subr.mxu0 0.0
      %4800 = vmatpush1.msra.mxu0 0.0
      %4801 = vmatprep.subr.mxu0 0.0
      %4802 = vmatpush1.msra.mxu0 0.0
      %4803 = vmatprep.subr.mxu0 0.0
      %4804 = vmatpush1.msra.mxu0 0.0
      %4805 = vmatprep.subr.mxu0 0.0
      %4806 = vmatpush1.msra.mxu0 0.0
      %4807 = vmatprep.subr.mxu0 0.0
      %4808 = vmatpush1.msra.mxu0 0.0
      %4809 = vmatprep.subr.mxu0 0.0
      %4810 = vmatpush1.msra.mxu0 0.0
      %4811 = vmatprep.subr.mxu0 0.0
      %4812 = vmatpush1.msra.mxu0 0.0
      %4813 = vmatprep.subr.mxu0 0.0
      %4814 = vmatpush1.msra.mxu0 0.0
      %4815 = vmatprep.subr.mxu0 0.0
      %4816 = vmatpush1.msra.mxu0 0.0
      %4817 = vmatprep.subr.mxu0 0.0
      %4818 = vmatpush1.msra.mxu0 0.0
      %4819 = vmatprep.subr.mxu0 0.0
      %4820 = vmatpush1.msra.mxu0 0.0
      %4821 = vmatprep.subr.mxu0 0.0
      %4822 = vmatpush1.msra.mxu0 0.0
      %4823 = vmatprep.subr.mxu0 0.0
      %4824 = vmatpush1.msra.mxu0 0.0
      %4825 = vmatprep.subr.mxu0 0.0
      %4826 = vmatpush1.msra.mxu0 0.0
      %4827 = vmatprep.subr.mxu0 0.0
      %4828 = vmatpush1.msra.mxu0 0.0
      %4829 = vmatprep.subr.mxu0 0.0
      %4830 = vmatpush1.msra.mxu0 0.0
      %4831 = vmatprep.subr.mxu0 0.0
      %4832 = vmatpush1.msra.mxu0 0.0
      %4833 = vmatprep.subr.mxu0 0.0
      %4834 = vmatpush1.msra.mxu0 0.0
      %4835 = vmatprep.subr.mxu0 0.0
      %4836 = vmatpush1.msra.mxu0 0.0
      %4837 = vmatprep.subr.mxu0 0.0
      %4838 = vmatpush1.msra.mxu0 0.0
      %4839 = vmatprep.subr.mxu0 0.0
      %4840 = vmatpush1.msra.mxu0 0.0
      %4841 = vmatprep.subr.mxu0 0.0
      %4842 = vmatpush1.msra.mxu0 0.0
      %4843 = vmatprep.subr.mxu0 0.0
      %4844 = vmatpush1.msra.mxu0 0.0
      %4845 = vmatprep.subr.mxu0 0.0
      %4846 = vmatpush1.msra.mxu0 0.0
      %4847 = vmatprep.subr.mxu0 0.0
      %4848 = vmatpush1.msra.mxu0 0.0
      %4849 = vmatprep.subr.mxu0 0.0
      %4850 = vmatpush1.msra.mxu0 0.0
      %4851 = vmatprep.mubr.f32.mxu0 0.0
      %4852 = vmatmul.mubr.f32.gmra.mrb[0].mxu0 %v4782
      %v4853 = vpop.f32.mrb[0].mxu0
      %v4854 = vadd.f32 %v4633, %v4853
      %v4855 = vpop.f32.mrb[0].mxu0
      %4856 = vmatprep.mubr.f32.mxu0 0.0
      %4857 = vmatmul.mubr.f32.gmra.mrb[0].mxu0 %v4785
      %v4858 = vpop.f32.mrb[0].mxu0
      %v4859 = vadd.f32 %v4638, %v4858
      %v4860 = vpop.f32.mrb[0].mxu0
      %4861 = vdwg.mxu0
      %v4863 = vsel %vm558, %v4560, 0
      %v4866 = vsel %vm558, %v4561, 0
      %4868 = vmatprep.subr.mxu0 0.0
      %4869 = vmatpush1.msra.mxu0 %v4537
      %4870 = vmatprep.subr.mxu0 0.0
      %4871 = vmatpush1.msra.mxu0 %v4542
      %4872 = vmatprep.subr.mxu0 0.0
      %4873 = vmatpush1.msra.mxu0 %v4547
      %4874 = vmatprep.subr.mxu0 0.0
      %4875 = vmatpush1.msra.mxu0 %v4552
      %4876 = vmatprep.subr.mxu0 0.0
      %4877 = vmatpush1.msra.mxu0 0.0
      %4878 = vmatprep.subr.mxu0 0.0
      %4879 = vmatpush1.msra.mxu0 0.0
      %4880 = vmatprep.subr.mxu0 0.0
      %4881 = vmatpush1.msra.mxu0 0.0
      %4882 = vmatprep.subr.mxu0 0.0
      %4883 = vmatpush1.msra.mxu0 0.0
      %4884 = vmatprep.subr.mxu0 0.0
      %4885 = vmatpush1.msra.mxu0 0.0
      %4886 = vmatprep.subr.mxu0 0.0
      %4887 = vmatpush1.msra.mxu0 0.0
      %4888 = vmatprep.subr.mxu0 0.0
      %4889 = vmatpush1.msra.mxu0 0.0
      %4890 = vmatprep.subr.mxu0 0.0
      %4891 = vmatpush1.msra.mxu0 0.0
      %4892 = vmatprep.subr.mxu0 0.0
      %4893 = vmatpush1.msra.mxu0 0.0
      %4894 = vmatprep.subr.mxu0 0.0
      %4895 = vmatpush1.msra.mxu0 0.0
      %4896 = vmatprep.subr.mxu0 0.0
      %4897 = vmatpush1.msra.mxu0 0.0
      %4898 = vmatprep.subr.mxu0 0.0
      %4899 = vmatpush1.msra.mxu0 0.0
      %4900 = vmatprep.subr.mxu0 0.0
      %4901 = vmatpush1.msra.mxu0 0.0
      %4902 = vmatprep.subr.mxu0 0.0
      %4903 = vmatpush1.msra.mxu0 0.0
      %4904 = vmatprep.subr.mxu0 0.0
      %4905 = vmatpush1.msra.mxu0 0.0
      %4906 = vmatprep.subr.mxu0 0.0
      %4907 = vmatpush1.msra.mxu0 0.0
      %4908 = vmatprep.subr.mxu0 0.0
      %4909 = vmatpush1.msra.mxu0 0.0
      %4910 = vmatprep.subr.mxu0 0.0
      %4911 = vmatpush1.msra.mxu0 0.0
      %4912 = vmatprep.subr.mxu0 0.0
      %4913 = vmatpush1.msra.mxu0 0.0
      %4914 = vmatprep.subr.mxu0 0.0
      %4915 = vmatpush1.msra.mxu0 0.0
      %4916 = vmatprep.subr.mxu0 0.0
      %4917 = vmatpush1.msra.mxu0 0.0
      %4918 = vmatprep.subr.mxu0 0.0
      %4919 = vmatpush1.msra.mxu0 0.0
      %4920 = vmatprep.subr.mxu0 0.0
      %4921 = vmatpush1.msra.mxu0 0.0
      %4922 = vmatprep.subr.mxu0 0.0
      %4923 = vmatpush1.msra.mxu0 0.0
      %4924 = vmatprep.subr.mxu0 0.0
      %4925 = vmatpush1.msra.mxu0 0.0
      %4926 = vmatprep.subr.mxu0 0.0
      %4927 = vmatpush1.msra.mxu0 0.0
      %4928 = vmatprep.subr.mxu0 0.0
      %4929 = vmatpush1.msra.mxu0 0.0
      %4930 = vmatprep.subr.mxu0 0.0
      %4931 = vmatpush1.msra.mxu0 0.0
      %4932 = vmatprep.mubr.f32.mxu0 0.0
      %4933 = vmatmul.mubr.f32.gmra.mrb[0].mxu0 %v4863
      %v4934 = vpop.f32.mrb[0].mxu0
      %v4935 = vadd.f32 %v4643, %v4934
      %v4936 = vpop.f32.mrb[0].mxu0
      %4937 = vmatprep.mubr.f32.mxu0 0.0
      %4938 = vmatmul.mubr.f32.gmra.mrb[0].mxu0 %v4866
      %v4939 = vpop.f32.mrb[0].mxu0
      %v4940 = vadd.f32 %v4648, %v4939
      %v4941 = vpop.f32.mrb[0].mxu0
      %4942 = vdwg.mxu0
      %v4944 = vsel %vm558, %v4562, 0
      %v4947 = vsel %vm558, %v4563, 0
      %4949 = vmatprep.subr.mxu0 0.0
      %4950 = vmatpush1.msra.mxu0 %v4537
      %4951 = vmatprep.subr.mxu0 0.0
      %4952 = vmatpush1.msra.mxu0 %v4542
      %4953 = vmatprep.subr.mxu0 0.0
      %4954 = vmatpush1.msra.mxu0 %v4547
      %4955 = vmatprep.subr.mxu0 0.0
      %4956 = vmatpush1.msra.mxu0 %v4552
      %4957 = vmatprep.subr.mxu0 0.0
      %4958 = vmatpush1.msra.mxu0 0.0
      %4959 = vmatprep.subr.mxu0 0.0
      %4960 = vmatpush1.msra.mxu0 0.0
      %4961 = vmatprep.subr.mxu0 0.0
      %4962 = vmatpush1.msra.mxu0 0.0
      %4963 = vmatprep.subr.mxu0 0.0
      %4964 = vmatpush1.msra.mxu0 0.0
      %4965 = vmatprep.subr.mxu0 0.0
      %4966 = vmatpush1.msra.mxu0 0.0
      %4967 = vmatprep.subr.mxu0 0.0
      %4968 = vmatpush1.msra.mxu0 0.0
      %4969 = vmatprep.subr.mxu0 0.0
      %4970 = vmatpush1.msra.mxu0 0.0
      %4971 = vmatprep.subr.mxu0 0.0
      %4972 = vmatpush1.msra.mxu0 0.0
      %4973 = vmatprep.subr.mxu0 0.0
      %4974 = vmatpush1.msra.mxu0 0.0
      %4975 = vmatprep.subr.mxu0 0.0
      %4976 = vmatpush1.msra.mxu0 0.0
      %4977 = vmatprep.subr.mxu0 0.0
      %4978 = vmatpush1.msra.mxu0 0.0
      %4979 = vmatprep.subr.mxu0 0.0
      %4980 = vmatpush1.msra.mxu0 0.0
      %4981 = vmatprep.subr.mxu0 0.0
      %4982 = vmatpush1.msra.mxu0 0.0
      %4983 = vmatprep.subr.mxu0 0.0
      %4984 = vmatpush1.msra.mxu0 0.0
      %4985 = vmatprep.subr.mxu0 0.0
      %4986 = vmatpush1.msra.mxu0 0.0
      %4987 = vmatprep.subr.mxu0 0.0
      %4988 = vmatpush1.msra.mxu0 0.0
      %4989 = vmatprep.subr.mxu0 0.0
      %4990 = vmatpush1.msra.mxu0 0.0
      %4991 = vmatprep.subr.mxu0 0.0
      %4992 = vmatpush1.msra.mxu0 0.0
      %4993 = vmatprep.subr.mxu0 0.0
      %4994 = vmatpush1.msra.mxu0 0.0
      %4995 = vmatprep.subr.mxu0 0.0
      %4996 = vmatpush1.msra.mxu0 0.0
      %4997 = vmatprep.subr.mxu0 0.0
      %4998 = vmatpush1.msra.mxu0 0.0
      %4999 = vmatprep.subr.mxu0 0.0
      %5000 = vmatpush1.msra.mxu0 0.0
      %5001 = vmatprep.subr.mxu0 0.0
      %5002 = vmatpush1.msra.mxu0 0.0
      %5003 = vmatprep.subr.mxu0 0.0
      %5004 = vmatpush1.msra.mxu0 0.0
      %5005 = vmatprep.subr.mxu0 0.0
      %5006 = vmatpush1.msra.mxu0 0.0
      %5007 = vmatprep.subr.mxu0 0.0
      %5008 = vmatpush1.msra.mxu0 0.0
      %5009 = vmatprep.subr.mxu0 0.0
      %5010 = vmatpush1.msra.mxu0 0.0
      %5011 = vmatprep.subr.mxu0 0.0
      %5012 = vmatpush1.msra.mxu0 0.0
      %5013 = vmatprep.mubr.f32.mxu0 0.0
      %5014 = vmatmul.mubr.f32.gmra.mrb[0].mxu0 %v4944
      %v5015 = vpop.f32.mrb[0].mxu0
      %v5016 = vadd.f32 %v4653, %v5015
      %v5017 = vpop.f32.mrb[0].mxu0
      %5018 = vmatprep.mubr.f32.mxu0 0.0
      %5019 = vmatmul.mubr.f32.gmra.mrb[0].mxu0 %v4947
      %v5020 = vpop.f32.mrb[0].mxu0
      %v5021 = vadd.f32 %v4658, %v5020
      %v5022 = vpop.f32.mrb[0].mxu0
      %5023 = vdwg.mxu0
      %v5025 = vsel %vm558, %v4564, 0
      %v5028 = vsel %vm558, %v4565, 0
      %5030 = vmatprep.subr.mxu0 0.0
      %5031 = vmatpush1.msra.mxu0 %v4537
      %5032 = vmatprep.subr.mxu0 0.0
      %5033 = vmatpush1.msra.mxu0 %v4542
      %5034 = vmatprep.subr.mxu0 0.0
      %5035 = vmatpush1.msra.mxu0 %v4547
      %5036 = vmatprep.subr.mxu0 0.0
      %5037 = vmatpush1.msra.mxu0 %v4552
      %5038 = vmatprep.subr.mxu0 0.0
      %5039 = vmatpush1.msra.mxu0 0.0
      %5040 = vmatprep.subr.mxu0 0.0
      %5041 = vmatpush1.msra.mxu0 0.0
      %5042 = vmatprep.subr.mxu0 0.0
      %5043 = vmatpush1.msra.mxu0 0.0
      %5044 = vmatprep.subr.mxu0 0.0
      %5045 = vmatpush1.msra.mxu0 0.0
      %5046 = vmatprep.subr.mxu0 0.0
      %5047 = vmatpush1.msra.mxu0 0.0
      %5048 = vmatprep.subr.mxu0 0.0
      %5049 = vmatpush1.msra.mxu0 0.0
      %5050 = vmatprep.subr.mxu0 0.0
      %5051 = vmatpush1.msra.mxu0 0.0
      %5052 = vmatprep.subr.mxu0 0.0
      %5053 = vmatpush1.msra.mxu0 0.0
      %5054 = vmatprep.subr.mxu0 0.0
      %5055 = vmatpush1.msra.mxu0 0.0
      %5056 = vmatprep.subr.mxu0 0.0
      %5057 = vmatpush1.msra.mxu0 0.0
      %5058 = vmatprep.subr.mxu0 0.0
      %5059 = vmatpush1.msra.mxu0 0.0
      %5060 = vmatprep.subr.mxu0 0.0
      %5061 = vmatpush1.msra.mxu0 0.0
      %5062 = vmatprep.subr.mxu0 0.0
      %5063 = vmatpush1.msra.mxu0 0.0
      %5064 = vmatprep.subr.mxu0 0.0
      %5065 = vmatpush1.msra.mxu0 0.0
      %5066 = vmatprep.subr.mxu0 0.0
      %5067 = vmatpush1.msra.mxu0 0.0
      %5068 = vmatprep.subr.mxu0 0.0
      %5069 = vmatpush1.msra.mxu0 0.0
      %5070 = vmatprep.subr.mxu0 0.0
      %5071 = vmatpush1.msra.mxu0 0.0
      %5072 = vmatprep.subr.mxu0 0.0
      %5073 = vmatpush1.msra.mxu0 0.0
      %5074 = vmatprep.subr.mxu0 0.0
      %5075 = vmatpush1.msra.mxu0 0.0
      %5076 = vmatprep.subr.mxu0 0.0
      %5077 = vmatpush1.msra.mxu0 0.0
      %5078 = vmatprep.subr.mxu0 0.0
      %5079 = vmatpush1.msra.mxu0 0.0
      %5080 = vmatprep.subr.mxu0 0.0
      %5081 = vmatpush1.msra.mxu0 0.0
      %5082 = vmatprep.subr.mxu0 0.0
      %5083 = vmatpush1.msra.mxu0 0.0
      %5084 = vmatprep.subr.mxu0 0.0
      %5085 = vmatpush1.msra.mxu0 0.0
      %5086 = vmatprep.subr.mxu0 0.0
      %5087 = vmatpush1.msra.mxu0 0.0
      %5088 = vmatprep.subr.mxu0 0.0
      %5089 = vmatpush1.msra.mxu0 0.0
      %5090 = vmatprep.subr.mxu0 0.0
      %5091 = vmatpush1.msra.mxu0 0.0
      %5092 = vmatprep.subr.mxu0 0.0
      %5093 = vmatpush1.msra.mxu0 0.0
      %5094 = vmatprep.mubr.f32.mxu0 0.0
      %5095 = vmatmul.mubr.f32.gmra.mrb[0].mxu0 %v5025
      %v5096 = vpop.f32.mrb[0].mxu0
      %v5097 = vadd.f32 %v4663, %v5096
      %v5098 = vpop.f32.mrb[0].mxu0
      %5099 = vmatprep.mubr.f32.mxu0 0.0
      %5100 = vmatmul.mubr.f32.gmra.mrb[0].mxu0 %v5028
      %v5101 = vpop.f32.mrb[0].mxu0
      %v5102 = vadd.f32 %v4668, %v5101
      %v5103 = vpop.f32.mrb[0].mxu0
      %5104 = vdwg.mxu0
      %v5106 = vsel %vm558, %v4566, 0
      %v5109 = vsel %vm558, %v4567, 0
      %5111 = vmatprep.subr.mxu0 0.0
      %5112 = vmatpush1.msra.mxu0 %v4537
      %5113 = vmatprep.subr.mxu0 0.0
      %5114 = vmatpush1.msra.mxu0 %v4542
      %5115 = vmatprep.subr.mxu0 0.0
      %5116 = vmatpush1.msra.mxu0 %v4547
      %5117 = vmatprep.subr.mxu0 0.0
      %5118 = vmatpush1.msra.mxu0 %v4552
      %5119 = vmatprep.subr.mxu0 0.0
      %5120 = vmatpush1.msra.mxu0 0.0
      %5121 = vmatprep.subr.mxu0 0.0
      %5122 = vmatpush1.msra.mxu0 0.0
      %5123 = vmatprep.subr.mxu0 0.0
      %5124 = vmatpush1.msra.mxu0 0.0
      %5125 = vmatprep.subr.mxu0 0.0
      %5126 = vmatpush1.msra.mxu0 0.0
      %5127 = vmatprep.subr.mxu0 0.0
      %5128 = vmatpush1.msra.mxu0 0.0
      %5129 = vmatprep.subr.mxu0 0.0
      %5130 = vmatpush1.msra.mxu0 0.0
      %5131 = vmatprep.subr.mxu0 0.0
      %5132 = vmatpush1.msra.mxu0 0.0
      %5133 = vmatprep.subr.mxu0 0.0
      %5134 = vmatpush1.msra.mxu0 0.0
      %5135 = vmatprep.subr.mxu0 0.0
      %5136 = vmatpush1.msra.mxu0 0.0
      %5137 = vmatprep.subr.mxu0 0.0
      %5138 = vmatpush1.msra.mxu0 0.0
      %5139 = vmatprep.subr.mxu0 0.0
      %5140 = vmatpush1.msra.mxu0 0.0
      %5141 = vmatprep.subr.mxu0 0.0
      %5142 = vmatpush1.msra.mxu0 0.0
      %5143 = vmatprep.subr.mxu0 0.0
      %5144 = vmatpush1.msra.mxu0 0.0
      %5145 = vmatprep.subr.mxu0 0.0
      %5146 = vmatpush1.msra.mxu0 0.0
      %5147 = vmatprep.subr.mxu0 0.0
      %5148 = vmatpush1.msra.mxu0 0.0
      %5149 = vmatprep.subr.mxu0 0.0
      %5150 = vmatpush1.msra.mxu0 0.0
      %5151 = vmatprep.subr.mxu0 0.0
      %5152 = vmatpush1.msra.mxu0 0.0
      %5153 = vmatprep.subr.mxu0 0.0
      %5154 = vmatpush1.msra.mxu0 0.0
      %5155 = vmatprep.subr.mxu0 0.0
      %5156 = vmatpush1.msra.mxu0 0.0
      %5157 = vmatprep.subr.mxu0 0.0
      %5158 = vmatpush1.msra.mxu0 0.0
      %5159 = vmatprep.subr.mxu0 0.0
      %5160 = vmatpush1.msra.mxu0 0.0
      %5161 = vmatprep.subr.mxu0 0.0
      %5162 = vmatpush1.msra.mxu0 0.0
      %5163 = vmatprep.subr.mxu0 0.0
      %5164 = vmatpush1.msra.mxu0 0.0
      %5165 = vmatprep.subr.mxu0 0.0
      %5166 = vmatpush1.msra.mxu0 0.0
      %5167 = vmatprep.subr.mxu0 0.0
      %5168 = vmatpush1.msra.mxu0 0.0
      %5169 = vmatprep.subr.mxu0 0.0
      %5170 = vmatpush1.msra.mxu0 0.0
      %5171 = vmatprep.subr.mxu0 0.0
      %5172 = vmatpush1.msra.mxu0 0.0
      %5173 = vmatprep.subr.mxu0 0.0
      %5174 = vmatpush1.msra.mxu0 0.0
      %5175 = vmatprep.mubr.f32.mxu0 0.0
      %5176 = vmatmul.mubr.f32.gmra.mrb[0].mxu0 %v5106
      %v5177 = vpop.f32.mrb[0].mxu0
      %v5178 = vadd.f32 %v4673, %v5177
      %v5179 = vpop.f32.mrb[0].mxu0
      %5180 = vmatprep.mubr.f32.mxu0 0.0
      %5181 = vmatmul.mubr.f32.gmra.mrb[0].mxu0 %v5109
      %v5182 = vpop.f32.mrb[0].mxu0
      %v5183 = vadd.f32 %v4678, %v5182
      %v5184 = vpop.f32.mrb[0].mxu0
      %5185 = vdwg.mxu0
      %v5187 = vsel %vm558, %v4568, 0
      %v5190 = vsel %vm558, %v4569, 0
      %5192 = vmatprep.subr.mxu0 0.0
      %5193 = vmatpush1.msra.mxu0 %v4537
      %5194 = vmatprep.subr.mxu0 0.0
      %5195 = vmatpush1.msra.mxu0 %v4542
      %5196 = vmatprep.subr.mxu0 0.0
      %5197 = vmatpush1.msra.mxu0 %v4547
      %5198 = vmatprep.subr.mxu0 0.0
      %5199 = vmatpush1.msra.mxu0 %v4552
      %5200 = vmatprep.subr.mxu0 0.0
      %5201 = vmatpush1.msra.mxu0 0.0
      %5202 = vmatprep.subr.mxu0 0.0
      %5203 = vmatpush1.msra.mxu0 0.0
      %5204 = vmatprep.subr.mxu0 0.0
      %5205 = vmatpush1.msra.mxu0 0.0
      %5206 = vmatprep.subr.mxu0 0.0
      %5207 = vmatpush1.msra.mxu0 0.0
      %5208 = vmatprep.subr.mxu0 0.0
      %5209 = vmatpush1.msra.mxu0 0.0
      %5210 = vmatprep.subr.mxu0 0.0
      %5211 = vmatpush1.msra.mxu0 0.0
      %5212 = vmatprep.subr.mxu0 0.0
      %5213 = vmatpush1.msra.mxu0 0.0
      %5214 = vmatprep.subr.mxu0 0.0
      %5215 = vmatpush1.msra.mxu0 0.0
      %5216 = vmatprep.subr.mxu0 0.0
      %5217 = vmatpush1.msra.mxu0 0.0
      %5218 = vmatprep.subr.mxu0 0.0
      %5219 = vmatpush1.msra.mxu0 0.0
      %5220 = vmatprep.subr.mxu0 0.0
      %5221 = vmatpush1.msra.mxu0 0.0
      %5222 = vmatprep.subr.mxu0 0.0
      %5223 = vmatpush1.msra.mxu0 0.0
      %5224 = vmatprep.subr.mxu0 0.0
      %5225 = vmatpush1.msra.mxu0 0.0
      %5226 = vmatprep.subr.mxu0 0.0
      %5227 = vmatpush1.msra.mxu0 0.0
      %5228 = vmatprep.subr.mxu0 0.0
      %5229 = vmatpush1.msra.mxu0 0.0
      %5230 = vmatprep.subr.mxu0 0.0
      %5231 = vmatpush1.msra.mxu0 0.0
      %5232 = vmatprep.subr.mxu0 0.0
      %5233 = vmatpush1.msra.mxu0 0.0
      %5234 = vmatprep.subr.mxu0 0.0
      %5235 = vmatpush1.msra.mxu0 0.0
      %5236 = vmatprep.subr.mxu0 0.0
      %5237 = vmatpush1.msra.mxu0 0.0
      %5238 = vmatprep.subr.mxu0 0.0
      %5239 = vmatpush1.msra.mxu0 0.0
      %5240 = vmatprep.subr.mxu0 0.0
      %5241 = vmatpush1.msra.mxu0 0.0
      %5242 = vmatprep.subr.mxu0 0.0
      %5243 = vmatpush1.msra.mxu0 0.0
      %5244 = vmatprep.subr.mxu0 0.0
      %5245 = vmatpush1.msra.mxu0 0.0
      %5246 = vmatprep.subr.mxu0 0.0
      %5247 = vmatpush1.msra.mxu0 0.0
      %5248 = vmatprep.subr.mxu0 0.0
      %5249 = vmatpush1.msra.mxu0 0.0
      %5250 = vmatprep.subr.mxu0 0.0
      %5251 = vmatpush1.msra.mxu0 0.0
      %5252 = vmatprep.subr.mxu0 0.0
      %5253 = vmatpush1.msra.mxu0 0.0
      %5254 = vmatprep.subr.mxu0 0.0
      %5255 = vmatpush1.msra.mxu0 0.0
      %5256 = vmatprep.mubr.f32.mxu0 0.0
      %5257 = vmatmul.mubr.f32.gmra.mrb[0].mxu0 %v5187
      %v5258 = vpop.f32.mrb[0].mxu0
      %v5259 = vadd.f32 %v4683, %v5258
      %v5260 = vpop.f32.mrb[0].mxu0
      %5261 = vmatprep.mubr.f32.mxu0 0.0
      %5262 = vmatmul.mubr.f32.gmra.mrb[0].mxu0 %v5190
      %v5263 = vpop.f32.mrb[0].mxu0
      %v5264 = vadd.f32 %v4688, %v5263
      %v5265 = vpop.f32.mrb[0].mxu0
      %5266 = vdwg.mxu0
      %v5268 = vsel %vm558, %v4570, 0
      %v5271 = vsel %vm558, %v4571, 0
      %5273 = vmatprep.subr.mxu0 0.0
      %5274 = vmatpush1.msra.mxu0 %v4537
      %5275 = vmatprep.subr.mxu0 0.0
      %5276 = vmatpush1.msra.mxu0 %v4542
      %5277 = vmatprep.subr.mxu0 0.0
      %5278 = vmatpush1.msra.mxu0 %v4547
      %5279 = vmatprep.subr.mxu0 0.0
      %5280 = vmatpush1.msra.mxu0 %v4552
      %5281 = vmatprep.subr.mxu0 0.0
      %5282 = vmatpush1.msra.mxu0 0.0
      %5283 = vmatprep.subr.mxu0 0.0
      %5284 = vmatpush1.msra.mxu0 0.0
      %5285 = vmatprep.subr.mxu0 0.0
      %5286 = vmatpush1.msra.mxu0 0.0
      %5287 = vmatprep.subr.mxu0 0.0
      %5288 = vmatpush1.msra.mxu0 0.0
      %5289 = vmatprep.subr.mxu0 0.0
      %5290 = vmatpush1.msra.mxu0 0.0
      %5291 = vmatprep.subr.mxu0 0.0
      %5292 = vmatpush1.msra.mxu0 0.0
      %5293 = vmatprep.subr.mxu0 0.0
      %5294 = vmatpush1.msra.mxu0 0.0
      %5295 = vmatprep.subr.mxu0 0.0
      %5296 = vmatpush1.msra.mxu0 0.0
      %5297 = vmatprep.subr.mxu0 0.0
      %5298 = vmatpush1.msra.mxu0 0.0
      %5299 = vmatprep.subr.mxu0 0.0
      %5300 = vmatpush1.msra.mxu0 0.0
      %5301 = vmatprep.subr.mxu0 0.0
      %5302 = vmatpush1.msra.mxu0 0.0
      %5303 = vmatprep.subr.mxu0 0.0
      %5304 = vmatpush1.msra.mxu0 0.0
      %5305 = vmatprep.subr.mxu0 0.0
      %5306 = vmatpush1.msra.mxu0 0.0
      %5307 = vmatprep.subr.mxu0 0.0
      %5308 = vmatpush1.msra.mxu0 0.0
      %5309 = vmatprep.subr.mxu0 0.0
      %5310 = vmatpush1.msra.mxu0 0.0
      %5311 = vmatprep.subr.mxu0 0.0
      %5312 = vmatpush1.msra.mxu0 0.0
      %5313 = vmatprep.subr.mxu0 0.0
      %5314 = vmatpush1.msra.mxu0 0.0
      %5315 = vmatprep.subr.mxu0 0.0
      %5316 = vmatpush1.msra.mxu0 0.0
      %5317 = vmatprep.subr.mxu0 0.0
      %5318 = vmatpush1.msra.mxu0 0.0
      %5319 = vmatprep.subr.mxu0 0.0
      %5320 = vmatpush1.msra.mxu0 0.0
      %5321 = vmatprep.subr.mxu0 0.0
      %5322 = vmatpush1.msra.mxu0 0.0
      %5323 = vmatprep.subr.mxu0 0.0
      %5324 = vmatpush1.msra.mxu0 0.0
      %5325 = vmatprep.subr.mxu0 0.0
      %5326 = vmatpush1.msra.mxu0 0.0
      %5327 = vmatprep.subr.mxu0 0.0
      %5328 = vmatpush1.msra.mxu0 0.0
      %5329 = vmatprep.subr.mxu0 0.0
      %5330 = vmatpush1.msra.mxu0 0.0
      %5331 = vmatprep.subr.mxu0 0.0
      %5332 = vmatpush1.msra.mxu0 0.0
      %5333 = vmatprep.subr.mxu0 0.0
      %5334 = vmatpush1.msra.mxu0 0.0
      %5335 = vmatprep.subr.mxu0 0.0
      %5336 = vmatpush1.msra.mxu0 0.0
      %5337 = vmatprep.mubr.f32.mxu0 0.0
      %5338 = vmatmul.mubr.f32.gmra.mrb[0].mxu0 %v5268
      %v5339 = vpop.f32.mrb[0].mxu0
      %v5340 = vadd.f32 %v4693, %v5339
      %v5341 = vpop.f32.mrb[0].mxu0
      %5342 = vmatprep.mubr.f32.mxu0 0.0
      %5343 = vmatmul.mubr.f32.gmra.mrb[0].mxu0 %v5271
      %v5344 = vpop.f32.mrb[0].mxu0
      %v5345 = vadd.f32 %v4698, %v5344
      %v5346 = vpop.f32.mrb[0].mxu0
      %5347 = vdwg.mxu0
      %5348 = vxpose.xlu0.b32.start [1/16] %v4773, 128
      %5349 = vxpose.xlu0.b32.cont [2/16] 0.0, 128
      %5350 = vxpose.xlu0.b32.cont [3/16] 0.0, 128
      %5351 = vxpose.xlu0.b32.cont [4/16] 0.0, 128
      %5352 = vxpose.xlu0.b32.cont [5/16] 0.0, 128
      %5353 = vxpose.xlu0.b32.cont [6/16] 0.0, 128
      %5354 = vxpose.xlu0.b32.cont [7/16] 0.0, 128
      %5355 = vxpose.xlu0.b32.cont [8/16] 0.0, 128
      %5356 = vxpose.xlu0.b32.cont [9/16] 0.0, 128
      %5357 = vxpose.xlu0.b32.cont [10/16] 0.0, 128
      %5358 = vxpose.xlu0.b32.cont [11/16] 0.0, 128
      %5359 = vxpose.xlu0.b32.cont [12/16] 0.0, 128
      %5360 = vxpose.xlu0.b32.cont [13/16] 0.0, 128
      %5361 = vxpose.xlu0.b32.cont [14/16] 0.0, 128
      %5362 = vxpose.xlu0.b32.cont [15/16] 0.0, 128
      %5363 = vxpose.xlu0.b32.end [16/16] 0.0, 128
      %v5364 = vpop.trf.xlu0
      %v5365 = vpop.trf.xlu0
      %v5366 = vpop.trf.xlu0
      %v5367 = vpop.trf.xlu0
      %v5368 = vpop.trf.xlu0
      %v5369 = vpop.trf.xlu0
      %v5370 = vpop.trf.xlu0
      %v5371 = vpop.trf.xlu0
      %v5372 = vpop.trf.xlu0
      %v5373 = vpop.trf.xlu0
      %v5374 = vpop.trf.xlu0
      %v5375 = vpop.trf.xlu0
      %v5376 = vpop.trf.xlu0
      %v5377 = vpop.trf.xlu0
      %v5378 = vpop.trf.xlu0
      %v5379 = vpop.trf.xlu0
      %5380 = vxpose.xlu0.b32.start [1/16] %v4854, 128
      %5381 = vxpose.xlu0.b32.cont [2/16] 0.0, 128
      %5382 = vxpose.xlu0.b32.cont [3/16] 0.0, 128
      %5383 = vxpose.xlu0.b32.cont [4/16] 0.0, 128
      %5384 = vxpose.xlu0.b32.cont [5/16] 0.0, 128
      %5385 = vxpose.xlu0.b32.cont [6/16] 0.0, 128
      %5386 = vxpose.xlu0.b32.cont [7/16] 0.0, 128
      %5387 = vxpose.xlu0.b32.cont [8/16] 0.0, 128
      %5388 = vxpose.xlu0.b32.cont [9/16] 0.0, 128
      %5389 = vxpose.xlu0.b32.cont [10/16] 0.0, 128
      %5390 = vxpose.xlu0.b32.cont [11/16] 0.0, 128
      %5391 = vxpose.xlu0.b32.cont [12/16] 0.0, 128
      %5392 = vxpose.xlu0.b32.cont [13/16] 0.0, 128
      %5393 = vxpose.xlu0.b32.cont [14/16] 0.0, 128
      %5394 = vxpose.xlu0.b32.cont [15/16] 0.0, 128
      %5395 = vxpose.xlu0.b32.end [16/16] 0.0, 128
      %v5396 = vpop.trf.xlu0
      %v5397 = vpop.trf.xlu0
      %v5398 = vpop.trf.xlu0
      %v5399 = vpop.trf.xlu0
      %v5400 = vpop.trf.xlu0
      %v5401 = vpop.trf.xlu0
      %v5402 = vpop.trf.xlu0
      %v5403 = vpop.trf.xlu0
      %v5404 = vpop.trf.xlu0
      %v5405 = vpop.trf.xlu0
      %v5406 = vpop.trf.xlu0
      %v5407 = vpop.trf.xlu0
      %v5408 = vpop.trf.xlu0
      %v5409 = vpop.trf.xlu0
      %v5410 = vpop.trf.xlu0
      %v5411 = vpop.trf.xlu0
      %5412 = vxpose.xlu0.b32.start [1/16] %v4935, 128
      %5413 = vxpose.xlu0.b32.cont [2/16] 0.0, 128
      %5414 = vxpose.xlu0.b32.cont [3/16] 0.0, 128
      %5415 = vxpose.xlu0.b32.cont [4/16] 0.0, 128
      %5416 = vxpose.xlu0.b32.cont [5/16] 0.0, 128
      %5417 = vxpose.xlu0.b32.cont [6/16] 0.0, 128
      %5418 = vxpose.xlu0.b32.cont [7/16] 0.0, 128
      %5419 = vxpose.xlu0.b32.cont [8/16] 0.0, 128
      %5420 = vxpose.xlu0.b32.cont [9/16] 0.0, 128
      %5421 = vxpose.xlu0.b32.cont [10/16] 0.0, 128
      %5422 = vxpose.xlu0.b32.cont [11/16] 0.0, 128
      %5423 = vxpose.xlu0.b32.cont [12/16] 0.0, 128
      %5424 = vxpose.xlu0.b32.cont [13/16] 0.0, 128
      %5425 = vxpose.xlu0.b32.cont [14/16] 0.0, 128
      %5426 = vxpose.xlu0.b32.cont [15/16] 0.0, 128
      %5427 = vxpose.xlu0.b32.end [16/16] 0.0, 128
      %v5428 = vpop.trf.xlu0
      %v5429 = vpop.trf.xlu0
      %v5430 = vpop.trf.xlu0
      %v5431 = vpop.trf.xlu0
      %v5432 = vpop.trf.xlu0
      %v5433 = vpop.trf.xlu0
      %v5434 = vpop.trf.xlu0
      %v5435 = vpop.trf.xlu0
      %v5436 = vpop.trf.xlu0
      %v5437 = vpop.trf.xlu0
      %v5438 = vpop.trf.xlu0
      %v5439 = vpop.trf.xlu0
      %v5440 = vpop.trf.xlu0
      %v5441 = vpop.trf.xlu0
      %v5442 = vpop.trf.xlu0
      %v5443 = vpop.trf.xlu0
      %5444 = vxpose.xlu0.b32.start [1/16] %v5016, 128
      %5445 = vxpose.xlu0.b32.cont [2/16] 0.0, 128
      %5446 = vxpose.xlu0.b32.cont [3/16] 0.0, 128
      %5447 = vxpose.xlu0.b32.cont [4/16] 0.0, 128
      %5448 = vxpose.xlu0.b32.cont [5/16] 0.0, 128
      %5449 = vxpose.xlu0.b32.cont [6/16] 0.0, 128
      %5450 = vxpose.xlu0.b32.cont [7/16] 0.0, 128
      %5451 = vxpose.xlu0.b32.cont [8/16] 0.0, 128
      %5452 = vxpose.xlu0.b32.cont [9/16] 0.0, 128
      %5453 = vxpose.xlu0.b32.cont [10/16] 0.0, 128
      %5454 = vxpose.xlu0.b32.cont [11/16] 0.0, 128
      %5455 = vxpose.xlu0.b32.cont [12/16] 0.0, 128
      %5456 = vxpose.xlu0.b32.cont [13/16] 0.0, 128
      %5457 = vxpose.xlu0.b32.cont [14/16] 0.0, 128
      %5458 = vxpose.xlu0.b32.cont [15/16] 0.0, 128
      %5459 = vxpose.xlu0.b32.end [16/16] 0.0, 128
      %v5460 = vpop.trf.xlu0
      %v5461 = vpop.trf.xlu0
      %v5462 = vpop.trf.xlu0
      %v5463 = vpop.trf.xlu0
      %v5464 = vpop.trf.xlu0
      %v5465 = vpop.trf.xlu0
      %v5466 = vpop.trf.xlu0
      %v5467 = vpop.trf.xlu0
      %v5468 = vpop.trf.xlu0
      %v5469 = vpop.trf.xlu0
      %v5470 = vpop.trf.xlu0
      %v5471 = vpop.trf.xlu0
      %v5472 = vpop.trf.xlu0
      %v5473 = vpop.trf.xlu0
      %v5474 = vpop.trf.xlu0
      %v5475 = vpop.trf.xlu0
      %5476 = vxpose.xlu0.b32.start [1/16] %v5097, 128
      %5477 = vxpose.xlu0.b32.cont [2/16] 0.0, 128
      %5478 = vxpose.xlu0.b32.cont [3/16] 0.0, 128
      %5479 = vxpose.xlu0.b32.cont [4/16] 0.0, 128
      %5480 = vxpose.xlu0.b32.cont [5/16] 0.0, 128
      %5481 = vxpose.xlu0.b32.cont [6/16] 0.0, 128
      %5482 = vxpose.xlu0.b32.cont [7/16] 0.0, 128
      %5483 = vxpose.xlu0.b32.cont [8/16] 0.0, 128
      %5484 = vxpose.xlu0.b32.cont [9/16] 0.0, 128
      %5485 = vxpose.xlu0.b32.cont [10/16] 0.0, 128
      %5486 = vxpose.xlu0.b32.cont [11/16] 0.0, 128
      %5487 = vxpose.xlu0.b32.cont [12/16] 0.0, 128
      %5488 = vxpose.xlu0.b32.cont [13/16] 0.0, 128
      %5489 = vxpose.xlu0.b32.cont [14/16] 0.0, 128
      %5490 = vxpose.xlu0.b32.cont [15/16] 0.0, 128
      %5491 = vxpose.xlu0.b32.end [16/16] 0.0, 128
      %v5492 = vpop.trf.xlu0
      %v5493 = vpop.trf.xlu0
      %v5494 = vpop.trf.xlu0
      %v5495 = vpop.trf.xlu0
      %v5496 = vpop.trf.xlu0
      %v5497 = vpop.trf.xlu0
      %v5498 = vpop.trf.xlu0
      %v5499 = vpop.trf.xlu0
      %v5500 = vpop.trf.xlu0
      %v5501 = vpop.trf.xlu0
      %v5502 = vpop.trf.xlu0
      %v5503 = vpop.trf.xlu0
      %v5504 = vpop.trf.xlu0
      %v5505 = vpop.trf.xlu0
      %v5506 = vpop.trf.xlu0
      %v5507 = vpop.trf.xlu0
      %5508 = vxpose.xlu0.b32.start [1/16] %v5178, 128
      %5509 = vxpose.xlu0.b32.cont [2/16] 0.0, 128
      %5510 = vxpose.xlu0.b32.cont [3/16] 0.0, 128
      %5511 = vxpose.xlu0.b32.cont [4/16] 0.0, 128
      %5512 = vxpose.xlu0.b32.cont [5/16] 0.0, 128
      %5513 = vxpose.xlu0.b32.cont [6/16] 0.0, 128
      %5514 = vxpose.xlu0.b32.cont [7/16] 0.0, 128
      %5515 = vxpose.xlu0.b32.cont [8/16] 0.0, 128
      %5516 = vxpose.xlu0.b32.cont [9/16] 0.0, 128
      %5517 = vxpose.xlu0.b32.cont [10/16] 0.0, 128
      %5518 = vxpose.xlu0.b32.cont [11/16] 0.0, 128
      %5519 = vxpose.xlu0.b32.cont [12/16] 0.0, 128
      %5520 = vxpose.xlu0.b32.cont [13/16] 0.0, 128
      %5521 = vxpose.xlu0.b32.cont [14/16] 0.0, 128
      %5522 = vxpose.xlu0.b32.cont [15/16] 0.0, 128
      %5523 = vxpose.xlu0.b32.end [16/16] 0.0, 128
      %v5524 = vpop.trf.xlu0
      %v5525 = vpop.trf.xlu0
      %v5526 = vpop.trf.xlu0
      %v5527 = vpop.trf.xlu0
      %v5528 = vpop.trf.xlu0
      %v5529 = vpop.trf.xlu0
      %v5530 = vpop.trf.xlu0
      %v5531 = vpop.trf.xlu0
      %v5532 = vpop.trf.xlu0
      %v5533 = vpop.trf.xlu0
      %v5534 = vpop.trf.xlu0
      %v5535 = vpop.trf.xlu0
      %v5536 = vpop.trf.xlu0
      %v5537 = vpop.trf.xlu0
      %v5538 = vpop.trf.xlu0
      %v5539 = vpop.trf.xlu0
      %5540 = vxpose.xlu0.b32.start [1/16] %v5259, 128
      %5541 = vxpose.xlu0.b32.cont [2/16] 0.0, 128
      %5542 = vxpose.xlu0.b32.cont [3/16] 0.0, 128
      %5543 = vxpose.xlu0.b32.cont [4/16] 0.0, 128
      %5544 = vxpose.xlu0.b32.cont [5/16] 0.0, 128
      %5545 = vxpose.xlu0.b32.cont [6/16] 0.0, 128
      %5546 = vxpose.xlu0.b32.cont [7/16] 0.0, 128
      %5547 = vxpose.xlu0.b32.cont [8/16] 0.0, 128
      %5548 = vxpose.xlu0.b32.cont [9/16] 0.0, 128
      %5549 = vxpose.xlu0.b32.cont [10/16] 0.0, 128
      %5550 = vxpose.xlu0.b32.cont [11/16] 0.0, 128
      %5551 = vxpose.xlu0.b32.cont [12/16] 0.0, 128
      %5552 = vxpose.xlu0.b32.cont [13/16] 0.0, 128
      %5553 = vxpose.xlu0.b32.cont [14/16] 0.0, 128
      %5554 = vxpose.xlu0.b32.cont [15/16] 0.0, 128
      %5555 = vxpose.xlu0.b32.end [16/16] 0.0, 128
      %v5556 = vpop.trf.xlu0
      %v5557 = vpop.trf.xlu0
      %v5558 = vpop.trf.xlu0
      %v5559 = vpop.trf.xlu0
      %v5560 = vpop.trf.xlu0
      %v5561 = vpop.trf.xlu0
      %v5562 = vpop.trf.xlu0
      %v5563 = vpop.trf.xlu0
      %v5564 = vpop.trf.xlu0
      %v5565 = vpop.trf.xlu0
      %v5566 = vpop.trf.xlu0
      %v5567 = vpop.trf.xlu0
      %v5568 = vpop.trf.xlu0
      %v5569 = vpop.trf.xlu0
      %v5570 = vpop.trf.xlu0
      %v5571 = vpop.trf.xlu0
      %5572 = vxpose.xlu0.b32.start [1/16] %v5340, 128
      %5573 = vxpose.xlu0.b32.cont [2/16] 0.0, 128
      %5574 = vxpose.xlu0.b32.cont [3/16] 0.0, 128
      %5575 = vxpose.xlu0.b32.cont [4/16] 0.0, 128
      %5576 = vxpose.xlu0.b32.cont [5/16] 0.0, 128
      %5577 = vxpose.xlu0.b32.cont [6/16] 0.0, 128
      %5578 = vxpose.xlu0.b32.cont [7/16] 0.0, 128
      %5579 = vxpose.xlu0.b32.cont [8/16] 0.0, 128
      %5580 = vxpose.xlu0.b32.cont [9/16] 0.0, 128
      %5581 = vxpose.xlu0.b32.cont [10/16] 0.0, 128
      %5582 = vxpose.xlu0.b32.cont [11/16] 0.0, 128
      %5583 = vxpose.xlu0.b32.cont [12/16] 0.0, 128
      %5584 = vxpose.xlu0.b32.cont [13/16] 0.0, 128
      %5585 = vxpose.xlu0.b32.cont [14/16] 0.0, 128
      %5586 = vxpose.xlu0.b32.cont [15/16] 0.0, 128
      %5587 = vxpose.xlu0.b32.end [16/16] 0.0, 128
      %v5588 = vpop.trf.xlu0
      %v5589 = vpop.trf.xlu0
      %v5590 = vpop.trf.xlu0
      %v5591 = vpop.trf.xlu0
      %v5592 = vpop.trf.xlu0
      %v5593 = vpop.trf.xlu0
      %v5594 = vpop.trf.xlu0
      %v5595 = vpop.trf.xlu0
      %v5596 = vpop.trf.xlu0
      %v5597 = vpop.trf.xlu0
      %v5598 = vpop.trf.xlu0
      %v5599 = vpop.trf.xlu0
      %v5600 = vpop.trf.xlu0
      %v5601 = vpop.trf.xlu0
      %v5602 = vpop.trf.xlu0
      %v5603 = vpop.trf.xlu0
      %v5605 = vrot.slane %v4773, 4
      %v5607 = vsel %vm1951, %v5364, 0
      %v5609 = vsel %vm1958, %v5605, 0
      %5611 = vmatprep.subr.mxu0 0.0
      %5612 = vmatpush1.msra.mxu0 %v5609
      %5613 = vmatprep.subr.mxu0 0.0
      %5614 = vmatpush1.msra.mxu0 0.0
      %5615 = vmatprep.subr.mxu0 0.0
      %5616 = vmatpush1.msra.mxu0 0.0
      %5617 = vmatprep.subr.mxu0 0.0
      %5618 = vmatpush1.msra.mxu0 0.0
      %5619 = vmatprep.subr.mxu0 0.0
      %5620 = vmatpush1.msra.mxu0 0.0
      %5621 = vmatprep.subr.mxu0 0.0
      %5622 = vmatpush1.msra.mxu0 0.0
      %5623 = vmatprep.subr.mxu0 0.0
      %5624 = vmatpush1.msra.mxu0 0.0
      %5625 = vmatprep.subr.mxu0 0.0
      %5626 = vmatpush1.msra.mxu0 0.0
      %5627 = vmatprep.subr.mxu0 0.0
      %5628 = vmatpush1.msra.mxu0 0.0
      %5629 = vmatprep.subr.mxu0 0.0
      %5630 = vmatpush1.msra.mxu0 0.0
      %5631 = vmatprep.subr.mxu0 0.0
      %5632 = vmatpush1.msra.mxu0 0.0
      %5633 = vmatprep.subr.mxu0 0.0
      %5634 = vmatpush1.msra.mxu0 0.0
      %5635 = vmatprep.subr.mxu0 0.0
      %5636 = vmatpush1.msra.mxu0 0.0
      %5637 = vmatprep.subr.mxu0 0.0
      %5638 = vmatpush1.msra.mxu0 0.0
      %5639 = vmatprep.subr.mxu0 0.0
      %5640 = vmatpush1.msra.mxu0 0.0
      %5641 = vmatprep.subr.mxu0 0.0
      %5642 = vmatpush1.msra.mxu0 0.0
      %5643 = vmatprep.subr.mxu0 0.0
      %5644 = vmatpush1.msra.mxu0 0.0
      %5645 = vmatprep.subr.mxu0 0.0
      %5646 = vmatpush1.msra.mxu0 0.0
      %5647 = vmatprep.subr.mxu0 0.0
      %5648 = vmatpush1.msra.mxu0 0.0
      %5649 = vmatprep.subr.mxu0 0.0
      %5650 = vmatpush1.msra.mxu0 0.0
      %5651 = vmatprep.subr.mxu0 0.0
      %5652 = vmatpush1.msra.mxu0 0.0
      %5653 = vmatprep.subr.mxu0 0.0
      %5654 = vmatpush1.msra.mxu0 0.0
      %5655 = vmatprep.subr.mxu0 0.0
      %5656 = vmatpush1.msra.mxu0 0.0
      %5657 = vmatprep.subr.mxu0 0.0
      %5658 = vmatpush1.msra.mxu0 0.0
      %5659 = vmatprep.subr.mxu0 0.0
      %5660 = vmatpush1.msra.mxu0 0.0
      %5661 = vmatprep.subr.mxu0 0.0
      %5662 = vmatpush1.msra.mxu0 0.0
      %5663 = vmatprep.subr.mxu0 0.0
      %5664 = vmatpush1.msra.mxu0 0.0
      %5665 = vmatprep.subr.mxu0 0.0
      %5666 = vmatpush1.msra.mxu0 0.0
      %5667 = vmatprep.subr.mxu0 0.0
      %5668 = vmatpush1.msra.mxu0 0.0
      %5669 = vmatprep.subr.mxu0 0.0
      %5670 = vmatpush1.msra.mxu0 0.0
      %5671 = vmatprep.subr.mxu0 0.0
      %5672 = vmatpush1.msra.mxu0 0.0
      %5673 = vmatprep.subr.mxu0 0.0
      %5674 = vmatpush1.msra.mxu0 0.0
      %5675 = vmatprep.mubr.f32.mxu0 0.0
      %5676 = vmatmul.mubr.f32.gmra.mrb[0].mxu0 %v5607
      %v5677 = vpop.f32.mrb[0].mxu0
      %v5678 = vadd.f32 0.0, %v5677
      %v5679 = vpop.f32.mrb[0].mxu0
      %5680 = vdwg.mxu0
      %v5682 = vrot.slane %v4854, 4
      %v5684 = vsel %vm1951, %v5396, 0
      %v5686 = vsel %vm1958, %v5682, 0
      %5688 = vmatprep.subr.mxu0 0.0
      %5689 = vmatpush1.msra.mxu0 %v5686
      %5690 = vmatprep.subr.mxu0 0.0
      %5691 = vmatpush1.msra.mxu0 0.0
      %5692 = vmatprep.subr.mxu0 0.0
      %5693 = vmatpush1.msra.mxu0 0.0
      %5694 = vmatprep.subr.mxu0 0.0
      %5695 = vmatpush1.msra.mxu0 0.0
      %5696 = vmatprep.subr.mxu0 0.0
      %5697 = vmatpush1.msra.mxu0 0.0
      %5698 = vmatprep.subr.mxu0 0.0
      %5699 = vmatpush1.msra.mxu0 0.0
      %5700 = vmatprep.subr.mxu0 0.0
      %5701 = vmatpush1.msra.mxu0 0.0
      %5702 = vmatprep.subr.mxu0 0.0
      %5703 = vmatpush1.msra.mxu0 0.0
      %5704 = vmatprep.subr.mxu0 0.0
      %5705 = vmatpush1.msra.mxu0 0.0
      %5706 = vmatprep.subr.mxu0 0.0
      %5707 = vmatpush1.msra.mxu0 0.0
      %5708 = vmatprep.subr.mxu0 0.0
      %5709 = vmatpush1.msra.mxu0 0.0
      %5710 = vmatprep.subr.mxu0 0.0
      %5711 = vmatpush1.msra.mxu0 0.0
      %5712 = vmatprep.subr.mxu0 0.0
      %5713 = vmatpush1.msra.mxu0 0.0
      %5714 = vmatprep.subr.mxu0 0.0
      %5715 = vmatpush1.msra.mxu0 0.0
      %5716 = vmatprep.subr.mxu0 0.0
      %5717 = vmatpush1.msra.mxu0 0.0
      %5718 = vmatprep.subr.mxu0 0.0
      %5719 = vmatpush1.msra.mxu0 0.0
      %5720 = vmatprep.subr.mxu0 0.0
      %5721 = vmatpush1.msra.mxu0 0.0
      %5722 = vmatprep.subr.mxu0 0.0
      %5723 = vmatpush1.msra.mxu0 0.0
      %5724 = vmatprep.subr.mxu0 0.0
      %5725 = vmatpush1.msra.mxu0 0.0
      %5726 = vmatprep.subr.mxu0 0.0
      %5727 = vmatpush1.msra.mxu0 0.0
      %5728 = vmatprep.subr.mxu0 0.0
      %5729 = vmatpush1.msra.mxu0 0.0
      %5730 = vmatprep.subr.mxu0 0.0
      %5731 = vmatpush1.msra.mxu0 0.0
      %5732 = vmatprep.subr.mxu0 0.0
      %5733 = vmatpush1.msra.mxu0 0.0
      %5734 = vmatprep.subr.mxu0 0.0
      %5735 = vmatpush1.msra.mxu0 0.0
      %5736 = vmatprep.subr.mxu0 0.0
      %5737 = vmatpush1.msra.mxu0 0.0
      %5738 = vmatprep.subr.mxu0 0.0
      %5739 = vmatpush1.msra.mxu0 0.0
      %5740 = vmatprep.subr.mxu0 0.0
      %5741 = vmatpush1.msra.mxu0 0.0
      %5742 = vmatprep.subr.mxu0 0.0
      %5743 = vmatpush1.msra.mxu0 0.0
      %5744 = vmatprep.subr.mxu0 0.0
      %5745 = vmatpush1.msra.mxu0 0.0
      %5746 = vmatprep.subr.mxu0 0.0
      %5747 = vmatpush1.msra.mxu0 0.0
      %5748 = vmatprep.subr.mxu0 0.0
      %5749 = vmatpush1.msra.mxu0 0.0
      %5750 = vmatprep.subr.mxu0 0.0
      %5751 = vmatpush1.msra.mxu0 0.0
      %5752 = vmatprep.mubr.f32.mxu0 0.0
      %5753 = vmatmul.mubr.f32.gmra.mrb[0].mxu0 %v5684
      %v5754 = vpop.f32.mrb[0].mxu0
      %v5755 = vadd.f32 0.0, %v5754
      %v5756 = vpop.f32.mrb[0].mxu0
      %5757 = vdwg.mxu0
      %v5759 = vrot.slane %v4935, 4
      %v5761 = vsel %vm1951, %v5428, 0
      %v5763 = vsel %vm1958, %v5759, 0
      %5765 = vmatprep.subr.mxu0 0.0
      %5766 = vmatpush1.msra.mxu0 %v5763
      %5767 = vmatprep.subr.mxu0 0.0
      %5768 = vmatpush1.msra.mxu0 0.0
      %5769 = vmatprep.subr.mxu0 0.0
      %5770 = vmatpush1.msra.mxu0 0.0
      %5771 = vmatprep.subr.mxu0 0.0
      %5772 = vmatpush1.msra.mxu0 0.0
      %5773 = vmatprep.subr.mxu0 0.0
      %5774 = vmatpush1.msra.mxu0 0.0
      %5775 = vmatprep.subr.mxu0 0.0
      %5776 = vmatpush1.msra.mxu0 0.0
      %5777 = vmatprep.subr.mxu0 0.0
      %5778 = vmatpush1.msra.mxu0 0.0
      %5779 = vmatprep.subr.mxu0 0.0
      %5780 = vmatpush1.msra.mxu0 0.0
      %5781 = vmatprep.subr.mxu0 0.0
      %5782 = vmatpush1.msra.mxu0 0.0
      %5783 = vmatprep.subr.mxu0 0.0
      %5784 = vmatpush1.msra.mxu0 0.0
      %5785 = vmatprep.subr.mxu0 0.0
      %5786 = vmatpush1.msra.mxu0 0.0
      %5787 = vmatprep.subr.mxu0 0.0
      %5788 = vmatpush1.msra.mxu0 0.0
      %5789 = vmatprep.subr.mxu0 0.0
      %5790 = vmatpush1.msra.mxu0 0.0
      %5791 = vmatprep.subr.mxu0 0.0
      %5792 = vmatpush1.msra.mxu0 0.0
      %5793 = vmatprep.subr.mxu0 0.0
      %5794 = vmatpush1.msra.mxu0 0.0
      %5795 = vmatprep.subr.mxu0 0.0
      %5796 = vmatpush1.msra.mxu0 0.0
      %5797 = vmatprep.subr.mxu0 0.0
      %5798 = vmatpush1.msra.mxu0 0.0
      %5799 = vmatprep.subr.mxu0 0.0
      %5800 = vmatpush1.msra.mxu0 0.0
      %5801 = vmatprep.subr.mxu0 0.0
      %5802 = vmatpush1.msra.mxu0 0.0
      %5803 = vmatprep.subr.mxu0 0.0
      %5804 = vmatpush1.msra.mxu0 0.0
      %5805 = vmatprep.subr.mxu0 0.0
      %5806 = vmatpush1.msra.mxu0 0.0
      %5807 = vmatprep.subr.mxu0 0.0
      %5808 = vmatpush1.msra.mxu0 0.0
      %5809 = vmatprep.subr.mxu0 0.0
      %5810 = vmatpush1.msra.mxu0 0.0
      %5811 = vmatprep.subr.mxu0 0.0
      %5812 = vmatpush1.msra.mxu0 0.0
      %5813 = vmatprep.subr.mxu0 0.0
      %5814 = vmatpush1.msra.mxu0 0.0
      %5815 = vmatprep.subr.mxu0 0.0
      %5816 = vmatpush1.msra.mxu0 0.0
      %5817 = vmatprep.subr.mxu0 0.0
      %5818 = vmatpush1.msra.mxu0 0.0
      %5819 = vmatprep.subr.mxu0 0.0
      %5820 = vmatpush1.msra.mxu0 0.0
      %5821 = vmatprep.subr.mxu0 0.0
      %5822 = vmatpush1.msra.mxu0 0.0
      %5823 = vmatprep.subr.mxu0 0.0
      %5824 = vmatpush1.msra.mxu0 0.0
      %5825 = vmatprep.subr.mxu0 0.0
      %5826 = vmatpush1.msra.mxu0 0.0
      %5827 = vmatprep.subr.mxu0 0.0
      %5828 = vmatpush1.msra.mxu0 0.0
      %5829 = vmatprep.mubr.f32.mxu0 0.0
      %5830 = vmatmul.mubr.f32.gmra.mrb[0].mxu0 %v5761
      %v5831 = vpop.f32.mrb[0].mxu0
      %v5832 = vadd.f32 0.0, %v5831
      %v5833 = vpop.f32.mrb[0].mxu0
      %5834 = vdwg.mxu0
      %v5836 = vrot.slane %v5016, 4
      %v5838 = vsel %vm1951, %v5460, 0
      %v5840 = vsel %vm1958, %v5836, 0
      %5842 = vmatprep.subr.mxu0 0.0
      %5843 = vmatpush1.msra.mxu0 %v5840
      %5844 = vmatprep.subr.mxu0 0.0
      %5845 = vmatpush1.msra.mxu0 0.0
      %5846 = vmatprep.subr.mxu0 0.0
      %5847 = vmatpush1.msra.mxu0 0.0
      %5848 = vmatprep.subr.mxu0 0.0
      %5849 = vmatpush1.msra.mxu0 0.0
      %5850 = vmatprep.subr.mxu0 0.0
      %5851 = vmatpush1.msra.mxu0 0.0
      %5852 = vmatprep.subr.mxu0 0.0
      %5853 = vmatpush1.msra.mxu0 0.0
      %5854 = vmatprep.subr.mxu0 0.0
      %5855 = vmatpush1.msra.mxu0 0.0
      %5856 = vmatprep.subr.mxu0 0.0
      %5857 = vmatpush1.msra.mxu0 0.0
      %5858 = vmatprep.subr.mxu0 0.0
      %5859 = vmatpush1.msra.mxu0 0.0
      %5860 = vmatprep.subr.mxu0 0.0
      %5861 = vmatpush1.msra.mxu0 0.0
      %5862 = vmatprep.subr.mxu0 0.0
      %5863 = vmatpush1.msra.mxu0 0.0
      %5864 = vmatprep.subr.mxu0 0.0
      %5865 = vmatpush1.msra.mxu0 0.0
      %5866 = vmatprep.subr.mxu0 0.0
      %5867 = vmatpush1.msra.mxu0 0.0
      %5868 = vmatprep.subr.mxu0 0.0
      %5869 = vmatpush1.msra.mxu0 0.0
      %5870 = vmatprep.subr.mxu0 0.0
      %5871 = vmatpush1.msra.mxu0 0.0
      %5872 = vmatprep.subr.mxu0 0.0
      %5873 = vmatpush1.msra.mxu0 0.0
      %5874 = vmatprep.subr.mxu0 0.0
      %5875 = vmatpush1.msra.mxu0 0.0
      %5876 = vmatprep.subr.mxu0 0.0
      %5877 = vmatpush1.msra.mxu0 0.0
      %5878 = vmatprep.subr.mxu0 0.0
      %5879 = vmatpush1.msra.mxu0 0.0
      %5880 = vmatprep.subr.mxu0 0.0
      %5881 = vmatpush1.msra.mxu0 0.0
      %5882 = vmatprep.subr.mxu0 0.0
      %5883 = vmatpush1.msra.mxu0 0.0
      %5884 = vmatprep.subr.mxu0 0.0
      %5885 = vmatpush1.msra.mxu0 0.0
      %5886 = vmatprep.subr.mxu0 0.0
      %5887 = vmatpush1.msra.mxu0 0.0
      %5888 = vmatprep.subr.mxu0 0.0
      %5889 = vmatpush1.msra.mxu0 0.0
      %5890 = vmatprep.subr.mxu0 0.0
      %5891 = vmatpush1.msra.mxu0 0.0
      %5892 = vmatprep.subr.mxu0 0.0
      %5893 = vmatpush1.msra.mxu0 0.0
      %5894 = vmatprep.subr.mxu0 0.0
      %5895 = vmatpush1.msra.mxu0 0.0
      %5896 = vmatprep.subr.mxu0 0.0
      %5897 = vmatpush1.msra.mxu0 0.0
      %5898 = vmatprep.subr.mxu0 0.0
      %5899 = vmatpush1.msra.mxu0 0.0
      %5900 = vmatprep.subr.mxu0 0.0
      %5901 = vmatpush1.msra.mxu0 0.0
      %5902 = vmatprep.subr.mxu0 0.0
      %5903 = vmatpush1.msra.mxu0 0.0
      %5904 = vmatprep.subr.mxu0 0.0
      %5905 = vmatpush1.msra.mxu0 0.0
      %5906 = vmatprep.mubr.f32.mxu0 0.0
      %5907 = vmatmul.mubr.f32.gmra.mrb[0].mxu0 %v5838
      %v5908 = vpop.f32.mrb[0].mxu0
      %v5909 = vadd.f32 0.0, %v5908
      %v5910 = vpop.f32.mrb[0].mxu0
      %5911 = vdwg.mxu0
      %v5913 = vrot.slane %v5097, 4
      %v5915 = vsel %vm1951, %v5492, 0
      %v5917 = vsel %vm1958, %v5913, 0
      %5919 = vmatprep.subr.mxu0 0.0
      %5920 = vmatpush1.msra.mxu0 %v5917
      %5921 = vmatprep.subr.mxu0 0.0
      %5922 = vmatpush1.msra.mxu0 0.0
      %5923 = vmatprep.subr.mxu0 0.0
      %5924 = vmatpush1.msra.mxu0 0.0
      %5925 = vmatprep.subr.mxu0 0.0
      %5926 = vmatpush1.msra.mxu0 0.0
      %5927 = vmatprep.subr.mxu0 0.0
      %5928 = vmatpush1.msra.mxu0 0.0
      %5929 = vmatprep.subr.mxu0 0.0
      %5930 = vmatpush1.msra.mxu0 0.0
      %5931 = vmatprep.subr.mxu0 0.0
      %5932 = vmatpush1.msra.mxu0 0.0
      %5933 = vmatprep.subr.mxu0 0.0
      %5934 = vmatpush1.msra.mxu0 0.0
      %5935 = vmatprep.subr.mxu0 0.0
      %5936 = vmatpush1.msra.mxu0 0.0
      %5937 = vmatprep.subr.mxu0 0.0
      %5938 = vmatpush1.msra.mxu0 0.0
      %5939 = vmatprep.subr.mxu0 0.0
      %5940 = vmatpush1.msra.mxu0 0.0
      %5941 = vmatprep.subr.mxu0 0.0
      %5942 = vmatpush1.msra.mxu0 0.0
      %5943 = vmatprep.subr.mxu0 0.0
      %5944 = vmatpush1.msra.mxu0 0.0
      %5945 = vmatprep.subr.mxu0 0.0
      %5946 = vmatpush1.msra.mxu0 0.0
      %5947 = vmatprep.subr.mxu0 0.0
      %5948 = vmatpush1.msra.mxu0 0.0
      %5949 = vmatprep.subr.mxu0 0.0
      %5950 = vmatpush1.msra.mxu0 0.0
      %5951 = vmatprep.subr.mxu0 0.0
      %5952 = vmatpush1.msra.mxu0 0.0
      %5953 = vmatprep.subr.mxu0 0.0
      %5954 = vmatpush1.msra.mxu0 0.0
      %5955 = vmatprep.subr.mxu0 0.0
      %5956 = vmatpush1.msra.mxu0 0.0
      %5957 = vmatprep.subr.mxu0 0.0
      %5958 = vmatpush1.msra.mxu0 0.0
      %5959 = vmatprep.subr.mxu0 0.0
      %5960 = vmatpush1.msra.mxu0 0.0
      %5961 = vmatprep.subr.mxu0 0.0
      %5962 = vmatpush1.msra.mxu0 0.0
      %5963 = vmatprep.subr.mxu0 0.0
      %5964 = vmatpush1.msra.mxu0 0.0
      %5965 = vmatprep.subr.mxu0 0.0
      %5966 = vmatpush1.msra.mxu0 0.0
      %5967 = vmatprep.subr.mxu0 0.0
      %5968 = vmatpush1.msra.mxu0 0.0
      %5969 = vmatprep.subr.mxu0 0.0
      %5970 = vmatpush1.msra.mxu0 0.0
      %5971 = vmatprep.subr.mxu0 0.0
      %5972 = vmatpush1.msra.mxu0 0.0
      %5973 = vmatprep.subr.mxu0 0.0
      %5974 = vmatpush1.msra.mxu0 0.0
      %5975 = vmatprep.subr.mxu0 0.0
      %5976 = vmatpush1.msra.mxu0 0.0
      %5977 = vmatprep.subr.mxu0 0.0
      %5978 = vmatpush1.msra.mxu0 0.0
      %5979 = vmatprep.subr.mxu0 0.0
      %5980 = vmatpush1.msra.mxu0 0.0
      %5981 = vmatprep.subr.mxu0 0.0
      %5982 = vmatpush1.msra.mxu0 0.0
      %5983 = vmatprep.mubr.f32.mxu0 0.0
      %5984 = vmatmul.mubr.f32.gmra.mrb[0].mxu0 %v5915
      %v5985 = vpop.f32.mrb[0].mxu0
      %v5986 = vadd.f32 0.0, %v5985
      %v5987 = vpop.f32.mrb[0].mxu0
      %5988 = vdwg.mxu0
      %v5990 = vrot.slane %v5178, 4
      %v5992 = vsel %vm1951, %v5524, 0
      %v5994 = vsel %vm1958, %v5990, 0
      %5996 = vmatprep.subr.mxu0 0.0
      %5997 = vmatpush1.msra.mxu0 %v5994
      %5998 = vmatprep.subr.mxu0 0.0
      %5999 = vmatpush1.msra.mxu0 0.0
      %6000 = vmatprep.subr.mxu0 0.0
      %6001 = vmatpush1.msra.mxu0 0.0
      %6002 = vmatprep.subr.mxu0 0.0
      %6003 = vmatpush1.msra.mxu0 0.0
      %6004 = vmatprep.subr.mxu0 0.0
      %6005 = vmatpush1.msra.mxu0 0.0
      %6006 = vmatprep.subr.mxu0 0.0
      %6007 = vmatpush1.msra.mxu0 0.0
      %6008 = vmatprep.subr.mxu0 0.0
      %6009 = vmatpush1.msra.mxu0 0.0
      %6010 = vmatprep.subr.mxu0 0.0
      %6011 = vmatpush1.msra.mxu0 0.0
      %6012 = vmatprep.subr.mxu0 0.0
      %6013 = vmatpush1.msra.mxu0 0.0
      %6014 = vmatprep.subr.mxu0 0.0
      %6015 = vmatpush1.msra.mxu0 0.0
      %6016 = vmatprep.subr.mxu0 0.0
      %6017 = vmatpush1.msra.mxu0 0.0
      %6018 = vmatprep.subr.mxu0 0.0
      %6019 = vmatpush1.msra.mxu0 0.0
      %6020 = vmatprep.subr.mxu0 0.0
      %6021 = vmatpush1.msra.mxu0 0.0
      %6022 = vmatprep.subr.mxu0 0.0
      %6023 = vmatpush1.msra.mxu0 0.0
      %6024 = vmatprep.subr.mxu0 0.0
      %6025 = vmatpush1.msra.mxu0 0.0
      %6026 = vmatprep.subr.mxu0 0.0
      %6027 = vmatpush1.msra.mxu0 0.0
      %6028 = vmatprep.subr.mxu0 0.0
      %6029 = vmatpush1.msra.mxu0 0.0
      %6030 = vmatprep.subr.mxu0 0.0
      %6031 = vmatpush1.msra.mxu0 0.0
      %6032 = vmatprep.subr.mxu0 0.0
      %6033 = vmatpush1.msra.mxu0 0.0
      %6034 = vmatprep.subr.mxu0 0.0
      %6035 = vmatpush1.msra.mxu0 0.0
      %6036 = vmatprep.subr.mxu0 0.0
      %6037 = vmatpush1.msra.mxu0 0.0
      %6038 = vmatprep.subr.mxu0 0.0
      %6039 = vmatpush1.msra.mxu0 0.0
      %6040 = vmatprep.subr.mxu0 0.0
      %6041 = vmatpush1.msra.mxu0 0.0
      %6042 = vmatprep.subr.mxu0 0.0
      %6043 = vmatpush1.msra.mxu0 0.0
      %6044 = vmatprep.subr.mxu0 0.0
      %6045 = vmatpush1.msra.mxu0 0.0
      %6046 = vmatprep.subr.mxu0 0.0
      %6047 = vmatpush1.msra.mxu0 0.0
      %6048 = vmatprep.subr.mxu0 0.0
      %6049 = vmatpush1.msra.mxu0 0.0
      %6050 = vmatprep.subr.mxu0 0.0
      %6051 = vmatpush1.msra.mxu0 0.0
      %6052 = vmatprep.subr.mxu0 0.0
      %6053 = vmatpush1.msra.mxu0 0.0
      %6054 = vmatprep.subr.mxu0 0.0
      %6055 = vmatpush1.msra.mxu0 0.0
      %6056 = vmatprep.subr.mxu0 0.0
      %6057 = vmatpush1.msra.mxu0 0.0
      %6058 = vmatprep.subr.mxu0 0.0
      %6059 = vmatpush1.msra.mxu0 0.0
      %6060 = vmatprep.mubr.f32.mxu0 0.0
      %6061 = vmatmul.mubr.f32.gmra.mrb[0].mxu0 %v5992
      %v6062 = vpop.f32.mrb[0].mxu0
      %v6063 = vadd.f32 0.0, %v6062
      %v6064 = vpop.f32.mrb[0].mxu0
      %6065 = vdwg.mxu0
      %v6067 = vrot.slane %v5259, 4
      %v6069 = vsel %vm1951, %v5556, 0
      %v6071 = vsel %vm1958, %v6067, 0
      %6073 = vmatprep.subr.mxu0 0.0
      %6074 = vmatpush1.msra.mxu0 %v6071
      %6075 = vmatprep.subr.mxu0 0.0
      %6076 = vmatpush1.msra.mxu0 0.0
      %6077 = vmatprep.subr.mxu0 0.0
      %6078 = vmatpush1.msra.mxu0 0.0
      %6079 = vmatprep.subr.mxu0 0.0
      %6080 = vmatpush1.msra.mxu0 0.0
      %6081 = vmatprep.subr.mxu0 0.0
      %6082 = vmatpush1.msra.mxu0 0.0
      %6083 = vmatprep.subr.mxu0 0.0
      %6084 = vmatpush1.msra.mxu0 0.0
      %6085 = vmatprep.subr.mxu0 0.0
      %6086 = vmatpush1.msra.mxu0 0.0
      %6087 = vmatprep.subr.mxu0 0.0
      %6088 = vmatpush1.msra.mxu0 0.0
      %6089 = vmatprep.subr.mxu0 0.0
      %6090 = vmatpush1.msra.mxu0 0.0
      %6091 = vmatprep.subr.mxu0 0.0
      %6092 = vmatpush1.msra.mxu0 0.0
      %6093 = vmatprep.subr.mxu0 0.0
      %6094 = vmatpush1.msra.mxu0 0.0
      %6095 = vmatprep.subr.mxu0 0.0
      %6096 = vmatpush1.msra.mxu0 0.0
      %6097 = vmatprep.subr.mxu0 0.0
      %6098 = vmatpush1.msra.mxu0 0.0
      %6099 = vmatprep.subr.mxu0 0.0
      %6100 = vmatpush1.msra.mxu0 0.0
      %6101 = vmatprep.subr.mxu0 0.0
      %6102 = vmatpush1.msra.mxu0 0.0
      %6103 = vmatprep.subr.mxu0 0.0
      %6104 = vmatpush1.msra.mxu0 0.0
      %6105 = vmatprep.subr.mxu0 0.0
      %6106 = vmatpush1.msra.mxu0 0.0
      %6107 = vmatprep.subr.mxu0 0.0
      %6108 = vmatpush1.msra.mxu0 0.0
      %6109 = vmatprep.subr.mxu0 0.0
      %6110 = vmatpush1.msra.mxu0 0.0
      %6111 = vmatprep.subr.mxu0 0.0
      %6112 = vmatpush1.msra.mxu0 0.0
      %6113 = vmatprep.subr.mxu0 0.0
      %6114 = vmatpush1.msra.mxu0 0.0
      %6115 = vmatprep.subr.mxu0 0.0
      %6116 = vmatpush1.msra.mxu0 0.0
      %6117 = vmatprep.subr.mxu0 0.0
      %6118 = vmatpush1.msra.mxu0 0.0
      %6119 = vmatprep.subr.mxu0 0.0
      %6120 = vmatpush1.msra.mxu0 0.0
      %6121 = vmatprep.subr.mxu0 0.0
      %6122 = vmatpush1.msra.mxu0 0.0
      %6123 = vmatprep.subr.mxu0 0.0
      %6124 = vmatpush1.msra.mxu0 0.0
      %6125 = vmatprep.subr.mxu0 0.0
      %6126 = vmatpush1.msra.mxu0 0.0
      %6127 = vmatprep.subr.mxu0 0.0
      %6128 = vmatpush1.msra.mxu0 0.0
      %6129 = vmatprep.subr.mxu0 0.0
      %6130 = vmatpush1.msra.mxu0 0.0
      %6131 = vmatprep.subr.mxu0 0.0
      %6132 = vmatpush1.msra.mxu0 0.0
      %6133 = vmatprep.subr.mxu0 0.0
      %6134 = vmatpush1.msra.mxu0 0.0
      %6135 = vmatprep.subr.mxu0 0.0
      %6136 = vmatpush1.msra.mxu0 0.0
      %6137 = vmatprep.mubr.f32.mxu0 0.0
      %6138 = vmatmul.mubr.f32.gmra.mrb[0].mxu0 %v6069
      %v6139 = vpop.f32.mrb[0].mxu0
      %v6140 = vadd.f32 0.0, %v6139
      %v6141 = vpop.f32.mrb[0].mxu0
      %6142 = vdwg.mxu0
      %v6144 = vrot.slane %v5340, 4
      %v6146 = vsel %vm1951, %v5588, 0
      %v6148 = vsel %vm1958, %v6144, 0
      %6150 = vmatprep.subr.mxu0 0.0
      %6151 = vmatpush1.msra.mxu0 %v6148
      %6152 = vmatprep.subr.mxu0 0.0
      %6153 = vmatpush1.msra.mxu0 0.0
      %6154 = vmatprep.subr.mxu0 0.0
      %6155 = vmatpush1.msra.mxu0 0.0
      %6156 = vmatprep.subr.mxu0 0.0
      %6157 = vmatpush1.msra.mxu0 0.0
      %6158 = vmatprep.subr.mxu0 0.0
      %6159 = vmatpush1.msra.mxu0 0.0
      %6160 = vmatprep.subr.mxu0 0.0
      %6161 = vmatpush1.msra.mxu0 0.0
      %6162 = vmatprep.subr.mxu0 0.0
      %6163 = vmatpush1.msra.mxu0 0.0
      %6164 = vmatprep.subr.mxu0 0.0
      %6165 = vmatpush1.msra.mxu0 0.0
      %6166 = vmatprep.subr.mxu0 0.0
      %6167 = vmatpush1.msra.mxu0 0.0
      %6168 = vmatprep.subr.mxu0 0.0
      %6169 = vmatpush1.msra.mxu0 0.0
      %6170 = vmatprep.subr.mxu0 0.0
      %6171 = vmatpush1.msra.mxu0 0.0
      %6172 = vmatprep.subr.mxu0 0.0
      %6173 = vmatpush1.msra.mxu0 0.0
      %6174 = vmatprep.subr.mxu0 0.0
      %6175 = vmatpush1.msra.mxu0 0.0
      %6176 = vmatprep.subr.mxu0 0.0
      %6177 = vmatpush1.msra.mxu0 0.0
      %6178 = vmatprep.subr.mxu0 0.0
      %6179 = vmatpush1.msra.mxu0 0.0
      %6180 = vmatprep.subr.mxu0 0.0
      %6181 = vmatpush1.msra.mxu0 0.0
      %6182 = vmatprep.subr.mxu0 0.0
      %6183 = vmatpush1.msra.mxu0 0.0
      %6184 = vmatprep.subr.mxu0 0.0
      %6185 = vmatpush1.msra.mxu0 0.0
      %6186 = vmatprep.subr.mxu0 0.0
      %6187 = vmatpush1.msra.mxu0 0.0
      %6188 = vmatprep.subr.mxu0 0.0
      %6189 = vmatpush1.msra.mxu0 0.0
      %6190 = vmatprep.subr.mxu0 0.0
      %6191 = vmatpush1.msra.mxu0 0.0
      %6192 = vmatprep.subr.mxu0 0.0
      %6193 = vmatpush1.msra.mxu0 0.0
      %6194 = vmatprep.subr.mxu0 0.0
      %6195 = vmatpush1.msra.mxu0 0.0
      %6196 = vmatprep.subr.mxu0 0.0
      %6197 = vmatpush1.msra.mxu0 0.0
      %6198 = vmatprep.subr.mxu0 0.0
      %6199 = vmatpush1.msra.mxu0 0.0
      %6200 = vmatprep.subr.mxu0 0.0
      %6201 = vmatpush1.msra.mxu0 0.0
      %6202 = vmatprep.subr.mxu0 0.0
      %6203 = vmatpush1.msra.mxu0 0.0
      %6204 = vmatprep.subr.mxu0 0.0
      %6205 = vmatpush1.msra.mxu0 0.0
      %6206 = vmatprep.subr.mxu0 0.0
      %6207 = vmatpush1.msra.mxu0 0.0
      %6208 = vmatprep.subr.mxu0 0.0
      %6209 = vmatpush1.msra.mxu0 0.0
      %6210 = vmatprep.subr.mxu0 0.0
      %6211 = vmatpush1.msra.mxu0 0.0
      %6212 = vmatprep.subr.mxu0 0.0
      %6213 = vmatpush1.msra.mxu0 0.0
      %6214 = vmatprep.mubr.f32.mxu0 0.0
      %6215 = vmatmul.mubr.f32.gmra.mrb[0].mxu0 %v6146
      %v6216 = vpop.f32.mrb[0].mxu0
      %v6217 = vadd.f32 0.0, %v6216
      %v6218 = vpop.f32.mrb[0].mxu0
      %6219 = vdwg.mxu0
      %vm6220 = vcmp.eq.f32.partialorder %v4555, 0.0
      %v6221 = vsel %vm6220, 1, 0
      %vm6222 = vcmp.eq.s32.totalorder %v6221, 1
      %v6223 = vsel %vm6222, -1e+30, %v5678
      %v6224 = vsel %vm6222, -1e+30, %v5755
      %v6225 = vsel %vm6222, -1e+30, %v5832
      %v6226 = vsel %vm6222, -1e+30, %v5909
      %v6227 = vsel %vm6222, -1e+30, %v5986
      %v6228 = vsel %vm6222, -1e+30, %v6063
      %v6229 = vsel %vm6222, -1e+30, %v6140
      %v6230 = vsel %vm6222, -1e+30, %v6217
      %v6231 = vsel %vm4444, %v6223, -inf
      %6232 = vmax.xlane.f32.xlu0 %v6231
      %v6233 = vpop.xlane.xlu0 %6232
      %v6234 = vsel %vm4444, %v6224, -inf
      %6235 = vmax.xlane.f32.xlu0 %v6234
      %v6236 = vpop.xlane.xlu0 %6235
      %v6237 = vsel %vm4444, %v6225, -inf
      %6238 = vmax.xlane.f32.xlu0 %v6237
      %v6239 = vpop.xlane.xlu0 %6238
      %v6240 = vsel %vm4444, %v6226, -inf
      %6241 = vmax.xlane.f32.xlu0 %v6240
      %v6242 = vpop.xlane.xlu0 %6241
      %v6243 = vsel %vm4444, %v6227, -inf
      %6244 = vmax.xlane.f32.xlu0 %v6243
      %v6245 = vpop.xlane.xlu0 %6244
      %v6246 = vsel %vm4444, %v6228, -inf
      %6247 = vmax.xlane.f32.xlu0 %v6246
      %v6248 = vpop.xlane.xlu0 %6247
      %v6249 = vsel %vm4444, %v6229, -inf
      %6250 = vmax.xlane.f32.xlu0 %v6249
      %v6251 = vpop.xlane.xlu0 %6250
      %v6252 = vsel %vm4444, %v6230, -inf
      %6253 = vmax.xlane.f32.xlu0 %v6252
      %v6254 = vpop.xlane.xlu0 %6253
      %v6255 = vsub.f32 %v6223, %v6233
      %v6256 = vsub.f32 %v6224, %v6236
      %v6257 = vsub.f32 %v6225, %v6239
      %v6258 = vsub.f32 %v6226, %v6242
      %v6259 = vsub.f32 %v6227, %v6245
      %v6260 = vsub.f32 %v6228, %v6248
      %v6261 = vsub.f32 %v6229, %v6251
      %v6262 = vsub.f32 %v6230, %v6254
      %v6263 = vmul.f32 %v6255, 1.442695
      %v6264 = vpow.pop %v6263
      %v6265 = vmul.f32 %v6256, 1.442695
      %v6266 = vpow.pop %v6265
      %v6267 = vmul.f32 %v6257, 1.442695
      %v6268 = vpow.pop %v6267
      %v6269 = vmul.f32 %v6258, 1.442695
      %v6270 = vpow.pop %v6269
      %v6271 = vmul.f32 %v6259, 1.442695
      %v6272 = vpow.pop %v6271
      %v6273 = vmul.f32 %v6260, 1.442695
      %v6274 = vpow.pop %v6273
      %v6275 = vmul.f32 %v6261, 1.442695
      %v6276 = vpow.pop %v6275
      %v6277 = vmul.f32 %v6262, 1.442695
      %v6278 = vpow.pop %v6277
      %v6279 = vsel %vm6222, 0.0, %v6264
      %v6280 = vsel %vm6222, 0.0, %v6266
      %v6281 = vsel %vm6222, 0.0, %v6268
      %v6282 = vsel %vm6222, 0.0, %v6270
      %v6283 = vsel %vm6222, 0.0, %v6272
      %v6284 = vsel %vm6222, 0.0, %v6274
      %v6285 = vsel %vm6222, 0.0, %v6276
      %v6286 = vsel %vm6222, 0.0, %v6278
      %v6287 = vsel %vm4444, %v6279, 0.0
      %6288 = vadd.xlane.f32.xlu0 %v6287
      %v6289 = vpop.xlane.xlu0 %6288
      %v6290 = vsel %vm4444, %v6280, 0.0
      %6291 = vadd.xlane.f32.xlu0 %v6290
      %v6292 = vpop.xlane.xlu0 %6291
      %v6293 = vsel %vm4444, %v6281, 0.0
      %6294 = vadd.xlane.f32.xlu0 %v6293
      %v6295 = vpop.xlane.xlu0 %6294
      %v6296 = vsel %vm4444, %v6282, 0.0
      %6297 = vadd.xlane.f32.xlu0 %v6296
      %v6298 = vpop.xlane.xlu0 %6297
      %v6299 = vsel %vm4444, %v6283, 0.0
      %6300 = vadd.xlane.f32.xlu0 %v6299
      %v6301 = vpop.xlane.xlu0 %6300
      %v6302 = vsel %vm4444, %v6284, 0.0
      %6303 = vadd.xlane.f32.xlu0 %v6302
      %v6304 = vpop.xlane.xlu0 %6303
      %v6305 = vsel %vm4444, %v6285, 0.0
      %6306 = vadd.xlane.f32.xlu0 %v6305
      %v6307 = vpop.xlane.xlu0 %6306
      %v6308 = vsel %vm4444, %v6286, 0.0
      %6309 = vadd.xlane.f32.xlu0 %v6308
      %v6310 = vpop.xlane.xlu0 %6309
      %v6311 = vmax.f32 %v6289, 1e-30
      %v6312 = vmax.f32 %v6292, 1e-30
      %v6313 = vmax.f32 %v6295, 1e-30
      %v6314 = vmax.f32 %v6298, 1e-30
      %v6315 = vmax.f32 %v6301, 1e-30
      %v6316 = vmax.f32 %v6304, 1e-30
      %v6317 = vmax.f32 %v6307, 1e-30
      %v6318 = vmax.f32 %v6310, 1e-30
      %v6319 = vrcp.pop %v6311
      %v6320 = vrcp.pop %v6312
      %v6321 = vrcp.pop %v6313
      %v6322 = vrcp.pop %v6314
      %v6323 = vrcp.pop %v6315
      %v6324 = vrcp.pop %v6316
      %v6325 = vrcp.pop %v6317
      %v6326 = vrcp.pop %v6318
      %v6327 = vmul.f32 %v6279, %v6319
      %v6328 = vmul.f32 %v6280, %v6320
      %v6329 = vmul.f32 %v6281, %v6321
      %v6330 = vmul.f32 %v6282, %v6322
      %v6331 = vmul.f32 %v6283, %v6323
      %v6332 = vmul.f32 %v6284, %v6324
      %v6333 = vmul.f32 %v6285, %v6325
      %v6334 = vmul.f32 %v6286, %v6326
      %v6336 = vsel %vm4444, %v6327, 0
      %v6339 = vsel %vm4444, %v4778, 0
      %6341 = vmatprep.subr.mxu0 0.0
      %6342 = vmatpush1.xpose.msra.mxu0 %v6339
      %6343 = vmatprep.subr.mxu0 0.0
      %6344 = vmatpush1.xpose.msra.mxu0 0.0
      %6345 = vmatprep.subr.mxu0 0.0
      %6346 = vmatpush1.xpose.msra.mxu0 0.0
      %6347 = vmatprep.subr.mxu0 0.0
      %6348 = vmatpush1.xpose.msra.mxu0 0.0
      %6349 = vmatprep.subr.mxu0 0.0
      %6350 = vmatpush1.xpose.msra.mxu0 0.0
      %6351 = vmatprep.subr.mxu0 0.0
      %6352 = vmatpush1.xpose.msra.mxu0 0.0
      %6353 = vmatprep.subr.mxu0 0.0
      %6354 = vmatpush1.xpose.msra.mxu0 0.0
      %6355 = vmatprep.subr.mxu0 0.0
      %6356 = vmatpush1.xpose.msra.mxu0 0.0
      %6357 = vmatprep.subr.mxu0 0.0
      %6358 = vmatpush1.xpose.msra.mxu0 0.0
      %6359 = vmatprep.subr.mxu0 0.0
      %6360 = vmatpush1.xpose.msra.mxu0 0.0
      %6361 = vmatprep.subr.mxu0 0.0
      %6362 = vmatpush1.xpose.msra.mxu0 0.0
      %6363 = vmatprep.subr.mxu0 0.0
      %6364 = vmatpush1.xpose.msra.mxu0 0.0
      %6365 = vmatprep.subr.mxu0 0.0
      %6366 = vmatpush1.xpose.msra.mxu0 0.0
      %6367 = vmatprep.subr.mxu0 0.0
      %6368 = vmatpush1.xpose.msra.mxu0 0.0
      %6369 = vmatprep.subr.mxu0 0.0
      %6370 = vmatpush1.xpose.msra.mxu0 0.0
      %6371 = vmatprep.subr.mxu0 0.0
      %6372 = vmatpush1.xpose.msra.mxu0 0.0
      %6373 = vmatprep.subr.mxu0 0.0
      %6374 = vmatpush1.xpose.msra.mxu0 0.0
      %6375 = vmatprep.subr.mxu0 0.0
      %6376 = vmatpush1.xpose.msra.mxu0 0.0
      %6377 = vmatprep.subr.mxu0 0.0
      %6378 = vmatpush1.xpose.msra.mxu0 0.0
      %6379 = vmatprep.subr.mxu0 0.0
      %6380 = vmatpush1.xpose.msra.mxu0 0.0
      %6381 = vmatprep.subr.mxu0 0.0
      %6382 = vmatpush1.xpose.msra.mxu0 0.0
      %6383 = vmatprep.subr.mxu0 0.0
      %6384 = vmatpush1.xpose.msra.mxu0 0.0
      %6385 = vmatprep.subr.mxu0 0.0
      %6386 = vmatpush1.xpose.msra.mxu0 0.0
      %6387 = vmatprep.subr.mxu0 0.0
      %6388 = vmatpush1.xpose.msra.mxu0 0.0
      %6389 = vmatprep.subr.mxu0 0.0
      %6390 = vmatpush1.xpose.msra.mxu0 0.0
      %6391 = vmatprep.subr.mxu0 0.0
      %6392 = vmatpush1.xpose.msra.mxu0 0.0
      %6393 = vmatprep.subr.mxu0 0.0
      %6394 = vmatpush1.xpose.msra.mxu0 0.0
      %6395 = vmatprep.subr.mxu0 0.0
      %6396 = vmatpush1.xpose.msra.mxu0 0.0
      %6397 = vmatprep.subr.mxu0 0.0
      %6398 = vmatpush1.xpose.msra.mxu0 0.0
      %6399 = vmatprep.subr.mxu0 0.0
      %6400 = vmatpush1.xpose.msra.mxu0 0.0
      %6401 = vmatprep.subr.mxu0 0.0
      %6402 = vmatpush1.xpose.msra.mxu0 0.0
      %6403 = vmatprep.subr.mxu0 0.0
      %6404 = vmatpush1.xpose.msra.mxu0 0.0
      %6405 = vmatprep.mubr.f32.mxu0 0.0
      %6406 = vmatmul.mubr.f32.gmra.mrb[0].mxu0 %v6336
      %v6407 = vpop.f32.mrb[0].mxu0
      %v6408 = vadd.f32 0.0, %v6407
      %v6409 = vpop.f32.mrb[0].mxu0
      %6410 = vdwg.mxu0
      %v6412 = vsel %vm4444, %v6328, 0
      %v6415 = vsel %vm4444, %v4859, 0
      %6417 = vmatprep.subr.mxu0 0.0
      %6418 = vmatpush1.xpose.msra.mxu0 %v6415
      %6419 = vmatprep.subr.mxu0 0.0
      %6420 = vmatpush1.xpose.msra.mxu0 0.0
      %6421 = vmatprep.subr.mxu0 0.0
      %6422 = vmatpush1.xpose.msra.mxu0 0.0
      %6423 = vmatprep.subr.mxu0 0.0
      %6424 = vmatpush1.xpose.msra.mxu0 0.0
      %6425 = vmatprep.subr.mxu0 0.0
      %6426 = vmatpush1.xpose.msra.mxu0 0.0
      %6427 = vmatprep.subr.mxu0 0.0
      %6428 = vmatpush1.xpose.msra.mxu0 0.0
      %6429 = vmatprep.subr.mxu0 0.0
      %6430 = vmatpush1.xpose.msra.mxu0 0.0
      %6431 = vmatprep.subr.mxu0 0.0
      %6432 = vmatpush1.xpose.msra.mxu0 0.0
      %6433 = vmatprep.subr.mxu0 0.0
      %6434 = vmatpush1.xpose.msra.mxu0 0.0
      %6435 = vmatprep.subr.mxu0 0.0
      %6436 = vmatpush1.xpose.msra.mxu0 0.0
      %6437 = vmatprep.subr.mxu0 0.0
      %6438 = vmatpush1.xpose.msra.mxu0 0.0
      %6439 = vmatprep.subr.mxu0 0.0
      %6440 = vmatpush1.xpose.msra.mxu0 0.0
      %6441 = vmatprep.subr.mxu0 0.0
      %6442 = vmatpush1.xpose.msra.mxu0 0.0
      %6443 = vmatprep.subr.mxu0 0.0
      %6444 = vmatpush1.xpose.msra.mxu0 0.0
      %6445 = vmatprep.subr.mxu0 0.0
      %6446 = vmatpush1.xpose.msra.mxu0 0.0
      %6447 = vmatprep.subr.mxu0 0.0
      %6448 = vmatpush1.xpose.msra.mxu0 0.0
      %6449 = vmatprep.subr.mxu0 0.0
      %6450 = vmatpush1.xpose.msra.mxu0 0.0
      %6451 = vmatprep.subr.mxu0 0.0
      %6452 = vmatpush1.xpose.msra.mxu0 0.0
      %6453 = vmatprep.subr.mxu0 0.0
      %6454 = vmatpush1.xpose.msra.mxu0 0.0
      %6455 = vmatprep.subr.mxu0 0.0
      %6456 = vmatpush1.xpose.msra.mxu0 0.0
      %6457 = vmatprep.subr.mxu0 0.0
      %6458 = vmatpush1.xpose.msra.mxu0 0.0
      %6459 = vmatprep.subr.mxu0 0.0
      %6460 = vmatpush1.xpose.msra.mxu0 0.0
      %6461 = vmatprep.subr.mxu0 0.0
      %6462 = vmatpush1.xpose.msra.mxu0 0.0
      %6463 = vmatprep.subr.mxu0 0.0
      %6464 = vmatpush1.xpose.msra.mxu0 0.0
      %6465 = vmatprep.subr.mxu0 0.0
      %6466 = vmatpush1.xpose.msra.mxu0 0.0
      %6467 = vmatprep.subr.mxu0 0.0
      %6468 = vmatpush1.xpose.msra.mxu0 0.0
      %6469 = vmatprep.subr.mxu0 0.0
      %6470 = vmatpush1.xpose.msra.mxu0 0.0
      %6471 = vmatprep.subr.mxu0 0.0
      %6472 = vmatpush1.xpose.msra.mxu0 0.0
      %6473 = vmatprep.subr.mxu0 0.0
      %6474 = vmatpush1.xpose.msra.mxu0 0.0
      %6475 = vmatprep.subr.mxu0 0.0
      %6476 = vmatpush1.xpose.msra.mxu0 0.0
      %6477 = vmatprep.subr.mxu0 0.0
      %6478 = vmatpush1.xpose.msra.mxu0 0.0
      %6479 = vmatprep.subr.mxu0 0.0
      %6480 = vmatpush1.xpose.msra.mxu0 0.0
      %6481 = vmatprep.mubr.f32.mxu0 0.0
      %6482 = vmatmul.mubr.f32.gmra.mrb[0].mxu0 %v6412
      %v6483 = vpop.f32.mrb[0].mxu0
      %v6484 = vadd.f32 0.0, %v6483
      %v6485 = vpop.f32.mrb[0].mxu0
      %6486 = vdwg.mxu0
      %v6488 = vsel %vm4444, %v6329, 0
      %v6491 = vsel %vm4444, %v4940, 0
      %6493 = vmatprep.subr.mxu0 0.0
      %6494 = vmatpush1.xpose.msra.mxu0 %v6491
      %6495 = vmatprep.subr.mxu0 0.0
      %6496 = vmatpush1.xpose.msra.mxu0 0.0
      %6497 = vmatprep.subr.mxu0 0.0
      %6498 = vmatpush1.xpose.msra.mxu0 0.0
      %6499 = vmatprep.subr.mxu0 0.0
      %6500 = vmatpush1.xpose.msra.mxu0 0.0
      %6501 = vmatprep.subr.mxu0 0.0
      %6502 = vmatpush1.xpose.msra.mxu0 0.0
      %6503 = vmatprep.subr.mxu0 0.0
      %6504 = vmatpush1.xpose.msra.mxu0 0.0
      %6505 = vmatprep.subr.mxu0 0.0
      %6506 = vmatpush1.xpose.msra.mxu0 0.0
      %6507 = vmatprep.subr.mxu0 0.0
      %6508 = vmatpush1.xpose.msra.mxu0 0.0
      %6509 = vmatprep.subr.mxu0 0.0
      %6510 = vmatpush1.xpose.msra.mxu0 0.0
      %6511 = vmatprep.subr.mxu0 0.0
      %6512 = vmatpush1.xpose.msra.mxu0 0.0
      %6513 = vmatprep.subr.mxu0 0.0
      %6514 = vmatpush1.xpose.msra.mxu0 0.0
      %6515 = vmatprep.subr.mxu0 0.0
      %6516 = vmatpush1.xpose.msra.mxu0 0.0
      %6517 = vmatprep.subr.mxu0 0.0
      %6518 = vmatpush1.xpose.msra.mxu0 0.0
      %6519 = vmatprep.subr.mxu0 0.0
      %6520 = vmatpush1.xpose.msra.mxu0 0.0
      %6521 = vmatprep.subr.mxu0 0.0
      %6522 = vmatpush1.xpose.msra.mxu0 0.0
      %6523 = vmatprep.subr.mxu0 0.0
      %6524 = vmatpush1.xpose.msra.mxu0 0.0
      %6525 = vmatprep.subr.mxu0 0.0
      %6526 = vmatpush1.xpose.msra.mxu0 0.0
      %6527 = vmatprep.subr.mxu0 0.0
      %6528 = vmatpush1.xpose.msra.mxu0 0.0
      %6529 = vmatprep.subr.mxu0 0.0
      %6530 = vmatpush1.xpose.msra.mxu0 0.0
      %6531 = vmatprep.subr.mxu0 0.0
      %6532 = vmatpush1.xpose.msra.mxu0 0.0
      %6533 = vmatprep.subr.mxu0 0.0
      %6534 = vmatpush1.xpose.msra.mxu0 0.0
      %6535 = vmatprep.subr.mxu0 0.0
      %6536 = vmatpush1.xpose.msra.mxu0 0.0
      %6537 = vmatprep.subr.mxu0 0.0
      %6538 = vmatpush1.xpose.msra.mxu0 0.0
      %6539 = vmatprep.subr.mxu0 0.0
      %6540 = vmatpush1.xpose.msra.mxu0 0.0
      %6541 = vmatprep.subr.mxu0 0.0
      %6542 = vmatpush1.xpose.msra.mxu0 0.0
      %6543 = vmatprep.subr.mxu0 0.0
      %6544 = vmatpush1.xpose.msra.mxu0 0.0
      %6545 = vmatprep.subr.mxu0 0.0
      %6546 = vmatpush1.xpose.msra.mxu0 0.0
      %6547 = vmatprep.subr.mxu0 0.0
      %6548 = vmatpush1.xpose.msra.mxu0 0.0
      %6549 = vmatprep.subr.mxu0 0.0
      %6550 = vmatpush1.xpose.msra.mxu0 0.0
      %6551 = vmatprep.subr.mxu0 0.0
      %6552 = vmatpush1.xpose.msra.mxu0 0.0
      %6553 = vmatprep.subr.mxu0 0.0
      %6554 = vmatpush1.xpose.msra.mxu0 0.0
      %6555 = vmatprep.subr.mxu0 0.0
      %6556 = vmatpush1.xpose.msra.mxu0 0.0
      %6557 = vmatprep.mubr.f32.mxu0 0.0
      %6558 = vmatmul.mubr.f32.gmra.mrb[0].mxu0 %v6488
      %v6559 = vpop.f32.mrb[0].mxu0
      %v6560 = vadd.f32 0.0, %v6559
      %v6561 = vpop.f32.mrb[0].mxu0
      %6562 = vdwg.mxu0
      %v6564 = vsel %vm4444, %v6330, 0
      %v6567 = vsel %vm4444, %v5021, 0
      %6569 = vmatprep.subr.mxu0 0.0
      %6570 = vmatpush1.xpose.msra.mxu0 %v6567
      %6571 = vmatprep.subr.mxu0 0.0
      %6572 = vmatpush1.xpose.msra.mxu0 0.0
      %6573 = vmatprep.subr.mxu0 0.0
      %6574 = vmatpush1.xpose.msra.mxu0 0.0
      %6575 = vmatprep.subr.mxu0 0.0
      %6576 = vmatpush1.xpose.msra.mxu0 0.0
      %6577 = vmatprep.subr.mxu0 0.0
      %6578 = vmatpush1.xpose.msra.mxu0 0.0
      %6579 = vmatprep.subr.mxu0 0.0
      %6580 = vmatpush1.xpose.msra.mxu0 0.0
      %6581 = vmatprep.subr.mxu0 0.0
      %6582 = vmatpush1.xpose.msra.mxu0 0.0
      %6583 = vmatprep.subr.mxu0 0.0
      %6584 = vmatpush1.xpose.msra.mxu0 0.0
      %6585 = vmatprep.subr.mxu0 0.0
      %6586 = vmatpush1.xpose.msra.mxu0 0.0
      %6587 = vmatprep.subr.mxu0 0.0
      %6588 = vmatpush1.xpose.msra.mxu0 0.0
      %6589 = vmatprep.subr.mxu0 0.0
      %6590 = vmatpush1.xpose.msra.mxu0 0.0
      %6591 = vmatprep.subr.mxu0 0.0
      %6592 = vmatpush1.xpose.msra.mxu0 0.0
      %6593 = vmatprep.subr.mxu0 0.0
      %6594 = vmatpush1.xpose.msra.mxu0 0.0
      %6595 = vmatprep.subr.mxu0 0.0
      %6596 = vmatpush1.xpose.msra.mxu0 0.0
      %6597 = vmatprep.subr.mxu0 0.0
      %6598 = vmatpush1.xpose.msra.mxu0 0.0
      %6599 = vmatprep.subr.mxu0 0.0
      %6600 = vmatpush1.xpose.msra.mxu0 0.0
      %6601 = vmatprep.subr.mxu0 0.0
      %6602 = vmatpush1.xpose.msra.mxu0 0.0
      %6603 = vmatprep.subr.mxu0 0.0
      %6604 = vmatpush1.xpose.msra.mxu0 0.0
      %6605 = vmatprep.subr.mxu0 0.0
      %6606 = vmatpush1.xpose.msra.mxu0 0.0
      %6607 = vmatprep.subr.mxu0 0.0
      %6608 = vmatpush1.xpose.msra.mxu0 0.0
      %6609 = vmatprep.subr.mxu0 0.0
      %6610 = vmatpush1.xpose.msra.mxu0 0.0
      %6611 = vmatprep.subr.mxu0 0.0
      %6612 = vmatpush1.xpose.msra.mxu0 0.0
      %6613 = vmatprep.subr.mxu0 0.0
      %6614 = vmatpush1.xpose.msra.mxu0 0.0
      %6615 = vmatprep.subr.mxu0 0.0
      %6616 = vmatpush1.xpose.msra.mxu0 0.0
      %6617 = vmatprep.subr.mxu0 0.0
      %6618 = vmatpush1.xpose.msra.mxu0 0.0
      %6619 = vmatprep.subr.mxu0 0.0
      %6620 = vmatpush1.xpose.msra.mxu0 0.0
      %6621 = vmatprep.subr.mxu0 0.0
      %6622 = vmatpush1.xpose.msra.mxu0 0.0
      %6623 = vmatprep.subr.mxu0 0.0
      %6624 = vmatpush1.xpose.msra.mxu0 0.0
      %6625 = vmatprep.subr.mxu0 0.0
      %6626 = vmatpush1.xpose.msra.mxu0 0.0
      %6627 = vmatprep.subr.mxu0 0.0
      %6628 = vmatpush1.xpose.msra.mxu0 0.0
      %6629 = vmatprep.subr.mxu0 0.0
      %6630 = vmatpush1.xpose.msra.mxu0 0.0
      %6631 = vmatprep.subr.mxu0 0.0
      %6632 = vmatpush1.xpose.msra.mxu0 0.0
      %6633 = vmatprep.mubr.f32.mxu0 0.0
      %6634 = vmatmul.mubr.f32.gmra.mrb[0].mxu0 %v6564
      %v6635 = vpop.f32.mrb[0].mxu0
      %v6636 = vadd.f32 0.0, %v6635
      %v6637 = vpop.f32.mrb[0].mxu0
      %6638 = vdwg.mxu0
      %v6640 = vsel %vm4444, %v6331, 0
      %v6643 = vsel %vm4444, %v5102, 0
      %6645 = vmatprep.subr.mxu0 0.0
      %6646 = vmatpush1.xpose.msra.mxu0 %v6643
      %6647 = vmatprep.subr.mxu0 0.0
      %6648 = vmatpush1.xpose.msra.mxu0 0.0
      %6649 = vmatprep.subr.mxu0 0.0
      %6650 = vmatpush1.xpose.msra.mxu0 0.0
      %6651 = vmatprep.subr.mxu0 0.0
      %6652 = vmatpush1.xpose.msra.mxu0 0.0
      %6653 = vmatprep.subr.mxu0 0.0
      %6654 = vmatpush1.xpose.msra.mxu0 0.0
      %6655 = vmatprep.subr.mxu0 0.0
      %6656 = vmatpush1.xpose.msra.mxu0 0.0
      %6657 = vmatprep.subr.mxu0 0.0
      %6658 = vmatpush1.xpose.msra.mxu0 0.0
      %6659 = vmatprep.subr.mxu0 0.0
      %6660 = vmatpush1.xpose.msra.mxu0 0.0
      %6661 = vmatprep.subr.mxu0 0.0
      %6662 = vmatpush1.xpose.msra.mxu0 0.0
      %6663 = vmatprep.subr.mxu0 0.0
      %6664 = vmatpush1.xpose.msra.mxu0 0.0
      %6665 = vmatprep.subr.mxu0 0.0
      %6666 = vmatpush1.xpose.msra.mxu0 0.0
      %6667 = vmatprep.subr.mxu0 0.0
      %6668 = vmatpush1.xpose.msra.mxu0 0.0
      %6669 = vmatprep.subr.mxu0 0.0
      %6670 = vmatpush1.xpose.msra.mxu0 0.0
      %6671 = vmatprep.subr.mxu0 0.0
      %6672 = vmatpush1.xpose.msra.mxu0 0.0
      %6673 = vmatprep.subr.mxu0 0.0
      %6674 = vmatpush1.xpose.msra.mxu0 0.0
      %6675 = vmatprep.subr.mxu0 0.0
      %6676 = vmatpush1.xpose.msra.mxu0 0.0
      %6677 = vmatprep.subr.mxu0 0.0
      %6678 = vmatpush1.xpose.msra.mxu0 0.0
      %6679 = vmatprep.subr.mxu0 0.0
      %6680 = vmatpush1.xpose.msra.mxu0 0.0
      %6681 = vmatprep.subr.mxu0 0.0
      %6682 = vmatpush1.xpose.msra.mxu0 0.0
      %6683 = vmatprep.subr.mxu0 0.0
      %6684 = vmatpush1.xpose.msra.mxu0 0.0
      %6685 = vmatprep.subr.mxu0 0.0
      %6686 = vmatpush1.xpose.msra.mxu0 0.0
      %6687 = vmatprep.subr.mxu0 0.0
      %6688 = vmatpush1.xpose.msra.mxu0 0.0
      %6689 = vmatprep.subr.mxu0 0.0
      %6690 = vmatpush1.xpose.msra.mxu0 0.0
      %6691 = vmatprep.subr.mxu0 0.0
      %6692 = vmatpush1.xpose.msra.mxu0 0.0
      %6693 = vmatprep.subr.mxu0 0.0
      %6694 = vmatpush1.xpose.msra.mxu0 0.0
      %6695 = vmatprep.subr.mxu0 0.0
      %6696 = vmatpush1.xpose.msra.mxu0 0.0
      %6697 = vmatprep.subr.mxu0 0.0
      %6698 = vmatpush1.xpose.msra.mxu0 0.0
      %6699 = vmatprep.subr.mxu0 0.0
      %6700 = vmatpush1.xpose.msra.mxu0 0.0
      %6701 = vmatprep.subr.mxu0 0.0
      %6702 = vmatpush1.xpose.msra.mxu0 0.0
      %6703 = vmatprep.subr.mxu0 0.0
      %6704 = vmatpush1.xpose.msra.mxu0 0.0
      %6705 = vmatprep.subr.mxu0 0.0
      %6706 = vmatpush1.xpose.msra.mxu0 0.0
      %6707 = vmatprep.subr.mxu0 0.0
      %6708 = vmatpush1.xpose.msra.mxu0 0.0
      %6709 = vmatprep.mubr.f32.mxu0 0.0
      %6710 = vmatmul.mubr.f32.gmra.mrb[0].mxu0 %v6640
      %v6711 = vpop.f32.mrb[0].mxu0
      %v6712 = vadd.f32 0.0, %v6711
      %v6713 = vpop.f32.mrb[0].mxu0
      %6714 = vdwg.mxu0
      %v6716 = vsel %vm4444, %v6332, 0
      %v6719 = vsel %vm4444, %v5183, 0
      %6721 = vmatprep.subr.mxu0 0.0
      %6722 = vmatpush1.xpose.msra.mxu0 %v6719
      %6723 = vmatprep.subr.mxu0 0.0
      %6724 = vmatpush1.xpose.msra.mxu0 0.0
      %6725 = vmatprep.subr.mxu0 0.0
      %6726 = vmatpush1.xpose.msra.mxu0 0.0
      %6727 = vmatprep.subr.mxu0 0.0
      %6728 = vmatpush1.xpose.msra.mxu0 0.0
      %6729 = vmatprep.subr.mxu0 0.0
      %6730 = vmatpush1.xpose.msra.mxu0 0.0
      %6731 = vmatprep.subr.mxu0 0.0
      %6732 = vmatpush1.xpose.msra.mxu0 0.0
      %6733 = vmatprep.subr.mxu0 0.0
      %6734 = vmatpush1.xpose.msra.mxu0 0.0
      %6735 = vmatprep.subr.mxu0 0.0
      %6736 = vmatpush1.xpose.msra.mxu0 0.0
      %6737 = vmatprep.subr.mxu0 0.0
      %6738 = vmatpush1.xpose.msra.mxu0 0.0
      %6739 = vmatprep.subr.mxu0 0.0
      %6740 = vmatpush1.xpose.msra.mxu0 0.0
      %6741 = vmatprep.subr.mxu0 0.0
      %6742 = vmatpush1.xpose.msra.mxu0 0.0
      %6743 = vmatprep.subr.mxu0 0.0
      %6744 = vmatpush1.xpose.msra.mxu0 0.0
      %6745 = vmatprep.subr.mxu0 0.0
      %6746 = vmatpush1.xpose.msra.mxu0 0.0
      %6747 = vmatprep.subr.mxu0 0.0
      %6748 = vmatpush1.xpose.msra.mxu0 0.0
      %6749 = vmatprep.subr.mxu0 0.0
      %6750 = vmatpush1.xpose.msra.mxu0 0.0
      %6751 = vmatprep.subr.mxu0 0.0
      %6752 = vmatpush1.xpose.msra.mxu0 0.0
      %6753 = vmatprep.subr.mxu0 0.0
      %6754 = vmatpush1.xpose.msra.mxu0 0.0
      %6755 = vmatprep.subr.mxu0 0.0
      %6756 = vmatpush1.xpose.msra.mxu0 0.0
      %6757 = vmatprep.subr.mxu0 0.0
      %6758 = vmatpush1.xpose.msra.mxu0 0.0
      %6759 = vmatprep.subr.mxu0 0.0
      %6760 = vmatpush1.xpose.msra.mxu0 0.0
      %6761 = vmatprep.subr.mxu0 0.0
      %6762 = vmatpush1.xpose.msra.mxu0 0.0
      %6763 = vmatprep.subr.mxu0 0.0
      %6764 = vmatpush1.xpose.msra.mxu0 0.0
      %6765 = vmatprep.subr.mxu0 0.0
      %6766 = vmatpush1.xpose.msra.mxu0 0.0
      %6767 = vmatprep.subr.mxu0 0.0
      %6768 = vmatpush1.xpose.msra.mxu0 0.0
      %6769 = vmatprep.subr.mxu0 0.0
      %6770 = vmatpush1.xpose.msra.mxu0 0.0
      %6771 = vmatprep.subr.mxu0 0.0
      %6772 = vmatpush1.xpose.msra.mxu0 0.0
      %6773 = vmatprep.subr.mxu0 0.0
      %6774 = vmatpush1.xpose.msra.mxu0 0.0
      %6775 = vmatprep.subr.mxu0 0.0
      %6776 = vmatpush1.xpose.msra.mxu0 0.0
      %6777 = vmatprep.subr.mxu0 0.0
      %6778 = vmatpush1.xpose.msra.mxu0 0.0
      %6779 = vmatprep.subr.mxu0 0.0
      %6780 = vmatpush1.xpose.msra.mxu0 0.0
      %6781 = vmatprep.subr.mxu0 0.0
      %6782 = vmatpush1.xpose.msra.mxu0 0.0
      %6783 = vmatprep.subr.mxu0 0.0
      %6784 = vmatpush1.xpose.msra.mxu0 0.0
      %6785 = vmatprep.mubr.f32.mxu0 0.0
      %6786 = vmatmul.mubr.f32.gmra.mrb[0].mxu0 %v6716
      %v6787 = vpop.f32.mrb[0].mxu0
      %v6788 = vadd.f32 0.0, %v6787
      %v6789 = vpop.f32.mrb[0].mxu0
      %6790 = vdwg.mxu0
      %v6792 = vsel %vm4444, %v6333, 0
      %v6795 = vsel %vm4444, %v5264, 0
      %6797 = vmatprep.subr.mxu0 0.0
      %6798 = vmatpush1.xpose.msra.mxu0 %v6795
      %6799 = vmatprep.subr.mxu0 0.0
      %6800 = vmatpush1.xpose.msra.mxu0 0.0
      %6801 = vmatprep.subr.mxu0 0.0
      %6802 = vmatpush1.xpose.msra.mxu0 0.0
      %6803 = vmatprep.subr.mxu0 0.0
      %6804 = vmatpush1.xpose.msra.mxu0 0.0
      %6805 = vmatprep.subr.mxu0 0.0
      %6806 = vmatpush1.xpose.msra.mxu0 0.0
      %6807 = vmatprep.subr.mxu0 0.0
      %6808 = vmatpush1.xpose.msra.mxu0 0.0
      %6809 = vmatprep.subr.mxu0 0.0
      %6810 = vmatpush1.xpose.msra.mxu0 0.0
      %6811 = vmatprep.subr.mxu0 0.0
      %6812 = vmatpush1.xpose.msra.mxu0 0.0
      %6813 = vmatprep.subr.mxu0 0.0
      %6814 = vmatpush1.xpose.msra.mxu0 0.0
      %6815 = vmatprep.subr.mxu0 0.0
      %6816 = vmatpush1.xpose.msra.mxu0 0.0
      %6817 = vmatprep.subr.mxu0 0.0
      %6818 = vmatpush1.xpose.msra.mxu0 0.0
      %6819 = vmatprep.subr.mxu0 0.0
      %6820 = vmatpush1.xpose.msra.mxu0 0.0
      %6821 = vmatprep.subr.mxu0 0.0
      %6822 = vmatpush1.xpose.msra.mxu0 0.0
      %6823 = vmatprep.subr.mxu0 0.0
      %6824 = vmatpush1.xpose.msra.mxu0 0.0
      %6825 = vmatprep.subr.mxu0 0.0
      %6826 = vmatpush1.xpose.msra.mxu0 0.0
      %6827 = vmatprep.subr.mxu0 0.0
      %6828 = vmatpush1.xpose.msra.mxu0 0.0
      %6829 = vmatprep.subr.mxu0 0.0
      %6830 = vmatpush1.xpose.msra.mxu0 0.0
      %6831 = vmatprep.subr.mxu0 0.0
      %6832 = vmatpush1.xpose.msra.mxu0 0.0
      %6833 = vmatprep.subr.mxu0 0.0
      %6834 = vmatpush1.xpose.msra.mxu0 0.0
      %6835 = vmatprep.subr.mxu0 0.0
      %6836 = vmatpush1.xpose.msra.mxu0 0.0
      %6837 = vmatprep.subr.mxu0 0.0
      %6838 = vmatpush1.xpose.msra.mxu0 0.0
      %6839 = vmatprep.subr.mxu0 0.0
      %6840 = vmatpush1.xpose.msra.mxu0 0.0
      %6841 = vmatprep.subr.mxu0 0.0
      %6842 = vmatpush1.xpose.msra.mxu0 0.0
      %6843 = vmatprep.subr.mxu0 0.0
      %6844 = vmatpush1.xpose.msra.mxu0 0.0
      %6845 = vmatprep.subr.mxu0 0.0
      %6846 = vmatpush1.xpose.msra.mxu0 0.0
      %6847 = vmatprep.subr.mxu0 0.0
      %6848 = vmatpush1.xpose.msra.mxu0 0.0
      %6849 = vmatprep.subr.mxu0 0.0
      %6850 = vmatpush1.xpose.msra.mxu0 0.0
      %6851 = vmatprep.subr.mxu0 0.0
      %6852 = vmatpush1.xpose.msra.mxu0 0.0
      %6853 = vmatprep.subr.mxu0 0.0
      %6854 = vmatpush1.xpose.msra.mxu0 0.0
      %6855 = vmatprep.subr.mxu0 0.0
      %6856 = vmatpush1.xpose.msra.mxu0 0.0
      %6857 = vmatprep.subr.mxu0 0.0
      %6858 = vmatpush1.xpose.msra.mxu0 0.0
      %6859 = vmatprep.subr.mxu0 0.0
      %6860 = vmatpush1.xpose.msra.mxu0 0.0
      %6861 = vmatprep.mubr.f32.mxu0 0.0
      %6862 = vmatmul.mubr.f32.gmra.mrb[0].mxu0 %v6792
      %v6863 = vpop.f32.mrb[0].mxu0
      %v6864 = vadd.f32 0.0, %v6863
      %v6865 = vpop.f32.mrb[0].mxu0
      %6866 = vdwg.mxu0
      %v6868 = vsel %vm4444, %v6334, 0
      %v6871 = vsel %vm4444, %v5345, 0
      %6873 = vmatprep.subr.mxu0 0.0
      %6874 = vmatpush1.xpose.msra.mxu0 %v6871
      %6875 = vmatprep.subr.mxu0 0.0
      %6876 = vmatpush1.xpose.msra.mxu0 0.0
      %6877 = vmatprep.subr.mxu0 0.0
      %6878 = vmatpush1.xpose.msra.mxu0 0.0
      %6879 = vmatprep.subr.mxu0 0.0
      %6880 = vmatpush1.xpose.msra.mxu0 0.0
      %6881 = vmatprep.subr.mxu0 0.0
      %6882 = vmatpush1.xpose.msra.mxu0 0.0
      %6883 = vmatprep.subr.mxu0 0.0
      %6884 = vmatpush1.xpose.msra.mxu0 0.0
      %6885 = vmatprep.subr.mxu0 0.0
      %6886 = vmatpush1.xpose.msra.mxu0 0.0
      %6887 = vmatprep.subr.mxu0 0.0
      %6888 = vmatpush1.xpose.msra.mxu0 0.0
      %6889 = vmatprep.subr.mxu0 0.0
      %6890 = vmatpush1.xpose.msra.mxu0 0.0
      %6891 = vmatprep.subr.mxu0 0.0
      %6892 = vmatpush1.xpose.msra.mxu0 0.0
      %6893 = vmatprep.subr.mxu0 0.0
      %6894 = vmatpush1.xpose.msra.mxu0 0.0
      %6895 = vmatprep.subr.mxu0 0.0
      %6896 = vmatpush1.xpose.msra.mxu0 0.0
      %6897 = vmatprep.subr.mxu0 0.0
      %6898 = vmatpush1.xpose.msra.mxu0 0.0
      %6899 = vmatprep.subr.mxu0 0.0
      %6900 = vmatpush1.xpose.msra.mxu0 0.0
      %6901 = vmatprep.subr.mxu0 0.0
      %6902 = vmatpush1.xpose.msra.mxu0 0.0
      %6903 = vmatprep.subr.mxu0 0.0
      %6904 = vmatpush1.xpose.msra.mxu0 0.0
      %6905 = vmatprep.subr.mxu0 0.0
      %6906 = vmatpush1.xpose.msra.mxu0 0.0
      %6907 = vmatprep.subr.mxu0 0.0
      %6908 = vmatpush1.xpose.msra.mxu0 0.0
      %6909 = vmatprep.subr.mxu0 0.0
      %6910 = vmatpush1.xpose.msra.mxu0 0.0
      %6911 = vmatprep.subr.mxu0 0.0
      %6912 = vmatpush1.xpose.msra.mxu0 0.0
      %6913 = vmatprep.subr.mxu0 0.0
      %6914 = vmatpush1.xpose.msra.mxu0 0.0
      %6915 = vmatprep.subr.mxu0 0.0
      %6916 = vmatpush1.xpose.msra.mxu0 0.0
      %6917 = vmatprep.subr.mxu0 0.0
      %6918 = vmatpush1.xpose.msra.mxu0 0.0
      %6919 = vmatprep.subr.mxu0 0.0
      %6920 = vmatpush1.xpose.msra.mxu0 0.0
      %6921 = vmatprep.subr.mxu0 0.0
      %6922 = vmatpush1.xpose.msra.mxu0 0.0
      %6923 = vmatprep.subr.mxu0 0.0
      %6924 = vmatpush1.xpose.msra.mxu0 0.0
      %6925 = vmatprep.subr.mxu0 0.0
      %6926 = vmatpush1.xpose.msra.mxu0 0.0
      %6927 = vmatprep.subr.mxu0 0.0
      %6928 = vmatpush1.xpose.msra.mxu0 0.0
      %6929 = vmatprep.subr.mxu0 0.0
      %6930 = vmatpush1.xpose.msra.mxu0 0.0
      %6931 = vmatprep.subr.mxu0 0.0
      %6932 = vmatpush1.xpose.msra.mxu0 0.0
      %6933 = vmatprep.subr.mxu0 0.0
      %6934 = vmatpush1.xpose.msra.mxu0 0.0
      %6935 = vmatprep.subr.mxu0 0.0
      %6936 = vmatpush1.xpose.msra.mxu0 0.0
      %6937 = vmatprep.mubr.f32.mxu0 0.0
      %6938 = vmatmul.mubr.f32.gmra.mrb[0].mxu0 %v6868
      %v6939 = vpop.f32.mrb[0].mxu0
      %v6940 = vadd.f32 0.0, %v6939
      %v6941 = vpop.f32.mrb[0].mxu0
      %6942 = vdwg.mxu0
      %v6944 = vsel %vm1951, %v4588, 0
      %v6947 = vsel %vm1951, %v4589, 0
      %v6950 = vsel %vm1951, %v4590, 0
      %v6953 = vsel %vm1951, %v4591, 0
      %v6956 = vsel %vm1951, %v6408, 0
      %6958 = vmatprep.subr.mxu0 0.0
      %6959 = vmatpush1.xpose.msra.mxu0 %v6956
      %6960 = vmatprep.subr.mxu0 0.0
      %6961 = vmatpush1.xpose.msra.mxu0 0.0
      %6962 = vmatprep.subr.mxu0 0.0
      %6963 = vmatpush1.xpose.msra.mxu0 0.0
      %6964 = vmatprep.subr.mxu0 0.0
      %6965 = vmatpush1.xpose.msra.mxu0 0.0
      %6966 = vmatprep.subr.mxu0 0.0
      %6967 = vmatpush1.xpose.msra.mxu0 0.0
      %6968 = vmatprep.subr.mxu0 0.0
      %6969 = vmatpush1.xpose.msra.mxu0 0.0
      %6970 = vmatprep.subr.mxu0 0.0
      %6971 = vmatpush1.xpose.msra.mxu0 0.0
      %6972 = vmatprep.subr.mxu0 0.0
      %6973 = vmatpush1.xpose.msra.mxu0 0.0
      %6974 = vmatprep.subr.mxu0 0.0
      %6975 = vmatpush1.xpose.msra.mxu0 0.0
      %6976 = vmatprep.subr.mxu0 0.0
      %6977 = vmatpush1.xpose.msra.mxu0 0.0
      %6978 = vmatprep.subr.mxu0 0.0
      %6979 = vmatpush1.xpose.msra.mxu0 0.0
      %6980 = vmatprep.subr.mxu0 0.0
      %6981 = vmatpush1.xpose.msra.mxu0 0.0
      %6982 = vmatprep.subr.mxu0 0.0
      %6983 = vmatpush1.xpose.msra.mxu0 0.0
      %6984 = vmatprep.subr.mxu0 0.0
      %6985 = vmatpush1.xpose.msra.mxu0 0.0
      %6986 = vmatprep.subr.mxu0 0.0
      %6987 = vmatpush1.xpose.msra.mxu0 0.0
      %6988 = vmatprep.subr.mxu0 0.0
      %6989 = vmatpush1.xpose.msra.mxu0 0.0
      %6990 = vmatprep.subr.mxu0 0.0
      %6991 = vmatpush1.xpose.msra.mxu0 0.0
      %6992 = vmatprep.subr.mxu0 0.0
      %6993 = vmatpush1.xpose.msra.mxu0 0.0
      %6994 = vmatprep.subr.mxu0 0.0
      %6995 = vmatpush1.xpose.msra.mxu0 0.0
      %6996 = vmatprep.subr.mxu0 0.0
      %6997 = vmatpush1.xpose.msra.mxu0 0.0
      %6998 = vmatprep.subr.mxu0 0.0
      %6999 = vmatpush1.xpose.msra.mxu0 0.0
      %7000 = vmatprep.subr.mxu0 0.0
      %7001 = vmatpush1.xpose.msra.mxu0 0.0
      %7002 = vmatprep.subr.mxu0 0.0
      %7003 = vmatpush1.xpose.msra.mxu0 0.0
      %7004 = vmatprep.subr.mxu0 0.0
      %7005 = vmatpush1.xpose.msra.mxu0 0.0
      %7006 = vmatprep.subr.mxu0 0.0
      %7007 = vmatpush1.xpose.msra.mxu0 0.0
      %7008 = vmatprep.subr.mxu0 0.0
      %7009 = vmatpush1.xpose.msra.mxu0 0.0
      %7010 = vmatprep.subr.mxu0 0.0
      %7011 = vmatpush1.xpose.msra.mxu0 0.0
      %7012 = vmatprep.subr.mxu0 0.0
      %7013 = vmatpush1.xpose.msra.mxu0 0.0
      %7014 = vmatprep.subr.mxu0 0.0
      %7015 = vmatpush1.xpose.msra.mxu0 0.0
      %7016 = vmatprep.subr.mxu0 0.0
      %7017 = vmatpush1.xpose.msra.mxu0 0.0
      %7018 = vmatprep.subr.mxu0 0.0
      %7019 = vmatpush1.xpose.msra.mxu0 0.0
      %7020 = vmatprep.subr.mxu0 0.0
      %7021 = vmatpush1.xpose.msra.mxu0 0.0
      %7022 = vmatprep.mubr.f32.mxu0 0.0
      %7023 = vmatmul.mubr.f32.gmra.mrb[0].mxu0 %v6944
      %v7024 = vpop.f32.mrb[0].mxu0
      %v7025 = vadd.f32 0.0, %v7024
      %v7026 = vpop.f32.mrb[0].mxu0
      %7027 = vmatprep.mubr.f32.mxu0 0.0
      %7028 = vmatmul.mubr.f32.gmra.mrb[0].mxu0 %v6947
      %v7029 = vpop.f32.mrb[0].mxu0
      %v7030 = vadd.f32 0.0, %v7029
      %v7031 = vpop.f32.mrb[0].mxu0
      %7032 = vmatprep.mubr.f32.mxu0 0.0
      %7033 = vmatmul.mubr.f32.gmra.mrb[0].mxu0 %v6950
      %v7034 = vpop.f32.mrb[0].mxu0
      %v7035 = vadd.f32 0.0, %v7034
      %v7036 = vpop.f32.mrb[0].mxu0
      %7037 = vmatprep.mubr.f32.mxu0 0.0
      %7038 = vmatmul.mubr.f32.gmra.mrb[0].mxu0 %v6953
      %v7039 = vpop.f32.mrb[0].mxu0
      %v7040 = vadd.f32 0.0, %v7039
      %v7041 = vpop.f32.mrb[0].mxu0
      %7042 = vdwg.mxu0
      %v7044 = vsel %vm1951, %v4592, 0
      %v7047 = vsel %vm1951, %v4593, 0
      %v7050 = vsel %vm1951, %v4594, 0
      %v7053 = vsel %vm1951, %v4595, 0
      %v7056 = vsel %vm1951, %v6484, 0
      %7058 = vmatprep.subr.mxu0 0.0
      %7059 = vmatpush1.xpose.msra.mxu0 %v7056
      %7060 = vmatprep.subr.mxu0 0.0
      %7061 = vmatpush1.xpose.msra.mxu0 0.0
      %7062 = vmatprep.subr.mxu0 0.0
      %7063 = vmatpush1.xpose.msra.mxu0 0.0
      %7064 = vmatprep.subr.mxu0 0.0
      %7065 = vmatpush1.xpose.msra.mxu0 0.0
      %7066 = vmatprep.subr.mxu0 0.0
      %7067 = vmatpush1.xpose.msra.mxu0 0.0
      %7068 = vmatprep.subr.mxu0 0.0
      %7069 = vmatpush1.xpose.msra.mxu0 0.0
      %7070 = vmatprep.subr.mxu0 0.0
      %7071 = vmatpush1.xpose.msra.mxu0 0.0
      %7072 = vmatprep.subr.mxu0 0.0
      %7073 = vmatpush1.xpose.msra.mxu0 0.0
      %7074 = vmatprep.subr.mxu0 0.0
      %7075 = vmatpush1.xpose.msra.mxu0 0.0
      %7076 = vmatprep.subr.mxu0 0.0
      %7077 = vmatpush1.xpose.msra.mxu0 0.0
      %7078 = vmatprep.subr.mxu0 0.0
      %7079 = vmatpush1.xpose.msra.mxu0 0.0
      %7080 = vmatprep.subr.mxu0 0.0
      %7081 = vmatpush1.xpose.msra.mxu0 0.0
      %7082 = vmatprep.subr.mxu0 0.0
      %7083 = vmatpush1.xpose.msra.mxu0 0.0
      %7084 = vmatprep.subr.mxu0 0.0
      %7085 = vmatpush1.xpose.msra.mxu0 0.0
      %7086 = vmatprep.subr.mxu0 0.0
      %7087 = vmatpush1.xpose.msra.mxu0 0.0
      %7088 = vmatprep.subr.mxu0 0.0
      %7089 = vmatpush1.xpose.msra.mxu0 0.0
      %7090 = vmatprep.subr.mxu0 0.0
      %7091 = vmatpush1.xpose.msra.mxu0 0.0
      %7092 = vmatprep.subr.mxu0 0.0
      %7093 = vmatpush1.xpose.msra.mxu0 0.0
      %7094 = vmatprep.subr.mxu0 0.0
      %7095 = vmatpush1.xpose.msra.mxu0 0.0
      %7096 = vmatprep.subr.mxu0 0.0
      %7097 = vmatpush1.xpose.msra.mxu0 0.0
      %7098 = vmatprep.subr.mxu0 0.0
      %7099 = vmatpush1.xpose.msra.mxu0 0.0
      %7100 = vmatprep.subr.mxu0 0.0
      %7101 = vmatpush1.xpose.msra.mxu0 0.0
      %7102 = vmatprep.subr.mxu0 0.0
      %7103 = vmatpush1.xpose.msra.mxu0 0.0
      %7104 = vmatprep.subr.mxu0 0.0
      %7105 = vmatpush1.xpose.msra.mxu0 0.0
      %7106 = vmatprep.subr.mxu0 0.0
      %7107 = vmatpush1.xpose.msra.mxu0 0.0
      %7108 = vmatprep.subr.mxu0 0.0
      %7109 = vmatpush1.xpose.msra.mxu0 0.0
      %7110 = vmatprep.subr.mxu0 0.0
      %7111 = vmatpush1.xpose.msra.mxu0 0.0
      %7112 = vmatprep.subr.mxu0 0.0
      %7113 = vmatpush1.xpose.msra.mxu0 0.0
      %7114 = vmatprep.subr.mxu0 0.0
      %7115 = vmatpush1.xpose.msra.mxu0 0.0
      %7116 = vmatprep.subr.mxu0 0.0
      %7117 = vmatpush1.xpose.msra.mxu0 0.0
      %7118 = vmatprep.subr.mxu0 0.0
      %7119 = vmatpush1.xpose.msra.mxu0 0.0
      %7120 = vmatprep.subr.mxu0 0.0
      %7121 = vmatpush1.xpose.msra.mxu0 0.0
      %7122 = vmatprep.mubr.f32.mxu0 0.0
      %7123 = vmatmul.mubr.f32.gmra.mrb[0].mxu0 %v7044
      %v7124 = vpop.f32.mrb[0].mxu0
      %v7125 = vadd.f32 0.0, %v7124
      %v7126 = vpop.f32.mrb[0].mxu0
      %7127 = vmatprep.mubr.f32.mxu0 0.0
      %7128 = vmatmul.mubr.f32.gmra.mrb[0].mxu0 %v7047
      %v7129 = vpop.f32.mrb[0].mxu0
      %v7130 = vadd.f32 0.0, %v7129
      %v7131 = vpop.f32.mrb[0].mxu0
      %7132 = vmatprep.mubr.f32.mxu0 0.0
      %7133 = vmatmul.mubr.f32.gmra.mrb[0].mxu0 %v7050
      %v7134 = vpop.f32.mrb[0].mxu0
      %v7135 = vadd.f32 0.0, %v7134
      %v7136 = vpop.f32.mrb[0].mxu0
      %7137 = vmatprep.mubr.f32.mxu0 0.0
      %7138 = vmatmul.mubr.f32.gmra.mrb[0].mxu0 %v7053
      %v7139 = vpop.f32.mrb[0].mxu0
      %v7140 = vadd.f32 0.0, %v7139
      %v7141 = vpop.f32.mrb[0].mxu0
      %7142 = vdwg.mxu0
      %v7144 = vsel %vm1951, %v4596, 0
      %v7147 = vsel %vm1951, %v4597, 0
      %v7150 = vsel %vm1951, %v4598, 0
      %v7153 = vsel %vm1951, %v4599, 0
      %v7156 = vsel %vm1951, %v6560, 0
      %7158 = vmatprep.subr.mxu0 0.0
      %7159 = vmatpush1.xpose.msra.mxu0 %v7156
      %7160 = vmatprep.subr.mxu0 0.0
      %7161 = vmatpush1.xpose.msra.mxu0 0.0
      %7162 = vmatprep.subr.mxu0 0.0
      %7163 = vmatpush1.xpose.msra.mxu0 0.0
      %7164 = vmatprep.subr.mxu0 0.0
      %7165 = vmatpush1.xpose.msra.mxu0 0.0
      %7166 = vmatprep.subr.mxu0 0.0
      %7167 = vmatpush1.xpose.msra.mxu0 0.0
      %7168 = vmatprep.subr.mxu0 0.0
      %7169 = vmatpush1.xpose.msra.mxu0 0.0
      %7170 = vmatprep.subr.mxu0 0.0
      %7171 = vmatpush1.xpose.msra.mxu0 0.0
      %7172 = vmatprep.subr.mxu0 0.0
      %7173 = vmatpush1.xpose.msra.mxu0 0.0
      %7174 = vmatprep.subr.mxu0 0.0
      %7175 = vmatpush1.xpose.msra.mxu0 0.0
      %7176 = vmatprep.subr.mxu0 0.0
      %7177 = vmatpush1.xpose.msra.mxu0 0.0
      %7178 = vmatprep.subr.mxu0 0.0
      %7179 = vmatpush1.xpose.msra.mxu0 0.0
      %7180 = vmatprep.subr.mxu0 0.0
      %7181 = vmatpush1.xpose.msra.mxu0 0.0
      %7182 = vmatprep.subr.mxu0 0.0
      %7183 = vmatpush1.xpose.msra.mxu0 0.0
      %7184 = vmatprep.subr.mxu0 0.0
      %7185 = vmatpush1.xpose.msra.mxu0 0.0
      %7186 = vmatprep.subr.mxu0 0.0
      %7187 = vmatpush1.xpose.msra.mxu0 0.0
      %7188 = vmatprep.subr.mxu0 0.0
      %7189 = vmatpush1.xpose.msra.mxu0 0.0
      %7190 = vmatprep.subr.mxu0 0.0
      %7191 = vmatpush1.xpose.msra.mxu0 0.0
      %7192 = vmatprep.subr.mxu0 0.0
      %7193 = vmatpush1.xpose.msra.mxu0 0.0
      %7194 = vmatprep.subr.mxu0 0.0
      %7195 = vmatpush1.xpose.msra.mxu0 0.0
      %7196 = vmatprep.subr.mxu0 0.0
      %7197 = vmatpush1.xpose.msra.mxu0 0.0
      %7198 = vmatprep.subr.mxu0 0.0
      %7199 = vmatpush1.xpose.msra.mxu0 0.0
      %7200 = vmatprep.subr.mxu0 0.0
      %7201 = vmatpush1.xpose.msra.mxu0 0.0
      %7202 = vmatprep.subr.mxu0 0.0
      %7203 = vmatpush1.xpose.msra.mxu0 0.0
      %7204 = vmatprep.subr.mxu0 0.0
      %7205 = vmatpush1.xpose.msra.mxu0 0.0
      %7206 = vmatprep.subr.mxu0 0.0
      %7207 = vmatpush1.xpose.msra.mxu0 0.0
      %7208 = vmatprep.subr.mxu0 0.0
      %7209 = vmatpush1.xpose.msra.mxu0 0.0
      %7210 = vmatprep.subr.mxu0 0.0
      %7211 = vmatpush1.xpose.msra.mxu0 0.0
      %7212 = vmatprep.subr.mxu0 0.0
      %7213 = vmatpush1.xpose.msra.mxu0 0.0
      %7214 = vmatprep.subr.mxu0 0.0
      %7215 = vmatpush1.xpose.msra.mxu0 0.0
      %7216 = vmatprep.subr.mxu0 0.0
      %7217 = vmatpush1.xpose.msra.mxu0 0.0
      %7218 = vmatprep.subr.mxu0 0.0
      %7219 = vmatpush1.xpose.msra.mxu0 0.0
      %7220 = vmatprep.subr.mxu0 0.0
      %7221 = vmatpush1.xpose.msra.mxu0 0.0
      %7222 = vmatprep.mubr.f32.mxu0 0.0
      %7223 = vmatmul.mubr.f32.gmra.mrb[0].mxu0 %v7144
      %v7224 = vpop.f32.mrb[0].mxu0
      %v7225 = vadd.f32 0.0, %v7224
      %v7226 = vpop.f32.mrb[0].mxu0
      %7227 = vmatprep.mubr.f32.mxu0 0.0
      %7228 = vmatmul.mubr.f32.gmra.mrb[0].mxu0 %v7147
      %v7229 = vpop.f32.mrb[0].mxu0
      %v7230 = vadd.f32 0.0, %v7229
      %v7231 = vpop.f32.mrb[0].mxu0
      %7232 = vmatprep.mubr.f32.mxu0 0.0
      %7233 = vmatmul.mubr.f32.gmra.mrb[0].mxu0 %v7150
      %v7234 = vpop.f32.mrb[0].mxu0
      %v7235 = vadd.f32 0.0, %v7234
      %v7236 = vpop.f32.mrb[0].mxu0
      %7237 = vmatprep.mubr.f32.mxu0 0.0
      %7238 = vmatmul.mubr.f32.gmra.mrb[0].mxu0 %v7153
      %v7239 = vpop.f32.mrb[0].mxu0
      %v7240 = vadd.f32 0.0, %v7239
      %v7241 = vpop.f32.mrb[0].mxu0
      %7242 = vdwg.mxu0
      %v7244 = vsel %vm1951, %v4600, 0
      %v7247 = vsel %vm1951, %v4601, 0
      %v7250 = vsel %vm1951, %v4602, 0
      %v7253 = vsel %vm1951, %v4603, 0
      %v7256 = vsel %vm1951, %v6636, 0
      %7258 = vmatprep.subr.mxu0 0.0
      %7259 = vmatpush1.xpose.msra.mxu0 %v7256
      %7260 = vmatprep.subr.mxu0 0.0
      %7261 = vmatpush1.xpose.msra.mxu0 0.0
      %7262 = vmatprep.subr.mxu0 0.0
      %7263 = vmatpush1.xpose.msra.mxu0 0.0
      %7264 = vmatprep.subr.mxu0 0.0
      %7265 = vmatpush1.xpose.msra.mxu0 0.0
      %7266 = vmatprep.subr.mxu0 0.0
      %7267 = vmatpush1.xpose.msra.mxu0 0.0
      %7268 = vmatprep.subr.mxu0 0.0
      %7269 = vmatpush1.xpose.msra.mxu0 0.0
      %7270 = vmatprep.subr.mxu0 0.0
      %7271 = vmatpush1.xpose.msra.mxu0 0.0
      %7272 = vmatprep.subr.mxu0 0.0
      %7273 = vmatpush1.xpose.msra.mxu0 0.0
      %7274 = vmatprep.subr.mxu0 0.0
      %7275 = vmatpush1.xpose.msra.mxu0 0.0
      %7276 = vmatprep.subr.mxu0 0.0
      %7277 = vmatpush1.xpose.msra.mxu0 0.0
      %7278 = vmatprep.subr.mxu0 0.0
      %7279 = vmatpush1.xpose.msra.mxu0 0.0
      %7280 = vmatprep.subr.mxu0 0.0
      %7281 = vmatpush1.xpose.msra.mxu0 0.0
      %7282 = vmatprep.subr.mxu0 0.0
      %7283 = vmatpush1.xpose.msra.mxu0 0.0
      %7284 = vmatprep.subr.mxu0 0.0
      %7285 = vmatpush1.xpose.msra.mxu0 0.0
      %7286 = vmatprep.subr.mxu0 0.0
      %7287 = vmatpush1.xpose.msra.mxu0 0.0
      %7288 = vmatprep.subr.mxu0 0.0
      %7289 = vmatpush1.xpose.msra.mxu0 0.0
      %7290 = vmatprep.subr.mxu0 0.0
      %7291 = vmatpush1.xpose.msra.mxu0 0.0
      %7292 = vmatprep.subr.mxu0 0.0
      %7293 = vmatpush1.xpose.msra.mxu0 0.0
      %7294 = vmatprep.subr.mxu0 0.0
      %7295 = vmatpush1.xpose.msra.mxu0 0.0
      %7296 = vmatprep.subr.mxu0 0.0
      %7297 = vmatpush1.xpose.msra.mxu0 0.0
      %7298 = vmatprep.subr.mxu0 0.0
      %7299 = vmatpush1.xpose.msra.mxu0 0.0
      %7300 = vmatprep.subr.mxu0 0.0
      %7301 = vmatpush1.xpose.msra.mxu0 0.0
      %7302 = vmatprep.subr.mxu0 0.0
      %7303 = vmatpush1.xpose.msra.mxu0 0.0
      %7304 = vmatprep.subr.mxu0 0.0
      %7305 = vmatpush1.xpose.msra.mxu0 0.0
      %7306 = vmatprep.subr.mxu0 0.0
      %7307 = vmatpush1.xpose.msra.mxu0 0.0
      %7308 = vmatprep.subr.mxu0 0.0
      %7309 = vmatpush1.xpose.msra.mxu0 0.0
      %7310 = vmatprep.subr.mxu0 0.0
      %7311 = vmatpush1.xpose.msra.mxu0 0.0
      %7312 = vmatprep.subr.mxu0 0.0
      %7313 = vmatpush1.xpose.msra.mxu0 0.0
      %7314 = vmatprep.subr.mxu0 0.0
      %7315 = vmatpush1.xpose.msra.mxu0 0.0
      %7316 = vmatprep.subr.mxu0 0.0
      %7317 = vmatpush1.xpose.msra.mxu0 0.0
      %7318 = vmatprep.subr.mxu0 0.0
      %7319 = vmatpush1.xpose.msra.mxu0 0.0
      %7320 = vmatprep.subr.mxu0 0.0
      %7321 = vmatpush1.xpose.msra.mxu0 0.0
      %7322 = vmatprep.mubr.f32.mxu0 0.0
      %7323 = vmatmul.mubr.f32.gmra.mrb[0].mxu0 %v7244
      %v7324 = vpop.f32.mrb[0].mxu0
      %v7325 = vadd.f32 0.0, %v7324
      %v7326 = vpop.f32.mrb[0].mxu0
      %7327 = vmatprep.mubr.f32.mxu0 0.0
      %7328 = vmatmul.mubr.f32.gmra.mrb[0].mxu0 %v7247
      %v7329 = vpop.f32.mrb[0].mxu0
      %v7330 = vadd.f32 0.0, %v7329
      %v7331 = vpop.f32.mrb[0].mxu0
      %7332 = vmatprep.mubr.f32.mxu0 0.0
      %7333 = vmatmul.mubr.f32.gmra.mrb[0].mxu0 %v7250
      %v7334 = vpop.f32.mrb[0].mxu0
      %v7335 = vadd.f32 0.0, %v7334
      %v7336 = vpop.f32.mrb[0].mxu0
      %7337 = vmatprep.mubr.f32.mxu0 0.0
      %7338 = vmatmul.mubr.f32.gmra.mrb[0].mxu0 %v7253
      %v7339 = vpop.f32.mrb[0].mxu0
      %v7340 = vadd.f32 0.0, %v7339
      %v7341 = vpop.f32.mrb[0].mxu0
      %7342 = vdwg.mxu0
      %v7344 = vsel %vm1951, %v4604, 0
      %v7347 = vsel %vm1951, %v4605, 0
      %v7350 = vsel %vm1951, %v4606, 0
      %v7353 = vsel %vm1951, %v4607, 0
      %v7356 = vsel %vm1951, %v6712, 0
      %7358 = vmatprep.subr.mxu0 0.0
      %7359 = vmatpush1.xpose.msra.mxu0 %v7356
      %7360 = vmatprep.subr.mxu0 0.0
      %7361 = vmatpush1.xpose.msra.mxu0 0.0
      %7362 = vmatprep.subr.mxu0 0.0
      %7363 = vmatpush1.xpose.msra.mxu0 0.0
      %7364 = vmatprep.subr.mxu0 0.0
      %7365 = vmatpush1.xpose.msra.mxu0 0.0
      %7366 = vmatprep.subr.mxu0 0.0
      %7367 = vmatpush1.xpose.msra.mxu0 0.0
      %7368 = vmatprep.subr.mxu0 0.0
      %7369 = vmatpush1.xpose.msra.mxu0 0.0
      %7370 = vmatprep.subr.mxu0 0.0
      %7371 = vmatpush1.xpose.msra.mxu0 0.0
      %7372 = vmatprep.subr.mxu0 0.0
      %7373 = vmatpush1.xpose.msra.mxu0 0.0
      %7374 = vmatprep.subr.mxu0 0.0
      %7375 = vmatpush1.xpose.msra.mxu0 0.0
      %7376 = vmatprep.subr.mxu0 0.0
      %7377 = vmatpush1.xpose.msra.mxu0 0.0
      %7378 = vmatprep.subr.mxu0 0.0
      %7379 = vmatpush1.xpose.msra.mxu0 0.0
      %7380 = vmatprep.subr.mxu0 0.0
      %7381 = vmatpush1.xpose.msra.mxu0 0.0
      %7382 = vmatprep.subr.mxu0 0.0
      %7383 = vmatpush1.xpose.msra.mxu0 0.0
      %7384 = vmatprep.subr.mxu0 0.0
      %7385 = vmatpush1.xpose.msra.mxu0 0.0
      %7386 = vmatprep.subr.mxu0 0.0
      %7387 = vmatpush1.xpose.msra.mxu0 0.0
      %7388 = vmatprep.subr.mxu0 0.0
      %7389 = vmatpush1.xpose.msra.mxu0 0.0
      %7390 = vmatprep.subr.mxu0 0.0
      %7391 = vmatpush1.xpose.msra.mxu0 0.0
      %7392 = vmatprep.subr.mxu0 0.0
      %7393 = vmatpush1.xpose.msra.mxu0 0.0
      %7394 = vmatprep.subr.mxu0 0.0
      %7395 = vmatpush1.xpose.msra.mxu0 0.0
      %7396 = vmatprep.subr.mxu0 0.0
      %7397 = vmatpush1.xpose.msra.mxu0 0.0
      %7398 = vmatprep.subr.mxu0 0.0
      %7399 = vmatpush1.xpose.msra.mxu0 0.0
      %7400 = vmatprep.subr.mxu0 0.0
      %7401 = vmatpush1.xpose.msra.mxu0 0.0
      %7402 = vmatprep.subr.mxu0 0.0
      %7403 = vmatpush1.xpose.msra.mxu0 0.0
      %7404 = vmatprep.subr.mxu0 0.0
      %7405 = vmatpush1.xpose.msra.mxu0 0.0
      %7406 = vmatprep.subr.mxu0 0.0
      %7407 = vmatpush1.xpose.msra.mxu0 0.0
      %7408 = vmatprep.subr.mxu0 0.0
      %7409 = vmatpush1.xpose.msra.mxu0 0.0
      %7410 = vmatprep.subr.mxu0 0.0
      %7411 = vmatpush1.xpose.msra.mxu0 0.0
      %7412 = vmatprep.subr.mxu0 0.0
      %7413 = vmatpush1.xpose.msra.mxu0 0.0
      %7414 = vmatprep.subr.mxu0 0.0
      %7415 = vmatpush1.xpose.msra.mxu0 0.0
      %7416 = vmatprep.subr.mxu0 0.0
      %7417 = vmatpush1.xpose.msra.mxu0 0.0
      %7418 = vmatprep.subr.mxu0 0.0
      %7419 = vmatpush1.xpose.msra.mxu0 0.0
      %7420 = vmatprep.subr.mxu0 0.0
      %7421 = vmatpush1.xpose.msra.mxu0 0.0
      %7422 = vmatprep.mubr.f32.mxu0 0.0
      %7423 = vmatmul.mubr.f32.gmra.mrb[0].mxu0 %v7344
      %v7424 = vpop.f32.mrb[0].mxu0
      %v7425 = vadd.f32 0.0, %v7424
      %v7426 = vpop.f32.mrb[0].mxu0
      %7427 = vmatprep.mubr.f32.mxu0 0.0
      %7428 = vmatmul.mubr.f32.gmra.mrb[0].mxu0 %v7347
      %v7429 = vpop.f32.mrb[0].mxu0
      %v7430 = vadd.f32 0.0, %v7429
      %v7431 = vpop.f32.mrb[0].mxu0
      %7432 = vmatprep.mubr.f32.mxu0 0.0
      %7433 = vmatmul.mubr.f32.gmra.mrb[0].mxu0 %v7350
      %v7434 = vpop.f32.mrb[0].mxu0
      %v7435 = vadd.f32 0.0, %v7434
      %v7436 = vpop.f32.mrb[0].mxu0
      %7437 = vmatprep.mubr.f32.mxu0 0.0
      %7438 = vmatmul.mubr.f32.gmra.mrb[0].mxu0 %v7353
      %v7439 = vpop.f32.mrb[0].mxu0
      %v7440 = vadd.f32 0.0, %v7439
      %v7441 = vpop.f32.mrb[0].mxu0
      %7442 = vdwg.mxu0
      %v7444 = vsel %vm1951, %v4608, 0
      %v7447 = vsel %vm1951, %v4609, 0
      %v7450 = vsel %vm1951, %v4610, 0
      %v7453 = vsel %vm1951, %v4611, 0
      %v7456 = vsel %vm1951, %v6788, 0
      %7458 = vmatprep.subr.mxu0 0.0
      %7459 = vmatpush1.xpose.msra.mxu0 %v7456
      %7460 = vmatprep.subr.mxu0 0.0
      %7461 = vmatpush1.xpose.msra.mxu0 0.0
      %7462 = vmatprep.subr.mxu0 0.0
      %7463 = vmatpush1.xpose.msra.mxu0 0.0
      %7464 = vmatprep.subr.mxu0 0.0
      %7465 = vmatpush1.xpose.msra.mxu0 0.0
      %7466 = vmatprep.subr.mxu0 0.0
      %7467 = vmatpush1.xpose.msra.mxu0 0.0
      %7468 = vmatprep.subr.mxu0 0.0
      %7469 = vmatpush1.xpose.msra.mxu0 0.0
      %7470 = vmatprep.subr.mxu0 0.0
      %7471 = vmatpush1.xpose.msra.mxu0 0.0
      %7472 = vmatprep.subr.mxu0 0.0
      %7473 = vmatpush1.xpose.msra.mxu0 0.0
      %7474 = vmatprep.subr.mxu0 0.0
      %7475 = vmatpush1.xpose.msra.mxu0 0.0
      %7476 = vmatprep.subr.mxu0 0.0
      %7477 = vmatpush1.xpose.msra.mxu0 0.0
      %7478 = vmatprep.subr.mxu0 0.0
      %7479 = vmatpush1.xpose.msra.mxu0 0.0
      %7480 = vmatprep.subr.mxu0 0.0
      %7481 = vmatpush1.xpose.msra.mxu0 0.0
      %7482 = vmatprep.subr.mxu0 0.0
      %7483 = vmatpush1.xpose.msra.mxu0 0.0
      %7484 = vmatprep.subr.mxu0 0.0
      %7485 = vmatpush1.xpose.msra.mxu0 0.0
      %7486 = vmatprep.subr.mxu0 0.0
      %7487 = vmatpush1.xpose.msra.mxu0 0.0
      %7488 = vmatprep.subr.mxu0 0.0
      %7489 = vmatpush1.xpose.msra.mxu0 0.0
      %7490 = vmatprep.subr.mxu0 0.0
      %7491 = vmatpush1.xpose.msra.mxu0 0.0
      %7492 = vmatprep.subr.mxu0 0.0
      %7493 = vmatpush1.xpose.msra.mxu0 0.0
      %7494 = vmatprep.subr.mxu0 0.0
      %7495 = vmatpush1.xpose.msra.mxu0 0.0
      %7496 = vmatprep.subr.mxu0 0.0
      %7497 = vmatpush1.xpose.msra.mxu0 0.0
      %7498 = vmatprep.subr.mxu0 0.0
      %7499 = vmatpush1.xpose.msra.mxu0 0.0
      %7500 = vmatprep.subr.mxu0 0.0
      %7501 = vmatpush1.xpose.msra.mxu0 0.0
      %7502 = vmatprep.subr.mxu0 0.0
      %7503 = vmatpush1.xpose.msra.mxu0 0.0
      %7504 = vmatprep.subr.mxu0 0.0
      %7505 = vmatpush1.xpose.msra.mxu0 0.0
      %7506 = vmatprep.subr.mxu0 0.0
      %7507 = vmatpush1.xpose.msra.mxu0 0.0
      %7508 = vmatprep.subr.mxu0 0.0
      %7509 = vmatpush1.xpose.msra.mxu0 0.0
      %7510 = vmatprep.subr.mxu0 0.0
      %7511 = vmatpush1.xpose.msra.mxu0 0.0
      %7512 = vmatprep.subr.mxu0 0.0
      %7513 = vmatpush1.xpose.msra.mxu0 0.0
      %7514 = vmatprep.subr.mxu0 0.0
      %7515 = vmatpush1.xpose.msra.mxu0 0.0
      %7516 = vmatprep.subr.mxu0 0.0
      %7517 = vmatpush1.xpose.msra.mxu0 0.0
      %7518 = vmatprep.subr.mxu0 0.0
      %7519 = vmatpush1.xpose.msra.mxu0 0.0
      %7520 = vmatprep.subr.mxu0 0.0
      %7521 = vmatpush1.xpose.msra.mxu0 0.0
      %7522 = vmatprep.mubr.f32.mxu0 0.0
      %7523 = vmatmul.mubr.f32.gmra.mrb[0].mxu0 %v7444
      %v7524 = vpop.f32.mrb[0].mxu0
      %v7525 = vadd.f32 0.0, %v7524
      %v7526 = vpop.f32.mrb[0].mxu0
      %7527 = vmatprep.mubr.f32.mxu0 0.0
      %7528 = vmatmul.mubr.f32.gmra.mrb[0].mxu0 %v7447
      %v7529 = vpop.f32.mrb[0].mxu0
      %v7530 = vadd.f32 0.0, %v7529
      %v7531 = vpop.f32.mrb[0].mxu0
      %7532 = vmatprep.mubr.f32.mxu0 0.0
      %7533 = vmatmul.mubr.f32.gmra.mrb[0].mxu0 %v7450
      %v7534 = vpop.f32.mrb[0].mxu0
      %v7535 = vadd.f32 0.0, %v7534
      %v7536 = vpop.f32.mrb[0].mxu0
      %7537 = vmatprep.mubr.f32.mxu0 0.0
      %7538 = vmatmul.mubr.f32.gmra.mrb[0].mxu0 %v7453
      %v7539 = vpop.f32.mrb[0].mxu0
      %v7540 = vadd.f32 0.0, %v7539
      %v7541 = vpop.f32.mrb[0].mxu0
      %7542 = vdwg.mxu0
      %v7544 = vsel %vm1951, %v4612, 0
      %v7547 = vsel %vm1951, %v4613, 0
      %v7550 = vsel %vm1951, %v4614, 0
      %v7553 = vsel %vm1951, %v4615, 0
      %v7556 = vsel %vm1951, %v6864, 0
      %7558 = vmatprep.subr.mxu0 0.0
      %7559 = vmatpush1.xpose.msra.mxu0 %v7556
      %7560 = vmatprep.subr.mxu0 0.0
      %7561 = vmatpush1.xpose.msra.mxu0 0.0
      %7562 = vmatprep.subr.mxu0 0.0
      %7563 = vmatpush1.xpose.msra.mxu0 0.0
      %7564 = vmatprep.subr.mxu0 0.0
      %7565 = vmatpush1.xpose.msra.mxu0 0.0
      %7566 = vmatprep.subr.mxu0 0.0
      %7567 = vmatpush1.xpose.msra.mxu0 0.0
      %7568 = vmatprep.subr.mxu0 0.0
      %7569 = vmatpush1.xpose.msra.mxu0 0.0
      %7570 = vmatprep.subr.mxu0 0.0
      %7571 = vmatpush1.xpose.msra.mxu0 0.0
      %7572 = vmatprep.subr.mxu0 0.0
      %7573 = vmatpush1.xpose.msra.mxu0 0.0
      %7574 = vmatprep.subr.mxu0 0.0
      %7575 = vmatpush1.xpose.msra.mxu0 0.0
      %7576 = vmatprep.subr.mxu0 0.0
      %7577 = vmatpush1.xpose.msra.mxu0 0.0
      %7578 = vmatprep.subr.mxu0 0.0
      %7579 = vmatpush1.xpose.msra.mxu0 0.0
      %7580 = vmatprep.subr.mxu0 0.0
      %7581 = vmatpush1.xpose.msra.mxu0 0.0
      %7582 = vmatprep.subr.mxu0 0.0
      %7583 = vmatpush1.xpose.msra.mxu0 0.0
      %7584 = vmatprep.subr.mxu0 0.0
      %7585 = vmatpush1.xpose.msra.mxu0 0.0
      %7586 = vmatprep.subr.mxu0 0.0
      %7587 = vmatpush1.xpose.msra.mxu0 0.0
      %7588 = vmatprep.subr.mxu0 0.0
      %7589 = vmatpush1.xpose.msra.mxu0 0.0
      %7590 = vmatprep.subr.mxu0 0.0
      %7591 = vmatpush1.xpose.msra.mxu0 0.0
      %7592 = vmatprep.subr.mxu0 0.0
      %7593 = vmatpush1.xpose.msra.mxu0 0.0
      %7594 = vmatprep.subr.mxu0 0.0
      %7595 = vmatpush1.xpose.msra.mxu0 0.0
      %7596 = vmatprep.subr.mxu0 0.0
      %7597 = vmatpush1.xpose.msra.mxu0 0.0
      %7598 = vmatprep.subr.mxu0 0.0
      %7599 = vmatpush1.xpose.msra.mxu0 0.0
      %7600 = vmatprep.subr.mxu0 0.0
      %7601 = vmatpush1.xpose.msra.mxu0 0.0
      %7602 = vmatprep.subr.mxu0 0.0
      %7603 = vmatpush1.xpose.msra.mxu0 0.0
      %7604 = vmatprep.subr.mxu0 0.0
      %7605 = vmatpush1.xpose.msra.mxu0 0.0
      %7606 = vmatprep.subr.mxu0 0.0
      %7607 = vmatpush1.xpose.msra.mxu0 0.0
      %7608 = vmatprep.subr.mxu0 0.0
      %7609 = vmatpush1.xpose.msra.mxu0 0.0
      %7610 = vmatprep.subr.mxu0 0.0
      %7611 = vmatpush1.xpose.msra.mxu0 0.0
      %7612 = vmatprep.subr.mxu0 0.0
      %7613 = vmatpush1.xpose.msra.mxu0 0.0
      %7614 = vmatprep.subr.mxu0 0.0
      %7615 = vmatpush1.xpose.msra.mxu0 0.0
      %7616 = vmatprep.subr.mxu0 0.0
      %7617 = vmatpush1.xpose.msra.mxu0 0.0
      %7618 = vmatprep.subr.mxu0 0.0
      %7619 = vmatpush1.xpose.msra.mxu0 0.0
      %7620 = vmatprep.subr.mxu0 0.0
      %7621 = vmatpush1.xpose.msra.mxu0 0.0
      %7622 = vmatprep.mubr.f32.mxu0 0.0
      %7623 = vmatmul.mubr.f32.gmra.mrb[0].mxu0 %v7544
      %v7624 = vpop.f32.mrb[0].mxu0
      %v7625 = vadd.f32 0.0, %v7624
      %v7626 = vpop.f32.mrb[0].mxu0
      %7627 = vmatprep.mubr.f32.mxu0 0.0
      %7628 = vmatmul.mubr.f32.gmra.mrb[0].mxu0 %v7547
      %v7629 = vpop.f32.mrb[0].mxu0
      %v7630 = vadd.f32 0.0, %v7629
      %v7631 = vpop.f32.mrb[0].mxu0
      %7632 = vmatprep.mubr.f32.mxu0 0.0
      %7633 = vmatmul.mubr.f32.gmra.mrb[0].mxu0 %v7550
      %v7634 = vpop.f32.mrb[0].mxu0
      %v7635 = vadd.f32 0.0, %v7634
      %v7636 = vpop.f32.mrb[0].mxu0
      %7637 = vmatprep.mubr.f32.mxu0 0.0
      %7638 = vmatmul.mubr.f32.gmra.mrb[0].mxu0 %v7553
      %v7639 = vpop.f32.mrb[0].mxu0
      %v7640 = vadd.f32 0.0, %v7639
      %v7641 = vpop.f32.mrb[0].mxu0
      %7642 = vdwg.mxu0
      %v7644 = vsel %vm1951, %v4616, 0
      %v7647 = vsel %vm1951, %v4617, 0
      %v7650 = vsel %vm1951, %v4618, 0
      %v7653 = vsel %vm1951, %v4619, 0
      %v7656 = vsel %vm1951, %v6940, 0
      %7658 = vmatprep.subr.mxu0 0.0
      %7659 = vmatpush1.xpose.msra.mxu0 %v7656
      %7660 = vmatprep.subr.mxu0 0.0
      %7661 = vmatpush1.xpose.msra.mxu0 0.0
      %7662 = vmatprep.subr.mxu0 0.0
      %7663 = vmatpush1.xpose.msra.mxu0 0.0
      %7664 = vmatprep.subr.mxu0 0.0
      %7665 = vmatpush1.xpose.msra.mxu0 0.0
      %7666 = vmatprep.subr.mxu0 0.0
      %7667 = vmatpush1.xpose.msra.mxu0 0.0
      %7668 = vmatprep.subr.mxu0 0.0
      %7669 = vmatpush1.xpose.msra.mxu0 0.0
      %7670 = vmatprep.subr.mxu0 0.0
      %7671 = vmatpush1.xpose.msra.mxu0 0.0
      %7672 = vmatprep.subr.mxu0 0.0
      %7673 = vmatpush1.xpose.msra.mxu0 0.0
      %7674 = vmatprep.subr.mxu0 0.0
      %7675 = vmatpush1.xpose.msra.mxu0 0.0
      %7676 = vmatprep.subr.mxu0 0.0
      %7677 = vmatpush1.xpose.msra.mxu0 0.0
      %7678 = vmatprep.subr.mxu0 0.0
      %7679 = vmatpush1.xpose.msra.mxu0 0.0
      %7680 = vmatprep.subr.mxu0 0.0
      %7681 = vmatpush1.xpose.msra.mxu0 0.0
      %7682 = vmatprep.subr.mxu0 0.0
      %7683 = vmatpush1.xpose.msra.mxu0 0.0
      %7684 = vmatprep.subr.mxu0 0.0
      %7685 = vmatpush1.xpose.msra.mxu0 0.0
      %7686 = vmatprep.subr.mxu0 0.0
      %7687 = vmatpush1.xpose.msra.mxu0 0.0
      %7688 = vmatprep.subr.mxu0 0.0
      %7689 = vmatpush1.xpose.msra.mxu0 0.0
      %7690 = vmatprep.subr.mxu0 0.0
      %7691 = vmatpush1.xpose.msra.mxu0 0.0
      %7692 = vmatprep.subr.mxu0 0.0
      %7693 = vmatpush1.xpose.msra.mxu0 0.0
      %7694 = vmatprep.subr.mxu0 0.0
      %7695 = vmatpush1.xpose.msra.mxu0 0.0
      %7696 = vmatprep.subr.mxu0 0.0
      %7697 = vmatpush1.xpose.msra.mxu0 0.0
      %7698 = vmatprep.subr.mxu0 0.0
      %7699 = vmatpush1.xpose.msra.mxu0 0.0
      %7700 = vmatprep.subr.mxu0 0.0
      %7701 = vmatpush1.xpose.msra.mxu0 0.0
      %7702 = vmatprep.subr.mxu0 0.0
      %7703 = vmatpush1.xpose.msra.mxu0 0.0
      %7704 = vmatprep.subr.mxu0 0.0
      %7705 = vmatpush1.xpose.msra.mxu0 0.0
      %7706 = vmatprep.subr.mxu0 0.0
      %7707 = vmatpush1.xpose.msra.mxu0 0.0
      %7708 = vmatprep.subr.mxu0 0.0
      %7709 = vmatpush1.xpose.msra.mxu0 0.0
      %7710 = vmatprep.subr.mxu0 0.0
      %7711 = vmatpush1.xpose.msra.mxu0 0.0
      %7712 = vmatprep.subr.mxu0 0.0
      %7713 = vmatpush1.xpose.msra.mxu0 0.0
      %7714 = vmatprep.subr.mxu0 0.0
      %7715 = vmatpush1.xpose.msra.mxu0 0.0
      %7716 = vmatprep.subr.mxu0 0.0
      %7717 = vmatpush1.xpose.msra.mxu0 0.0
      %7718 = vmatprep.subr.mxu0 0.0
      %7719 = vmatpush1.xpose.msra.mxu0 0.0
      %7720 = vmatprep.subr.mxu0 0.0
      %7721 = vmatpush1.xpose.msra.mxu0 0.0
      %7722 = vmatprep.mubr.f32.mxu0 0.0
      %7723 = vmatmul.mubr.f32.gmra.mrb[0].mxu0 %v7644
      %v7724 = vpop.f32.mrb[0].mxu0
      %v7725 = vadd.f32 0.0, %v7724
      %v7726 = vpop.f32.mrb[0].mxu0
      %7727 = vmatprep.mubr.f32.mxu0 0.0
      %7728 = vmatmul.mubr.f32.gmra.mrb[0].mxu0 %v7647
      %v7729 = vpop.f32.mrb[0].mxu0
      %v7730 = vadd.f32 0.0, %v7729
      %v7731 = vpop.f32.mrb[0].mxu0
      %7732 = vmatprep.mubr.f32.mxu0 0.0
      %7733 = vmatmul.mubr.f32.gmra.mrb[0].mxu0 %v7650
      %v7734 = vpop.f32.mrb[0].mxu0
      %v7735 = vadd.f32 0.0, %v7734
      %v7736 = vpop.f32.mrb[0].mxu0
      %7737 = vmatprep.mubr.f32.mxu0 0.0
      %7738 = vmatmul.mubr.f32.gmra.mrb[0].mxu0 %v7653
      %v7739 = vpop.f32.mrb[0].mxu0
      %v7740 = vadd.f32 0.0, %v7739
      %v7741 = vpop.f32.mrb[0].mxu0
      %7742 = vdwg.mxu0
      %v7743 = vsel %vm4444, %v7025, 0.0
      %v7744 = vsel %vm4444, %v7125, 0.0
      %v7745 = vadd.f32 %v7743, %v7744
      %v7746 = vsel %vm4444, %v7225, 0.0
      %v7747 = vadd.f32 %v7745, %v7746
      %v7748 = vsel %vm4444, %v7325, 0.0
      %v7749 = vadd.f32 %v7747, %v7748
      %v7750 = vsel %vm4444, %v7425, 0.0
      %v7751 = vadd.f32 %v7749, %v7750
      %v7752 = vsel %vm4444, %v7525, 0.0
      %v7753 = vadd.f32 %v7751, %v7752
      %v7754 = vsel %vm4444, %v7625, 0.0
      %v7755 = vadd.f32 %v7753, %v7754
      %v7756 = vsel %vm4444, %v7725, 0.0
      %v7757 = vadd.f32 %v7755, %v7756
      %v7758 = vsel %vm4444, %v7030, 0.0
      %v7759 = vsel %vm4444, %v7130, 0.0
      %v7760 = vadd.f32 %v7758, %v7759
      %v7761 = vsel %vm4444, %v7230, 0.0
      %v7762 = vadd.f32 %v7760, %v7761
      %v7763 = vsel %vm4444, %v7330, 0.0
      %v7764 = vadd.f32 %v7762, %v7763
      %v7765 = vsel %vm4444, %v7430, 0.0
      %v7766 = vadd.f32 %v7764, %v7765
      %v7767 = vsel %vm4444, %v7530, 0.0
      %v7768 = vadd.f32 %v7766, %v7767
      %v7769 = vsel %vm4444, %v7630, 0.0
      %v7770 = vadd.f32 %v7768, %v7769
      %v7771 = vsel %vm4444, %v7730, 0.0
      %v7772 = vadd.f32 %v7770, %v7771
      %v7773 = vsel %vm4444, %v7035, 0.0
      %v7774 = vsel %vm4444, %v7135, 0.0
      %v7775 = vadd.f32 %v7773, %v7774
      %v7776 = vsel %vm4444, %v7235, 0.0
      %v7777 = vadd.f32 %v7775, %v7776
      %v7778 = vsel %vm4444, %v7335, 0.0
      %v7779 = vadd.f32 %v7777, %v7778
      %v7780 = vsel %vm4444, %v7435, 0.0
      %v7781 = vadd.f32 %v7779, %v7780
      %v7782 = vsel %vm4444, %v7535, 0.0
      %v7783 = vadd.f32 %v7781, %v7782
      %v7784 = vsel %vm4444, %v7635, 0.0
      %v7785 = vadd.f32 %v7783, %v7784
      %v7786 = vsel %vm4444, %v7735, 0.0
      %v7787 = vadd.f32 %v7785, %v7786
      %v7788 = vsel %vm4444, %v7040, 0.0
      %v7789 = vsel %vm4444, %v7140, 0.0
      %v7790 = vadd.f32 %v7788, %v7789
      %v7791 = vsel %vm4444, %v7240, 0.0
      %v7792 = vadd.f32 %v7790, %v7791
      %v7793 = vsel %vm4444, %v7340, 0.0
      %v7794 = vadd.f32 %v7792, %v7793
      %v7795 = vsel %vm4444, %v7440, 0.0
      %v7796 = vadd.f32 %v7794, %v7795
      %v7797 = vsel %vm4444, %v7540, 0.0
      %v7798 = vadd.f32 %v7796, %v7797
      %v7799 = vsel %vm4444, %v7640, 0.0
      %v7800 = vadd.f32 %v7798, %v7799
      %v7801 = vsel %vm4444, %v7740, 0.0
      %v7802 = vadd.f32 %v7800, %v7801
      %7803 = vadd.xlane.f32.xlu0 %v4445
      %v7804 = vpop.xlane.xlu0 %7803
      %7805 = vadd.xlane.f32.xlu0 %v4446
      %v7806 = vpop.xlane.xlu0 %7805
      %v7807 = vmax.f32 %v7804, 1e-05
      %v7808 = vmax.f32 %v7806, 1e-05
      %v7809 = vrcp.pop %v7807
      %v7810 = vmul.f32 %v4442, %v7809
      %v7811 = vrcp.pop %v7808
      %v7812 = vmul.f32 %v4443, %v7811
      %v7814 = vsel %vm4444, %v7757, 0
      %v7817 = vsel %vm4444, %v7772, 0
      %v7820 = vsel %vm4444, %v7787, 0
      %v7823 = vsel %vm4444, %v7802, 0
      %v7826 = vsel %vm4444, %v7810, 0
      %v7829 = vsel %vm4444, %v7812, 0
      %7831 = vmatprep.subr.mxu0 0.0
      %7832 = vmatpush1.xpose.msra.mxu0 %v7826
      %7833 = vmatprep.subr.mxu0 0.0
      %7834 = vmatpush1.xpose.msra.mxu0 %v7829
      %7835 = vmatprep.subr.mxu0 0.0
      %7836 = vmatpush1.xpose.msra.mxu0 0.0
      %7837 = vmatprep.subr.mxu0 0.0
      %7838 = vmatpush1.xpose.msra.mxu0 0.0
      %7839 = vmatprep.subr.mxu0 0.0
      %7840 = vmatpush1.xpose.msra.mxu0 0.0
      %7841 = vmatprep.subr.mxu0 0.0
      %7842 = vmatpush1.xpose.msra.mxu0 0.0
      %7843 = vmatprep.subr.mxu0 0.0
      %7844 = vmatpush1.xpose.msra.mxu0 0.0
      %7845 = vmatprep.subr.mxu0 0.0
      %7846 = vmatpush1.xpose.msra.mxu0 0.0
      %7847 = vmatprep.subr.mxu0 0.0
      %7848 = vmatpush1.xpose.msra.mxu0 0.0
      %7849 = vmatprep.subr.mxu0 0.0
      %7850 = vmatpush1.xpose.msra.mxu0 0.0
      %7851 = vmatprep.subr.mxu0 0.0
      %7852 = vmatpush1.xpose.msra.mxu0 0.0
      %7853 = vmatprep.subr.mxu0 0.0
      %7854 = vmatpush1.xpose.msra.mxu0 0.0
      %7855 = vmatprep.subr.mxu0 0.0
      %7856 = vmatpush1.xpose.msra.mxu0 0.0
      %7857 = vmatprep.subr.mxu0 0.0
      %7858 = vmatpush1.xpose.msra.mxu0 0.0
      %7859 = vmatprep.subr.mxu0 0.0
      %7860 = vmatpush1.xpose.msra.mxu0 0.0
      %7861 = vmatprep.subr.mxu0 0.0
      %7862 = vmatpush1.xpose.msra.mxu0 0.0
      %7863 = vmatprep.subr.mxu0 0.0
      %7864 = vmatpush1.xpose.msra.mxu0 0.0
      %7865 = vmatprep.subr.mxu0 0.0
      %7866 = vmatpush1.xpose.msra.mxu0 0.0
      %7867 = vmatprep.subr.mxu0 0.0
      %7868 = vmatpush1.xpose.msra.mxu0 0.0
      %7869 = vmatprep.subr.mxu0 0.0
      %7870 = vmatpush1.xpose.msra.mxu0 0.0
      %7871 = vmatprep.subr.mxu0 0.0
      %7872 = vmatpush1.xpose.msra.mxu0 0.0
      %7873 = vmatprep.subr.mxu0 0.0
      %7874 = vmatpush1.xpose.msra.mxu0 0.0
      %7875 = vmatprep.subr.mxu0 0.0
      %7876 = vmatpush1.xpose.msra.mxu0 0.0
      %7877 = vmatprep.subr.mxu0 0.0
      %7878 = vmatpush1.xpose.msra.mxu0 0.0
      %7879 = vmatprep.subr.mxu0 0.0
      %7880 = vmatpush1.xpose.msra.mxu0 0.0
      %7881 = vmatprep.subr.mxu0 0.0
      %7882 = vmatpush1.xpose.msra.mxu0 0.0
      %7883 = vmatprep.subr.mxu0 0.0
      %7884 = vmatpush1.xpose.msra.mxu0 0.0
      %7885 = vmatprep.subr.mxu0 0.0
      %7886 = vmatpush1.xpose.msra.mxu0 0.0
      %7887 = vmatprep.subr.mxu0 0.0
      %7888 = vmatpush1.xpose.msra.mxu0 0.0
      %7889 = vmatprep.subr.mxu0 0.0
      %7890 = vmatpush1.xpose.msra.mxu0 0.0
      %7891 = vmatprep.subr.mxu0 0.0
      %7892 = vmatpush1.xpose.msra.mxu0 0.0
      %7893 = vmatprep.subr.mxu0 0.0
      %7894 = vmatpush1.xpose.msra.mxu0 0.0
      %7895 = vmatprep.mubr.f32.mxu0 0.0
      %7896 = vmatmul.mubr.f32.gmra.mrb[0].mxu0 %v7814
      %v7897 = vpop.f32.mrb[0].mxu0
      %v7898 = vadd.f32 0.0, %v7897
      %v7899 = vpop.f32.mrb[0].mxu0
      %7900 = vmatprep.mubr.f32.mxu0 0.0
      %7901 = vmatmul.mubr.f32.gmra.mrb[0].mxu0 %v7817
      %v7902 = vpop.f32.mrb[0].mxu0
      %v7903 = vadd.f32 0.0, %v7902
      %v7904 = vpop.f32.mrb[0].mxu0
      %7905 = vmatprep.mubr.f32.mxu0 0.0
      %7906 = vmatmul.mubr.f32.gmra.mrb[0].mxu0 %v7820
      %v7907 = vpop.f32.mrb[0].mxu0
      %v7908 = vadd.f32 0.0, %v7907
      %v7909 = vpop.f32.mrb[0].mxu0
      %7910 = vmatprep.mubr.f32.mxu0 0.0
      %7911 = vmatmul.mubr.f32.gmra.mrb[0].mxu0 %v7823
      %v7912 = vpop.f32.mrb[0].mxu0
      %v7913 = vadd.f32 0.0, %v7912
      %v7914 = vpop.f32.mrb[0].mxu0
      %7915 = vdwg.mxu0
      %v7916 = vadd.f32 %v4438, %v7898
      %v7917 = vadd.f32 %v4439, %v7903
      %v7918 = vadd.f32 %v4440, %v7908
      %v7919 = vadd.f32 %v4441, %v7913
      %7920 = vset.pattern.permute.xlu0 2
      %7921 = vperm.xlu0 %7920, %v525
      %v7922 = vpop.permute.xlu0 %7921
      %7924 = vset.pattern.permute.xlu0 2
      %7925 = vperm.xlu0 %7924, %v526
      %v7926 = vpop.permute.xlu0 %7925
      %7928 = vset.pattern.permute.xlu0 2
      %7929 = vperm.xlu0 %7928, %v527
      %v7930 = vpop.permute.xlu0 %7929
      %7932 = vset.pattern.permute.xlu0 2
      %7933 = vperm.xlu0 %7932, %v528
      %v7934 = vpop.permute.xlu0 %7933
      %v7936 = vadd.f32 %v7916, %v7922
      %v7937 = vadd.f32 %v7917, %v7926
      %v7938 = vadd.f32 %v7918, %v7930
      %v7939 = vadd.f32 %v7919, %v7934
      %v7940 = vld [vmem:[%s12] sm:$0xff]
      %v7941 = vld [vmem:[%s13] sm:$0xff]
      %7943 = vset.pattern.permute.xlu0 0
      %7944 = vperm.xlu0 %7943, %v7941
      %v7945 = vpop.permute.xlu0 %7944
      %v7948 = vsel %vm558, %v7940, 0
      %7950 = vmatprep.subr.mxu0 0.0
      %7951 = vmatpush1.msra.mxu0 %v7936
      %7952 = vmatprep.subr.mxu0 0.0
      %7953 = vmatpush1.msra.mxu0 %v7937
      %7954 = vmatprep.subr.mxu0 0.0
      %7955 = vmatpush1.msra.mxu0 %v7938
      %7956 = vmatprep.subr.mxu0 0.0
      %7957 = vmatpush1.msra.mxu0 %v7939
      %7958 = vmatprep.subr.mxu0 0.0
      %7959 = vmatpush1.msra.mxu0 0.0
      %7960 = vmatprep.subr.mxu0 0.0
      %7961 = vmatpush1.msra.mxu0 0.0
      %7962 = vmatprep.subr.mxu0 0.0
      %7963 = vmatpush1.msra.mxu0 0.0
      %7964 = vmatprep.subr.mxu0 0.0
      %7965 = vmatpush1.msra.mxu0 0.0
      %7966 = vmatprep.subr.mxu0 0.0
      %7967 = vmatpush1.msra.mxu0 0.0
      %7968 = vmatprep.subr.mxu0 0.0
      %7969 = vmatpush1.msra.mxu0 0.0
      %7970 = vmatprep.subr.mxu0 0.0
      %7971 = vmatpush1.msra.mxu0 0.0
      %7972 = vmatprep.subr.mxu0 0.0
      %7973 = vmatpush1.msra.mxu0 0.0
      %7974 = vmatprep.subr.mxu0 0.0
      %7975 = vmatpush1.msra.mxu0 0.0
      %7976 = vmatprep.subr.mxu0 0.0
      %7977 = vmatpush1.msra.mxu0 0.0
      %7978 = vmatprep.subr.mxu0 0.0
      %7979 = vmatpush1.msra.mxu0 0.0
      %7980 = vmatprep.subr.mxu0 0.0
      %7981 = vmatpush1.msra.mxu0 0.0
      %7982 = vmatprep.subr.mxu0 0.0
      %7983 = vmatpush1.msra.mxu0 0.0
      %7984 = vmatprep.subr.mxu0 0.0
      %7985 = vmatpush1.msra.mxu0 0.0
      %7986 = vmatprep.subr.mxu0 0.0
      %7987 = vmatpush1.msra.mxu0 0.0
      %7988 = vmatprep.subr.mxu0 0.0
      %7989 = vmatpush1.msra.mxu0 0.0
      %7990 = vmatprep.subr.mxu0 0.0
      %7991 = vmatpush1.msra.mxu0 0.0
      %7992 = vmatprep.subr.mxu0 0.0
      %7993 = vmatpush1.msra.mxu0 0.0
      %7994 = vmatprep.subr.mxu0 0.0
      %7995 = vmatpush1.msra.mxu0 0.0
      %7996 = vmatprep.subr.mxu0 0.0
      %7997 = vmatpush1.msra.mxu0 0.0
      %7998 = vmatprep.subr.mxu0 0.0
      %7999 = vmatpush1.msra.mxu0 0.0
      %8000 = vmatprep.subr.mxu0 0.0
      %8001 = vmatpush1.msra.mxu0 0.0
      %8002 = vmatprep.subr.mxu0 0.0
      %8003 = vmatpush1.msra.mxu0 0.0
      %8004 = vmatprep.subr.mxu0 0.0
      %8005 = vmatpush1.msra.mxu0 0.0
      %8006 = vmatprep.subr.mxu0 0.0
      %8007 = vmatpush1.msra.mxu0 0.0
      %8008 = vmatprep.subr.mxu0 0.0
      %8009 = vmatpush1.msra.mxu0 0.0
      %8010 = vmatprep.subr.mxu0 0.0
      %8011 = vmatpush1.msra.mxu0 0.0
      %8012 = vmatprep.subr.mxu0 0.0
      %8013 = vmatpush1.msra.mxu0 0.0
      %8014 = vmatprep.mubr.f32.mxu0 0.0
      %8015 = vmatmul.mubr.f32.gmra.mrb[0].mxu0 %v7948
      %v8016 = vpop.f32.mrb[0].mxu0
      %v8017 = vadd.f32 %v7945, %v8016
      %v8018 = vpop.f32.mrb[0].mxu0
      %8019 = vdwg.mxu0
      %8020 = vxpose.xlu0.b32.start [1/16] %v8017, 128
      %8021 = vxpose.xlu0.b32.cont [2/16] 0.0, 128
      %8022 = vxpose.xlu0.b32.cont [3/16] 0.0, 128
      %8023 = vxpose.xlu0.b32.cont [4/16] 0.0, 128
      %8024 = vxpose.xlu0.b32.cont [5/16] 0.0, 128
      %8025 = vxpose.xlu0.b32.cont [6/16] 0.0, 128
      %8026 = vxpose.xlu0.b32.cont [7/16] 0.0, 128
      %8027 = vxpose.xlu0.b32.cont [8/16] 0.0, 128
      %8028 = vxpose.xlu0.b32.cont [9/16] 0.0, 128
      %8029 = vxpose.xlu0.b32.cont [10/16] 0.0, 128
      %8030 = vxpose.xlu0.b32.cont [11/16] 0.0, 128
      %8031 = vxpose.xlu0.b32.cont [12/16] 0.0, 128
      %8032 = vxpose.xlu0.b32.cont [13/16] 0.0, 128
      %8033 = vxpose.xlu0.b32.cont [14/16] 0.0, 128
      %8034 = vxpose.xlu0.b32.cont [15/16] 0.0, 128
      %8035 = vxpose.xlu0.b32.end [16/16] 0.0, 128
      %v8036 = vpop.trf.xlu0
      %v8037 = vpop.trf.xlu0
      %v8038 = vpop.trf.xlu0
      %v8039 = vpop.trf.xlu0
      %v8040 = vpop.trf.xlu0
      %v8041 = vpop.trf.xlu0
      %v8042 = vpop.trf.xlu0
      %v8043 = vpop.trf.xlu0
      %v8044 = vpop.trf.xlu0
      %v8045 = vpop.trf.xlu0
      %v8046 = vpop.trf.xlu0
      %v8047 = vpop.trf.xlu0
      %v8048 = vpop.trf.xlu0
      %v8049 = vpop.trf.xlu0
      %v8050 = vpop.trf.xlu0
      %v8051 = vpop.trf.xlu0
      %vm8052 = vcmask 15360
      %v8053 = vsel %vm8052, %v8036, -inf
      %8054 = vmax.xlane.f32.xlu0 %v8053
      %v8055 = vpop.xlane.xlu0 %8054
      %v8056 = vsel %vm8052, %v8037, -inf
      %8057 = vmax.xlane.f32.xlu0 %v8056
      %v8058 = vpop.xlane.xlu0 %8057
      %v8059 = vsub.f32 %v8036, %v8055
      %v8060 = vsub.f32 %v8037, %v8058
      %v8061 = vmul.f32 %v8059, 1.442695
      %v8062 = vpow.pop %v8061
      %v8063 = vmul.f32 %v8060, 1.442695
      %v8064 = vpow.pop %v8063
      %v8065 = vsel %vm8052, %v8062, 0.0
      %8066 = vadd.xlane.f32.xlu0 %v8065
      %v8067 = vpop.xlane.xlu0 %8066
      %v8068 = vsel %vm8052, %v8064, 0.0
      %8069 = vadd.xlane.f32.xlu0 %v8068
      %v8070 = vpop.xlane.xlu0 %8069
      %v8071 = vrcp.pop %v8067
      %v8072 = vmul.f32 %v8062, %v8071
      %v8073 = vrcp.pop %v8070
      %v8074 = vmul.f32 %v8064, %v8073
      %8076 = vset.pattern.permute.xlu0 0
      %8077 = vperm.xlu0 %8076, %v8072
      %v8078 = vpop.permute.xlu0 %8077
      %8081 = vset.pattern.permute.xlu0 0
      %8082 = vperm.xlu0 %8081, %v8074
      %v8083 = vpop.permute.xlu0 %8082
      %v8085 = vmul.f32 %v8036, %v8078
      %v8086 = vmul.f32 %v8037, %v8083
      %8087 = vset.pattern.permute.xlu0 1
      %8088 = vperm.xlu0 %8087, %v8072
      %v8089 = vpop.permute.xlu0 %8088
      %8091 = vset.pattern.permute.xlu0 1
      %8092 = vperm.xlu0 %8091, %v8074
      %v8093 = vpop.permute.xlu0 %8092
      %v8095 = vmul.f32 %v8036, %v8089
      %v8096 = vmul.f32 %v8037, %v8093
      %v8097 = vlaneseq
      %v8098 = vshrl.u32 %v8097, 7
      %v8099 = vadd.s32 %v8098, 8
      %v8100 = vcvt.s32.f32 %v8098
      %v8101 = vcvt.s32.f32 %v8099
      %vm8102 = vcmask 64536
      %v8103 = vsel %vm8102, %v8085, -inf
      %v8104 = vsel %vm8102, %v8086, -inf
      %v8105 = vmax.f32 %v8103, %v8104
      %v8106 = vrot.slane %v8105, 4
      %v8107 = vmax.f32 %v8105, %v8106
      %v8108 = vrot.slane %v8107, 2
      %v8109 = vmax.f32 %v8107, %v8108
      %v8110 = vrot.slane %v8109, 1
      %v8111 = vmax.f32 %v8109, %v8110
      %v8112 = vadd.f32 %v8111, 0.0
      %vm8113 = vcmp.eq.f32.partialorder %v8085, %v8111
      %vm8114 = vcmp.eq.f32.partialorder %v8086, %v8111
      %v8115 = vsel %vm8113, %v8100, 16.0
      %v8116 = vsel %vm8114, %v8101, 16.0
      %v8117 = vsel %vm8102, %v8115, inf
      %v8118 = vsel %vm8102, %v8116, inf
      %v8119 = vmin.f32 %v8117, %v8118
      %v8120 = vrot.slane %v8119, 4
      %v8121 = vmin.f32 %v8119, %v8120
      %v8122 = vrot.slane %v8121, 2
      %v8123 = vmin.f32 %v8121, %v8122
      %v8124 = vrot.slane %v8123, 1
      %v8125 = vmin.f32 %v8123, %v8124
      %vm8126 = vcmp.eq.f32.partialorder %v8100, %v8125
      %vm8127 = vcmp.eq.f32.partialorder %v8101, %v8125
      %v8128 = vsel %vm8126, -1e+30, %v8085
      %v8129 = vsel %vm8127, -1e+30, %v8086
      %v8130 = vsel %vm8102, %v8128, -inf
      %v8131 = vsel %vm8102, %v8129, -inf
      %v8132 = vmax.f32 %v8130, %v8131
      %v8133 = vrot.slane %v8132, 4
      %v8134 = vmax.f32 %v8132, %v8133
      %v8135 = vrot.slane %v8134, 2
      %v8136 = vmax.f32 %v8134, %v8135
      %v8137 = vrot.slane %v8136, 1
      %v8138 = vmax.f32 %v8136, %v8137
      %v8139 = vadd.f32 %v8112, %v8138
      %v8140 = vmul.f32 %v8139, 0.5
      %v8141 = vsel %vm8102, %v8140, -inf
      %8142 = vmax.xlane.f32.xlu0 %v8141
      %v8143 = vpop.xlane.xlu0 %8142
      %v8144 = vsub.f32 %v8140, %v8143
      %v8145 = vmul.f32 %v8144, 1.442695
      %v8146 = vpow.pop %v8145
      %8148 = vrot.lane.b32.xlu0 %v8146, 125
      %v8149 = vpop.permute.xlu0 %8148
      %vm8151 = vcmask 39936
      %v8152 = vsel %vm8151, %v8149, 0.0
      %8153 = vadd.xlane.f32.xlu0 %v8152
      %v8154 = vpop.xlane.xlu0 %8153
      %v8155 = vrcp.pop %v8154
      %v8156 = vmul.f32 %v8146, %v8155
      %v8157 = vsel %vm8102, %v8095, -inf
      %v8158 = vsel %vm8102, %v8096, -inf
      %v8159 = vmax.f32 %v8157, %v8158
      %v8160 = vrot.slane %v8159, 4
      %v8161 = vmax.f32 %v8159, %v8160
      %v8162 = vrot.slane %v8161, 2
      %v8163 = vmax.f32 %v8161, %v8162
      %v8164 = vrot.slane %v8163, 1
      %v8165 = vmax.f32 %v8163, %v8164
      %v8166 = vadd.f32 %v8165, 0.0
      %vm8167 = vcmp.eq.f32.partialorder %v8095, %v8165
      %vm8168 = vcmp.eq.f32.partialorder %v8096, %v8165
      %v8169 = vsel %vm8167, %v8100, 16.0
      %v8170 = vsel %vm8168, %v8101, 16.0
      %v8171 = vsel %vm8102, %v8169, inf
      %v8172 = vsel %vm8102, %v8170, inf
      %v8173 = vmin.f32 %v8171, %v8172
      %v8174 = vrot.slane %v8173, 4
      %v8175 = vmin.f32 %v8173, %v8174
      %v8176 = vrot.slane %v8175, 2
      %v8177 = vmin.f32 %v8175, %v8176
      %v8178 = vrot.slane %v8177, 1
      %v8179 = vmin.f32 %v8177, %v8178
      %vm8180 = vcmp.eq.f32.partialorder %v8100, %v8179
      %vm8181 = vcmp.eq.f32.partialorder %v8101, %v8179
      %v8182 = vsel %vm8180, -1e+30, %v8095
      %v8183 = vsel %vm8181, -1e+30, %v8096
      %v8184 = vsel %vm8102, %v8182, -inf
      %v8185 = vsel %vm8102, %v8183, -inf
      %v8186 = vmax.f32 %v8184, %v8185
      %v8187 = vrot.slane %v8186, 4
      %v8188 = vmax.f32 %v8186, %v8187
      %v8189 = vrot.slane %v8188, 2
      %v8190 = vmax.f32 %v8188, %v8189
      %v8191 = vrot.slane %v8190, 1
      %v8192 = vmax.f32 %v8190, %v8191
      %v8193 = vadd.f32 %v8166, %v8192
      %vm8194 = vcmp.eq.f32.partialorder %v8182, %v8192
      %vm8195 = vcmp.eq.f32.partialorder %v8183, %v8192
      %v8196 = vsel %vm8194, %v8100, 16.0
      %v8197 = vsel %vm8195, %v8101, 16.0
      %v8198 = vsel %vm8102, %v8196, inf
      %v8199 = vsel %vm8102, %v8197, inf
      %v8200 = vmin.f32 %v8198, %v8199
      %v8201 = vrot.slane %v8200, 4
      %v8202 = vmin.f32 %v8200, %v8201
      %v8203 = vrot.slane %v8202, 2
      %v8204 = vmin.f32 %v8202, %v8203
      %v8205 = vrot.slane %v8204, 1
      %v8206 = vmin.f32 %v8204, %v8205
      %vm8207 = vcmp.eq.f32.partialorder %v8100, %v8206
      %vm8208 = vcmp.eq.f32.partialorder %v8101, %v8206
      %v8209 = vsel %vm8207, -1e+30, %v8182
      %v8210 = vsel %vm8208, -1e+30, %v8183
      %v8211 = vsel %vm8102, %v8209, -inf
      %v8212 = vsel %vm8102, %v8210, -inf
      %v8213 = vmax.f32 %v8211, %v8212
      %v8214 = vrot.slane %v8213, 4
      %v8215 = vmax.f32 %v8213, %v8214
      %v8216 = vrot.slane %v8215, 2
      %v8217 = vmax.f32 %v8215, %v8216
      %v8218 = vrot.slane %v8217, 1
      %v8219 = vmax.f32 %v8217, %v8218
      %v8220 = vadd.f32 %v8193, %v8219
      %vm8221 = vcmp.eq.f32.partialorder %v8209, %v8219
      %vm8222 = vcmp.eq.f32.partialorder %v8210, %v8219
      %v8223 = vsel %vm8221, %v8100, 16.0
      %v8224 = vsel %vm8222, %v8101, 16.0
      %v8225 = vsel %vm8102, %v8223, inf
      %v8226 = vsel %vm8102, %v8224, inf
      %v8227 = vmin.f32 %v8225, %v8226
      %v8228 = vrot.slane %v8227, 4
      %v8229 = vmin.f32 %v8227, %v8228
      %v8230 = vrot.slane %v8229, 2
      %v8231 = vmin.f32 %v8229, %v8230
      %v8232 = vrot.slane %v8231, 1
      %v8233 = vmin.f32 %v8231, %v8232
      %vm8234 = vcmp.eq.f32.partialorder %v8100, %v8233
      %vm8235 = vcmp.eq.f32.partialorder %v8101, %v8233
      %v8236 = vsel %vm8234, -1e+30, %v8209
      %v8237 = vsel %vm8235, -1e+30, %v8210
      %v8238 = vsel %vm8102, %v8236, -inf
      %v8239 = vsel %vm8102, %v8237, -inf
      %v8240 = vmax.f32 %v8238, %v8239
      %v8241 = vrot.slane %v8240, 4
      %v8242 = vmax.f32 %v8240, %v8241
      %v8243 = vrot.slane %v8242, 2
      %v8244 = vmax.f32 %v8242, %v8243
      %v8245 = vrot.slane %v8244, 1
      %v8246 = vmax.f32 %v8244, %v8245
      %v8247 = vadd.f32 %v8220, %v8246
      %v8248 = vmul.f32 %v8247, 0.25
      %v8249 = vsel %vm8102, %v8248, -inf
      %8250 = vmax.xlane.f32.xlu0 %v8249
      %v8251 = vpop.xlane.xlu0 %8250
      %v8252 = vsub.f32 %v8248, %v8251
      %v8253 = vmul.f32 %v8252, 1.442695
      %v8254 = vpow.pop %v8253
      %8256 = vrot.lane.b32.xlu0 %v8254, 125
      %v8257 = vpop.permute.xlu0 %8256
      %v8259 = vsel %vm8151, %v8257, 0.0
      %8260 = vadd.xlane.f32.xlu0 %v8259
      %v8261 = vpop.xlane.xlu0 %8260
      %v8262 = vrcp.pop %v8261
      %v8263 = vmul.f32 %v8254, %v8262
      %v8264 = vsel %vm8102, %v8036, -inf
      %8265 = vmax.xlane.f32.xlu0 %v8264
      %v8266 = vpop.xlane.xlu0 %8265
      %v8267 = vsel %vm8102, %v8037, -inf
      %8268 = vmax.xlane.f32.xlu0 %v8267
      %v8269 = vpop.xlane.xlu0 %8268
      %v8270 = vsub.f32 %v8036, %v8266
      %v8271 = vsub.f32 %v8037, %v8269
      %v8272 = vmul.f32 %v8270, 1.442695
      %v8273 = vpow.pop %v8272
      %v8274 = vmul.f32 %v8271, 1.442695
      %v8275 = vpow.pop %v8274
      %8278 = vrot.lane.b32.xlu0 %v8273, 125
      %v8279 = vpop.permute.xlu0 %8278
      %8280 = vrot.lane.b32.xlu0 %v8275, 125
      %v8281 = vpop.permute.xlu0 %8280
      %v8284 = vsel %vm8151, %v8279, 0.0
      %8285 = vadd.xlane.f32.xlu0 %v8284
      %v8286 = vpop.xlane.xlu0 %8285
      %v8287 = vsel %vm8151, %v8281, 0.0
      %8288 = vadd.xlane.f32.xlu0 %v8287
      %v8289 = vpop.xlane.xlu0 %8288
      %v8290 = vrcp.pop %v8286
      %v8291 = vmul.f32 %v8273, %v8290
      %v8292 = vrcp.pop %v8289
      %v8293 = vmul.f32 %v8275, %v8292
      %8294 = vmax.xlane.f32.xlu0 %v8103
      %v8295 = vpop.xlane.xlu0 %8294
      %8296 = vmax.xlane.f32.xlu0 %v8104
      %v8297 = vpop.xlane.xlu0 %8296
      %v8298 = vsub.f32 %v8085, %v8295
      %v8299 = vsub.f32 %v8086, %v8297
      %v8300 = vmul.f32 %v8298, 1.442695
      %v8301 = vpow.pop %v8300
      %v8302 = vmul.f32 %v8299, 1.442695
      %v8303 = vpow.pop %v8302
      %8306 = vrot.lane.b32.xlu0 %v8301, 125
      %v8307 = vpop.permute.xlu0 %8306
      %8308 = vrot.lane.b32.xlu0 %v8303, 125
      %v8309 = vpop.permute.xlu0 %8308
      %v8312 = vsel %vm8151, %v8307, 0.0
      %8313 = vadd.xlane.f32.xlu0 %v8312
      %v8314 = vpop.xlane.xlu0 %8313
      %v8315 = vsel %vm8151, %v8309, 0.0
      %8316 = vadd.xlane.f32.xlu0 %v8315
      %v8317 = vpop.xlane.xlu0 %8316
      %v8318 = vrcp.pop %v8314
      %v8319 = vmul.f32 %v8301, %v8318
      %v8320 = vrcp.pop %v8317
      %v8321 = vmul.f32 %v8303, %v8320
      %8322 = vmax.xlane.f32.xlu0 %v8157
      %v8323 = vpop.xlane.xlu0 %8322
      %8324 = vmax.xlane.f32.xlu0 %v8158
      %v8325 = vpop.xlane.xlu0 %8324
      %v8326 = vsub.f32 %v8095, %v8323
      %v8327 = vsub.f32 %v8096, %v8325
      %v8328 = vmul.f32 %v8326, 1.442695
      %v8329 = vpow.pop %v8328
      %v8330 = vmul.f32 %v8327, 1.442695
      %v8331 = vpow.pop %v8330
      %8334 = vrot.lane.b32.xlu0 %v8329, 125
      %v8335 = vpop.permute.xlu0 %8334
      %8336 = vrot.lane.b32.xlu0 %v8331, 125
      %v8337 = vpop.permute.xlu0 %8336
      %v8340 = vsel %vm8151, %v8335, 0.0
      %8341 = vadd.xlane.f32.xlu0 %v8340
      %v8342 = vpop.xlane.xlu0 %8341
      %v8343 = vsel %vm8151, %v8337, 0.0
      %8344 = vadd.xlane.f32.xlu0 %v8343
      %v8345 = vpop.xlane.xlu0 %8344
      %v8346 = vrcp.pop %v8342
      %v8347 = vmul.f32 %v8329, %v8346
      %v8348 = vrcp.pop %v8345
      %v8349 = vmul.f32 %v8331, %v8348
      %8352 = vrot.lane.b32.xlu0 %v8291, 127
      %v8353 = vpop.permute.xlu0 %8352
      %8354 = vrot.lane.b32.xlu0 %v8293, 127
      %v8355 = vpop.permute.xlu0 %8354
      %8360 = vrot.lane.b32.xlu0 %v8319, 4
      %v8361 = vpop.permute.xlu0 %8360
      %8362 = vrot.lane.b32.xlu0 %v8321, 4
      %v8363 = vpop.permute.xlu0 %8362
      %8368 = vrot.lane.b32.xlu0 %v8347, 9
      %v8369 = vpop.permute.xlu0 %8368
      %8370 = vrot.lane.b32.xlu0 %v8349, 9
      %v8371 = vpop.permute.xlu0 %8370
      %8376 = vrot.lane.b32.xlu0 %v8036, 15
      %v8377 = vpop.permute.xlu0 %8376
      %8378 = vrot.lane.b32.xlu0 %v8037, 15
      %v8379 = vpop.permute.xlu0 %8378
      %8383 = vrot.lane.b32.xlu0 %v8156, 15
      %v8384 = vpop.permute.xlu0 %8383
      %8387 = vrot.lane.b32.xlu0 %v8263, 20
      %v8388 = vpop.permute.xlu0 %8387
      %v8390 = vsel %vm8052, %v8072, %v8353
      %v8391 = vsel %vm8052, %v8074, %v8355
      %vm8392 = vcmask 56320
      %v8393 = vsel %vm8392, %v8390, %v8361
      %v8394 = vsel %vm8392, %v8391, %v8363
      %vm8395 = vcmask 97280
      %v8396 = vsel %vm8395, %v8393, %v8369
      %v8397 = vsel %vm8395, %v8394, %v8371
      %vm8398 = vcmask 138240
      %v8399 = vsel %vm8398, %v8396, %v8377
      %v8400 = vsel %vm8398, %v8397, %v8379
      %vm8401 = vcmask 146432
      %v8402 = vsel %vm8401, %v8399, %v8384
      %v8403 = vsel %vm8401, %v8400, %v8384
      %vm8404 = vcmask 187392
      %v8405 = vsel %vm8404, %v8402, %v8388
      %v8406 = vsel %vm8404, %v8403, %v8388
      %vm8407 = vcmask 228352
      %v8408 = vsel %vm8407, %v8405, 0.0
      %v8409 = vsel %vm8407, %v8406, 0.0
      %8410 = vst [vmem:[%s524] sm:$0xff] %v8408
      %8411 = vst [vmem:[%s524 + $0x8] sm:$0xff] %v8409
      %p8412 = scmp.lt.s32.totalorder %s25, 1
      %s8413 = scalar_select %p8412, %s25, 1
      %s8414 = smul.addr %s8413, 2
      %s8415 = smul.addr %s8414, 8
      %s8416 = scalar_lea.vmem %s14, %s8415
      // Predicated region
      $region77: #{asmloc_forward.1} parent=75 // pred_check
        %p8417 = pneg %p357
      $region78: #{asmloc_forward.1} parent=75 // pred_check_branch
        %8419 = sbr.rel (%p8417) target = $region80
      $region79: #{asmloc_forward.1} parent=75 // pred_region
        _
      $region80: #{asmloc_forward.1} parent=75 // pred_fallthru
        _
    $region76: #{asmloc_forward.1} parent=5 // pred_fallthru
      _
    %p8420 = scmp.le.s32.totalorder 2, %s20
    // Predicated region
    $region81: #{asmloc_forward.1} parent=5 // pred_check
      %p8421 = pneg %p8420
    $region82: #{asmloc_forward.1} parent=5 // pred_check_branch
      %8423 = sbr.rel (%p8421) target = $region84
    $region83: #{asmloc_forward.1} parent=5 // pred_region
      %s8424 = ssub.s32 %s20, 2
      // Predicated region
      $region85: #{asmloc_forward.1} parent=83 // pred_check
        %p8425 = pneg %p363
      $region86: #{asmloc_forward.1} parent=83 // pred_check_branch
        %8427 = sbr.rel (%p8425) target = $region88
      $region87: #{asmloc_forward.1} parent=83 // pred_region
        %p8428 = scmp.lt.s32.totalorder %s26, 1
        %s8429 = scalar_select %p8428, %s26, 1
        %s8430 = smul.addr %s8429, 2
        %s8431 = smul.addr %s8430, 8
        %s8432 = scalar_lea.vmem %s14, %s8431
      $region88: #{asmloc_forward.1} parent=83 // pred_fallthru
        _
    $region84: #{asmloc_forward.1} parent=5 // pred_fallthru
      _
  $region6: #{asmloc_forward.1} parent=0 // loop_footer
    %s24 = sadd.s32 1, %s20
  $region7: #{asmloc_forward.1} parent=0 // loop_footer_branch
    %19 = sbr.rel target = $region3
  $region8: #{asmloc_forward.1} parent=0 // loop_exit
    _

</llo_original>
